<compile_context>
chip_gen: v7x
topology: tpu7x:2x2x1
jax: 0.10.0
libtpu: 0.0.40
codegen_flags: <defaults>
</compile_context>

<pallas_src>
import math

import jax
import jax.numpy as jnp
from jax.experimental import pallas as pl
from jax.experimental.pallas import tpu as pltpu


def _round_up(x, m):
    return ((x + m - 1) // m) * m


def _flat_geom(H, W):
    """Geometry of the flat zero-padded layout FB[base + h*(W+2) + w] = X[h, w]."""
    Wp = W + 2
    base = W + 8                                    # >= W + 3 leading zeros
    rows = _round_up(base + (H + 1) * Wp + 8, 8)    # covers lowest/highest tap reads
    return base, rows, Wp


def build_convnet_call(N, H0, W0, channel_dims, out_hw=(5, 5)):
    """Builds the fused encoder pallas_call for static geometry."""
    OH, OW = out_hw

    blocks = []
    H, W = H0, W0
    for (cin, cout) in channel_dims:
        if H % 2 or W % 2:
            raise ValueError("spatial dims must stay even for MaxPool2d(2)")
        base, rows, Wp = _flat_geom(H, W)
        blocks.append(dict(H=H, W=W, Wp=Wp, base=base, rows=rows,
                           Cin=cin, Cout=cout, Hout=H // 2, Wout=W // 2))
        H, W = H // 2, W // 2

    n_blocks = len(blocks)
    Cmax = max(b["Cout"] for b in blocks)
    last = blocks[-1]
    identity_pool = (last["Hout"], last["Wout"]) == (OH, OW)

    def kernel(*args):
        x_ref = args[0]
        p_refs = args[1:1 + 3 * n_blocks]
        o_ref = args[1 + 3 * n_blocks]
        scratch = args[2 + 3 * n_blocks:]
        fbs = scratch[:n_blocks - 1]                 # flat padded buffers, blocks 2..4
        abuf, rowbuf, fin = scratch[n_blocks - 1:]

        # Zero the flat padded buffers once per sample: the border rows and the
        # per-row gap columns must be zero and are never overwritten below.
        for fb in fbs:
            fb[...] = jnp.zeros_like(fb)

        def process_block(l, src_ref):
            blk = blocks[l]
            Wb, Wp, base = blk["W"], blk["Wp"], blk["base"]
            Cout, Hout, Wout = blk["Cout"], blk["Hout"], blk["Wout"]
            M = 2 * Wp                               # both pooling rows in one matmul
            cc = slice(None) if Cout == Cmax else pl.ds(0, Cout)

            # Hoisted loop-invariant operands.
            wk = [p_refs[3 * l][t] for t in range(9)]        # 9 x (Cin, Cout)
            scale = p_refs[3 * l + 1][...]                   # (1, Cout)
            shift = p_refs[3 * l + 2][...]                   # (1, Cout)

            if l + 1 < n_blocks:
                nblk = blocks[l + 1]
                dst_ref, dst_base, dst_wp = fbs[l], nblk["base"], nblk["Wp"]
            else:
                dst_ref, dst_base, dst_wp = fin, 0, 0

            @pl.loop(0, Hout)
            def _(ho):
                r0 = 2 * ho * Wp
                acc = None
                for t in range(9):                           # 3x3 taps
                    dy, dx = t // 3, t % 3
                    off = base + (dy - 1) * Wp + (dx - 1) + r0
                    lhs = src_ref[pl.ds(off, M), :]          # (M, Cin)
                    d = jnp.dot(lhs, wk[t], preferred_element_type=jnp.float32)
                    acc = d if acc is None else acc + d

                # conv bias + BatchNorm (folded) + ReLU
                act = jnp.maximum(acc * scale + shift, 0.0)  # (M, Cout)

                # MaxPool2d(2): rows 2*ho / 2*ho+1, then column pairs.
                abuf[pl.ds(0, M), cc] = act
                vert = jnp.maximum(abuf[pl.ds(0, Wb), cc],
                                   abuf[pl.ds(Wp, Wb), cc])  # (Wb, Cout)
                rowbuf[pl.ds(0, Wb), cc] = vert
                pooled = jnp.maximum(rowbuf[pl.ds(0, Wout, 2), cc],
                                     rowbuf[pl.ds(1, Wout, 2), cc])  # (Wout, Cout)

                if l + 1 < n_blocks:
                    # Write straight into the interior of the next block's
                    # padded flat buffer (gap/border zeros stay from memset).
                    dst_ref[pl.ds(dst_base + ho * dst_wp, Wout), cc] = pooled
                else:
                    dst_ref[ho, :, :] = pooled               # fin (Hout, Wout, Cout)

        src = x_ref
        for l in range(n_blocks):
            process_block(l, src)
            if l + 1 < n_blocks:
                src = fbs[l]

        if identity_pool:
            # AdaptiveMaxPool2d((5,5)) on a 5x5 map is the identity.
            o_ref[...] = fin[...]
        else:
            Hf, Wf = last["Hout"], last["Wout"]
            for i in range(OH):
                hs = (i * Hf) // OH
                he = -((-(i + 1) * Hf) // OH)                # ceil((i+1)*Hf/OH)
                for j in range(OW):
                    ws = (j * Wf) // OW
                    we = -((-(j + 1) * Wf) // OW)
                    win = fin[hs:he, ws:we, :]
                    o_ref[i:i + 1, j:j + 1, :] = jnp.max(win, axis=(0, 1),
                                                         keepdims=True)

    b0 = blocks[0]
    in_specs = [pl.BlockSpec((None, b0["rows"], b0["Cin"]), lambda n: (n, 0, 0))]
    for b in blocks:
        cin, cout = b["Cin"], b["Cout"]
        in_specs += [
            pl.BlockSpec((9, cin, cout), lambda n: (0, 0, 0)),
            pl.BlockSpec((1, cout), lambda n: (0, 0)),
            pl.BlockSpec((1, cout), lambda n: (0, 0)),
        ]

    scratch_shapes = [pltpu.VMEM((b["rows"], b["Cin"]), jnp.float32)
                      for b in blocks[1:]]
    scratch_shapes += [
        pltpu.VMEM((2 * blocks[0]["Wp"], Cmax), jnp.float32),                 # abuf
        pltpu.VMEM((blocks[0]["W"], Cmax), jnp.float32),                      # rowbuf
        pltpu.VMEM((last["Hout"], last["Wout"], last["Cout"]), jnp.float32),  # fin
    ]

    call = pl.pallas_call(
        kernel,
        out_shape=jax.ShapeDtypeStruct((N, OH, OW, last["Cout"]), jnp.float32),
        grid=(N,),
        in_specs=in_specs,
        out_specs=pl.BlockSpec((None, OH, OW, last["Cout"]),
                               lambda n: (n, 0, 0, 0)),
        scratch_shapes=scratch_shapes,
        compiler_params=pltpu.CompilerParams(
            dimension_semantics=("parallel",),
            vmem_limit_bytes=32 * 1024 * 1024,
        ),
    )
    return call, blocks


# ---------------------------------------------------------------------------
# Parameter init (deterministic, synthetic) + forward
# ---------------------------------------------------------------------------
def init_params(key, x_dim=3, hid_dim=16, z_dim=16):
    dims = [(x_dim, hid_dim), (hid_dim, hid_dim), (hid_dim, hid_dim), (hid_dim, z_dim)]
    eps = 1e-5
    params = []
    for cin, cout in dims:
        key, kw, kb, kg = jax.random.split(key, 4)
        fan_in = cin * 9
        bound = 1.0 / math.sqrt(fan_in)
        w = jax.random.uniform(kw, (3, 3, cin, cout), jnp.float32, -bound, bound)
        b = jax.random.uniform(kb, (cout,), jnp.float32, -bound, bound)
        gamma = jax.random.uniform(kg, (cout,), jnp.float32, 0.0, 1.0)  # nn.init.uniform_
        beta = jnp.zeros((cout,), jnp.float32)
        running_mean = jnp.zeros((cout,), jnp.float32)
        running_var = jnp.ones((cout,), jnp.float32)
        scale = gamma / jnp.sqrt(running_var + eps)
        shift = scale * (b - running_mean) + beta
        params.append((w, scale.reshape(1, cout), shift.reshape(1, cout)))
    return params


def convnet_forward(x_nchw, params):
    """x_nchw: (N, C, H, W); params: list of (w(3,3,Cin,Cout), scale(1,C), shift(1,C))."""
    N, C0, H0, W0 = x_nchw.shape
    x = jnp.transpose(x_nchw, (0, 2, 3, 1)).astype(jnp.float32)     # NHWC

    channel_dims = [(w.shape[2], w.shape[3]) for (w, _, _) in params]
    assert channel_dims[0][0] == C0

    call, blocks = build_convnet_call(N, H0, W0, channel_dims)

    # Lay the network input out in the flat zero-padded form expected by the
    # kernel (one tiny O(input) pad+reshape; all deeper activations never
    # leave VMEM).
    b0 = blocks[0]
    xp = jnp.pad(x, ((0, 0), (0, 0), (0, 2), (0, 0)))               # per-row gap zeros
    xf = xp.reshape(N, b0["H"] * b0["Wp"], b0["Cin"])
    xf = jnp.pad(xf, ((0, 0),
                      (b0["base"], b0["rows"] - b0["base"] - b0["H"] * b0["Wp"]),
                      (0, 0)))

    args = [xf]
    for (w, scale, shift) in params:
        args += [w.reshape(9, w.shape[2], w.shape[3]), scale, shift]

    out = call(*args)                                               # (N, 5, 5, Cout)
    out = jnp.transpose(out, (0, 3, 1, 2))                          # NCHW like torch
    return out.reshape(N, -1)                                       # (N, z_dim*5*5)


if __name__ == "__main__":
    key = jax.random.PRNGKey(0)
    k_param, k_x = jax.random.split(key)

    x_dim, hid_dim, z_dim = 3, 16, 16
    params = init_params(k_param, x_dim=x_dim, hid_dim=hid_dim, z_dim=z_dim)

    # 80x80 input -> 40 -> 20 -> 10 -> 5 after the four conv blocks
    # (AdaptiveMaxPool2d((5,5)) is then the identity).
    x = jax.random.normal(k_x, (2, x_dim, 80, 80), jnp.float32)

    fwd = jax.jit(convnet_forward)
    out = jax.block_until_ready(fwd(x, params))
    assert out.shape == (2, z_dim * 5 * 5), out.shape
    print("KERNEL_OK")
</pallas_src>

<mosaic_0001>
module attributes {stable_mosaic.version = 11 : i64} {
  func.func @kernel(%arg0: i32, %arg1: memref<1x6744x3xf32, #tpu.memory_space<vmem>>, %arg2: memref<9x3x16xf32, #tpu.memory_space<vmem>>, %arg3: memref<1x16xf32, #tpu.memory_space<vmem>>, %arg4: memref<1x16xf32, #tpu.memory_space<vmem>>, %arg5: memref<9x16x16xf32, #tpu.memory_space<vmem>>, %arg6: memref<1x16xf32, #tpu.memory_space<vmem>>, %arg7: memref<1x16xf32, #tpu.memory_space<vmem>>, %arg8: memref<9x16x16xf32, #tpu.memory_space<vmem>>, %arg9: memref<1x16xf32, #tpu.memory_space<vmem>>, %arg10: memref<1x16xf32, #tpu.memory_space<vmem>>, %arg11: memref<9x16x16xf32, #tpu.memory_space<vmem>>, %arg12: memref<1x16xf32, #tpu.memory_space<vmem>>, %arg13: memref<1x16xf32, #tpu.memory_space<vmem>>, %arg14: memref<1x5x5x16xf32, #tpu.memory_space<vmem>>, %arg15: memref<1784x16xf32, #tpu.memory_space<vmem>>, %arg16: memref<504x16xf32, #tpu.memory_space<vmem>>, %arg17: memref<160x16xf32, #tpu.memory_space<vmem>>, %arg18: memref<164x16xf32, #tpu.memory_space<vmem>>, %arg19: memref<80x16xf32, #tpu.memory_space<vmem>>, %arg20: memref<5x5x16xf32, #tpu.memory_space<vmem>>) attributes {dimension_semantics = [#tpu.dimension_semantics<parallel>], iteration_bounds = array<i64: 2>, scalar_prefetch = 0 : i64, scratch_operands = 6 : i64, tpu.core_type = #tpu.core_type<tc>, window_params = [{transform_indices = @transform_0, window_bounds = array<i64: 1, 6744, 3>}, {pipeline_mode = #tpu.pipeline_mode<synchronous>, transform_indices = @transform_1, window_bounds = array<i64: 9, 3, 16>}, {pipeline_mode = #tpu.pipeline_mode<synchronous>, transform_indices = @transform_2, window_bounds = array<i64: 1, 16>}, {pipeline_mode = #tpu.pipeline_mode<synchronous>, transform_indices = @transform_3, window_bounds = array<i64: 1, 16>}, {pipeline_mode = #tpu.pipeline_mode<synchronous>, transform_indices = @transform_4, window_bounds = array<i64: 9, 16, 16>}, {pipeline_mode = #tpu.pipeline_mode<synchronous>, transform_indices = @transform_5, window_bounds = array<i64: 1, 16>}, {pipeline_mode = #tpu.pipeline_mode<synchronous>, transform_indices = @transform_6, window_bounds = array<i64: 1, 16>}, {pipeline_mode = #tpu.pipeline_mode<synchronous>, transform_indices = @transform_7, window_bounds = array<i64: 9, 16, 16>}, {pipeline_mode = #tpu.pipeline_mode<synchronous>, transform_indices = @transform_8, window_bounds = array<i64: 1, 16>}, {pipeline_mode = #tpu.pipeline_mode<synchronous>, transform_indices = @transform_9, window_bounds = array<i64: 1, 16>}, {pipeline_mode = #tpu.pipeline_mode<synchronous>, transform_indices = @transform_10, window_bounds = array<i64: 9, 16, 16>}, {pipeline_mode = #tpu.pipeline_mode<synchronous>, transform_indices = @transform_11, window_bounds = array<i64: 1, 16>}, {pipeline_mode = #tpu.pipeline_mode<synchronous>, transform_indices = @transform_12, window_bounds = array<i64: 1, 16>}, {transform_indices = @transform_13, window_bounds = array<i64: 1, 5, 5, 16>}]} {
    %cst = arith.constant 0.000000e+00 : f32
    %0 = vector.broadcast %cst : f32 to vector<1784x16xf32>
    %c0 = arith.constant 0 : index
    %c0_0 = arith.constant 0 : index
    %1 = vector.load %arg15[%c0, %c0_0] : memref<1784x16xf32, #tpu.memory_space<vmem>>, vector<1784x16xf32>
    tpu.vector_store %arg15[%c0, %c0_0], %0 {strides = array<i32>} : memref<1784x16xf32, #tpu.memory_space<vmem>>, vector<1784x16xf32>,
    %cst_1 = arith.constant 0.000000e+00 : f32
    %2 = vector.broadcast %cst_1 : f32 to vector<504x16xf32>
    %c0_2 = arith.constant 0 : index
    %c0_3 = arith.constant 0 : index
    %3 = vector.load %arg16[%c0_2, %c0_3] : memref<504x16xf32, #tpu.memory_space<vmem>>, vector<504x16xf32>
    tpu.vector_store %arg16[%c0_2, %c0_3], %2 {strides = array<i32>} : memref<504x16xf32, #tpu.memory_space<vmem>>, vector<504x16xf32>,
    %cst_4 = arith.constant 0.000000e+00 : f32
    %4 = vector.broadcast %cst_4 : f32 to vector<160x16xf32>
    %c0_5 = arith.constant 0 : index
    %c0_6 = arith.constant 0 : index
    %5 = vector.load %arg17[%c0_5, %c0_6] : memref<160x16xf32, #tpu.memory_space<vmem>>, vector<160x16xf32>
    tpu.vector_store %arg17[%c0_5, %c0_6], %4 {strides = array<i32>} : memref<160x16xf32, #tpu.memory_space<vmem>>, vector<160x16xf32>,
    %c0_7 = arith.constant 0 : index
    %c0_8 = arith.constant 0 : index
    %c0_9 = arith.constant 0 : index
    %6 = vector.load %arg2[%c0_7, %c0_8, %c0_9] : memref<9x3x16xf32, #tpu.memory_space<vmem>>, vector<1x3x16xf32>
    %7 = vector.shape_cast %6 : vector<1x3x16xf32> to vector<3x16xf32>
    %c1 = arith.constant 1 : index
    %c0_10 = arith.constant 0 : index
    %c0_11 = arith.constant 0 : index
    %8 = vector.load %arg2[%c1, %c0_10, %c0_11] : memref<9x3x16xf32, #tpu.memory_space<vmem>>, vector<1x3x16xf32>
    %9 = vector.shape_cast %8 : vector<1x3x16xf32> to vector<3x16xf32>
    %c2 = arith.constant 2 : index
    %c0_12 = arith.constant 0 : index
    %c0_13 = arith.constant 0 : index
    %10 = vector.load %arg2[%c2, %c0_12, %c0_13] : memref<9x3x16xf32, #tpu.memory_space<vmem>>, vector<1x3x16xf32>
    %11 = vector.shape_cast %10 : vector<1x3x16xf32> to vector<3x16xf32>
    %c3 = arith.constant 3 : index
    %c0_14 = arith.constant 0 : index
    %c0_15 = arith.constant 0 : index
    %12 = vector.load %arg2[%c3, %c0_14, %c0_15] : memref<9x3x16xf32, #tpu.memory_space<vmem>>, vector<1x3x16xf32>
    %13 = vector.shape_cast %12 : vector<1x3x16xf32> to vector<3x16xf32>
    %c4 = arith.constant 4 : index
    %c0_16 = arith.constant 0 : index
    %c0_17 = arith.constant 0 : index
    %14 = vector.load %arg2[%c4, %c0_16, %c0_17] : memref<9x3x16xf32, #tpu.memory_space<vmem>>, vector<1x3x16xf32>
    %15 = vector.shape_cast %14 : vector<1x3x16xf32> to vector<3x16xf32>
    %c5 = arith.constant 5 : index
    %c0_18 = arith.constant 0 : index
    %c0_19 = arith.constant 0 : index
    %16 = vector.load %arg2[%c5, %c0_18, %c0_19] : memref<9x3x16xf32, #tpu.memory_space<vmem>>, vector<1x3x16xf32>
    %17 = vector.shape_cast %16 : vector<1x3x16xf32> to vector<3x16xf32>
    %c6 = arith.constant 6 : index
    %c0_20 = arith.constant 0 : index
    %c0_21 = arith.constant 0 : index
    %18 = vector.load %arg2[%c6, %c0_20, %c0_21] : memref<9x3x16xf32, #tpu.memory_space<vmem>>, vector<1x3x16xf32>
    %19 = vector.shape_cast %18 : vector<1x3x16xf32> to vector<3x16xf32>
    %c7 = arith.constant 7 : index
    %c0_22 = arith.constant 0 : index
    %c0_23 = arith.constant 0 : index
    %20 = vector.load %arg2[%c7, %c0_22, %c0_23] : memref<9x3x16xf32, #tpu.memory_space<vmem>>, vector<1x3x16xf32>
    %21 = vector.shape_cast %20 : vector<1x3x16xf32> to vector<3x16xf32>
    %c8 = arith.constant 8 : index
    %c0_24 = arith.constant 0 : index
    %c0_25 = arith.constant 0 : index
    %22 = vector.load %arg2[%c8, %c0_24, %c0_25] : memref<9x3x16xf32, #tpu.memory_space<vmem>>, vector<1x3x16xf32>
    %23 = vector.shape_cast %22 : vector<1x3x16xf32> to vector<3x16xf32>
    %c0_26 = arith.constant 0 : index
    %c0_27 = arith.constant 0 : index
    %24 = vector.load %arg3[%c0_26, %c0_27] : memref<1x16xf32, #tpu.memory_space<vmem>>, vector<1x16xf32>
    %c0_28 = arith.constant 0 : index
    %c0_29 = arith.constant 0 : index
    %25 = vector.load %arg4[%c0_28, %c0_29] : memref<1x16xf32, #tpu.memory_space<vmem>>, vector<1x16xf32>
    %c0_i32 = arith.constant 0 : i32
    %c40_i32 = arith.constant 40 : i32
    %26 = arith.addi %c0_i32, %c40_i32 : i32
    %c1_i32 = arith.constant 1 : i32
    scf.for %arg21 = %c0_i32 to %26 step %c1_i32  : i32 {
      %c1_i32_140 = arith.constant 1 : i32
      %94 = arith.muli %arg21, %c1_i32_140 : i32
      %c0_i32_141 = arith.constant 0 : i32
      %95 = arith.addi %c0_i32_141, %94 : i32
      %c2_i32 = arith.constant 2 : i32
      %96 = arith.muli %c2_i32, %95 : i32
      %c82_i32 = arith.constant 82 : i32
      %97 = arith.muli %96, %c82_i32 : i32
      %c5_i32_142 = arith.constant 5 : i32
      %98 = arith.addi %c5_i32_142, %97 : i32
      %c0_143 = arith.constant 0 : index
      %99 = arith.index_cast %98 : i32 to index
      %c0_144 = arith.constant 0 : index
      %100 = vector.load %arg1[%c0_143, %99, %c0_144] : memref<1x6744x3xf32, #tpu.memory_space<vmem>>, vector<1x164x3xf32>
      %101 = vector.shape_cast %100 : vector<1x164x3xf32> to vector<164x3xf32>
      %cst_145 = arith.constant dense<0.000000e+00> : vector<164x16xf32>
      %102 = tpu.matmul %101, %7, %cst_145 {dimension_numbers = #tpu.dot_dimension_numbers<[1], [0], [0], [1], [0, 0, 1, 1], [], []>} : vector<164x3xf32>, vector<3x16xf32>, vector<164x16xf32> -> vector<164x16xf32>
      %c6_i32 = arith.constant 6 : i32
      %103 = arith.addi %c6_i32, %97 : i32
      %c0_146 = arith.constant 0 : index
      %104 = arith.index_cast %103 : i32 to index
      %c0_147 = arith.constant 0 : index
      %105 = vector.load %arg1[%c0_146, %104, %c0_147] : memref<1x6744x3xf32, #tpu.memory_space<vmem>>, vector<1x164x3xf32>
      %106 = vector.shape_cast %105 : vector<1x164x3xf32> to vector<164x3xf32>
      %cst_148 = arith.constant dense<0.000000e+00> : vector<164x16xf32>
      %107 = tpu.matmul %106, %9, %cst_148 {dimension_numbers = #tpu.dot_dimension_numbers<[1], [0], [0], [1], [0, 0, 1, 1], [], []>} : vector<164x3xf32>, vector<3x16xf32>, vector<164x16xf32> -> vector<164x16xf32>
      %108 = arith.addf %102, %107 : vector<164x16xf32>
      %c7_i32 = arith.constant 7 : i32
      %109 = arith.addi %c7_i32, %97 : i32
      %c0_149 = arith.constant 0 : index
      %110 = arith.index_cast %109 : i32 to index
      %c0_150 = arith.constant 0 : index
      %111 = vector.load %arg1[%c0_149, %110, %c0_150] : memref<1x6744x3xf32, #tpu.memory_space<vmem>>, vector<1x164x3xf32>
      %112 = vector.shape_cast %111 : vector<1x164x3xf32> to vector<164x3xf32>
      %cst_151 = arith.constant dense<0.000000e+00> : vector<164x16xf32>
      %113 = tpu.matmul %112, %11, %cst_151 {dimension_numbers = #tpu.dot_dimension_numbers<[1], [0], [0], [1], [0, 0, 1, 1], [], []>} : vector<164x3xf32>, vector<3x16xf32>, vector<164x16xf32> -> vector<164x16xf32>
      %114 = arith.addf %108, %113 : vector<164x16xf32>
      %c87_i32 = arith.constant 87 : i32
      %115 = arith.addi %c87_i32, %97 : i32
      %c0_152 = arith.constant 0 : index
      %116 = arith.index_cast %115 : i32 to index
      %c0_153 = arith.constant 0 : index
      %117 = vector.load %arg1[%c0_152, %116, %c0_153] : memref<1x6744x3xf32, #tpu.memory_space<vmem>>, vector<1x164x3xf32>
      %118 = vector.shape_cast %117 : vector<1x164x3xf32> to vector<164x3xf32>
      %cst_154 = arith.constant dense<0.000000e+00> : vector<164x16xf32>
      %119 = tpu.matmul %118, %13, %cst_154 {dimension_numbers = #tpu.dot_dimension_numbers<[1], [0], [0], [1], [0, 0, 1, 1], [], []>} : vector<164x3xf32>, vector<3x16xf32>, vector<164x16xf32> -> vector<164x16xf32>
      %120 = arith.addf %114, %119 : vector<164x16xf32>
      %c88_i32 = arith.constant 88 : i32
      %121 = arith.addi %c88_i32, %97 : i32
      %c0_155 = arith.constant 0 : index
      %122 = arith.index_cast %121 : i32 to index
      %c0_156 = arith.constant 0 : index
      %123 = vector.load %arg1[%c0_155, %122, %c0_156] : memref<1x6744x3xf32, #tpu.memory_space<vmem>>, vector<1x164x3xf32>
      %124 = vector.shape_cast %123 : vector<1x164x3xf32> to vector<164x3xf32>
      %cst_157 = arith.constant dense<0.000000e+00> : vector<164x16xf32>
      %125 = tpu.matmul %124, %15, %cst_157 {dimension_numbers = #tpu.dot_dimension_numbers<[1], [0], [0], [1], [0, 0, 1, 1], [], []>} : vector<164x3xf32>, vector<3x16xf32>, vector<164x16xf32> -> vector<164x16xf32>
      %126 = arith.addf %120, %125 : vector<164x16xf32>
      %c89_i32 = arith.constant 89 : i32
      %127 = arith.addi %c89_i32, %97 : i32
      %c0_158 = arith.constant 0 : index
      %128 = arith.index_cast %127 : i32 to index
      %c0_159 = arith.constant 0 : index
      %129 = vector.load %arg1[%c0_158, %128, %c0_159] : memref<1x6744x3xf32, #tpu.memory_space<vmem>>, vector<1x164x3xf32>
      %130 = vector.shape_cast %129 : vector<1x164x3xf32> to vector<164x3xf32>
      %cst_160 = arith.constant dense<0.000000e+00> : vector<164x16xf32>
      %131 = tpu.matmul %130, %17, %cst_160 {dimension_numbers = #tpu.dot_dimension_numbers<[1], [0], [0], [1], [0, 0, 1, 1], [], []>} : vector<164x3xf32>, vector<3x16xf32>, vector<164x16xf32> -> vector<164x16xf32>
      %132 = arith.addf %126, %131 : vector<164x16xf32>
      %c169_i32 = arith.constant 169 : i32
      %133 = arith.addi %c169_i32, %97 : i32
      %c0_161 = arith.constant 0 : index
      %134 = arith.index_cast %133 : i32 to index
      %c0_162 = arith.constant 0 : index
      %135 = vector.load %arg1[%c0_161, %134, %c0_162] : memref<1x6744x3xf32, #tpu.memory_space<vmem>>, vector<1x164x3xf32>
      %136 = vector.shape_cast %135 : vector<1x164x3xf32> to vector<164x3xf32>
      %cst_163 = arith.constant dense<0.000000e+00> : vector<164x16xf32>
      %137 = tpu.matmul %136, %19, %cst_163 {dimension_numbers = #tpu.dot_dimension_numbers<[1], [0], [0], [1], [0, 0, 1, 1], [], []>} : vector<164x3xf32>, vector<3x16xf32>, vector<164x16xf32> -> vector<164x16xf32>
      %138 = arith.addf %132, %137 : vector<164x16xf32>
      %c170_i32 = arith.constant 170 : i32
      %139 = arith.addi %c170_i32, %97 : i32
      %c0_164 = arith.constant 0 : index
      %140 = arith.index_cast %139 : i32 to index
      %c0_165 = arith.constant 0 : index
      %141 = vector.load %arg1[%c0_164, %140, %c0_165] : memref<1x6744x3xf32, #tpu.memory_space<vmem>>, vector<1x164x3xf32>
      %142 = vector.shape_cast %141 : vector<1x164x3xf32> to vector<164x3xf32>
      %cst_166 = arith.constant dense<0.000000e+00> : vector<164x16xf32>
      %143 = tpu.matmul %142, %21, %cst_166 {dimension_numbers = #tpu.dot_dimension_numbers<[1], [0], [0], [1], [0, 0, 1, 1], [], []>} : vector<164x3xf32>, vector<3x16xf32>, vector<164x16xf32> -> vector<164x16xf32>
      %144 = arith.addf %138, %143 : vector<164x16xf32>
      %c171_i32 = arith.constant 171 : i32
      %145 = arith.addi %c171_i32, %97 : i32
      %c0_167 = arith.constant 0 : index
      %146 = arith.index_cast %145 : i32 to index
      %c0_168 = arith.constant 0 : index
      %147 = vector.load %arg1[%c0_167, %146, %c0_168] : memref<1x6744x3xf32, #tpu.memory_space<vmem>>, vector<1x164x3xf32>
      %148 = vector.shape_cast %147 : vector<1x164x3xf32> to vector<164x3xf32>
      %cst_169 = arith.constant dense<0.000000e+00> : vector<164x16xf32>
      %149 = tpu.matmul %148, %23, %cst_169 {dimension_numbers = #tpu.dot_dimension_numbers<[1], [0], [0], [1], [0, 0, 1, 1], [], []>} : vector<164x3xf32>, vector<3x16xf32>, vector<164x16xf32> -> vector<164x16xf32>
      %150 = arith.addf %144, %149 : vector<164x16xf32>
      %151 = vector.broadcast %24 : vector<1x16xf32> to vector<164x16xf32>
      %152 = arith.mulf %150, %151 : vector<164x16xf32>
      %153 = vector.broadcast %25 : vector<1x16xf32> to vector<164x16xf32>
      %154 = arith.addf %152, %153 : vector<164x16xf32>
      %cst_170 = arith.constant 0.000000e+00 : f32
      %155 = vector.broadcast %cst_170 : f32 to vector<164x16xf32>
      %156 = arith.maximumf %154, %155 : vector<164x16xf32>
      %c0_171 = arith.constant 0 : index
      %c0_172 = arith.constant 0 : index
      %157 = vector.load %arg18[%c0_171, %c0_172] : memref<164x16xf32, #tpu.memory_space<vmem>>, vector<164x16xf32>
      tpu.vector_store %arg18[%c0_171, %c0_172], %156 {strides = array<i32>} : memref<164x16xf32, #tpu.memory_space<vmem>>, vector<164x16xf32>,
      %c0_173 = arith.constant 0 : index
      %c0_174 = arith.constant 0 : index
      %158 = vector.load %arg18[%c0_173, %c0_174] : memref<164x16xf32, #tpu.memory_space<vmem>>, vector<80x16xf32>
      %c82 = arith.constant 82 : index
      %c0_175 = arith.constant 0 : index
      %159 = vector.load %arg18[%c82, %c0_175] : memref<164x16xf32, #tpu.memory_space<vmem>>, vector<80x16xf32>
      %160 = arith.maximumf %158, %159 : vector<80x16xf32>
      %c0_176 = arith.constant 0 : index
      %c0_177 = arith.constant 0 : index
      %161 = vector.load %arg19[%c0_176, %c0_177] : memref<80x16xf32, #tpu.memory_space<vmem>>, vector<80x16xf32>
      tpu.vector_store %arg19[%c0_176, %c0_177], %160 {strides = array<i32>} : memref<80x16xf32, #tpu.memory_space<vmem>>, vector<80x16xf32>,
      %c0_178 = arith.constant 0 : index
      %c0_179 = arith.constant 0 : index
      %162 = tpu.strided_load %arg19[%c0_178, %c0_179] {strides = array<i32: 2, 1>} : memref<80x16xf32, #tpu.memory_space<vmem>>, vector<40x16xf32>
      %c1_180 = arith.constant 1 : index
      %c0_181 = arith.constant 0 : index
      %163 = tpu.strided_load %arg19[%c1_180, %c0_181] {strides = array<i32: 2, 1>} : memref<80x16xf32, #tpu.memory_space<vmem>>, vector<40x16xf32>
      %164 = arith.maximumf %162, %163 : vector<40x16xf32>
      %c42_i32 = arith.constant 42 : i32
      %165 = arith.muli %95, %c42_i32 : i32
      %c48_i32 = arith.constant 48 : i32
      %166 = arith.addi %c48_i32, %165 : i32
      %167 = arith.index_cast %166 : i32 to index
      %c0_182 = arith.constant 0 : index
      %168 = vector.load %arg15[%167, %c0_182] : memref<1784x16xf32, #tpu.memory_space<vmem>>, vector<40x16xf32>
      tpu.vector_store %arg15[%167, %c0_182], %164 {strides = array<i32>} : memref<1784x16xf32, #tpu.memory_space<vmem>>, vector<40x16xf32>,
    }
    %c40_i32_30 = arith.constant 40 : i32
    %c0_31 = arith.constant 0 : index
    %c0_32 = arith.constant 0 : index
    %c0_33 = arith.constant 0 : index
    %27 = vector.load %arg5[%c0_31, %c0_32, %c0_33] : memref<9x16x16xf32, #tpu.memory_space<vmem>>, vector<1x16x16xf32>
    %28 = vector.shape_cast %27 : vector<1x16x16xf32> to vector<16x16xf32>
    %c1_34 = arith.constant 1 : index
    %c0_35 = arith.constant 0 : index
    %c0_36 = arith.constant 0 : index
    %29 = vector.load %arg5[%c1_34, %c0_35, %c0_36] : memref<9x16x16xf32, #tpu.memory_space<vmem>>, vector<1x16x16xf32>
    %30 = vector.shape_cast %29 : vector<1x16x16xf32> to vector<16x16xf32>
    %c2_37 = arith.constant 2 : index
    %c0_38 = arith.constant 0 : index
    %c0_39 = arith.constant 0 : index
    %31 = vector.load %arg5[%c2_37, %c0_38, %c0_39] : memref<9x16x16xf32, #tpu.memory_space<vmem>>, vector<1x16x16xf32>
    %32 = vector.shape_cast %31 : vector<1x16x16xf32> to vector<16x16xf32>
    %c3_40 = arith.constant 3 : index
    %c0_41 = arith.constant 0 : index
    %c0_42 = arith.constant 0 : index
    %33 = vector.load %arg5[%c3_40, %c0_41, %c0_42] : memref<9x16x16xf32, #tpu.memory_space<vmem>>, vector<1x16x16xf32>
    %34 = vector.shape_cast %33 : vector<1x16x16xf32> to vector<16x16xf32>
    %c4_43 = arith.constant 4 : index
    %c0_44 = arith.constant 0 : index
    %c0_45 = arith.constant 0 : index
    %35 = vector.load %arg5[%c4_43, %c0_44, %c0_45] : memref<9x16x16xf32, #tpu.memory_space<vmem>>, vector<1x16x16xf32>
    %36 = vector.shape_cast %35 : vector<1x16x16xf32> to vector<16x16xf32>
    %c5_46 = arith.constant 5 : index
    %c0_47 = arith.constant 0 : index
    %c0_48 = arith.constant 0 : index
    %37 = vector.load %arg5[%c5_46, %c0_47, %c0_48] : memref<9x16x16xf32, #tpu.memory_space<vmem>>, vector<1x16x16xf32>
    %38 = vector.shape_cast %37 : vector<1x16x16xf32> to vector<16x16xf32>
    %c6_49 = arith.constant 6 : index
    %c0_50 = arith.constant 0 : index
    %c0_51 = arith.constant 0 : index
    %39 = vector.load %arg5[%c6_49, %c0_50, %c0_51] : memref<9x16x16xf32, #tpu.memory_space<vmem>>, vector<1x16x16xf32>
    %40 = vector.shape_cast %39 : vector<1x16x16xf32> to vector<16x16xf32>
    %c7_52 = arith.constant 7 : index
    %c0_53 = arith.constant 0 : index
    %c0_54 = arith.constant 0 : index
    %41 = vector.load %arg5[%c7_52, %c0_53, %c0_54] : memref<9x16x16xf32, #tpu.memory_space<vmem>>, vector<1x16x16xf32>
    %42 = vector.shape_cast %41 : vector<1x16x16xf32> to vector<16x16xf32>
    %c8_55 = arith.constant 8 : index
    %c0_56 = arith.constant 0 : index
    %c0_57 = arith.constant 0 : index
    %43 = vector.load %arg5[%c8_55, %c0_56, %c0_57] : memref<9x16x16xf32, #tpu.memory_space<vmem>>, vector<1x16x16xf32>
    %44 = vector.shape_cast %43 : vector<1x16x16xf32> to vector<16x16xf32>
    %c0_58 = arith.constant 0 : index
    %c0_59 = arith.constant 0 : index
    %45 = vector.load %arg6[%c0_58, %c0_59] : memref<1x16xf32, #tpu.memory_space<vmem>>, vector<1x16xf32>
    %c0_60 = arith.constant 0 : index
    %c0_61 = arith.constant 0 : index
    %46 = vector.load %arg7[%c0_60, %c0_61] : memref<1x16xf32, #tpu.memory_space<vmem>>, vector<1x16xf32>
    %c0_i32_62 = arith.constant 0 : i32
    %c20_i32 = arith.constant 20 : i32
    %47 = arith.addi %c0_i32_62, %c20_i32 : i32
    %c1_i32_63 = arith.constant 1 : i32
    scf.for %arg21 = %c0_i32_62 to %47 step %c1_i32_63  : i32 {
      %c1_i32_140 = arith.constant 1 : i32
      %94 = arith.muli %arg21, %c1_i32_140 : i32
      %c0_i32_141 = arith.constant 0 : i32
      %95 = arith.addi %c0_i32_141, %94 : i32
      %c2_i32 = arith.constant 2 : i32
      %96 = arith.muli %c2_i32, %95 : i32
      %c42_i32 = arith.constant 42 : i32
      %97 = arith.muli %96, %c42_i32 : i32
      %c5_i32_142 = arith.constant 5 : i32
      %98 = arith.addi %c5_i32_142, %97 : i32
      %99 = arith.index_cast %98 : i32 to index
      %c0_143 = arith.constant 0 : index
      %100 = vector.load %arg15[%99, %c0_143] : memref<1784x16xf32, #tpu.memory_space<vmem>>, vector<84x16xf32>
      %cst_144 = arith.constant dense<0.000000e+00> : vector<84x16xf32>
      %101 = tpu.matmul %100, %28, %cst_144 {dimension_numbers = #tpu.dot_dimension_numbers<[1], [0], [0], [1], [0, 0, 1, 1], [], []>} : vector<84x16xf32>, vector<16x16xf32>, vector<84x16xf32> -> vector<84x16xf32>
      %c6_i32 = arith.constant 6 : i32
      %102 = arith.addi %c6_i32, %97 : i32
      %103 = arith.index_cast %102 : i32 to index
      %c0_145 = arith.constant 0 : index
      %104 = vector.load %arg15[%103, %c0_145] : memref<1784x16xf32, #tpu.memory_space<vmem>>, vector<84x16xf32>
      %cst_146 = arith.constant dense<0.000000e+00> : vector<84x16xf32>
      %105 = tpu.matmul %104, %30, %cst_146 {dimension_numbers = #tpu.dot_dimension_numbers<[1], [0], [0], [1], [0, 0, 1, 1], [], []>} : vector<84x16xf32>, vector<16x16xf32>, vector<84x16xf32> -> vector<84x16xf32>
      %106 = arith.addf %101, %105 : vector<84x16xf32>
      %c7_i32 = arith.constant 7 : i32
      %107 = arith.addi %c7_i32, %97 : i32
      %108 = arith.index_cast %107 : i32 to index
      %c0_147 = arith.constant 0 : index
      %109 = vector.load %arg15[%108, %c0_147] : memref<1784x16xf32, #tpu.memory_space<vmem>>, vector<84x16xf32>
      %cst_148 = arith.constant dense<0.000000e+00> : vector<84x16xf32>
      %110 = tpu.matmul %109, %32, %cst_148 {dimension_numbers = #tpu.dot_dimension_numbers<[1], [0], [0], [1], [0, 0, 1, 1], [], []>} : vector<84x16xf32>, vector<16x16xf32>, vector<84x16xf32> -> vector<84x16xf32>
      %111 = arith.addf %106, %110 : vector<84x16xf32>
      %c47_i32 = arith.constant 47 : i32
      %112 = arith.addi %c47_i32, %97 : i32
      %113 = arith.index_cast %112 : i32 to index
      %c0_149 = arith.constant 0 : index
      %114 = vector.load %arg15[%113, %c0_149] : memref<1784x16xf32, #tpu.memory_space<vmem>>, vector<84x16xf32>
      %cst_150 = arith.constant dense<0.000000e+00> : vector<84x16xf32>
      %115 = tpu.matmul %114, %34, %cst_150 {dimension_numbers = #tpu.dot_dimension_numbers<[1], [0], [0], [1], [0, 0, 1, 1], [], []>} : vector<84x16xf32>, vector<16x16xf32>, vector<84x16xf32> -> vector<84x16xf32>
      %116 = arith.addf %111, %115 : vector<84x16xf32>
      %c48_i32 = arith.constant 48 : i32
      %117 = arith.addi %c48_i32, %97 : i32
      %118 = arith.index_cast %117 : i32 to index
      %c0_151 = arith.constant 0 : index
      %119 = vector.load %arg15[%118, %c0_151] : memref<1784x16xf32, #tpu.memory_space<vmem>>, vector<84x16xf32>
      %cst_152 = arith.constant dense<0.000000e+00> : vector<84x16xf32>
      %120 = tpu.matmul %119, %36, %cst_152 {dimension_numbers = #tpu.dot_dimension_numbers<[1], [0], [0], [1], [0, 0, 1, 1], [], []>} : vector<84x16xf32>, vector<16x16xf32>, vector<84x16xf32> -> vector<84x16xf32>
      %121 = arith.addf %116, %120 : vector<84x16xf32>
      %c49_i32 = arith.constant 49 : i32
      %122 = arith.addi %c49_i32, %97 : i32
      %123 = arith.index_cast %122 : i32 to index
      %c0_153 = arith.constant 0 : index
      %124 = vector.load %arg15[%123, %c0_153] : memref<1784x16xf32, #tpu.memory_space<vmem>>, vector<84x16xf32>
      %cst_154 = arith.constant dense<0.000000e+00> : vector<84x16xf32>
      %125 = tpu.matmul %124, %38, %cst_154 {dimension_numbers = #tpu.dot_dimension_numbers<[1], [0], [0], [1], [0, 0, 1, 1], [], []>} : vector<84x16xf32>, vector<16x16xf32>, vector<84x16xf32> -> vector<84x16xf32>
      %126 = arith.addf %121, %125 : vector<84x16xf32>
      %c89_i32 = arith.constant 89 : i32
      %127 = arith.addi %c89_i32, %97 : i32
      %128 = arith.index_cast %127 : i32 to index
      %c0_155 = arith.constant 0 : index
      %129 = vector.load %arg15[%128, %c0_155] : memref<1784x16xf32, #tpu.memory_space<vmem>>, vector<84x16xf32>
      %cst_156 = arith.constant dense<0.000000e+00> : vector<84x16xf32>
      %130 = tpu.matmul %129, %40, %cst_156 {dimension_numbers = #tpu.dot_dimension_numbers<[1], [0], [0], [1], [0, 0, 1, 1], [], []>} : vector<84x16xf32>, vector<16x16xf32>, vector<84x16xf32> -> vector<84x16xf32>
      %131 = arith.addf %126, %130 : vector<84x16xf32>
      %c90_i32 = arith.constant 90 : i32
      %132 = arith.addi %c90_i32, %97 : i32
      %133 = arith.index_cast %132 : i32 to index
      %c0_157 = arith.constant 0 : index
      %134 = vector.load %arg15[%133, %c0_157] : memref<1784x16xf32, #tpu.memory_space<vmem>>, vector<84x16xf32>
      %cst_158 = arith.constant dense<0.000000e+00> : vector<84x16xf32>
      %135 = tpu.matmul %134, %42, %cst_158 {dimension_numbers = #tpu.dot_dimension_numbers<[1], [0], [0], [1], [0, 0, 1, 1], [], []>} : vector<84x16xf32>, vector<16x16xf32>, vector<84x16xf32> -> vector<84x16xf32>
      %136 = arith.addf %131, %135 : vector<84x16xf32>
      %c91_i32 = arith.constant 91 : i32
      %137 = arith.addi %c91_i32, %97 : i32
      %138 = arith.index_cast %137 : i32 to index
      %c0_159 = arith.constant 0 : index
      %139 = vector.load %arg15[%138, %c0_159] : memref<1784x16xf32, #tpu.memory_space<vmem>>, vector<84x16xf32>
      %cst_160 = arith.constant dense<0.000000e+00> : vector<84x16xf32>
      %140 = tpu.matmul %139, %44, %cst_160 {dimension_numbers = #tpu.dot_dimension_numbers<[1], [0], [0], [1], [0, 0, 1, 1], [], []>} : vector<84x16xf32>, vector<16x16xf32>, vector<84x16xf32> -> vector<84x16xf32>
      %141 = arith.addf %136, %140 : vector<84x16xf32>
      %142 = vector.broadcast %45 : vector<1x16xf32> to vector<84x16xf32>
      %143 = arith.mulf %141, %142 : vector<84x16xf32>
      %144 = vector.broadcast %46 : vector<1x16xf32> to vector<84x16xf32>
      %145 = arith.addf %143, %144 : vector<84x16xf32>
      %cst_161 = arith.constant 0.000000e+00 : f32
      %146 = vector.broadcast %cst_161 : f32 to vector<84x16xf32>
      %147 = arith.maximumf %145, %146 : vector<84x16xf32>
      %c0_162 = arith.constant 0 : index
      %c0_163 = arith.constant 0 : index
      %148 = vector.load %arg18[%c0_162, %c0_163] : memref<164x16xf32, #tpu.memory_space<vmem>>, vector<84x16xf32>
      tpu.vector_store %arg18[%c0_162, %c0_163], %147 {strides = array<i32>} : memref<164x16xf32, #tpu.memory_space<vmem>>, vector<84x16xf32>,
      %c0_164 = arith.constant 0 : index
      %c0_165 = arith.constant 0 : index
      %149 = vector.load %arg18[%c0_164, %c0_165] : memref<164x16xf32, #tpu.memory_space<vmem>>, vector<40x16xf32>
      %c42 = arith.constant 42 : index
      %c0_166 = arith.constant 0 : index
      %150 = vector.load %arg18[%c42, %c0_166] : memref<164x16xf32, #tpu.memory_space<vmem>>, vector<40x16xf32>
      %151 = arith.maximumf %149, %150 : vector<40x16xf32>
      %c0_167 = arith.constant 0 : index
      %c0_168 = arith.constant 0 : index
      %152 = vector.load %arg19[%c0_167, %c0_168] : memref<80x16xf32, #tpu.memory_space<vmem>>, vector<40x16xf32>
      tpu.vector_store %arg19[%c0_167, %c0_168], %151 {strides = array<i32>} : memref<80x16xf32, #tpu.memory_space<vmem>>, vector<40x16xf32>,
      %c0_169 = arith.constant 0 : index
      %c0_170 = arith.constant 0 : index
      %153 = tpu.strided_load %arg19[%c0_169, %c0_170] {strides = array<i32: 2, 1>} : memref<80x16xf32, #tpu.memory_space<vmem>>, vector<20x16xf32>
      %c1_171 = arith.constant 1 : index
      %c0_172 = arith.constant 0 : index
      %154 = tpu.strided_load %arg19[%c1_171, %c0_172] {strides = array<i32: 2, 1>} : memref<80x16xf32, #tpu.memory_space<vmem>>, vector<20x16xf32>
      %155 = arith.maximumf %153, %154 : vector<20x16xf32>
      %c22_i32 = arith.constant 22 : i32
      %156 = arith.muli %95, %c22_i32 : i32
      %c28_i32 = arith.constant 28 : i32
      %157 = arith.addi %c28_i32, %156 : i32
      %158 = arith.index_cast %157 : i32 to index
      %c0_173 = arith.constant 0 : index
      %159 = vector.load %arg16[%158, %c0_173] : memref<504x16xf32, #tpu.memory_space<vmem>>, vector<20x16xf32>
      tpu.vector_store %arg16[%158, %c0_173], %155 {strides = array<i32>} : memref<504x16xf32, #tpu.memory_space<vmem>>, vector<20x16xf32>,
    }
    %c20_i32_64 = arith.constant 20 : i32
    %c0_65 = arith.constant 0 : index
    %c0_66 = arith.constant 0 : index
    %c0_67 = arith.constant 0 : index
    %48 = vector.load %arg8[%c0_65, %c0_66, %c0_67] : memref<9x16x16xf32, #tpu.memory_space<vmem>>, vector<1x16x16xf32>
    %49 = vector.shape_cast %48 : vector<1x16x16xf32> to vector<16x16xf32>
    %c1_68 = arith.constant 1 : index
    %c0_69 = arith.constant 0 : index
    %c0_70 = arith.constant 0 : index
    %50 = vector.load %arg8[%c1_68, %c0_69, %c0_70] : memref<9x16x16xf32, #tpu.memory_space<vmem>>, vector<1x16x16xf32>
    %51 = vector.shape_cast %50 : vector<1x16x16xf32> to vector<16x16xf32>
    %c2_71 = arith.constant 2 : index
    %c0_72 = arith.constant 0 : index
    %c0_73 = arith.constant 0 : index
    %52 = vector.load %arg8[%c2_71, %c0_72, %c0_73] : memref<9x16x16xf32, #tpu.memory_space<vmem>>, vector<1x16x16xf32>
    %53 = vector.shape_cast %52 : vector<1x16x16xf32> to vector<16x16xf32>
    %c3_74 = arith.constant 3 : index
    %c0_75 = arith.constant 0 : index
    %c0_76 = arith.constant 0 : index
    %54 = vector.load %arg8[%c3_74, %c0_75, %c0_76] : memref<9x16x16xf32, #tpu.memory_space<vmem>>, vector<1x16x16xf32>
    %55 = vector.shape_cast %54 : vector<1x16x16xf32> to vector<16x16xf32>
    %c4_77 = arith.constant 4 : index
    %c0_78 = arith.constant 0 : index
    %c0_79 = arith.constant 0 : index
    %56 = vector.load %arg8[%c4_77, %c0_78, %c0_79] : memref<9x16x16xf32, #tpu.memory_space<vmem>>, vector<1x16x16xf32>
    %57 = vector.shape_cast %56 : vector<1x16x16xf32> to vector<16x16xf32>
    %c5_80 = arith.constant 5 : index
    %c0_81 = arith.constant 0 : index
    %c0_82 = arith.constant 0 : index
    %58 = vector.load %arg8[%c5_80, %c0_81, %c0_82] : memref<9x16x16xf32, #tpu.memory_space<vmem>>, vector<1x16x16xf32>
    %59 = vector.shape_cast %58 : vector<1x16x16xf32> to vector<16x16xf32>
    %c6_83 = arith.constant 6 : index
    %c0_84 = arith.constant 0 : index
    %c0_85 = arith.constant 0 : index
    %60 = vector.load %arg8[%c6_83, %c0_84, %c0_85] : memref<9x16x16xf32, #tpu.memory_space<vmem>>, vector<1x16x16xf32>
    %61 = vector.shape_cast %60 : vector<1x16x16xf32> to vector<16x16xf32>
    %c7_86 = arith.constant 7 : index
    %c0_87 = arith.constant 0 : index
    %c0_88 = arith.constant 0 : index
    %62 = vector.load %arg8[%c7_86, %c0_87, %c0_88] : memref<9x16x16xf32, #tpu.memory_space<vmem>>, vector<1x16x16xf32>
    %63 = vector.shape_cast %62 : vector<1x16x16xf32> to vector<16x16xf32>
    %c8_89 = arith.constant 8 : index
    %c0_90 = arith.constant 0 : index
    %c0_91 = arith.constant 0 : index
    %64 = vector.load %arg8[%c8_89, %c0_90, %c0_91] : memref<9x16x16xf32, #tpu.memory_space<vmem>>, vector<1x16x16xf32>
    %65 = vector.shape_cast %64 : vector<1x16x16xf32> to vector<16x16xf32>
    %c0_92 = arith.constant 0 : index
    %c0_93 = arith.constant 0 : index
    %66 = vector.load %arg9[%c0_92, %c0_93] : memref<1x16xf32, #tpu.memory_space<vmem>>, vector<1x16xf32>
    %c0_94 = arith.constant 0 : index
    %c0_95 = arith.constant 0 : index
    %67 = vector.load %arg10[%c0_94, %c0_95] : memref<1x16xf32, #tpu.memory_space<vmem>>, vector<1x16xf32>
    %c0_i32_96 = arith.constant 0 : i32
    %c10_i32 = arith.constant 10 : i32
    %68 = arith.addi %c0_i32_96, %c10_i32 : i32
    %c1_i32_97 = arith.constant 1 : i32
    scf.for %arg21 = %c0_i32_96 to %68 step %c1_i32_97  : i32 {
      %c1_i32_140 = arith.constant 1 : i32
      %94 = arith.muli %arg21, %c1_i32_140 : i32
      %c0_i32_141 = arith.constant 0 : i32
      %95 = arith.addi %c0_i32_141, %94 : i32
      %c2_i32 = arith.constant 2 : i32
      %96 = arith.muli %c2_i32, %95 : i32
      %c22_i32 = arith.constant 22 : i32
      %97 = arith.muli %96, %c22_i32 : i32
      %c5_i32_142 = arith.constant 5 : i32
      %98 = arith.addi %c5_i32_142, %97 : i32
      %99 = arith.index_cast %98 : i32 to index
      %c0_143 = arith.constant 0 : index
      %100 = vector.load %arg16[%99, %c0_143] : memref<504x16xf32, #tpu.memory_space<vmem>>, vector<44x16xf32>
      %cst_144 = arith.constant dense<0.000000e+00> : vector<44x16xf32>
      %101 = tpu.matmul %100, %49, %cst_144 {dimension_numbers = #tpu.dot_dimension_numbers<[1], [0], [0], [1], [0, 0, 1, 1], [], []>} : vector<44x16xf32>, vector<16x16xf32>, vector<44x16xf32> -> vector<44x16xf32>
      %c6_i32 = arith.constant 6 : i32
      %102 = arith.addi %c6_i32, %97 : i32
      %103 = arith.index_cast %102 : i32 to index
      %c0_145 = arith.constant 0 : index
      %104 = vector.load %arg16[%103, %c0_145] : memref<504x16xf32, #tpu.memory_space<vmem>>, vector<44x16xf32>
      %cst_146 = arith.constant dense<0.000000e+00> : vector<44x16xf32>
      %105 = tpu.matmul %104, %51, %cst_146 {dimension_numbers = #tpu.dot_dimension_numbers<[1], [0], [0], [1], [0, 0, 1, 1], [], []>} : vector<44x16xf32>, vector<16x16xf32>, vector<44x16xf32> -> vector<44x16xf32>
      %106 = arith.addf %101, %105 : vector<44x16xf32>
      %c7_i32 = arith.constant 7 : i32
      %107 = arith.addi %c7_i32, %97 : i32
      %108 = arith.index_cast %107 : i32 to index
      %c0_147 = arith.constant 0 : index
      %109 = vector.load %arg16[%108, %c0_147] : memref<504x16xf32, #tpu.memory_space<vmem>>, vector<44x16xf32>
      %cst_148 = arith.constant dense<0.000000e+00> : vector<44x16xf32>
      %110 = tpu.matmul %109, %53, %cst_148 {dimension_numbers = #tpu.dot_dimension_numbers<[1], [0], [0], [1], [0, 0, 1, 1], [], []>} : vector<44x16xf32>, vector<16x16xf32>, vector<44x16xf32> -> vector<44x16xf32>
      %111 = arith.addf %106, %110 : vector<44x16xf32>
      %c27_i32 = arith.constant 27 : i32
      %112 = arith.addi %c27_i32, %97 : i32
      %113 = arith.index_cast %112 : i32 to index
      %c0_149 = arith.constant 0 : index
      %114 = vector.load %arg16[%113, %c0_149] : memref<504x16xf32, #tpu.memory_space<vmem>>, vector<44x16xf32>
      %cst_150 = arith.constant dense<0.000000e+00> : vector<44x16xf32>
      %115 = tpu.matmul %114, %55, %cst_150 {dimension_numbers = #tpu.dot_dimension_numbers<[1], [0], [0], [1], [0, 0, 1, 1], [], []>} : vector<44x16xf32>, vector<16x16xf32>, vector<44x16xf32> -> vector<44x16xf32>
      %116 = arith.addf %111, %115 : vector<44x16xf32>
      %c28_i32 = arith.constant 28 : i32
      %117 = arith.addi %c28_i32, %97 : i32
      %118 = arith.index_cast %117 : i32 to index
      %c0_151 = arith.constant 0 : index
      %119 = vector.load %arg16[%118, %c0_151] : memref<504x16xf32, #tpu.memory_space<vmem>>, vector<44x16xf32>
      %cst_152 = arith.constant dense<0.000000e+00> : vector<44x16xf32>
      %120 = tpu.matmul %119, %57, %cst_152 {dimension_numbers = #tpu.dot_dimension_numbers<[1], [0], [0], [1], [0, 0, 1, 1], [], []>} : vector<44x16xf32>, vector<16x16xf32>, vector<44x16xf32> -> vector<44x16xf32>
      %121 = arith.addf %116, %120 : vector<44x16xf32>
      %c29_i32 = arith.constant 29 : i32
      %122 = arith.addi %c29_i32, %97 : i32
      %123 = arith.index_cast %122 : i32 to index
      %c0_153 = arith.constant 0 : index
      %124 = vector.load %arg16[%123, %c0_153] : memref<504x16xf32, #tpu.memory_space<vmem>>, vector<44x16xf32>
      %cst_154 = arith.constant dense<0.000000e+00> : vector<44x16xf32>
      %125 = tpu.matmul %124, %59, %cst_154 {dimension_numbers = #tpu.dot_dimension_numbers<[1], [0], [0], [1], [0, 0, 1, 1], [], []>} : vector<44x16xf32>, vector<16x16xf32>, vector<44x16xf32> -> vector<44x16xf32>
      %126 = arith.addf %121, %125 : vector<44x16xf32>
      %c49_i32 = arith.constant 49 : i32
      %127 = arith.addi %c49_i32, %97 : i32
      %128 = arith.index_cast %127 : i32 to index
      %c0_155 = arith.constant 0 : index
      %129 = vector.load %arg16[%128, %c0_155] : memref<504x16xf32, #tpu.memory_space<vmem>>, vector<44x16xf32>
      %cst_156 = arith.constant dense<0.000000e+00> : vector<44x16xf32>
      %130 = tpu.matmul %129, %61, %cst_156 {dimension_numbers = #tpu.dot_dimension_numbers<[1], [0], [0], [1], [0, 0, 1, 1], [], []>} : vector<44x16xf32>, vector<16x16xf32>, vector<44x16xf32> -> vector<44x16xf32>
      %131 = arith.addf %126, %130 : vector<44x16xf32>
      %c50_i32 = arith.constant 50 : i32
      %132 = arith.addi %c50_i32, %97 : i32
      %133 = arith.index_cast %132 : i32 to index
      %c0_157 = arith.constant 0 : index
      %134 = vector.load %arg16[%133, %c0_157] : memref<504x16xf32, #tpu.memory_space<vmem>>, vector<44x16xf32>
      %cst_158 = arith.constant dense<0.000000e+00> : vector<44x16xf32>
      %135 = tpu.matmul %134, %63, %cst_158 {dimension_numbers = #tpu.dot_dimension_numbers<[1], [0], [0], [1], [0, 0, 1, 1], [], []>} : vector<44x16xf32>, vector<16x16xf32>, vector<44x16xf32> -> vector<44x16xf32>
      %136 = arith.addf %131, %135 : vector<44x16xf32>
      %c51_i32 = arith.constant 51 : i32
      %137 = arith.addi %c51_i32, %97 : i32
      %138 = arith.index_cast %137 : i32 to index
      %c0_159 = arith.constant 0 : index
      %139 = vector.load %arg16[%138, %c0_159] : memref<504x16xf32, #tpu.memory_space<vmem>>, vector<44x16xf32>
      %cst_160 = arith.constant dense<0.000000e+00> : vector<44x16xf32>
      %140 = tpu.matmul %139, %65, %cst_160 {dimension_numbers = #tpu.dot_dimension_numbers<[1], [0], [0], [1], [0, 0, 1, 1], [], []>} : vector<44x16xf32>, vector<16x16xf32>, vector<44x16xf32> -> vector<44x16xf32>
      %141 = arith.addf %136, %140 : vector<44x16xf32>
      %142 = vector.broadcast %66 : vector<1x16xf32> to vector<44x16xf32>
      %143 = arith.mulf %141, %142 : vector<44x16xf32>
      %144 = vector.broadcast %67 : vector<1x16xf32> to vector<44x16xf32>
      %145 = arith.addf %143, %144 : vector<44x16xf32>
      %cst_161 = arith.constant 0.000000e+00 : f32
      %146 = vector.broadcast %cst_161 : f32 to vector<44x16xf32>
      %147 = arith.maximumf %145, %146 : vector<44x16xf32>
      %c0_162 = arith.constant 0 : index
      %c0_163 = arith.constant 0 : index
      %148 = vector.load %arg18[%c0_162, %c0_163] : memref<164x16xf32, #tpu.memory_space<vmem>>, vector<44x16xf32>
      tpu.vector_store %arg18[%c0_162, %c0_163], %147 {strides = array<i32>} : memref<164x16xf32, #tpu.memory_space<vmem>>, vector<44x16xf32>,
      %c0_164 = arith.constant 0 : index
      %c0_165 = arith.constant 0 : index
      %149 = vector.load %arg18[%c0_164, %c0_165] : memref<164x16xf32, #tpu.memory_space<vmem>>, vector<20x16xf32>
      %c22 = arith.constant 22 : index
      %c0_166 = arith.constant 0 : index
      %150 = vector.load %arg18[%c22, %c0_166] : memref<164x16xf32, #tpu.memory_space<vmem>>, vector<20x16xf32>
      %151 = arith.maximumf %149, %150 : vector<20x16xf32>
      %c0_167 = arith.constant 0 : index
      %c0_168 = arith.constant 0 : index
      %152 = vector.load %arg19[%c0_167, %c0_168] : memref<80x16xf32, #tpu.memory_space<vmem>>, vector<20x16xf32>
      tpu.vector_store %arg19[%c0_167, %c0_168], %151 {strides = array<i32>} : memref<80x16xf32, #tpu.memory_space<vmem>>, vector<20x16xf32>,
      %c0_169 = arith.constant 0 : index
      %c0_170 = arith.constant 0 : index
      %153 = tpu.strided_load %arg19[%c0_169, %c0_170] {strides = array<i32: 2, 1>} : memref<80x16xf32, #tpu.memory_space<vmem>>, vector<10x16xf32>
      %c1_171 = arith.constant 1 : index
      %c0_172 = arith.constant 0 : index
      %154 = tpu.strided_load %arg19[%c1_171, %c0_172] {strides = array<i32: 2, 1>} : memref<80x16xf32, #tpu.memory_space<vmem>>, vector<10x16xf32>
      %155 = arith.maximumf %153, %154 : vector<10x16xf32>
      %c12_i32 = arith.constant 12 : i32
      %156 = arith.muli %95, %c12_i32 : i32
      %c18_i32 = arith.constant 18 : i32
      %157 = arith.addi %c18_i32, %156 : i32
      %158 = arith.index_cast %157 : i32 to index
      %c0_173 = arith.constant 0 : index
      %159 = vector.load %arg17[%158, %c0_173] : memref<160x16xf32, #tpu.memory_space<vmem>>, vector<10x16xf32>
      tpu.vector_store %arg17[%158, %c0_173], %155 {strides = array<i32>} : memref<160x16xf32, #tpu.memory_space<vmem>>, vector<10x16xf32>,
    }
    %c10_i32_98 = arith.constant 10 : i32
    %c0_99 = arith.constant 0 : index
    %c0_100 = arith.constant 0 : index
    %c0_101 = arith.constant 0 : index
    %69 = vector.load %arg11[%c0_99, %c0_100, %c0_101] : memref<9x16x16xf32, #tpu.memory_space<vmem>>, vector<1x16x16xf32>
    %70 = vector.shape_cast %69 : vector<1x16x16xf32> to vector<16x16xf32>
    %c1_102 = arith.constant 1 : index
    %c0_103 = arith.constant 0 : index
    %c0_104 = arith.constant 0 : index
    %71 = vector.load %arg11[%c1_102, %c0_103, %c0_104] : memref<9x16x16xf32, #tpu.memory_space<vmem>>, vector<1x16x16xf32>
    %72 = vector.shape_cast %71 : vector<1x16x16xf32> to vector<16x16xf32>
    %c2_105 = arith.constant 2 : index
    %c0_106 = arith.constant 0 : index
    %c0_107 = arith.constant 0 : index
    %73 = vector.load %arg11[%c2_105, %c0_106, %c0_107] : memref<9x16x16xf32, #tpu.memory_space<vmem>>, vector<1x16x16xf32>
    %74 = vector.shape_cast %73 : vector<1x16x16xf32> to vector<16x16xf32>
    %c3_108 = arith.constant 3 : index
    %c0_109 = arith.constant 0 : index
    %c0_110 = arith.constant 0 : index
    %75 = vector.load %arg11[%c3_108, %c0_109, %c0_110] : memref<9x16x16xf32, #tpu.memory_space<vmem>>, vector<1x16x16xf32>
    %76 = vector.shape_cast %75 : vector<1x16x16xf32> to vector<16x16xf32>
    %c4_111 = arith.constant 4 : index
    %c0_112 = arith.constant 0 : index
    %c0_113 = arith.constant 0 : index
    %77 = vector.load %arg11[%c4_111, %c0_112, %c0_113] : memref<9x16x16xf32, #tpu.memory_space<vmem>>, vector<1x16x16xf32>
    %78 = vector.shape_cast %77 : vector<1x16x16xf32> to vector<16x16xf32>
    %c5_114 = arith.constant 5 : index
    %c0_115 = arith.constant 0 : index
    %c0_116 = arith.constant 0 : index
    %79 = vector.load %arg11[%c5_114, %c0_115, %c0_116] : memref<9x16x16xf32, #tpu.memory_space<vmem>>, vector<1x16x16xf32>
    %80 = vector.shape_cast %79 : vector<1x16x16xf32> to vector<16x16xf32>
    %c6_117 = arith.constant 6 : index
    %c0_118 = arith.constant 0 : index
    %c0_119 = arith.constant 0 : index
    %81 = vector.load %arg11[%c6_117, %c0_118, %c0_119] : memref<9x16x16xf32, #tpu.memory_space<vmem>>, vector<1x16x16xf32>
    %82 = vector.shape_cast %81 : vector<1x16x16xf32> to vector<16x16xf32>
    %c7_120 = arith.constant 7 : index
    %c0_121 = arith.constant 0 : index
    %c0_122 = arith.constant 0 : index
    %83 = vector.load %arg11[%c7_120, %c0_121, %c0_122] : memref<9x16x16xf32, #tpu.memory_space<vmem>>, vector<1x16x16xf32>
    %84 = vector.shape_cast %83 : vector<1x16x16xf32> to vector<16x16xf32>
    %c8_123 = arith.constant 8 : index
    %c0_124 = arith.constant 0 : index
    %c0_125 = arith.constant 0 : index
    %85 = vector.load %arg11[%c8_123, %c0_124, %c0_125] : memref<9x16x16xf32, #tpu.memory_space<vmem>>, vector<1x16x16xf32>
    %86 = vector.shape_cast %85 : vector<1x16x16xf32> to vector<16x16xf32>
    %c0_126 = arith.constant 0 : index
    %c0_127 = arith.constant 0 : index
    %87 = vector.load %arg12[%c0_126, %c0_127] : memref<1x16xf32, #tpu.memory_space<vmem>>, vector<1x16xf32>
    %c0_128 = arith.constant 0 : index
    %c0_129 = arith.constant 0 : index
    %88 = vector.load %arg13[%c0_128, %c0_129] : memref<1x16xf32, #tpu.memory_space<vmem>>, vector<1x16xf32>
    %c0_i32_130 = arith.constant 0 : i32
    %c5_i32 = arith.constant 5 : i32
    %89 = arith.addi %c0_i32_130, %c5_i32 : i32
    %c1_i32_131 = arith.constant 1 : i32
    scf.for %arg21 = %c0_i32_130 to %89 step %c1_i32_131  : i32 {
      %c1_i32_140 = arith.constant 1 : i32
      %94 = arith.muli %arg21, %c1_i32_140 : i32
      %c0_i32_141 = arith.constant 0 : i32
      %95 = arith.addi %c0_i32_141, %94 : i32
      %c2_i32 = arith.constant 2 : i32
      %96 = arith.muli %c2_i32, %95 : i32
      %c12_i32 = arith.constant 12 : i32
      %97 = arith.muli %96, %c12_i32 : i32
      %c5_i32_142 = arith.constant 5 : i32
      %98 = arith.addi %c5_i32_142, %97 : i32
      %99 = arith.index_cast %98 : i32 to index
      %c0_143 = arith.constant 0 : index
      %100 = vector.load %arg17[%99, %c0_143] : memref<160x16xf32, #tpu.memory_space<vmem>>, vector<24x16xf32>
      %cst_144 = arith.constant dense<0.000000e+00> : vector<24x16xf32>
      %101 = tpu.matmul %100, %70, %cst_144 {dimension_numbers = #tpu.dot_dimension_numbers<[1], [0], [0], [1], [0, 0, 1, 1], [], []>} : vector<24x16xf32>, vector<16x16xf32>, vector<24x16xf32> -> vector<24x16xf32>
      %c6_i32 = arith.constant 6 : i32
      %102 = arith.addi %c6_i32, %97 : i32
      %103 = arith.index_cast %102 : i32 to index
      %c0_145 = arith.constant 0 : index
      %104 = vector.load %arg17[%103, %c0_145] : memref<160x16xf32, #tpu.memory_space<vmem>>, vector<24x16xf32>
      %cst_146 = arith.constant dense<0.000000e+00> : vector<24x16xf32>
      %105 = tpu.matmul %104, %72, %cst_146 {dimension_numbers = #tpu.dot_dimension_numbers<[1], [0], [0], [1], [0, 0, 1, 1], [], []>} : vector<24x16xf32>, vector<16x16xf32>, vector<24x16xf32> -> vector<24x16xf32>
      %106 = arith.addf %101, %105 : vector<24x16xf32>
      %c7_i32 = arith.constant 7 : i32
      %107 = arith.addi %c7_i32, %97 : i32
      %108 = arith.index_cast %107 : i32 to index
      %c0_147 = arith.constant 0 : index
      %109 = vector.load %arg17[%108, %c0_147] : memref<160x16xf32, #tpu.memory_space<vmem>>, vector<24x16xf32>
      %cst_148 = arith.constant dense<0.000000e+00> : vector<24x16xf32>
      %110 = tpu.matmul %109, %74, %cst_148 {dimension_numbers = #tpu.dot_dimension_numbers<[1], [0], [0], [1], [0, 0, 1, 1], [], []>} : vector<24x16xf32>, vector<16x16xf32>, vector<24x16xf32> -> vector<24x16xf32>
      %111 = arith.addf %106, %110 : vector<24x16xf32>
      %c17_i32 = arith.constant 17 : i32
      %112 = arith.addi %c17_i32, %97 : i32
      %113 = arith.index_cast %112 : i32 to index
      %c0_149 = arith.constant 0 : index
      %114 = vector.load %arg17[%113, %c0_149] : memref<160x16xf32, #tpu.memory_space<vmem>>, vector<24x16xf32>
      %cst_150 = arith.constant dense<0.000000e+00> : vector<24x16xf32>
      %115 = tpu.matmul %114, %76, %cst_150 {dimension_numbers = #tpu.dot_dimension_numbers<[1], [0], [0], [1], [0, 0, 1, 1], [], []>} : vector<24x16xf32>, vector<16x16xf32>, vector<24x16xf32> -> vector<24x16xf32>
      %116 = arith.addf %111, %115 : vector<24x16xf32>
      %c18_i32 = arith.constant 18 : i32
      %117 = arith.addi %c18_i32, %97 : i32
      %118 = arith.index_cast %117 : i32 to index
      %c0_151 = arith.constant 0 : index
      %119 = vector.load %arg17[%118, %c0_151] : memref<160x16xf32, #tpu.memory_space<vmem>>, vector<24x16xf32>
      %cst_152 = arith.constant dense<0.000000e+00> : vector<24x16xf32>
      %120 = tpu.matmul %119, %78, %cst_152 {dimension_numbers = #tpu.dot_dimension_numbers<[1], [0], [0], [1], [0, 0, 1, 1], [], []>} : vector<24x16xf32>, vector<16x16xf32>, vector<24x16xf32> -> vector<24x16xf32>
      %121 = arith.addf %116, %120 : vector<24x16xf32>
      %c19_i32 = arith.constant 19 : i32
      %122 = arith.addi %c19_i32, %97 : i32
      %123 = arith.index_cast %122 : i32 to index
      %c0_153 = arith.constant 0 : index
      %124 = vector.load %arg17[%123, %c0_153] : memref<160x16xf32, #tpu.memory_space<vmem>>, vector<24x16xf32>
      %cst_154 = arith.constant dense<0.000000e+00> : vector<24x16xf32>
      %125 = tpu.matmul %124, %80, %cst_154 {dimension_numbers = #tpu.dot_dimension_numbers<[1], [0], [0], [1], [0, 0, 1, 1], [], []>} : vector<24x16xf32>, vector<16x16xf32>, vector<24x16xf32> -> vector<24x16xf32>
      %126 = arith.addf %121, %125 : vector<24x16xf32>
      %c29_i32 = arith.constant 29 : i32
      %127 = arith.addi %c29_i32, %97 : i32
      %128 = arith.index_cast %127 : i32 to index
      %c0_155 = arith.constant 0 : index
      %129 = vector.load %arg17[%128, %c0_155] : memref<160x16xf32, #tpu.memory_space<vmem>>, vector<24x16xf32>
      %cst_156 = arith.constant dense<0.000000e+00> : vector<24x16xf32>
      %130 = tpu.matmul %129, %82, %cst_156 {dimension_numbers = #tpu.dot_dimension_numbers<[1], [0], [0], [1], [0, 0, 1, 1], [], []>} : vector<24x16xf32>, vector<16x16xf32>, vector<24x16xf32> -> vector<24x16xf32>
      %131 = arith.addf %126, %130 : vector<24x16xf32>
      %c30_i32 = arith.constant 30 : i32
      %132 = arith.addi %c30_i32, %97 : i32
      %133 = arith.index_cast %132 : i32 to index
      %c0_157 = arith.constant 0 : index
      %134 = vector.load %arg17[%133, %c0_157] : memref<160x16xf32, #tpu.memory_space<vmem>>, vector<24x16xf32>
      %cst_158 = arith.constant dense<0.000000e+00> : vector<24x16xf32>
      %135 = tpu.matmul %134, %84, %cst_158 {dimension_numbers = #tpu.dot_dimension_numbers<[1], [0], [0], [1], [0, 0, 1, 1], [], []>} : vector<24x16xf32>, vector<16x16xf32>, vector<24x16xf32> -> vector<24x16xf32>
      %136 = arith.addf %131, %135 : vector<24x16xf32>
      %c31_i32 = arith.constant 31 : i32
      %137 = arith.addi %c31_i32, %97 : i32
      %138 = arith.index_cast %137 : i32 to index
      %c0_159 = arith.constant 0 : index
      %139 = vector.load %arg17[%138, %c0_159] : memref<160x16xf32, #tpu.memory_space<vmem>>, vector<24x16xf32>
      %cst_160 = arith.constant dense<0.000000e+00> : vector<24x16xf32>
      %140 = tpu.matmul %139, %86, %cst_160 {dimension_numbers = #tpu.dot_dimension_numbers<[1], [0], [0], [1], [0, 0, 1, 1], [], []>} : vector<24x16xf32>, vector<16x16xf32>, vector<24x16xf32> -> vector<24x16xf32>
      %141 = arith.addf %136, %140 : vector<24x16xf32>
      %142 = vector.broadcast %87 : vector<1x16xf32> to vector<24x16xf32>
      %143 = arith.mulf %141, %142 : vector<24x16xf32>
      %144 = vector.broadcast %88 : vector<1x16xf32> to vector<24x16xf32>
      %145 = arith.addf %143, %144 : vector<24x16xf32>
      %cst_161 = arith.constant 0.000000e+00 : f32
      %146 = vector.broadcast %cst_161 : f32 to vector<24x16xf32>
      %147 = arith.maximumf %145, %146 : vector<24x16xf32>
      %c0_162 = arith.constant 0 : index
      %c0_163 = arith.constant 0 : index
      %148 = vector.load %arg18[%c0_162, %c0_163] : memref<164x16xf32, #tpu.memory_space<vmem>>, vector<24x16xf32>
      tpu.vector_store %arg18[%c0_162, %c0_163], %147 {strides = array<i32>} : memref<164x16xf32, #tpu.memory_space<vmem>>, vector<24x16xf32>,
      %c0_164 = arith.constant 0 : index
      %c0_165 = arith.constant 0 : index
      %149 = vector.load %arg18[%c0_164, %c0_165] : memref<164x16xf32, #tpu.memory_space<vmem>>, vector<10x16xf32>
      %c12 = arith.constant 12 : index
      %c0_166 = arith.constant 0 : index
      %150 = vector.load %arg18[%c12, %c0_166] : memref<164x16xf32, #tpu.memory_space<vmem>>, vector<10x16xf32>
      %151 = arith.maximumf %149, %150 : vector<10x16xf32>
      %c0_167 = arith.constant 0 : index
      %c0_168 = arith.constant 0 : index
      %152 = vector.load %arg19[%c0_167, %c0_168] : memref<80x16xf32, #tpu.memory_space<vmem>>, vector<10x16xf32>
      tpu.vector_store %arg19[%c0_167, %c0_168], %151 {strides = array<i32>} : memref<80x16xf32, #tpu.memory_space<vmem>>, vector<10x16xf32>,
      %c0_169 = arith.constant 0 : index
      %c0_170 = arith.constant 0 : index
      %153 = tpu.strided_load %arg19[%c0_169, %c0_170] {strides = array<i32: 2, 1>} : memref<80x16xf32, #tpu.memory_space<vmem>>, vector<5x16xf32>
      %c1_171 = arith.constant 1 : index
      %c0_172 = arith.constant 0 : index
      %154 = tpu.strided_load %arg19[%c1_171, %c0_172] {strides = array<i32: 2, 1>} : memref<80x16xf32, #tpu.memory_space<vmem>>, vector<5x16xf32>
      %155 = arith.maximumf %153, %154 : vector<5x16xf32>
      %156 = arith.index_cast %95 : i32 to index
      %c0_173 = arith.constant 0 : index
      %c0_174 = arith.constant 0 : index
      %157 = vector.load %arg20[%156, %c0_173, %c0_174] : memref<5x5x16xf32, #tpu.memory_space<vmem>>, vector<1x5x16xf32>
      %158 = vector.shape_cast %157 : vector<1x5x16xf32> to vector<5x16xf32>
      %159 = vector.shape_cast %155 : vector<5x16xf32> to vector<1x5x16xf32>
      tpu.vector_store %arg20[%156, %c0_173, %c0_174], %159 {strides = array<i32>} : memref<5x5x16xf32, #tpu.memory_space<vmem>>, vector<1x5x16xf32>,
    }
    %c5_i32_132 = arith.constant 5 : i32
    %c0_133 = arith.constant 0 : index
    %c0_134 = arith.constant 0 : index
    %c0_135 = arith.constant 0 : index
    %90 = vector.load %arg20[%c0_133, %c0_134, %c0_135] : memref<5x5x16xf32, #tpu.memory_space<vmem>>, vector<5x5x16xf32>
    %c0_136 = arith.constant 0 : index
    %c0_137 = arith.constant 0 : index
    %c0_138 = arith.constant 0 : index
    %c0_139 = arith.constant 0 : index
    %91 = vector.load %arg14[%c0_136, %c0_137, %c0_138, %c0_139] : memref<1x5x5x16xf32, #tpu.memory_space<vmem>>, vector<1x5x5x16xf32>
    %92 = vector.shape_cast %91 : vector<1x5x5x16xf32> to vector<5x5x16xf32>
    %93 = vector.shape_cast %90 : vector<5x5x16xf32> to vector<1x5x5x16xf32>
    tpu.vector_store %arg14[%c0_136, %c0_137, %c0_138, %c0_139], %93 {strides = array<i32>} : memref<1x5x5x16xf32, #tpu.memory_space<vmem>>, vector<1x5x5x16xf32>,
    return
  }
  func.func @transform_0(%arg0: i32) -> (i32, i32, i32) {
    %c0_i32 = arith.constant 0 : i32
    %c0_i32_0 = arith.constant 0 : i32
    %c0_i32_1 = arith.constant 0 : i32
    return %arg0, %c0_i32, %c0_i32_0 : i32, i32, i32
  }
  func.func @transform_1(%arg0: i32) -> (i32, i32, i32) {
    %c0_i32 = arith.constant 0 : i32
    %c0_i32_0 = arith.constant 0 : i32
    %c0_i32_1 = arith.constant 0 : i32
    %c0_i32_2 = arith.constant 0 : i32
    return %c0_i32, %c0_i32_0, %c0_i32_1 : i32, i32, i32
  }
  func.func @transform_2(%arg0: i32) -> (i32, i32) {
    %c0_i32 = arith.constant 0 : i32
    %c0_i32_0 = arith.constant 0 : i32
    %c0_i32_1 = arith.constant 0 : i32
    return %c0_i32, %c0_i32_0 : i32, i32
  }
  func.func @transform_3(%arg0: i32) -> (i32, i32) {
    %c0_i32 = arith.constant 0 : i32
    %c0_i32_0 = arith.constant 0 : i32
    %c0_i32_1 = arith.constant 0 : i32
    return %c0_i32, %c0_i32_0 : i32, i32
  }
  func.func @transform_4(%arg0: i32) -> (i32, i32, i32) {
    %c0_i32 = arith.constant 0 : i32
    %c0_i32_0 = arith.constant 0 : i32
    %c0_i32_1 = arith.constant 0 : i32
    %c0_i32_2 = arith.constant 0 : i32
    return %c0_i32, %c0_i32_0, %c0_i32_1 : i32, i32, i32
  }
  func.func @transform_5(%arg0: i32) -> (i32, i32) {
    %c0_i32 = arith.constant 0 : i32
    %c0_i32_0 = arith.constant 0 : i32
    %c0_i32_1 = arith.constant 0 : i32
    return %c0_i32, %c0_i32_0 : i32, i32
  }
  func.func @transform_6(%arg0: i32) -> (i32, i32) {
    %c0_i32 = arith.constant 0 : i32
    %c0_i32_0 = arith.constant 0 : i32
    %c0_i32_1 = arith.constant 0 : i32
    return %c0_i32, %c0_i32_0 : i32, i32
  }
  func.func @transform_7(%arg0: i32) -> (i32, i32, i32) {
    %c0_i32 = arith.constant 0 : i32
    %c0_i32_0 = arith.constant 0 : i32
    %c0_i32_1 = arith.constant 0 : i32
    %c0_i32_2 = arith.constant 0 : i32
    return %c0_i32, %c0_i32_0, %c0_i32_1 : i32, i32, i32
  }
  func.func @transform_8(%arg0: i32) -> (i32, i32) {
    %c0_i32 = arith.constant 0 : i32
    %c0_i32_0 = arith.constant 0 : i32
    %c0_i32_1 = arith.constant 0 : i32
    return %c0_i32, %c0_i32_0 : i32, i32
  }
  func.func @transform_9(%arg0: i32) -> (i32, i32) {
    %c0_i32 = arith.constant 0 : i32
    %c0_i32_0 = arith.constant 0 : i32
    %c0_i32_1 = arith.constant 0 : i32
    return %c0_i32, %c0_i32_0 : i32, i32
  }
  func.func @transform_10(%arg0: i32) -> (i32, i32, i32) {
    %c0_i32 = arith.constant 0 : i32
    %c0_i32_0 = arith.constant 0 : i32
    %c0_i32_1 = arith.constant 0 : i32
    %c0_i32_2 = arith.constant 0 : i32
    return %c0_i32, %c0_i32_0, %c0_i32_1 : i32, i32, i32
  }
  func.func @transform_11(%arg0: i32) -> (i32, i32) {
    %c0_i32 = arith.constant 0 : i32
    %c0_i32_0 = arith.constant 0 : i32
    %c0_i32_1 = arith.constant 0 : i32
    return %c0_i32, %c0_i32_0 : i32, i32
  }
  func.func @transform_12(%arg0: i32) -> (i32, i32) {
    %c0_i32 = arith.constant 0 : i32
    %c0_i32_0 = arith.constant 0 : i32
    %c0_i32_1 = arith.constant 0 : i32
    return %c0_i32, %c0_i32_0 : i32, i32
  }
  func.func @transform_13(%arg0: i32) -> (i32, i32, i32, i32) {
    %c0_i32 = arith.constant 0 : i32
    %c0_i32_0 = arith.constant 0 : i32
    %c0_i32_1 = arith.constant 0 : i32
    %c0_i32_2 = arith.constant 0 : i32
    return %arg0, %c0_i32, %c0_i32_0, %c0_i32_1 : i32, i32, i32, i32
  }
}

</mosaic_0001>

<llo_original>
// kernel: convnet_forward.1
$region0: #{convnet_forward.1}
  #allocation0 [shape = 'u32[]', space=smem, size = 0x4, offset = 0x4, fixed_abs, tag = 'smem constant byte address 0x4 - core index']
  #allocation1 [shape = 'u32[144,128]{1,0:T(1,128)}', space=vmem, size = 0x12000, scoped, tag = 'internal scratch']
  #allocation2 [shape = 'f32[1784,16]{1,0:T(8,128)}', space=vmem, size = 0xdf000, scoped, tag = 'scratch operand']
  #allocation3 [shape = 'f32[504,16]{1,0:T(8,128)}', space=vmem, size = 0x3f000, scoped, tag = 'scratch operand']
  #allocation4 [shape = 'f32[160,16]{1,0:T(8,128)}', space=vmem, size = 0x14000, scoped, tag = 'scratch operand']
  #allocation5 [shape = 'f32[164,16]{1,0:T(8,128)}', space=vmem, size = 0x15000, scoped, tag = 'scratch operand']
  #allocation6 [shape = 'f32[80,16]{1,0:T(8,128)}', space=vmem, size = 0xa000, scoped, tag = 'scratch operand']
  #allocation7 [shape = 'f32[5,5,16]{2,1,0:T(8,128)}', space=vmem, size = 0x5000, scoped, tag = 'scratch operand']
  %s0 = inlined_call_operand.vmem [shape: f32[2,6744,3], index: 0, kind: input, shape index: {}]
  %s1 = inlined_call_operand.vmem [shape: f32[9,3,16], index: 1, kind: input, shape index: {}]
  %s2 = inlined_call_operand.vmem [shape: f32[1,16], index: 2, kind: input, shape index: {}]
  %s3 = inlined_call_operand.vmem [shape: f32[1,16], index: 3, kind: input, shape index: {}]
  %s4 = inlined_call_operand.vmem [shape: f32[9,16,16], index: 4, kind: input, shape index: {}]
  %s5 = inlined_call_operand.vmem [shape: f32[1,16], index: 5, kind: input, shape index: {}]
  %s6 = inlined_call_operand.vmem [shape: f32[1,16], index: 6, kind: input, shape index: {}]
  %s7 = inlined_call_operand.vmem [shape: f32[9,16,16], index: 7, kind: input, shape index: {}]
  %s8 = inlined_call_operand.vmem [shape: f32[1,16], index: 8, kind: input, shape index: {}]
  %s9 = inlined_call_operand.vmem [shape: f32[1,16], index: 9, kind: input, shape index: {}]
  %s10 = inlined_call_operand.vmem [shape: f32[9,16,16], index: 10, kind: input, shape index: {}]
  %s11 = inlined_call_operand.vmem [shape: f32[1,16], index: 11, kind: input, shape index: {}]
  %s12 = inlined_call_operand.vmem [shape: f32[1,16], index: 12, kind: input, shape index: {}]
  %s13 = inlined_call_operand.vmem [shape: f32[2,5,5,16], index: 13, kind: output, shape index: {}]
  %s14 = sld [smem:[#allocation0]]
  $region113: #{convnet_forward.1} parent=0
    _
  %s16 = ssub.s32 1, %s14
  %s17 = scalar_select 0, %s16, %s14
  loop: start=0, step=1, limit=4
  $region2: #{convnet_forward.1} parent=0 // loop_pre_header
    _
  $region3: #{convnet_forward.1} parent=0 // loop_header
    %s19 = sphi 0, %s23
    %p20 = scmp.ge.s32.totalorder %s19, 4
    %s29 = sphi 0, %s31
    %s32 = sphi 0, %s29
    %s33 = sphi 0, %s32
    %s49 = sphi 0, %s33
    %s53 = sphi 0, %s53
    %s55 = sphi 0, %s53
    %s56 = sphi 0, %s55
    %s70 = sphi 0, %s56
    %s74 = sphi 0, %s74
    %s76 = sphi 0, %s74
    %s77 = sphi 0, %s76
    %s91 = sphi 0, %s77
    %s95 = sphi 0, %s95
    %s97 = sphi 0, %s95
    %s98 = sphi 0, %s97
    %s112 = sphi 0, %s98
    %s116 = sphi 0, %s116
    %s118 = sphi 0, %s116
    %s119 = sphi 0, %s118
    %s133 = sphi 0, %s119
    %s137 = sphi 0, %s137
    %s139 = sphi 0, %s137
    %s140 = sphi 0, %s139
    %s154 = sphi 0, %s140
    %s158 = sphi 0, %s158
    %s160 = sphi 0, %s158
    %s161 = sphi 0, %s160
    %s175 = sphi 0, %s161
    %s179 = sphi 0, %s179
    %s181 = sphi 0, %s179
    %s182 = sphi 0, %s181
    %s196 = sphi 0, %s182
    %s200 = sphi 0, %s200
    %s202 = sphi 0, %s200
    %s203 = sphi 0, %s202
    %s217 = sphi 0, %s203
    %s221 = sphi 0, %s221
    %s223 = sphi 0, %s221
    %s224 = sphi 0, %s223
    %s238 = sphi 0, %s224
    %s242 = sphi 0, %s242
    %s244 = sphi 0, %s242
    %s245 = sphi 0, %s244
    %s259 = sphi 0, %s245
    %s263 = sphi 0, %s263
    %s265 = sphi 0, %s263
    %s266 = sphi 0, %s265
    %s280 = sphi 0, %s266
    %s284 = sphi 0, %s284
    %s286 = sphi 0, %s284
    %s287 = sphi 0, %s286
    %s301 = sphi 0, %s287
    %s307 = sphi 0, %s309
    %s310 = sphi 0, %s307
    %s311 = sphi 0, %s310
    %s327 = sphi 0, %s311
  $region4: #{convnet_forward.1} parent=0 // loop_header_branch
    %22 = sbr.rel (%p20) target = $region8
  $region5: #{convnet_forward.1} parent=0 // loop_body
    %s24 = ssub.s32 %s19, 1
    %s25 = ssub.s32 %s19, 2
    %s26 = sadd.s32 %s19, 1
    %s27 = ssub.s32 %s19, %s26
    %p28 = scmp.eq.s32.totalorder %s27, 0
    %s30 = sadd.s32 %s29, 1
    %s31 = scalar_select %p28, %s29, %s30
    %p34 = pneg %p28
    %p35 = scmp.eq.s32.totalorder %s19, 1
    %p36 = por %p34, %p35
    %p37 = scmp.ne.s32.totalorder %s29, %s32
    %p38 = scmp.eq.s32.totalorder %s19, 0
    %p39 = por %p37, %p38
    %p40 = scmp.ne.s32.totalorder %s29, %s32
    %p41 = scmp.eq.s32.totalorder %s24, 1
    %p42 = por %p40, %p41
    %p43 = scmp.ne.s32.totalorder %s32, %s33
    %p44 = scmp.eq.s32.totalorder %s24, 0
    %p45 = por %p43, %p44
    %p46 = scmp.ne.s32.totalorder %s32, %s33
    %p47 = scmp.eq.s32.totalorder %s25, 1
    %p48 = por %p46, %p47
    %p50 = scmp.ne.s32.totalorder %s33, %s49
    %p51 = scmp.eq.s32.totalorder %s25, 0
    %p52 = por %p50, %p51
    %s54 = sadd.s32 %s53, 1
    %p57 = scmp.eq.s32.totalorder %s19, 1
    %p58 = scmp.ne.s32.totalorder %s53, %s55
    %p59 = scmp.eq.s32.totalorder %s19, 0
    %p60 = por %p58, %p59
    %p61 = scmp.ne.s32.totalorder %s53, %s55
    %p62 = scmp.eq.s32.totalorder %s24, 1
    %p63 = por %p61, %p62
    %p64 = scmp.ne.s32.totalorder %s55, %s56
    %p65 = scmp.eq.s32.totalorder %s24, 0
    %p66 = por %p64, %p65
    %p67 = scmp.ne.s32.totalorder %s55, %s56
    %p68 = scmp.eq.s32.totalorder %s25, 1
    %p69 = por %p67, %p68
    %p71 = scmp.ne.s32.totalorder %s56, %s70
    %p72 = scmp.eq.s32.totalorder %s25, 0
    %p73 = por %p71, %p72
    %s75 = sadd.s32 %s74, 1
    %p78 = scmp.eq.s32.totalorder %s19, 1
    %p79 = scmp.ne.s32.totalorder %s74, %s76
    %p80 = scmp.eq.s32.totalorder %s19, 0
    %p81 = por %p79, %p80
    %p82 = scmp.ne.s32.totalorder %s74, %s76
    %p83 = scmp.eq.s32.totalorder %s24, 1
    %p84 = por %p82, %p83
    %p85 = scmp.ne.s32.totalorder %s76, %s77
    %p86 = scmp.eq.s32.totalorder %s24, 0
    %p87 = por %p85, %p86
    %p88 = scmp.ne.s32.totalorder %s76, %s77
    %p89 = scmp.eq.s32.totalorder %s25, 1
    %p90 = por %p88, %p89
    %p92 = scmp.ne.s32.totalorder %s77, %s91
    %p93 = scmp.eq.s32.totalorder %s25, 0
    %p94 = por %p92, %p93
    %s96 = sadd.s32 %s95, 1
    %p99 = scmp.eq.s32.totalorder %s19, 1
    %p100 = scmp.ne.s32.totalorder %s95, %s97
    %p101 = scmp.eq.s32.totalorder %s19, 0
    %p102 = por %p100, %p101
    %p103 = scmp.ne.s32.totalorder %s95, %s97
    %p104 = scmp.eq.s32.totalorder %s24, 1
    %p105 = por %p103, %p104
    %p106 = scmp.ne.s32.totalorder %s97, %s98
    %p107 = scmp.eq.s32.totalorder %s24, 0
    %p108 = por %p106, %p107
    %p109 = scmp.ne.s32.totalorder %s97, %s98
    %p110 = scmp.eq.s32.totalorder %s25, 1
    %p111 = por %p109, %p110
    %p113 = scmp.ne.s32.totalorder %s98, %s112
    %p114 = scmp.eq.s32.totalorder %s25, 0
    %p115 = por %p113, %p114
    %s117 = sadd.s32 %s116, 1
    %p120 = scmp.eq.s32.totalorder %s19, 1
    %p121 = scmp.ne.s32.totalorder %s116, %s118
    %p122 = scmp.eq.s32.totalorder %s19, 0
    %p123 = por %p121, %p122
    %p124 = scmp.ne.s32.totalorder %s116, %s118
    %p125 = scmp.eq.s32.totalorder %s24, 1
    %p126 = por %p124, %p125
    %p127 = scmp.ne.s32.totalorder %s118, %s119
    %p128 = scmp.eq.s32.totalorder %s24, 0
    %p129 = por %p127, %p128
    %p130 = scmp.ne.s32.totalorder %s118, %s119
    %p131 = scmp.eq.s32.totalorder %s25, 1
    %p132 = por %p130, %p131
    %p134 = scmp.ne.s32.totalorder %s119, %s133
    %p135 = scmp.eq.s32.totalorder %s25, 0
    %p136 = por %p134, %p135
    %s138 = sadd.s32 %s137, 1
    %p141 = scmp.eq.s32.totalorder %s19, 1
    %p142 = scmp.ne.s32.totalorder %s137, %s139
    %p143 = scmp.eq.s32.totalorder %s19, 0
    %p144 = por %p142, %p143
    %p145 = scmp.ne.s32.totalorder %s137, %s139
    %p146 = scmp.eq.s32.totalorder %s24, 1
    %p147 = por %p145, %p146
    %p148 = scmp.ne.s32.totalorder %s139, %s140
    %p149 = scmp.eq.s32.totalorder %s24, 0
    %p150 = por %p148, %p149
    %p151 = scmp.ne.s32.totalorder %s139, %s140
    %p152 = scmp.eq.s32.totalorder %s25, 1
    %p153 = por %p151, %p152
    %p155 = scmp.ne.s32.totalorder %s140, %s154
    %p156 = scmp.eq.s32.totalorder %s25, 0
    %p157 = por %p155, %p156
    %s159 = sadd.s32 %s158, 1
    %p162 = scmp.eq.s32.totalorder %s19, 1
    %p163 = scmp.ne.s32.totalorder %s158, %s160
    %p164 = scmp.eq.s32.totalorder %s19, 0
    %p165 = por %p163, %p164
    %p166 = scmp.ne.s32.totalorder %s158, %s160
    %p167 = scmp.eq.s32.totalorder %s24, 1
    %p168 = por %p166, %p167
    %p169 = scmp.ne.s32.totalorder %s160, %s161
    %p170 = scmp.eq.s32.totalorder %s24, 0
    %p171 = por %p169, %p170
    %p172 = scmp.ne.s32.totalorder %s160, %s161
    %p173 = scmp.eq.s32.totalorder %s25, 1
    %p174 = por %p172, %p173
    %p176 = scmp.ne.s32.totalorder %s161, %s175
    %p177 = scmp.eq.s32.totalorder %s25, 0
    %p178 = por %p176, %p177
    %s180 = sadd.s32 %s179, 1
    %p183 = scmp.eq.s32.totalorder %s19, 1
    %p184 = scmp.ne.s32.totalorder %s179, %s181
    %p185 = scmp.eq.s32.totalorder %s19, 0
    %p186 = por %p184, %p185
    %p187 = scmp.ne.s32.totalorder %s179, %s181
    %p188 = scmp.eq.s32.totalorder %s24, 1
    %p189 = por %p187, %p188
    %p190 = scmp.ne.s32.totalorder %s181, %s182
    %p191 = scmp.eq.s32.totalorder %s24, 0
    %p192 = por %p190, %p191
    %p193 = scmp.ne.s32.totalorder %s181, %s182
    %p194 = scmp.eq.s32.totalorder %s25, 1
    %p195 = por %p193, %p194
    %p197 = scmp.ne.s32.totalorder %s182, %s196
    %p198 = scmp.eq.s32.totalorder %s25, 0
    %p199 = por %p197, %p198
    %s201 = sadd.s32 %s200, 1
    %p204 = scmp.eq.s32.totalorder %s19, 1
    %p205 = scmp.ne.s32.totalorder %s200, %s202
    %p206 = scmp.eq.s32.totalorder %s19, 0
    %p207 = por %p205, %p206
    %p208 = scmp.ne.s32.totalorder %s200, %s202
    %p209 = scmp.eq.s32.totalorder %s24, 1
    %p210 = por %p208, %p209
    %p211 = scmp.ne.s32.totalorder %s202, %s203
    %p212 = scmp.eq.s32.totalorder %s24, 0
    %p213 = por %p211, %p212
    %p214 = scmp.ne.s32.totalorder %s202, %s203
    %p215 = scmp.eq.s32.totalorder %s25, 1
    %p216 = por %p214, %p215
    %p218 = scmp.ne.s32.totalorder %s203, %s217
    %p219 = scmp.eq.s32.totalorder %s25, 0
    %p220 = por %p218, %p219
    %s222 = sadd.s32 %s221, 1
    %p225 = scmp.eq.s32.totalorder %s19, 1
    %p226 = scmp.ne.s32.totalorder %s221, %s223
    %p227 = scmp.eq.s32.totalorder %s19, 0
    %p228 = por %p226, %p227
    %p229 = scmp.ne.s32.totalorder %s221, %s223
    %p230 = scmp.eq.s32.totalorder %s24, 1
    %p231 = por %p229, %p230
    %p232 = scmp.ne.s32.totalorder %s223, %s224
    %p233 = scmp.eq.s32.totalorder %s24, 0
    %p234 = por %p232, %p233
    %p235 = scmp.ne.s32.totalorder %s223, %s224
    %p236 = scmp.eq.s32.totalorder %s25, 1
    %p237 = por %p235, %p236
    %p239 = scmp.ne.s32.totalorder %s224, %s238
    %p240 = scmp.eq.s32.totalorder %s25, 0
    %p241 = por %p239, %p240
    %s243 = sadd.s32 %s242, 1
    %p246 = scmp.eq.s32.totalorder %s19, 1
    %p247 = scmp.ne.s32.totalorder %s242, %s244
    %p248 = scmp.eq.s32.totalorder %s19, 0
    %p249 = por %p247, %p248
    %p250 = scmp.ne.s32.totalorder %s242, %s244
    %p251 = scmp.eq.s32.totalorder %s24, 1
    %p252 = por %p250, %p251
    %p253 = scmp.ne.s32.totalorder %s244, %s245
    %p254 = scmp.eq.s32.totalorder %s24, 0
    %p255 = por %p253, %p254
    %p256 = scmp.ne.s32.totalorder %s244, %s245
    %p257 = scmp.eq.s32.totalorder %s25, 1
    %p258 = por %p256, %p257
    %p260 = scmp.ne.s32.totalorder %s245, %s259
    %p261 = scmp.eq.s32.totalorder %s25, 0
    %p262 = por %p260, %p261
    %s264 = sadd.s32 %s263, 1
    %p267 = scmp.eq.s32.totalorder %s19, 1
    %p268 = scmp.ne.s32.totalorder %s263, %s265
    %p269 = scmp.eq.s32.totalorder %s19, 0
    %p270 = por %p268, %p269
    %p271 = scmp.ne.s32.totalorder %s263, %s265
    %p272 = scmp.eq.s32.totalorder %s24, 1
    %p273 = por %p271, %p272
    %p274 = scmp.ne.s32.totalorder %s265, %s266
    %p275 = scmp.eq.s32.totalorder %s24, 0
    %p276 = por %p274, %p275
    %p277 = scmp.ne.s32.totalorder %s265, %s266
    %p278 = scmp.eq.s32.totalorder %s25, 1
    %p279 = por %p277, %p278
    %p281 = scmp.ne.s32.totalorder %s266, %s280
    %p282 = scmp.eq.s32.totalorder %s25, 0
    %p283 = por %p281, %p282
    %s285 = sadd.s32 %s284, 1
    %p288 = scmp.eq.s32.totalorder %s19, 1
    %p289 = scmp.ne.s32.totalorder %s284, %s286
    %p290 = scmp.eq.s32.totalorder %s19, 0
    %p291 = por %p289, %p290
    %p292 = scmp.ne.s32.totalorder %s284, %s286
    %p293 = scmp.eq.s32.totalorder %s24, 1
    %p294 = por %p292, %p293
    %p295 = scmp.ne.s32.totalorder %s286, %s287
    %p296 = scmp.eq.s32.totalorder %s24, 0
    %p297 = por %p295, %p296
    %p298 = scmp.ne.s32.totalorder %s286, %s287
    %p299 = scmp.eq.s32.totalorder %s25, 1
    %p300 = por %p298, %p299
    %p302 = scmp.ne.s32.totalorder %s287, %s301
    %p303 = scmp.eq.s32.totalorder %s25, 0
    %p304 = por %p302, %p303
    %s305 = ssub.s32 %s19, %s26
    %p306 = scmp.eq.s32.totalorder %s305, 0
    %s308 = sadd.s32 %s307, 1
    %s309 = scalar_select %p306, %s307, %s308
    %p312 = pneg %p306
    %p313 = scmp.eq.s32.totalorder %s19, 1
    %p314 = por %p312, %p313
    %p315 = scmp.ne.s32.totalorder %s307, %s310
    %p316 = scmp.eq.s32.totalorder %s19, 0
    %p317 = por %p315, %p316
    %p318 = scmp.ne.s32.totalorder %s307, %s310
    %p319 = scmp.eq.s32.totalorder %s24, 1
    %p320 = por %p318, %p319
    %p321 = scmp.ne.s32.totalorder %s310, %s311
    %p322 = scmp.eq.s32.totalorder %s24, 0
    %p323 = por %p321, %p322
    %p324 = scmp.ne.s32.totalorder %s310, %s311
    %p325 = scmp.eq.s32.totalorder %s25, 1
    %p326 = por %p324, %p325
    %p328 = scmp.ne.s32.totalorder %s311, %s327
    %p329 = scmp.eq.s32.totalorder %s25, 0
    %p330 = por %p328, %p329
    %p331 = scmp.le.s32.totalorder 1, %s19
    %p332 = scmp.lt.s32.totalorder %s19, 3
    %p333 = pnand %p331, %p332
    %p334 = pneg %p333
    // Predicated region
    $region9: #{convnet_forward.1} parent=5 // pred_check
      _
    $region10: #{convnet_forward.1} parent=5 // pred_check_branch
      %336 = sbr.rel (%p333) target = $region12
    $region11: #{convnet_forward.1} parent=5 // pred_region
      %s337 = ssub.s32 %s19, 1
      // Predicated region
      $region13: #{convnet_forward.1} parent=11 // pred_check
        %p338 = pneg %p66
      $region14: #{convnet_forward.1} parent=11 // pred_check_branch
        %340 = sbr.rel (%p338) target = $region16
      $region15: #{convnet_forward.1} parent=11 // pred_region
        _
      $region16: #{convnet_forward.1} parent=11 // pred_fallthru
        _
      // Predicated region
      $region17: #{convnet_forward.1} parent=11 // pred_check
        %p341 = pneg %p87
      $region18: #{convnet_forward.1} parent=11 // pred_check_branch
        %343 = sbr.rel (%p341) target = $region20
      $region19: #{convnet_forward.1} parent=11 // pred_region
        _
      $region20: #{convnet_forward.1} parent=11 // pred_fallthru
        _
      // Predicated region
      $region21: #{convnet_forward.1} parent=11 // pred_check
        %p344 = pneg %p108
      $region22: #{convnet_forward.1} parent=11 // pred_check_branch
        %346 = sbr.rel (%p344) target = $region24
      $region23: #{convnet_forward.1} parent=11 // pred_region
        _
      $region24: #{convnet_forward.1} parent=11 // pred_fallthru
        _
      // Predicated region
      $region25: #{convnet_forward.1} parent=11 // pred_check
        %p347 = pneg %p129
      $region26: #{convnet_forward.1} parent=11 // pred_check_branch
        %349 = sbr.rel (%p347) target = $region28
      $region27: #{convnet_forward.1} parent=11 // pred_region
        _
      $region28: #{convnet_forward.1} parent=11 // pred_fallthru
        _
      // Predicated region
      $region29: #{convnet_forward.1} parent=11 // pred_check
        %p350 = pneg %p150
      $region30: #{convnet_forward.1} parent=11 // pred_check_branch
        %352 = sbr.rel (%p350) target = $region32
      $region31: #{convnet_forward.1} parent=11 // pred_region
        _
      $region32: #{convnet_forward.1} parent=11 // pred_fallthru
        _
      // Predicated region
      $region33: #{convnet_forward.1} parent=11 // pred_check
        %p353 = pneg %p171
      $region34: #{convnet_forward.1} parent=11 // pred_check_branch
        %355 = sbr.rel (%p353) target = $region36
      $region35: #{convnet_forward.1} parent=11 // pred_region
        _
      $region36: #{convnet_forward.1} parent=11 // pred_fallthru
        _
      // Predicated region
      $region37: #{convnet_forward.1} parent=11 // pred_check
        %p356 = pneg %p192
      $region38: #{convnet_forward.1} parent=11 // pred_check_branch
        %358 = sbr.rel (%p356) target = $region40
      $region39: #{convnet_forward.1} parent=11 // pred_region
        _
      $region40: #{convnet_forward.1} parent=11 // pred_fallthru
        _
      // Predicated region
      $region41: #{convnet_forward.1} parent=11 // pred_check
        %p359 = pneg %p213
      $region42: #{convnet_forward.1} parent=11 // pred_check_branch
        %361 = sbr.rel (%p359) target = $region44
      $region43: #{convnet_forward.1} parent=11 // pred_region
        _
      $region44: #{convnet_forward.1} parent=11 // pred_fallthru
        _
      // Predicated region
      $region45: #{convnet_forward.1} parent=11 // pred_check
        %p362 = pneg %p234
      $region46: #{convnet_forward.1} parent=11 // pred_check_branch
        %364 = sbr.rel (%p362) target = $region48
      $region47: #{convnet_forward.1} parent=11 // pred_region
        _
      $region48: #{convnet_forward.1} parent=11 // pred_fallthru
        _
      // Predicated region
      $region49: #{convnet_forward.1} parent=11 // pred_check
        %p365 = pneg %p255
      $region50: #{convnet_forward.1} parent=11 // pred_check_branch
        %367 = sbr.rel (%p365) target = $region52
      $region51: #{convnet_forward.1} parent=11 // pred_region
        _
      $region52: #{convnet_forward.1} parent=11 // pred_fallthru
        _
      // Predicated region
      $region53: #{convnet_forward.1} parent=11 // pred_check
        %p368 = pneg %p276
      $region54: #{convnet_forward.1} parent=11 // pred_check_branch
        %370 = sbr.rel (%p368) target = $region56
      $region55: #{convnet_forward.1} parent=11 // pred_region
        _
      $region56: #{convnet_forward.1} parent=11 // pred_fallthru
        _
      // Predicated region
      $region57: #{convnet_forward.1} parent=11 // pred_check
        %p371 = pneg %p297
      $region58: #{convnet_forward.1} parent=11 // pred_check_branch
        %373 = sbr.rel (%p371) target = $region60
      $region59: #{convnet_forward.1} parent=11 // pred_region
        _
      $region60: #{convnet_forward.1} parent=11 // pred_fallthru
        _
    $region12: #{convnet_forward.1} parent=5 // pred_fallthru
      _
    %p374 = scmp.lt.s32.totalorder %s19, 2
    // Predicated region
    $region61: #{convnet_forward.1} parent=5 // pred_check
      %p375 = pneg %p374
    $region62: #{convnet_forward.1} parent=5 // pred_check_branch
      %377 = sbr.rel (%p375) target = $region64
    $region63: #{convnet_forward.1} parent=5 // pred_region
      // Predicated region
      $region65: #{convnet_forward.1} parent=63 // pred_check
        %p378 = pneg %p39
      $region66: #{convnet_forward.1} parent=63 // pred_check_branch
        %380 = sbr.rel (%p378) target = $region68
      $region67: #{convnet_forward.1} parent=63 // pred_region
        %p381 = scmp.lt.s32.totalorder %s19, 1
        %s382 = scalar_select %p381, %s19, 1
        %s383 = smul.addr %s382, 843
        %s384 = smul.addr %s383, 8
        %s385 = scalar_lea.vmem %s0, %s384
      $region68: #{convnet_forward.1} parent=63 // pred_fallthru
        _
    $region64: #{convnet_forward.1} parent=5 // pred_fallthru
      _
    %p386 = scmp.le.s32.totalorder 1, %s19
    %p387 = scmp.lt.s32.totalorder %s19, 3
    %p388 = pnand %p386, %p387
    %p389 = pneg %p388
    // Predicated region
    $region69: #{convnet_forward.1} parent=5 // pred_check
      _
    $region70: #{convnet_forward.1} parent=5 // pred_check_branch
      %391 = sbr.rel (%p388) target = $region72
    $region71: #{convnet_forward.1} parent=5 // pred_region
      %s392 = ssub.s32 %s19, 1
      %p393 = scmp.lt.s32.totalorder %s24, 1
      %s394 = scalar_select %p393, %s24, 1
      %s395 = smul.addr %s394, 843
      %s396 = smul.addr %s395, 8
      %s397 = scalar_lea.vmem %s0, %s396
      %p398 = pneg %p45
      %p399 = pneg %p42
      %p400 = pneg %p66
      %p401 = pneg %p63
      %p402 = pneg %p87
      %p403 = pneg %p84
      %p404 = pneg %p108
      %p405 = pneg %p105
      %p406 = pneg %p129
      %p407 = pneg %p126
      %p408 = pneg %p150
      %p409 = pneg %p147
      %p410 = pneg %p171
      %p411 = pneg %p168
      %p412 = pneg %p192
      %p413 = pneg %p189
      %p414 = pneg %p213
      %p415 = pneg %p210
      %p416 = pneg %p234
      %p417 = pneg %p231
      %p418 = pneg %p255
      %p419 = pneg %p252
      %p420 = pneg %p276
      %p421 = pneg %p273
      %p422 = pneg %p297
      %p423 = pneg %p294
      %p424 = pneg %p323
      %p425 = pneg %p320
      %p426 = scmp.lt.s32.totalorder %s24, 1
      %s427 = scalar_select %p426, %s24, 1
      %s428 = smul.addr %s427, 5
      %s429 = smul.addr %s428, 8
      %s430 = scalar_lea.vmem %s13, %s429
      %p431 = scmp.lt.s32.totalorder %s24, 1
      %s432 = scalar_select %p431, %s24, 1
      %s433 = smul.addr %s432, 843
      %s434 = smul.addr %s433, 8
      %s435 = scalar_lea.vmem %s0, %s434
      %p436 = scmp.lt.s32.totalorder %s24, 1
      %s437 = scalar_select %p436, %s24, 1
      %s438 = smul.addr %s437, 5
      %s439 = smul.addr %s438, 8
      %s440 = scalar_lea.vmem %s13, %s439
      %vm441 = vcmask 130048
      %442 = vst.msk [vmem:[#allocation2] sm:$0xff] %vm441, 0.0
      %443 = vst.msk [vmem:[#allocation2 + $0x8] sm:$0xff] %vm441, 0.0
      %444 = vst.msk [vmem:[#allocation2 + $0x10] sm:$0xff] %vm441, 0.0
      %445 = vst.msk [vmem:[#allocation2 + $0x18] sm:$0xff] %vm441, 0.0
      %446 = vst.msk [vmem:[#allocation2 + $0x20] sm:$0xff] %vm441, 0.0
      %447 = vst.msk [vmem:[#allocation2 + $0x28] sm:$0xff] %vm441, 0.0
      %448 = vst.msk [vmem:[#allocation2 + $0x30] sm:$0xff] %vm441, 0.0
      %449 = vst.msk [vmem:[#allocation2 + $0x38] sm:$0xff] %vm441, 0.0
      %450 = vst.msk [vmem:[#allocation2 + $0x40] sm:$0xff] %vm441, 0.0
      %451 = vst.msk [vmem:[#allocation2 + $0x48] sm:$0xff] %vm441, 0.0
      %452 = vst.msk [vmem:[#allocation2 + $0x50] sm:$0xff] %vm441, 0.0
      %453 = vst.msk [vmem:[#allocation2 + $0x58] sm:$0xff] %vm441, 0.0
      %454 = vst.msk [vmem:[#allocation2 + $0x60] sm:$0xff] %vm441, 0.0
      %455 = vst.msk [vmem:[#allocation2 + $0x68] sm:$0xff] %vm441, 0.0
      %456 = vst.msk [vmem:[#allocation2 + $0x70] sm:$0xff] %vm441, 0.0
      %457 = vst.msk [vmem:[#allocation2 + $0x78] sm:$0xff] %vm441, 0.0
      %458 = vst.msk [vmem:[#allocation2 + $0x80] sm:$0xff] %vm441, 0.0
      %459 = vst.msk [vmem:[#allocation2 + $0x88] sm:$0xff] %vm441, 0.0
      %460 = vst.msk [vmem:[#allocation2 + $0x90] sm:$0xff] %vm441, 0.0
      %461 = vst.msk [vmem:[#allocation2 + $0x98] sm:$0xff] %vm441, 0.0
      %462 = vst.msk [vmem:[#allocation2 + $0xa0] sm:$0xff] %vm441, 0.0
      %463 = vst.msk [vmem:[#allocation2 + $0xa8] sm:$0xff] %vm441, 0.0
      %464 = vst.msk [vmem:[#allocation2 + $0xb0] sm:$0xff] %vm441, 0.0
      %465 = vst.msk [vmem:[#allocation2 + $0xb8] sm:$0xff] %vm441, 0.0
      %466 = vst.msk [vmem:[#allocation2 + $0xc0] sm:$0xff] %vm441, 0.0
      %467 = vst.msk [vmem:[#allocation2 + $0xc8] sm:$0xff] %vm441, 0.0
      %468 = vst.msk [vmem:[#allocation2 + $0xd0] sm:$0xff] %vm441, 0.0
      %469 = vst.msk [vmem:[#allocation2 + $0xd8] sm:$0xff] %vm441, 0.0
      %470 = vst.msk [vmem:[#allocation2 + $0xe0] sm:$0xff] %vm441, 0.0
      %471 = vst.msk [vmem:[#allocation2 + $0xe8] sm:$0xff] %vm441, 0.0
      %472 = vst.msk [vmem:[#allocation2 + $0xf0] sm:$0xff] %vm441, 0.0
      %473 = vst.msk [vmem:[#allocation2 + $0xf8] sm:$0xff] %vm441, 0.0
      %474 = vst.msk [vmem:[#allocation2 + $0x100] sm:$0xff] %vm441, 0.0
      %475 = vst.msk [vmem:[#allocation2 + $0x108] sm:$0xff] %vm441, 0.0
      %476 = vst.msk [vmem:[#allocation2 + $0x110] sm:$0xff] %vm441, 0.0
      %477 = vst.msk [vmem:[#allocation2 + $0x118] sm:$0xff] %vm441, 0.0
      %478 = vst.msk [vmem:[#allocation2 + $0x120] sm:$0xff] %vm441, 0.0
      %479 = vst.msk [vmem:[#allocation2 + $0x128] sm:$0xff] %vm441, 0.0
      %480 = vst.msk [vmem:[#allocation2 + $0x130] sm:$0xff] %vm441, 0.0
      %481 = vst.msk [vmem:[#allocation2 + $0x138] sm:$0xff] %vm441, 0.0
      %482 = vst.msk [vmem:[#allocation2 + $0x140] sm:$0xff] %vm441, 0.0
      %483 = vst.msk [vmem:[#allocation2 + $0x148] sm:$0xff] %vm441, 0.0
      %484 = vst.msk [vmem:[#allocation2 + $0x150] sm:$0xff] %vm441, 0.0
      %485 = vst.msk [vmem:[#allocation2 + $0x158] sm:$0xff] %vm441, 0.0
      %486 = vst.msk [vmem:[#allocation2 + $0x160] sm:$0xff] %vm441, 0.0
      %487 = vst.msk [vmem:[#allocation2 + $0x168] sm:$0xff] %vm441, 0.0
      %488 = vst.msk [vmem:[#allocation2 + $0x170] sm:$0xff] %vm441, 0.0
      %489 = vst.msk [vmem:[#allocation2 + $0x178] sm:$0xff] %vm441, 0.0
      %490 = vst.msk [vmem:[#allocation2 + $0x180] sm:$0xff] %vm441, 0.0
      %491 = vst.msk [vmem:[#allocation2 + $0x188] sm:$0xff] %vm441, 0.0
      %492 = vst.msk [vmem:[#allocation2 + $0x190] sm:$0xff] %vm441, 0.0
      %493 = vst.msk [vmem:[#allocation2 + $0x198] sm:$0xff] %vm441, 0.0
      %494 = vst.msk [vmem:[#allocation2 + $0x1a0] sm:$0xff] %vm441, 0.0
      %495 = vst.msk [vmem:[#allocation2 + $0x1a8] sm:$0xff] %vm441, 0.0
      %496 = vst.msk [vmem:[#allocation2 + $0x1b0] sm:$0xff] %vm441, 0.0
      %497 = vst.msk [vmem:[#allocation2 + $0x1b8] sm:$0xff] %vm441, 0.0
      %498 = vst.msk [vmem:[#allocation2 + $0x1c0] sm:$0xff] %vm441, 0.0
      %499 = vst.msk [vmem:[#allocation2 + $0x1c8] sm:$0xff] %vm441, 0.0
      %500 = vst.msk [vmem:[#allocation2 + $0x1d0] sm:$0xff] %vm441, 0.0
      %501 = vst.msk [vmem:[#allocation2 + $0x1d8] sm:$0xff] %vm441, 0.0
      %502 = vst.msk [vmem:[#allocation2 + $0x1e0] sm:$0xff] %vm441, 0.0
      %503 = vst.msk [vmem:[#allocation2 + $0x1e8] sm:$0xff] %vm441, 0.0
      %504 = vst.msk [vmem:[#allocation2 + $0x1f0] sm:$0xff] %vm441, 0.0
      %505 = vst.msk [vmem:[#allocation2 + $0x1f8] sm:$0xff] %vm441, 0.0
      %506 = vst.msk [vmem:[#allocation2 + $0x200] sm:$0xff] %vm441, 0.0
      %507 = vst.msk [vmem:[#allocation2 + $0x208] sm:$0xff] %vm441, 0.0
      %508 = vst.msk [vmem:[#allocation2 + $0x210] sm:$0xff] %vm441, 0.0
      %509 = vst.msk [vmem:[#allocation2 + $0x218] sm:$0xff] %vm441, 0.0
      %510 = vst.msk [vmem:[#allocation2 + $0x220] sm:$0xff] %vm441, 0.0
      %511 = vst.msk [vmem:[#allocation2 + $0x228] sm:$0xff] %vm441, 0.0
      %512 = vst.msk [vmem:[#allocation2 + $0x230] sm:$0xff] %vm441, 0.0
      %513 = vst.msk [vmem:[#allocation2 + $0x238] sm:$0xff] %vm441, 0.0
      %514 = vst.msk [vmem:[#allocation2 + $0x240] sm:$0xff] %vm441, 0.0
      %515 = vst.msk [vmem:[#allocation2 + $0x248] sm:$0xff] %vm441, 0.0
      %516 = vst.msk [vmem:[#allocation2 + $0x250] sm:$0xff] %vm441, 0.0
      %517 = vst.msk [vmem:[#allocation2 + $0x258] sm:$0xff] %vm441, 0.0
      %518 = vst.msk [vmem:[#allocation2 + $0x260] sm:$0xff] %vm441, 0.0
      %519 = vst.msk [vmem:[#allocation2 + $0x268] sm:$0xff] %vm441, 0.0
      %520 = vst.msk [vmem:[#allocation2 + $0x270] sm:$0xff] %vm441, 0.0
      %521 = vst.msk [vmem:[#allocation2 + $0x278] sm:$0xff] %vm441, 0.0
      %522 = vst.msk [vmem:[#allocation2 + $0x280] sm:$0xff] %vm441, 0.0
      %523 = vst.msk [vmem:[#allocation2 + $0x288] sm:$0xff] %vm441, 0.0
      %524 = vst.msk [vmem:[#allocation2 + $0x290] sm:$0xff] %vm441, 0.0
      %525 = vst.msk [vmem:[#allocation2 + $0x298] sm:$0xff] %vm441, 0.0
      %526 = vst.msk [vmem:[#allocation2 + $0x2a0] sm:$0xff] %vm441, 0.0
      %527 = vst.msk [vmem:[#allocation2 + $0x2a8] sm:$0xff] %vm441, 0.0
      %528 = vst.msk [vmem:[#allocation2 + $0x2b0] sm:$0xff] %vm441, 0.0
      %529 = vst.msk [vmem:[#allocation2 + $0x2b8] sm:$0xff] %vm441, 0.0
      %530 = vst.msk [vmem:[#allocation2 + $0x2c0] sm:$0xff] %vm441, 0.0
      %531 = vst.msk [vmem:[#allocation2 + $0x2c8] sm:$0xff] %vm441, 0.0
      %532 = vst.msk [vmem:[#allocation2 + $0x2d0] sm:$0xff] %vm441, 0.0
      %533 = vst.msk [vmem:[#allocation2 + $0x2d8] sm:$0xff] %vm441, 0.0
      %534 = vst.msk [vmem:[#allocation2 + $0x2e0] sm:$0xff] %vm441, 0.0
      %535 = vst.msk [vmem:[#allocation2 + $0x2e8] sm:$0xff] %vm441, 0.0
      %536 = vst.msk [vmem:[#allocation2 + $0x2f0] sm:$0xff] %vm441, 0.0
      %537 = vst.msk [vmem:[#allocation2 + $0x2f8] sm:$0xff] %vm441, 0.0
      %538 = vst.msk [vmem:[#allocation2 + $0x300] sm:$0xff] %vm441, 0.0
      %539 = vst.msk [vmem:[#allocation2 + $0x308] sm:$0xff] %vm441, 0.0
      %540 = vst.msk [vmem:[#allocation2 + $0x310] sm:$0xff] %vm441, 0.0
      %541 = vst.msk [vmem:[#allocation2 + $0x318] sm:$0xff] %vm441, 0.0
      %542 = vst.msk [vmem:[#allocation2 + $0x320] sm:$0xff] %vm441, 0.0
      %543 = vst.msk [vmem:[#allocation2 + $0x328] sm:$0xff] %vm441, 0.0
      %544 = vst.msk [vmem:[#allocation2 + $0x330] sm:$0xff] %vm441, 0.0
      %545 = vst.msk [vmem:[#allocation2 + $0x338] sm:$0xff] %vm441, 0.0
      %546 = vst.msk [vmem:[#allocation2 + $0x340] sm:$0xff] %vm441, 0.0
      %547 = vst.msk [vmem:[#allocation2 + $0x348] sm:$0xff] %vm441, 0.0
      %548 = vst.msk [vmem:[#allocation2 + $0x350] sm:$0xff] %vm441, 0.0
      %549 = vst.msk [vmem:[#allocation2 + $0x358] sm:$0xff] %vm441, 0.0
      %550 = vst.msk [vmem:[#allocation2 + $0x360] sm:$0xff] %vm441, 0.0
      %551 = vst.msk [vmem:[#allocation2 + $0x368] sm:$0xff] %vm441, 0.0
      %552 = vst.msk [vmem:[#allocation2 + $0x370] sm:$0xff] %vm441, 0.0
      %553 = vst.msk [vmem:[#allocation2 + $0x378] sm:$0xff] %vm441, 0.0
      %554 = vst.msk [vmem:[#allocation2 + $0x380] sm:$0xff] %vm441, 0.0
      %555 = vst.msk [vmem:[#allocation2 + $0x388] sm:$0xff] %vm441, 0.0
      %556 = vst.msk [vmem:[#allocation2 + $0x390] sm:$0xff] %vm441, 0.0
      %557 = vst.msk [vmem:[#allocation2 + $0x398] sm:$0xff] %vm441, 0.0
      %558 = vst.msk [vmem:[#allocation2 + $0x3a0] sm:$0xff] %vm441, 0.0
      %559 = vst.msk [vmem:[#allocation2 + $0x3a8] sm:$0xff] %vm441, 0.0
      %560 = vst.msk [vmem:[#allocation2 + $0x3b0] sm:$0xff] %vm441, 0.0
      %561 = vst.msk [vmem:[#allocation2 + $0x3b8] sm:$0xff] %vm441, 0.0
      %562 = vst.msk [vmem:[#allocation2 + $0x3c0] sm:$0xff] %vm441, 0.0
      %563 = vst.msk [vmem:[#allocation2 + $0x3c8] sm:$0xff] %vm441, 0.0
      %564 = vst.msk [vmem:[#allocation2 + $0x3d0] sm:$0xff] %vm441, 0.0
      %565 = vst.msk [vmem:[#allocation2 + $0x3d8] sm:$0xff] %vm441, 0.0
      %566 = vst.msk [vmem:[#allocation2 + $0x3e0] sm:$0xff] %vm441, 0.0
      %567 = vst.msk [vmem:[#allocation2 + $0x3e8] sm:$0xff] %vm441, 0.0
      %568 = vst.msk [vmem:[#allocation2 + $0x3f0] sm:$0xff] %vm441, 0.0
      %569 = vst.msk [vmem:[#allocation2 + $0x3f8] sm:$0xff] %vm441, 0.0
      %570 = vst.msk [vmem:[#allocation2 + $0x400] sm:$0xff] %vm441, 0.0
      %571 = vst.msk [vmem:[#allocation2 + $0x408] sm:$0xff] %vm441, 0.0
      %572 = vst.msk [vmem:[#allocation2 + $0x410] sm:$0xff] %vm441, 0.0
      %573 = vst.msk [vmem:[#allocation2 + $0x418] sm:$0xff] %vm441, 0.0
      %574 = vst.msk [vmem:[#allocation2 + $0x420] sm:$0xff] %vm441, 0.0
      %575 = vst.msk [vmem:[#allocation2 + $0x428] sm:$0xff] %vm441, 0.0
      %576 = vst.msk [vmem:[#allocation2 + $0x430] sm:$0xff] %vm441, 0.0
      %577 = vst.msk [vmem:[#allocation2 + $0x438] sm:$0xff] %vm441, 0.0
      %578 = vst.msk [vmem:[#allocation2 + $0x440] sm:$0xff] %vm441, 0.0
      %579 = vst.msk [vmem:[#allocation2 + $0x448] sm:$0xff] %vm441, 0.0
      %580 = vst.msk [vmem:[#allocation2 + $0x450] sm:$0xff] %vm441, 0.0
      %581 = vst.msk [vmem:[#allocation2 + $0x458] sm:$0xff] %vm441, 0.0
      %582 = vst.msk [vmem:[#allocation2 + $0x460] sm:$0xff] %vm441, 0.0
      %583 = vst.msk [vmem:[#allocation2 + $0x468] sm:$0xff] %vm441, 0.0
      %584 = vst.msk [vmem:[#allocation2 + $0x470] sm:$0xff] %vm441, 0.0
      %585 = vst.msk [vmem:[#allocation2 + $0x478] sm:$0xff] %vm441, 0.0
      %586 = vst.msk [vmem:[#allocation2 + $0x480] sm:$0xff] %vm441, 0.0
      %587 = vst.msk [vmem:[#allocation2 + $0x488] sm:$0xff] %vm441, 0.0
      %588 = vst.msk [vmem:[#allocation2 + $0x490] sm:$0xff] %vm441, 0.0
      %589 = vst.msk [vmem:[#allocation2 + $0x498] sm:$0xff] %vm441, 0.0
      %590 = vst.msk [vmem:[#allocation2 + $0x4a0] sm:$0xff] %vm441, 0.0
      %591 = vst.msk [vmem:[#allocation2 + $0x4a8] sm:$0xff] %vm441, 0.0
      %592 = vst.msk [vmem:[#allocation2 + $0x4b0] sm:$0xff] %vm441, 0.0
      %593 = vst.msk [vmem:[#allocation2 + $0x4b8] sm:$0xff] %vm441, 0.0
      %594 = vst.msk [vmem:[#allocation2 + $0x4c0] sm:$0xff] %vm441, 0.0
      %595 = vst.msk [vmem:[#allocation2 + $0x4c8] sm:$0xff] %vm441, 0.0
      %596 = vst.msk [vmem:[#allocation2 + $0x4d0] sm:$0xff] %vm441, 0.0
      %597 = vst.msk [vmem:[#allocation2 + $0x4d8] sm:$0xff] %vm441, 0.0
      %598 = vst.msk [vmem:[#allocation2 + $0x4e0] sm:$0xff] %vm441, 0.0
      %599 = vst.msk [vmem:[#allocation2 + $0x4e8] sm:$0xff] %vm441, 0.0
      %600 = vst.msk [vmem:[#allocation2 + $0x4f0] sm:$0xff] %vm441, 0.0
      %601 = vst.msk [vmem:[#allocation2 + $0x4f8] sm:$0xff] %vm441, 0.0
      %602 = vst.msk [vmem:[#allocation2 + $0x500] sm:$0xff] %vm441, 0.0
      %603 = vst.msk [vmem:[#allocation2 + $0x508] sm:$0xff] %vm441, 0.0
      %604 = vst.msk [vmem:[#allocation2 + $0x510] sm:$0xff] %vm441, 0.0
      %605 = vst.msk [vmem:[#allocation2 + $0x518] sm:$0xff] %vm441, 0.0
      %606 = vst.msk [vmem:[#allocation2 + $0x520] sm:$0xff] %vm441, 0.0
      %607 = vst.msk [vmem:[#allocation2 + $0x528] sm:$0xff] %vm441, 0.0
      %608 = vst.msk [vmem:[#allocation2 + $0x530] sm:$0xff] %vm441, 0.0
      %609 = vst.msk [vmem:[#allocation2 + $0x538] sm:$0xff] %vm441, 0.0
      %610 = vst.msk [vmem:[#allocation2 + $0x540] sm:$0xff] %vm441, 0.0
      %611 = vst.msk [vmem:[#allocation2 + $0x548] sm:$0xff] %vm441, 0.0
      %612 = vst.msk [vmem:[#allocation2 + $0x550] sm:$0xff] %vm441, 0.0
      %613 = vst.msk [vmem:[#allocation2 + $0x558] sm:$0xff] %vm441, 0.0
      %614 = vst.msk [vmem:[#allocation2 + $0x560] sm:$0xff] %vm441, 0.0
      %615 = vst.msk [vmem:[#allocation2 + $0x568] sm:$0xff] %vm441, 0.0
      %616 = vst.msk [vmem:[#allocation2 + $0x570] sm:$0xff] %vm441, 0.0
      %617 = vst.msk [vmem:[#allocation2 + $0x578] sm:$0xff] %vm441, 0.0
      %618 = vst.msk [vmem:[#allocation2 + $0x580] sm:$0xff] %vm441, 0.0
      %619 = vst.msk [vmem:[#allocation2 + $0x588] sm:$0xff] %vm441, 0.0
      %620 = vst.msk [vmem:[#allocation2 + $0x590] sm:$0xff] %vm441, 0.0
      %621 = vst.msk [vmem:[#allocation2 + $0x598] sm:$0xff] %vm441, 0.0
      %622 = vst.msk [vmem:[#allocation2 + $0x5a0] sm:$0xff] %vm441, 0.0
      %623 = vst.msk [vmem:[#allocation2 + $0x5a8] sm:$0xff] %vm441, 0.0
      %624 = vst.msk [vmem:[#allocation2 + $0x5b0] sm:$0xff] %vm441, 0.0
      %625 = vst.msk [vmem:[#allocation2 + $0x5b8] sm:$0xff] %vm441, 0.0
      %626 = vst.msk [vmem:[#allocation2 + $0x5c0] sm:$0xff] %vm441, 0.0
      %627 = vst.msk [vmem:[#allocation2 + $0x5c8] sm:$0xff] %vm441, 0.0
      %628 = vst.msk [vmem:[#allocation2 + $0x5d0] sm:$0xff] %vm441, 0.0
      %629 = vst.msk [vmem:[#allocation2 + $0x5d8] sm:$0xff] %vm441, 0.0
      %630 = vst.msk [vmem:[#allocation2 + $0x5e0] sm:$0xff] %vm441, 0.0
      %631 = vst.msk [vmem:[#allocation2 + $0x5e8] sm:$0xff] %vm441, 0.0
      %632 = vst.msk [vmem:[#allocation2 + $0x5f0] sm:$0xff] %vm441, 0.0
      %633 = vst.msk [vmem:[#allocation2 + $0x5f8] sm:$0xff] %vm441, 0.0
      %634 = vst.msk [vmem:[#allocation2 + $0x600] sm:$0xff] %vm441, 0.0
      %635 = vst.msk [vmem:[#allocation2 + $0x608] sm:$0xff] %vm441, 0.0
      %636 = vst.msk [vmem:[#allocation2 + $0x610] sm:$0xff] %vm441, 0.0
      %637 = vst.msk [vmem:[#allocation2 + $0x618] sm:$0xff] %vm441, 0.0
      %638 = vst.msk [vmem:[#allocation2 + $0x620] sm:$0xff] %vm441, 0.0
      %639 = vst.msk [vmem:[#allocation2 + $0x628] sm:$0xff] %vm441, 0.0
      %640 = vst.msk [vmem:[#allocation2 + $0x630] sm:$0xff] %vm441, 0.0
      %641 = vst.msk [vmem:[#allocation2 + $0x638] sm:$0xff] %vm441, 0.0
      %642 = vst.msk [vmem:[#allocation2 + $0x640] sm:$0xff] %vm441, 0.0
      %643 = vst.msk [vmem:[#allocation2 + $0x648] sm:$0xff] %vm441, 0.0
      %644 = vst.msk [vmem:[#allocation2 + $0x650] sm:$0xff] %vm441, 0.0
      %645 = vst.msk [vmem:[#allocation2 + $0x658] sm:$0xff] %vm441, 0.0
      %646 = vst.msk [vmem:[#allocation2 + $0x660] sm:$0xff] %vm441, 0.0
      %647 = vst.msk [vmem:[#allocation2 + $0x668] sm:$0xff] %vm441, 0.0
      %648 = vst.msk [vmem:[#allocation2 + $0x670] sm:$0xff] %vm441, 0.0
      %649 = vst.msk [vmem:[#allocation2 + $0x678] sm:$0xff] %vm441, 0.0
      %650 = vst.msk [vmem:[#allocation2 + $0x680] sm:$0xff] %vm441, 0.0
      %651 = vst.msk [vmem:[#allocation2 + $0x688] sm:$0xff] %vm441, 0.0
      %652 = vst.msk [vmem:[#allocation2 + $0x690] sm:$0xff] %vm441, 0.0
      %653 = vst.msk [vmem:[#allocation2 + $0x698] sm:$0xff] %vm441, 0.0
      %654 = vst.msk [vmem:[#allocation2 + $0x6a0] sm:$0xff] %vm441, 0.0
      %655 = vst.msk [vmem:[#allocation2 + $0x6a8] sm:$0xff] %vm441, 0.0
      %656 = vst.msk [vmem:[#allocation2 + $0x6b0] sm:$0xff] %vm441, 0.0
      %657 = vst.msk [vmem:[#allocation2 + $0x6b8] sm:$0xff] %vm441, 0.0
      %658 = vst.msk [vmem:[#allocation2 + $0x6c0] sm:$0xff] %vm441, 0.0
      %659 = vst.msk [vmem:[#allocation2 + $0x6c8] sm:$0xff] %vm441, 0.0
      %660 = vst.msk [vmem:[#allocation2 + $0x6d0] sm:$0xff] %vm441, 0.0
      %661 = vst.msk [vmem:[#allocation2 + $0x6d8] sm:$0xff] %vm441, 0.0
      %662 = vst.msk [vmem:[#allocation2 + $0x6e0] sm:$0xff] %vm441, 0.0
      %663 = vst.msk [vmem:[#allocation2 + $0x6e8] sm:$0xff] %vm441, 0.0
      %664 = vst.msk [vmem:[#allocation2 + $0x6f0] sm:$0xff] %vm441, 0.0
      %665 = vst.msk [vmem:[#allocation3] sm:$0xff] %vm441, 0.0
      %666 = vst.msk [vmem:[#allocation3 + $0x8] sm:$0xff] %vm441, 0.0
      %667 = vst.msk [vmem:[#allocation3 + $0x10] sm:$0xff] %vm441, 0.0
      %668 = vst.msk [vmem:[#allocation3 + $0x18] sm:$0xff] %vm441, 0.0
      %669 = vst.msk [vmem:[#allocation3 + $0x20] sm:$0xff] %vm441, 0.0
      %670 = vst.msk [vmem:[#allocation3 + $0x28] sm:$0xff] %vm441, 0.0
      %671 = vst.msk [vmem:[#allocation3 + $0x30] sm:$0xff] %vm441, 0.0
      %672 = vst.msk [vmem:[#allocation3 + $0x38] sm:$0xff] %vm441, 0.0
      %673 = vst.msk [vmem:[#allocation3 + $0x40] sm:$0xff] %vm441, 0.0
      %674 = vst.msk [vmem:[#allocation3 + $0x48] sm:$0xff] %vm441, 0.0
      %675 = vst.msk [vmem:[#allocation3 + $0x50] sm:$0xff] %vm441, 0.0
      %676 = vst.msk [vmem:[#allocation3 + $0x58] sm:$0xff] %vm441, 0.0
      %677 = vst.msk [vmem:[#allocation3 + $0x60] sm:$0xff] %vm441, 0.0
      %678 = vst.msk [vmem:[#allocation3 + $0x68] sm:$0xff] %vm441, 0.0
      %679 = vst.msk [vmem:[#allocation3 + $0x70] sm:$0xff] %vm441, 0.0
      %680 = vst.msk [vmem:[#allocation3 + $0x78] sm:$0xff] %vm441, 0.0
      %681 = vst.msk [vmem:[#allocation3 + $0x80] sm:$0xff] %vm441, 0.0
      %682 = vst.msk [vmem:[#allocation3 + $0x88] sm:$0xff] %vm441, 0.0
      %683 = vst.msk [vmem:[#allocation3 + $0x90] sm:$0xff] %vm441, 0.0
      %684 = vst.msk [vmem:[#allocation3 + $0x98] sm:$0xff] %vm441, 0.0
      %685 = vst.msk [vmem:[#allocation3 + $0xa0] sm:$0xff] %vm441, 0.0
      %686 = vst.msk [vmem:[#allocation3 + $0xa8] sm:$0xff] %vm441, 0.0
      %687 = vst.msk [vmem:[#allocation3 + $0xb0] sm:$0xff] %vm441, 0.0
      %688 = vst.msk [vmem:[#allocation3 + $0xb8] sm:$0xff] %vm441, 0.0
      %689 = vst.msk [vmem:[#allocation3 + $0xc0] sm:$0xff] %vm441, 0.0
      %690 = vst.msk [vmem:[#allocation3 + $0xc8] sm:$0xff] %vm441, 0.0
      %691 = vst.msk [vmem:[#allocation3 + $0xd0] sm:$0xff] %vm441, 0.0
      %692 = vst.msk [vmem:[#allocation3 + $0xd8] sm:$0xff] %vm441, 0.0
      %693 = vst.msk [vmem:[#allocation3 + $0xe0] sm:$0xff] %vm441, 0.0
      %694 = vst.msk [vmem:[#allocation3 + $0xe8] sm:$0xff] %vm441, 0.0
      %695 = vst.msk [vmem:[#allocation3 + $0xf0] sm:$0xff] %vm441, 0.0
      %696 = vst.msk [vmem:[#allocation3 + $0xf8] sm:$0xff] %vm441, 0.0
      %697 = vst.msk [vmem:[#allocation3 + $0x100] sm:$0xff] %vm441, 0.0
      %698 = vst.msk [vmem:[#allocation3 + $0x108] sm:$0xff] %vm441, 0.0
      %699 = vst.msk [vmem:[#allocation3 + $0x110] sm:$0xff] %vm441, 0.0
      %700 = vst.msk [vmem:[#allocation3 + $0x118] sm:$0xff] %vm441, 0.0
      %701 = vst.msk [vmem:[#allocation3 + $0x120] sm:$0xff] %vm441, 0.0
      %702 = vst.msk [vmem:[#allocation3 + $0x128] sm:$0xff] %vm441, 0.0
      %703 = vst.msk [vmem:[#allocation3 + $0x130] sm:$0xff] %vm441, 0.0
      %704 = vst.msk [vmem:[#allocation3 + $0x138] sm:$0xff] %vm441, 0.0
      %705 = vst.msk [vmem:[#allocation3 + $0x140] sm:$0xff] %vm441, 0.0
      %706 = vst.msk [vmem:[#allocation3 + $0x148] sm:$0xff] %vm441, 0.0
      %707 = vst.msk [vmem:[#allocation3 + $0x150] sm:$0xff] %vm441, 0.0
      %708 = vst.msk [vmem:[#allocation3 + $0x158] sm:$0xff] %vm441, 0.0
      %709 = vst.msk [vmem:[#allocation3 + $0x160] sm:$0xff] %vm441, 0.0
      %710 = vst.msk [vmem:[#allocation3 + $0x168] sm:$0xff] %vm441, 0.0
      %711 = vst.msk [vmem:[#allocation3 + $0x170] sm:$0xff] %vm441, 0.0
      %712 = vst.msk [vmem:[#allocation3 + $0x178] sm:$0xff] %vm441, 0.0
      %713 = vst.msk [vmem:[#allocation3 + $0x180] sm:$0xff] %vm441, 0.0
      %714 = vst.msk [vmem:[#allocation3 + $0x188] sm:$0xff] %vm441, 0.0
      %715 = vst.msk [vmem:[#allocation3 + $0x190] sm:$0xff] %vm441, 0.0
      %716 = vst.msk [vmem:[#allocation3 + $0x198] sm:$0xff] %vm441, 0.0
      %717 = vst.msk [vmem:[#allocation3 + $0x1a0] sm:$0xff] %vm441, 0.0
      %718 = vst.msk [vmem:[#allocation3 + $0x1a8] sm:$0xff] %vm441, 0.0
      %719 = vst.msk [vmem:[#allocation3 + $0x1b0] sm:$0xff] %vm441, 0.0
      %720 = vst.msk [vmem:[#allocation3 + $0x1b8] sm:$0xff] %vm441, 0.0
      %721 = vst.msk [vmem:[#allocation3 + $0x1c0] sm:$0xff] %vm441, 0.0
      %722 = vst.msk [vmem:[#allocation3 + $0x1c8] sm:$0xff] %vm441, 0.0
      %723 = vst.msk [vmem:[#allocation3 + $0x1d0] sm:$0xff] %vm441, 0.0
      %724 = vst.msk [vmem:[#allocation3 + $0x1d8] sm:$0xff] %vm441, 0.0
      %725 = vst.msk [vmem:[#allocation3 + $0x1e0] sm:$0xff] %vm441, 0.0
      %726 = vst.msk [vmem:[#allocation3 + $0x1e8] sm:$0xff] %vm441, 0.0
      %727 = vst.msk [vmem:[#allocation3 + $0x1f0] sm:$0xff] %vm441, 0.0
      %728 = vst.msk [vmem:[#allocation4] sm:$0xff] %vm441, 0.0
      %729 = vst.msk [vmem:[#allocation4 + $0x8] sm:$0xff] %vm441, 0.0
      %730 = vst.msk [vmem:[#allocation4 + $0x10] sm:$0xff] %vm441, 0.0
      %731 = vst.msk [vmem:[#allocation4 + $0x18] sm:$0xff] %vm441, 0.0
      %732 = vst.msk [vmem:[#allocation4 + $0x20] sm:$0xff] %vm441, 0.0
      %733 = vst.msk [vmem:[#allocation4 + $0x28] sm:$0xff] %vm441, 0.0
      %734 = vst.msk [vmem:[#allocation4 + $0x30] sm:$0xff] %vm441, 0.0
      %735 = vst.msk [vmem:[#allocation4 + $0x38] sm:$0xff] %vm441, 0.0
      %736 = vst.msk [vmem:[#allocation4 + $0x40] sm:$0xff] %vm441, 0.0
      %737 = vst.msk [vmem:[#allocation4 + $0x48] sm:$0xff] %vm441, 0.0
      %738 = vst.msk [vmem:[#allocation4 + $0x50] sm:$0xff] %vm441, 0.0
      %739 = vst.msk [vmem:[#allocation4 + $0x58] sm:$0xff] %vm441, 0.0
      %740 = vst.msk [vmem:[#allocation4 + $0x60] sm:$0xff] %vm441, 0.0
      %741 = vst.msk [vmem:[#allocation4 + $0x68] sm:$0xff] %vm441, 0.0
      %742 = vst.msk [vmem:[#allocation4 + $0x70] sm:$0xff] %vm441, 0.0
      %743 = vst.msk [vmem:[#allocation4 + $0x78] sm:$0xff] %vm441, 0.0
      %744 = vst.msk [vmem:[#allocation4 + $0x80] sm:$0xff] %vm441, 0.0
      %745 = vst.msk [vmem:[#allocation4 + $0x88] sm:$0xff] %vm441, 0.0
      %746 = vst.msk [vmem:[#allocation4 + $0x90] sm:$0xff] %vm441, 0.0
      %747 = vst.msk [vmem:[#allocation4 + $0x98] sm:$0xff] %vm441, 0.0
      %v748 = vld [vmem:[%s1] sm:$0x7]
      %s749 = scalar_lea.vmem %s1, 4
      %v750 = vld [vmem:[%s749] sm:$0x7]
      %s751 = scalar_lea.vmem %s1, 8
      %v752 = vld [vmem:[%s751] sm:$0x7]
      %s753 = scalar_lea.vmem %s1, 12
      %v754 = vld [vmem:[%s753] sm:$0x7]
      %s755 = scalar_lea.vmem %s1, 16
      %v756 = vld [vmem:[%s755] sm:$0x7]
      %s757 = scalar_lea.vmem %s1, 20
      %v758 = vld [vmem:[%s757] sm:$0x7]
      %s759 = scalar_lea.vmem %s1, 24
      %v760 = vld [vmem:[%s759] sm:$0x7]
      %s761 = scalar_lea.vmem %s1, 28
      %v762 = vld [vmem:[%s761] sm:$0x7]
      %s763 = scalar_lea.vmem %s1, 32
      %v764 = vld [vmem:[%s763] sm:$0x7]
      %v765 = vld [vmem:[%s2] sm:$0x1]
      %v766 = vld [vmem:[%s3] sm:$0x1]
      loop: start=0, step=1, limit=40
      $region73: #{convnet_forward.1} parent=71 // loop_pre_header
        _
      $region74: #{convnet_forward.1} parent=71 // loop_header
        %s768 = sphi 0, %s772
        %p769 = scmp.ge.s32.totalorder %s768, 40
      $region75: #{convnet_forward.1} parent=71 // loop_header_branch
        %771 = sbr.rel (%p769) target = $region79
      $region76: #{convnet_forward.1} parent=71 // loop_body
        %s773 = smul.u32 %s768, 164
        %s774 = sadd.s32 %s773, 5
        %s775 = scalar_lea.vmem %s435, %s774
        %v776 = vld [vmem:[%s775] sm:$0xff]
        %v777 = vld [vmem:[%s775 + $0x8] sm:$0xff]
        %v778 = vld [vmem:[%s775 + $0x10] sm:$0xff]
        %v779 = vld [vmem:[%s775 + $0x18] sm:$0xff]
        %v780 = vld [vmem:[%s775 + $0x20] sm:$0xff]
        %v781 = vld [vmem:[%s775 + $0x28] sm:$0xff]
        %v782 = vld [vmem:[%s775 + $0x30] sm:$0xff]
        %v783 = vld [vmem:[%s775 + $0x38] sm:$0xff]
        %v784 = vld [vmem:[%s775 + $0x40] sm:$0xff]
        %v785 = vld [vmem:[%s775 + $0x48] sm:$0xff]
        %v786 = vld [vmem:[%s775 + $0x50] sm:$0xff]
        %v787 = vld [vmem:[%s775 + $0x58] sm:$0xff]
        %v788 = vld [vmem:[%s775 + $0x60] sm:$0xff]
        %v789 = vld [vmem:[%s775 + $0x68] sm:$0xff]
        %v790 = vld [vmem:[%s775 + $0x70] sm:$0xff]
        %v791 = vld [vmem:[%s775 + $0x78] sm:$0xff]
        %v792 = vld [vmem:[%s775 + $0x80] sm:$0xff]
        %v793 = vld [vmem:[%s775 + $0x88] sm:$0xff]
        %v794 = vld [vmem:[%s775 + $0x90] sm:$0xff]
        %v795 = vld [vmem:[%s775 + $0x98] sm:$0xff]
        %v796 = vld [vmem:[%s775 + $0xa0] sm:$0xf]
        %s797 = sadd.s32 %s773, 6
        %s798 = scalar_lea.vmem %s435, %s797
        %v799 = vld [vmem:[%s798] sm:$0xff]
        %v800 = vld [vmem:[%s798 + $0x8] sm:$0xff]
        %v801 = vld [vmem:[%s798 + $0x10] sm:$0xff]
        %v802 = vld [vmem:[%s798 + $0x18] sm:$0xff]
        %v803 = vld [vmem:[%s798 + $0x20] sm:$0xff]
        %v804 = vld [vmem:[%s798 + $0x28] sm:$0xff]
        %v805 = vld [vmem:[%s798 + $0x30] sm:$0xff]
        %v806 = vld [vmem:[%s798 + $0x38] sm:$0xff]
        %v807 = vld [vmem:[%s798 + $0x40] sm:$0xff]
        %v808 = vld [vmem:[%s798 + $0x48] sm:$0xff]
        %v809 = vld [vmem:[%s798 + $0x50] sm:$0xff]
        %v810 = vld [vmem:[%s798 + $0x58] sm:$0xff]
        %v811 = vld [vmem:[%s798 + $0x60] sm:$0xff]
        %v812 = vld [vmem:[%s798 + $0x68] sm:$0xff]
        %v813 = vld [vmem:[%s798 + $0x70] sm:$0xff]
        %v814 = vld [vmem:[%s798 + $0x78] sm:$0xff]
        %v815 = vld [vmem:[%s798 + $0x80] sm:$0xff]
        %v816 = vld [vmem:[%s798 + $0x88] sm:$0xff]
        %v817 = vld [vmem:[%s798 + $0x90] sm:$0xff]
        %v818 = vld [vmem:[%s798 + $0x98] sm:$0xff]
        %v819 = vld [vmem:[%s798 + $0xa0] sm:$0xf]
        %vm820 = vcmask 23552
        %v822 = vsel %vm820, %v799, 0
        %v825 = vsel %vm820, %v800, 0
        %v828 = vsel %vm820, %v801, 0
        %v831 = vsel %vm820, %v802, 0
        %v834 = vsel %vm820, %v803, 0
        %v837 = vsel %vm820, %v804, 0
        %v840 = vsel %vm820, %v805, 0
        %v843 = vsel %vm820, %v806, 0
        %v846 = vsel %vm820, %v807, 0
        %v849 = vsel %vm820, %v808, 0
        %v852 = vsel %vm820, %v809, 0
        %v855 = vsel %vm820, %v810, 0
        %v858 = vsel %vm820, %v811, 0
        %v861 = vsel %vm820, %v812, 0
        %v864 = vsel %vm820, %v813, 0
        %v867 = vsel %vm820, %v814, 0
        %v870 = vsel %vm820, %v815, 0
        %v873 = vsel %vm820, %v816, 0
        %v876 = vsel %vm820, %v817, 0
        %v879 = vsel %vm820, %v818, 0
        %v882 = vsel %vm820, %v819, 0
        %vm884 = vcmask 1042432
        %v886 = vsel %vm884, %v750, 0
        %888 = vmatprep.subr.mxu0 0.0
        %889 = vmatpush1.msra.mxu0 %v886
        %890 = vmatprep.subr.mxu0 0.0
        %891 = vmatpush1.msra.mxu0 0.0
        %892 = vmatprep.subr.mxu0 0.0
        %893 = vmatpush1.msra.mxu0 0.0
        %894 = vmatprep.subr.mxu0 0.0
        %895 = vmatpush1.msra.mxu0 0.0
        %896 = vmatprep.subr.mxu0 0.0
        %897 = vmatpush1.msra.mxu0 0.0
        %898 = vmatprep.subr.mxu0 0.0
        %899 = vmatpush1.msra.mxu0 0.0
        %900 = vmatprep.subr.mxu0 0.0
        %901 = vmatpush1.msra.mxu0 0.0
        %902 = vmatprep.subr.mxu0 0.0
        %903 = vmatpush1.msra.mxu0 0.0
        %904 = vmatprep.subr.mxu0 0.0
        %905 = vmatpush1.msra.mxu0 0.0
        %906 = vmatprep.subr.mxu0 0.0
        %907 = vmatpush1.msra.mxu0 0.0
        %908 = vmatprep.subr.mxu0 0.0
        %909 = vmatpush1.msra.mxu0 0.0
        %910 = vmatprep.subr.mxu0 0.0
        %911 = vmatpush1.msra.mxu0 0.0
        %912 = vmatprep.subr.mxu0 0.0
        %913 = vmatpush1.msra.mxu0 0.0
        %914 = vmatprep.subr.mxu0 0.0
        %915 = vmatpush1.msra.mxu0 0.0
        %916 = vmatprep.subr.mxu0 0.0
        %917 = vmatpush1.msra.mxu0 0.0
        %918 = vmatprep.subr.mxu0 0.0
        %919 = vmatpush1.msra.mxu0 0.0
        %920 = vmatprep.subr.mxu0 0.0
        %921 = vmatpush1.msra.mxu0 0.0
        %922 = vmatprep.subr.mxu0 0.0
        %923 = vmatpush1.msra.mxu0 0.0
        %924 = vmatprep.subr.mxu0 0.0
        %925 = vmatpush1.msra.mxu0 0.0
        %926 = vmatprep.subr.mxu0 0.0
        %927 = vmatpush1.msra.mxu0 0.0
        %928 = vmatprep.subr.mxu0 0.0
        %929 = vmatpush1.msra.mxu0 0.0
        %930 = vmatprep.subr.mxu0 0.0
        %931 = vmatpush1.msra.mxu0 0.0
        %932 = vmatprep.subr.mxu0 0.0
        %933 = vmatpush1.msra.mxu0 0.0
        %934 = vmatprep.subr.mxu0 0.0
        %935 = vmatpush1.msra.mxu0 0.0
        %936 = vmatprep.subr.mxu0 0.0
        %937 = vmatpush1.msra.mxu0 0.0
        %938 = vmatprep.subr.mxu0 0.0
        %939 = vmatpush1.msra.mxu0 0.0
        %940 = vmatprep.subr.mxu0 0.0
        %941 = vmatpush1.msra.mxu0 0.0
        %942 = vmatprep.subr.mxu0 0.0
        %943 = vmatpush1.msra.mxu0 0.0
        %944 = vmatprep.subr.mxu0 0.0
        %945 = vmatpush1.msra.mxu0 0.0
        %946 = vmatprep.subr.mxu0 0.0
        %947 = vmatpush1.msra.mxu0 0.0
        %948 = vmatprep.subr.mxu0 0.0
        %949 = vmatpush1.msra.mxu0 0.0
        %950 = vmatprep.subr.mxu0 0.0
        %951 = vmatpush1.msra.mxu0 0.0
        %952 = vmatprep.mubr.f32.mxu0 0.0
        %953 = vmatmul.mubr.f32.gmra.mrb[0].mxu0 %v822
        %v954 = vpop.f32.mrb[0].mxu0
        %v955 = vadd.f32 0.0, %v954
        %v956 = vpop.f32.mrb[0].mxu0
        %957 = vmatprep.mubr.f32.mxu0 0.0
        %958 = vmatmul.mubr.f32.gmra.mrb[0].mxu0 %v825
        %v959 = vpop.f32.mrb[0].mxu0
        %v960 = vadd.f32 0.0, %v959
        %v961 = vpop.f32.mrb[0].mxu0
        %962 = vmatprep.mubr.f32.mxu0 0.0
        %963 = vmatmul.mubr.f32.gmra.mrb[0].mxu0 %v828
        %v964 = vpop.f32.mrb[0].mxu0
        %v965 = vadd.f32 0.0, %v964
        %v966 = vpop.f32.mrb[0].mxu0
        %967 = vmatprep.mubr.f32.mxu0 0.0
        %968 = vmatmul.mubr.f32.gmra.mrb[0].mxu0 %v831
        %v969 = vpop.f32.mrb[0].mxu0
        %v970 = vadd.f32 0.0, %v969
        %v971 = vpop.f32.mrb[0].mxu0
        %972 = vmatprep.mubr.f32.mxu0 0.0
        %973 = vmatmul.mubr.f32.gmra.mrb[0].mxu0 %v834
        %v974 = vpop.f32.mrb[0].mxu0
        %v975 = vadd.f32 0.0, %v974
        %v976 = vpop.f32.mrb[0].mxu0
        %977 = vmatprep.mubr.f32.mxu0 0.0
        %978 = vmatmul.mubr.f32.gmra.mrb[0].mxu0 %v837
        %v979 = vpop.f32.mrb[0].mxu0
        %v980 = vadd.f32 0.0, %v979
        %v981 = vpop.f32.mrb[0].mxu0
        %982 = vmatprep.mubr.f32.mxu0 0.0
        %983 = vmatmul.mubr.f32.gmra.mrb[0].mxu0 %v840
        %v984 = vpop.f32.mrb[0].mxu0
        %v985 = vadd.f32 0.0, %v984
        %v986 = vpop.f32.mrb[0].mxu0
        %987 = vmatprep.mubr.f32.mxu0 0.0
        %988 = vmatmul.mubr.f32.gmra.mrb[0].mxu0 %v843
        %v989 = vpop.f32.mrb[0].mxu0
        %v990 = vadd.f32 0.0, %v989
        %v991 = vpop.f32.mrb[0].mxu0
        %992 = vmatprep.mubr.f32.mxu0 0.0
        %993 = vmatmul.mubr.f32.gmra.mrb[0].mxu0 %v846
        %v994 = vpop.f32.mrb[0].mxu0
        %v995 = vadd.f32 0.0, %v994
        %v996 = vpop.f32.mrb[0].mxu0
        %997 = vmatprep.mubr.f32.mxu0 0.0
        %998 = vmatmul.mubr.f32.gmra.mrb[0].mxu0 %v849
        %v999 = vpop.f32.mrb[0].mxu0
        %v1000 = vadd.f32 0.0, %v999
        %v1001 = vpop.f32.mrb[0].mxu0
        %1002 = vmatprep.mubr.f32.mxu0 0.0
        %1003 = vmatmul.mubr.f32.gmra.mrb[0].mxu0 %v852
        %v1004 = vpop.f32.mrb[0].mxu0
        %v1005 = vadd.f32 0.0, %v1004
        %v1006 = vpop.f32.mrb[0].mxu0
        %1007 = vmatprep.mubr.f32.mxu0 0.0
        %1008 = vmatmul.mubr.f32.gmra.mrb[0].mxu0 %v855
        %v1009 = vpop.f32.mrb[0].mxu0
        %v1010 = vadd.f32 0.0, %v1009
        %v1011 = vpop.f32.mrb[0].mxu0
        %1012 = vmatprep.mubr.f32.mxu0 0.0
        %1013 = vmatmul.mubr.f32.gmra.mrb[0].mxu0 %v858
        %v1014 = vpop.f32.mrb[0].mxu0
        %v1015 = vadd.f32 0.0, %v1014
        %v1016 = vpop.f32.mrb[0].mxu0
        %1017 = vmatprep.mubr.f32.mxu0 0.0
        %1018 = vmatmul.mubr.f32.gmra.mrb[0].mxu0 %v861
        %v1019 = vpop.f32.mrb[0].mxu0
        %v1020 = vadd.f32 0.0, %v1019
        %v1021 = vpop.f32.mrb[0].mxu0
        %1022 = vmatprep.mubr.f32.mxu0 0.0
        %1023 = vmatmul.mubr.f32.gmra.mrb[0].mxu0 %v864
        %v1024 = vpop.f32.mrb[0].mxu0
        %v1025 = vadd.f32 0.0, %v1024
        %v1026 = vpop.f32.mrb[0].mxu0
        %1027 = vmatprep.mubr.f32.mxu0 0.0
        %1028 = vmatmul.mubr.f32.gmra.mrb[0].mxu0 %v867
        %v1029 = vpop.f32.mrb[0].mxu0
        %v1030 = vadd.f32 0.0, %v1029
        %v1031 = vpop.f32.mrb[0].mxu0
        %1032 = vmatprep.mubr.f32.mxu0 0.0
        %1033 = vmatmul.mubr.f32.gmra.mrb[0].mxu0 %v870
        %v1034 = vpop.f32.mrb[0].mxu0
        %v1035 = vadd.f32 0.0, %v1034
        %v1036 = vpop.f32.mrb[0].mxu0
        %1037 = vmatprep.mubr.f32.mxu0 0.0
        %1038 = vmatmul.mubr.f32.gmra.mrb[0].mxu0 %v873
        %v1039 = vpop.f32.mrb[0].mxu0
        %v1040 = vadd.f32 0.0, %v1039
        %v1041 = vpop.f32.mrb[0].mxu0
        %1042 = vmatprep.mubr.f32.mxu0 0.0
        %1043 = vmatmul.mubr.f32.gmra.mrb[0].mxu0 %v876
        %v1044 = vpop.f32.mrb[0].mxu0
        %v1045 = vadd.f32 0.0, %v1044
        %v1046 = vpop.f32.mrb[0].mxu0
        %1047 = vmatprep.mubr.f32.mxu0 0.0
        %1048 = vmatmul.mubr.f32.gmra.mrb[0].mxu0 %v879
        %v1049 = vpop.f32.mrb[0].mxu0
        %v1050 = vadd.f32 0.0, %v1049
        %v1051 = vpop.f32.mrb[0].mxu0
        %1052 = vmatprep.mubr.f32.mxu0 0.0
        %1053 = vmatmul.mubr.f32.gmra.mrb[0].mxu0 %v882
        %v1054 = vpop.f32.mrb[0].mxu0
        %v1055 = vadd.f32 0.0, %v1054
        %v1056 = vpop.f32.mrb[0].mxu0
        %1057 = vdwg.mxu0
        %v1059 = vsel %vm820, %v776, 0
        %v1062 = vsel %vm820, %v777, 0
        %v1065 = vsel %vm820, %v778, 0
        %v1068 = vsel %vm820, %v779, 0
        %v1071 = vsel %vm820, %v780, 0
        %v1074 = vsel %vm820, %v781, 0
        %v1077 = vsel %vm820, %v782, 0
        %v1080 = vsel %vm820, %v783, 0
        %v1083 = vsel %vm820, %v784, 0
        %v1086 = vsel %vm820, %v785, 0
        %v1089 = vsel %vm820, %v786, 0
        %v1092 = vsel %vm820, %v787, 0
        %v1095 = vsel %vm820, %v788, 0
        %v1098 = vsel %vm820, %v789, 0
        %v1101 = vsel %vm820, %v790, 0
        %v1104 = vsel %vm820, %v791, 0
        %v1107 = vsel %vm820, %v792, 0
        %v1110 = vsel %vm820, %v793, 0
        %v1113 = vsel %vm820, %v794, 0
        %v1116 = vsel %vm820, %v795, 0
        %v1119 = vsel %vm820, %v796, 0
        %v1122 = vsel %vm884, %v748, 0
        %1124 = vmatprep.subr.mxu0 0.0
        %1125 = vmatpush1.msra.mxu0 %v1122
        %1126 = vmatprep.subr.mxu0 0.0
        %1127 = vmatpush1.msra.mxu0 0.0
        %1128 = vmatprep.subr.mxu0 0.0
        %1129 = vmatpush1.msra.mxu0 0.0
        %1130 = vmatprep.subr.mxu0 0.0
        %1131 = vmatpush1.msra.mxu0 0.0
        %1132 = vmatprep.subr.mxu0 0.0
        %1133 = vmatpush1.msra.mxu0 0.0
        %1134 = vmatprep.subr.mxu0 0.0
        %1135 = vmatpush1.msra.mxu0 0.0
        %1136 = vmatprep.subr.mxu0 0.0
        %1137 = vmatpush1.msra.mxu0 0.0
        %1138 = vmatprep.subr.mxu0 0.0
        %1139 = vmatpush1.msra.mxu0 0.0
        %1140 = vmatprep.subr.mxu0 0.0
        %1141 = vmatpush1.msra.mxu0 0.0
        %1142 = vmatprep.subr.mxu0 0.0
        %1143 = vmatpush1.msra.mxu0 0.0
        %1144 = vmatprep.subr.mxu0 0.0
        %1145 = vmatpush1.msra.mxu0 0.0
        %1146 = vmatprep.subr.mxu0 0.0
        %1147 = vmatpush1.msra.mxu0 0.0
        %1148 = vmatprep.subr.mxu0 0.0
        %1149 = vmatpush1.msra.mxu0 0.0
        %1150 = vmatprep.subr.mxu0 0.0
        %1151 = vmatpush1.msra.mxu0 0.0
        %1152 = vmatprep.subr.mxu0 0.0
        %1153 = vmatpush1.msra.mxu0 0.0
        %1154 = vmatprep.subr.mxu0 0.0
        %1155 = vmatpush1.msra.mxu0 0.0
        %1156 = vmatprep.subr.mxu0 0.0
        %1157 = vmatpush1.msra.mxu0 0.0
        %1158 = vmatprep.subr.mxu0 0.0
        %1159 = vmatpush1.msra.mxu0 0.0
        %1160 = vmatprep.subr.mxu0 0.0
        %1161 = vmatpush1.msra.mxu0 0.0
        %1162 = vmatprep.subr.mxu0 0.0
        %1163 = vmatpush1.msra.mxu0 0.0
        %1164 = vmatprep.subr.mxu0 0.0
        %1165 = vmatpush1.msra.mxu0 0.0
        %1166 = vmatprep.subr.mxu0 0.0
        %1167 = vmatpush1.msra.mxu0 0.0
        %1168 = vmatprep.subr.mxu0 0.0
        %1169 = vmatpush1.msra.mxu0 0.0
        %1170 = vmatprep.subr.mxu0 0.0
        %1171 = vmatpush1.msra.mxu0 0.0
        %1172 = vmatprep.subr.mxu0 0.0
        %1173 = vmatpush1.msra.mxu0 0.0
        %1174 = vmatprep.subr.mxu0 0.0
        %1175 = vmatpush1.msra.mxu0 0.0
        %1176 = vmatprep.subr.mxu0 0.0
        %1177 = vmatpush1.msra.mxu0 0.0
        %1178 = vmatprep.subr.mxu0 0.0
        %1179 = vmatpush1.msra.mxu0 0.0
        %1180 = vmatprep.subr.mxu0 0.0
        %1181 = vmatpush1.msra.mxu0 0.0
        %1182 = vmatprep.subr.mxu0 0.0
        %1183 = vmatpush1.msra.mxu0 0.0
        %1184 = vmatprep.subr.mxu0 0.0
        %1185 = vmatpush1.msra.mxu0 0.0
        %1186 = vmatprep.subr.mxu0 0.0
        %1187 = vmatpush1.msra.mxu0 0.0
        %1188 = vmatprep.mubr.f32.mxu0 0.0
        %1189 = vmatmul.mubr.f32.gmra.mrb[0].mxu0 %v1059
        %v1190 = vpop.f32.mrb[0].mxu0
        %v1191 = vadd.f32 %v955, %v1190
        %v1192 = vpop.f32.mrb[0].mxu0
        %1193 = vmatprep.mubr.f32.mxu0 0.0
        %1194 = vmatmul.mubr.f32.gmra.mrb[0].mxu0 %v1062
        %v1195 = vpop.f32.mrb[0].mxu0
        %v1196 = vadd.f32 %v960, %v1195
        %v1197 = vpop.f32.mrb[0].mxu0
        %1198 = vmatprep.mubr.f32.mxu0 0.0
        %1199 = vmatmul.mubr.f32.gmra.mrb[0].mxu0 %v1065
        %v1200 = vpop.f32.mrb[0].mxu0
        %v1201 = vadd.f32 %v965, %v1200
        %v1202 = vpop.f32.mrb[0].mxu0
        %1203 = vmatprep.mubr.f32.mxu0 0.0
        %1204 = vmatmul.mubr.f32.gmra.mrb[0].mxu0 %v1068
        %v1205 = vpop.f32.mrb[0].mxu0
        %v1206 = vadd.f32 %v970, %v1205
        %v1207 = vpop.f32.mrb[0].mxu0
        %1208 = vmatprep.mubr.f32.mxu0 0.0
        %1209 = vmatmul.mubr.f32.gmra.mrb[0].mxu0 %v1071
        %v1210 = vpop.f32.mrb[0].mxu0
        %v1211 = vadd.f32 %v975, %v1210
        %v1212 = vpop.f32.mrb[0].mxu0
        %1213 = vmatprep.mubr.f32.mxu0 0.0
        %1214 = vmatmul.mubr.f32.gmra.mrb[0].mxu0 %v1074
        %v1215 = vpop.f32.mrb[0].mxu0
        %v1216 = vadd.f32 %v980, %v1215
        %v1217 = vpop.f32.mrb[0].mxu0
        %1218 = vmatprep.mubr.f32.mxu0 0.0
        %1219 = vmatmul.mubr.f32.gmra.mrb[0].mxu0 %v1077
        %v1220 = vpop.f32.mrb[0].mxu0
        %v1221 = vadd.f32 %v985, %v1220
        %v1222 = vpop.f32.mrb[0].mxu0
        %1223 = vmatprep.mubr.f32.mxu0 0.0
        %1224 = vmatmul.mubr.f32.gmra.mrb[0].mxu0 %v1080
        %v1225 = vpop.f32.mrb[0].mxu0
        %v1226 = vadd.f32 %v990, %v1225
        %v1227 = vpop.f32.mrb[0].mxu0
        %1228 = vmatprep.mubr.f32.mxu0 0.0
        %1229 = vmatmul.mubr.f32.gmra.mrb[0].mxu0 %v1083
        %v1230 = vpop.f32.mrb[0].mxu0
        %v1231 = vadd.f32 %v995, %v1230
        %v1232 = vpop.f32.mrb[0].mxu0
        %1233 = vmatprep.mubr.f32.mxu0 0.0
        %1234 = vmatmul.mubr.f32.gmra.mrb[0].mxu0 %v1086
        %v1235 = vpop.f32.mrb[0].mxu0
        %v1236 = vadd.f32 %v1000, %v1235
        %v1237 = vpop.f32.mrb[0].mxu0
        %1238 = vmatprep.mubr.f32.mxu0 0.0
        %1239 = vmatmul.mubr.f32.gmra.mrb[0].mxu0 %v1089
        %v1240 = vpop.f32.mrb[0].mxu0
        %v1241 = vadd.f32 %v1005, %v1240
        %v1242 = vpop.f32.mrb[0].mxu0
        %1243 = vmatprep.mubr.f32.mxu0 0.0
        %1244 = vmatmul.mubr.f32.gmra.mrb[0].mxu0 %v1092
        %v1245 = vpop.f32.mrb[0].mxu0
        %v1246 = vadd.f32 %v1010, %v1245
        %v1247 = vpop.f32.mrb[0].mxu0
        %1248 = vmatprep.mubr.f32.mxu0 0.0
        %1249 = vmatmul.mubr.f32.gmra.mrb[0].mxu0 %v1095
        %v1250 = vpop.f32.mrb[0].mxu0
        %v1251 = vadd.f32 %v1015, %v1250
        %v1252 = vpop.f32.mrb[0].mxu0
        %1253 = vmatprep.mubr.f32.mxu0 0.0
        %1254 = vmatmul.mubr.f32.gmra.mrb[0].mxu0 %v1098
        %v1255 = vpop.f32.mrb[0].mxu0
        %v1256 = vadd.f32 %v1020, %v1255
        %v1257 = vpop.f32.mrb[0].mxu0
        %1258 = vmatprep.mubr.f32.mxu0 0.0
        %1259 = vmatmul.mubr.f32.gmra.mrb[0].mxu0 %v1101
        %v1260 = vpop.f32.mrb[0].mxu0
        %v1261 = vadd.f32 %v1025, %v1260
        %v1262 = vpop.f32.mrb[0].mxu0
        %1263 = vmatprep.mubr.f32.mxu0 0.0
        %1264 = vmatmul.mubr.f32.gmra.mrb[0].mxu0 %v1104
        %v1265 = vpop.f32.mrb[0].mxu0
        %v1266 = vadd.f32 %v1030, %v1265
        %v1267 = vpop.f32.mrb[0].mxu0
        %1268 = vmatprep.mubr.f32.mxu0 0.0
        %1269 = vmatmul.mubr.f32.gmra.mrb[0].mxu0 %v1107
        %v1270 = vpop.f32.mrb[0].mxu0
        %v1271 = vadd.f32 %v1035, %v1270
        %v1272 = vpop.f32.mrb[0].mxu0
        %1273 = vmatprep.mubr.f32.mxu0 0.0
        %1274 = vmatmul.mubr.f32.gmra.mrb[0].mxu0 %v1110
        %v1275 = vpop.f32.mrb[0].mxu0
        %v1276 = vadd.f32 %v1040, %v1275
        %v1277 = vpop.f32.mrb[0].mxu0
        %1278 = vmatprep.mubr.f32.mxu0 0.0
        %1279 = vmatmul.mubr.f32.gmra.mrb[0].mxu0 %v1113
        %v1280 = vpop.f32.mrb[0].mxu0
        %v1281 = vadd.f32 %v1045, %v1280
        %v1282 = vpop.f32.mrb[0].mxu0
        %1283 = vmatprep.mubr.f32.mxu0 0.0
        %1284 = vmatmul.mubr.f32.gmra.mrb[0].mxu0 %v1116
        %v1285 = vpop.f32.mrb[0].mxu0
        %v1286 = vadd.f32 %v1050, %v1285
        %v1287 = vpop.f32.mrb[0].mxu0
        %1288 = vmatprep.mubr.f32.mxu0 0.0
        %1289 = vmatmul.mubr.f32.gmra.mrb[0].mxu0 %v1119
        %v1290 = vpop.f32.mrb[0].mxu0
        %v1291 = vadd.f32 %v1055, %v1290
        %v1292 = vpop.f32.mrb[0].mxu0
        %1293 = vdwg.mxu0
        %s1294 = sadd.s32 %s773, 7
        %s1295 = scalar_lea.vmem %s435, %s1294
        %v1296 = vld [vmem:[%s1295] sm:$0xff]
        %v1297 = vld [vmem:[%s1295 + $0x8] sm:$0xff]
        %v1298 = vld [vmem:[%s1295 + $0x10] sm:$0xff]
        %v1299 = vld [vmem:[%s1295 + $0x18] sm:$0xff]
        %v1300 = vld [vmem:[%s1295 + $0x20] sm:$0xff]
        %v1301 = vld [vmem:[%s1295 + $0x28] sm:$0xff]
        %v1302 = vld [vmem:[%s1295 + $0x30] sm:$0xff]
        %v1303 = vld [vmem:[%s1295 + $0x38] sm:$0xff]
        %v1304 = vld [vmem:[%s1295 + $0x40] sm:$0xff]
        %v1305 = vld [vmem:[%s1295 + $0x48] sm:$0xff]
        %v1306 = vld [vmem:[%s1295 + $0x50] sm:$0xff]
        %v1307 = vld [vmem:[%s1295 + $0x58] sm:$0xff]
        %v1308 = vld [vmem:[%s1295 + $0x60] sm:$0xff]
        %v1309 = vld [vmem:[%s1295 + $0x68] sm:$0xff]
        %v1310 = vld [vmem:[%s1295 + $0x70] sm:$0xff]
        %v1311 = vld [vmem:[%s1295 + $0x78] sm:$0xff]
        %v1312 = vld [vmem:[%s1295 + $0x80] sm:$0xff]
        %v1313 = vld [vmem:[%s1295 + $0x88] sm:$0xff]
        %v1314 = vld [vmem:[%s1295 + $0x90] sm:$0xff]
        %v1315 = vld [vmem:[%s1295 + $0x98] sm:$0xff]
        %v1316 = vld [vmem:[%s1295 + $0xa0] sm:$0xf]
        %v1318 = vsel %vm820, %v1296, 0
        %v1321 = vsel %vm820, %v1297, 0
        %v1324 = vsel %vm820, %v1298, 0
        %v1327 = vsel %vm820, %v1299, 0
        %v1330 = vsel %vm820, %v1300, 0
        %v1333 = vsel %vm820, %v1301, 0
        %v1336 = vsel %vm820, %v1302, 0
        %v1339 = vsel %vm820, %v1303, 0
        %v1342 = vsel %vm820, %v1304, 0
        %v1345 = vsel %vm820, %v1305, 0
        %v1348 = vsel %vm820, %v1306, 0
        %v1351 = vsel %vm820, %v1307, 0
        %v1354 = vsel %vm820, %v1308, 0
        %v1357 = vsel %vm820, %v1309, 0
        %v1360 = vsel %vm820, %v1310, 0
        %v1363 = vsel %vm820, %v1311, 0
        %v1366 = vsel %vm820, %v1312, 0
        %v1369 = vsel %vm820, %v1313, 0
        %v1372 = vsel %vm820, %v1314, 0
        %v1375 = vsel %vm820, %v1315, 0
        %v1378 = vsel %vm820, %v1316, 0
        %v1381 = vsel %vm884, %v752, 0
        %1383 = vmatprep.subr.mxu0 0.0
        %1384 = vmatpush1.msra.mxu0 %v1381
        %1385 = vmatprep.subr.mxu0 0.0
        %1386 = vmatpush1.msra.mxu0 0.0
        %1387 = vmatprep.subr.mxu0 0.0
        %1388 = vmatpush1.msra.mxu0 0.0
        %1389 = vmatprep.subr.mxu0 0.0
        %1390 = vmatpush1.msra.mxu0 0.0
        %1391 = vmatprep.subr.mxu0 0.0
        %1392 = vmatpush1.msra.mxu0 0.0
        %1393 = vmatprep.subr.mxu0 0.0
        %1394 = vmatpush1.msra.mxu0 0.0
        %1395 = vmatprep.subr.mxu0 0.0
        %1396 = vmatpush1.msra.mxu0 0.0
        %1397 = vmatprep.subr.mxu0 0.0
        %1398 = vmatpush1.msra.mxu0 0.0
        %1399 = vmatprep.subr.mxu0 0.0
        %1400 = vmatpush1.msra.mxu0 0.0
        %1401 = vmatprep.subr.mxu0 0.0
        %1402 = vmatpush1.msra.mxu0 0.0
        %1403 = vmatprep.subr.mxu0 0.0
        %1404 = vmatpush1.msra.mxu0 0.0
        %1405 = vmatprep.subr.mxu0 0.0
        %1406 = vmatpush1.msra.mxu0 0.0
        %1407 = vmatprep.subr.mxu0 0.0
        %1408 = vmatpush1.msra.mxu0 0.0
        %1409 = vmatprep.subr.mxu0 0.0
        %1410 = vmatpush1.msra.mxu0 0.0
        %1411 = vmatprep.subr.mxu0 0.0
        %1412 = vmatpush1.msra.mxu0 0.0
        %1413 = vmatprep.subr.mxu0 0.0
        %1414 = vmatpush1.msra.mxu0 0.0
        %1415 = vmatprep.subr.mxu0 0.0
        %1416 = vmatpush1.msra.mxu0 0.0
        %1417 = vmatprep.subr.mxu0 0.0
        %1418 = vmatpush1.msra.mxu0 0.0
        %1419 = vmatprep.subr.mxu0 0.0
        %1420 = vmatpush1.msra.mxu0 0.0
        %1421 = vmatprep.subr.mxu0 0.0
        %1422 = vmatpush1.msra.mxu0 0.0
        %1423 = vmatprep.subr.mxu0 0.0
        %1424 = vmatpush1.msra.mxu0 0.0
        %1425 = vmatprep.subr.mxu0 0.0
        %1426 = vmatpush1.msra.mxu0 0.0
        %1427 = vmatprep.subr.mxu0 0.0
        %1428 = vmatpush1.msra.mxu0 0.0
        %1429 = vmatprep.subr.mxu0 0.0
        %1430 = vmatpush1.msra.mxu0 0.0
        %1431 = vmatprep.subr.mxu0 0.0
        %1432 = vmatpush1.msra.mxu0 0.0
        %1433 = vmatprep.subr.mxu0 0.0
        %1434 = vmatpush1.msra.mxu0 0.0
        %1435 = vmatprep.subr.mxu0 0.0
        %1436 = vmatpush1.msra.mxu0 0.0
        %1437 = vmatprep.subr.mxu0 0.0
        %1438 = vmatpush1.msra.mxu0 0.0
        %1439 = vmatprep.subr.mxu0 0.0
        %1440 = vmatpush1.msra.mxu0 0.0
        %1441 = vmatprep.subr.mxu0 0.0
        %1442 = vmatpush1.msra.mxu0 0.0
        %1443 = vmatprep.subr.mxu0 0.0
        %1444 = vmatpush1.msra.mxu0 0.0
        %1445 = vmatprep.subr.mxu0 0.0
        %1446 = vmatpush1.msra.mxu0 0.0
        %1447 = vmatprep.mubr.f32.mxu0 0.0
        %1448 = vmatmul.mubr.f32.gmra.mrb[0].mxu0 %v1318
        %v1449 = vpop.f32.mrb[0].mxu0
        %v1450 = vadd.f32 0.0, %v1449
        %v1451 = vpop.f32.mrb[0].mxu0
        %1452 = vmatprep.mubr.f32.mxu0 0.0
        %1453 = vmatmul.mubr.f32.gmra.mrb[0].mxu0 %v1321
        %v1454 = vpop.f32.mrb[0].mxu0
        %v1455 = vadd.f32 0.0, %v1454
        %v1456 = vpop.f32.mrb[0].mxu0
        %1457 = vmatprep.mubr.f32.mxu0 0.0
        %1458 = vmatmul.mubr.f32.gmra.mrb[0].mxu0 %v1324
        %v1459 = vpop.f32.mrb[0].mxu0
        %v1460 = vadd.f32 0.0, %v1459
        %v1461 = vpop.f32.mrb[0].mxu0
        %1462 = vmatprep.mubr.f32.mxu0 0.0
        %1463 = vmatmul.mubr.f32.gmra.mrb[0].mxu0 %v1327
        %v1464 = vpop.f32.mrb[0].mxu0
        %v1465 = vadd.f32 0.0, %v1464
        %v1466 = vpop.f32.mrb[0].mxu0
        %1467 = vmatprep.mubr.f32.mxu0 0.0
        %1468 = vmatmul.mubr.f32.gmra.mrb[0].mxu0 %v1330
        %v1469 = vpop.f32.mrb[0].mxu0
        %v1470 = vadd.f32 0.0, %v1469
        %v1471 = vpop.f32.mrb[0].mxu0
        %1472 = vmatprep.mubr.f32.mxu0 0.0
        %1473 = vmatmul.mubr.f32.gmra.mrb[0].mxu0 %v1333
        %v1474 = vpop.f32.mrb[0].mxu0
        %v1475 = vadd.f32 0.0, %v1474
        %v1476 = vpop.f32.mrb[0].mxu0
        %1477 = vmatprep.mubr.f32.mxu0 0.0
        %1478 = vmatmul.mubr.f32.gmra.mrb[0].mxu0 %v1336
        %v1479 = vpop.f32.mrb[0].mxu0
        %v1480 = vadd.f32 0.0, %v1479
        %v1481 = vpop.f32.mrb[0].mxu0
        %1482 = vmatprep.mubr.f32.mxu0 0.0
        %1483 = vmatmul.mubr.f32.gmra.mrb[0].mxu0 %v1339
        %v1484 = vpop.f32.mrb[0].mxu0
        %v1485 = vadd.f32 0.0, %v1484
        %v1486 = vpop.f32.mrb[0].mxu0
        %1487 = vmatprep.mubr.f32.mxu0 0.0
        %1488 = vmatmul.mubr.f32.gmra.mrb[0].mxu0 %v1342
        %v1489 = vpop.f32.mrb[0].mxu0
        %v1490 = vadd.f32 0.0, %v1489
        %v1491 = vpop.f32.mrb[0].mxu0
        %1492 = vmatprep.mubr.f32.mxu0 0.0
        %1493 = vmatmul.mubr.f32.gmra.mrb[0].mxu0 %v1345
        %v1494 = vpop.f32.mrb[0].mxu0
        %v1495 = vadd.f32 0.0, %v1494
        %v1496 = vpop.f32.mrb[0].mxu0
        %1497 = vmatprep.mubr.f32.mxu0 0.0
        %1498 = vmatmul.mubr.f32.gmra.mrb[0].mxu0 %v1348
        %v1499 = vpop.f32.mrb[0].mxu0
        %v1500 = vadd.f32 0.0, %v1499
        %v1501 = vpop.f32.mrb[0].mxu0
        %1502 = vmatprep.mubr.f32.mxu0 0.0
        %1503 = vmatmul.mubr.f32.gmra.mrb[0].mxu0 %v1351
        %v1504 = vpop.f32.mrb[0].mxu0
        %v1505 = vadd.f32 0.0, %v1504
        %v1506 = vpop.f32.mrb[0].mxu0
        %1507 = vmatprep.mubr.f32.mxu0 0.0
        %1508 = vmatmul.mubr.f32.gmra.mrb[0].mxu0 %v1354
        %v1509 = vpop.f32.mrb[0].mxu0
        %v1510 = vadd.f32 0.0, %v1509
        %v1511 = vpop.f32.mrb[0].mxu0
        %1512 = vmatprep.mubr.f32.mxu0 0.0
        %1513 = vmatmul.mubr.f32.gmra.mrb[0].mxu0 %v1357
        %v1514 = vpop.f32.mrb[0].mxu0
        %v1515 = vadd.f32 0.0, %v1514
        %v1516 = vpop.f32.mrb[0].mxu0
        %1517 = vmatprep.mubr.f32.mxu0 0.0
        %1518 = vmatmul.mubr.f32.gmra.mrb[0].mxu0 %v1360
        %v1519 = vpop.f32.mrb[0].mxu0
        %v1520 = vadd.f32 0.0, %v1519
        %v1521 = vpop.f32.mrb[0].mxu0
        %1522 = vmatprep.mubr.f32.mxu0 0.0
        %1523 = vmatmul.mubr.f32.gmra.mrb[0].mxu0 %v1363
        %v1524 = vpop.f32.mrb[0].mxu0
        %v1525 = vadd.f32 0.0, %v1524
        %v1526 = vpop.f32.mrb[0].mxu0
        %1527 = vmatprep.mubr.f32.mxu0 0.0
        %1528 = vmatmul.mubr.f32.gmra.mrb[0].mxu0 %v1366
        %v1529 = vpop.f32.mrb[0].mxu0
        %v1530 = vadd.f32 0.0, %v1529
        %v1531 = vpop.f32.mrb[0].mxu0
        %1532 = vmatprep.mubr.f32.mxu0 0.0
        %1533 = vmatmul.mubr.f32.gmra.mrb[0].mxu0 %v1369
        %v1534 = vpop.f32.mrb[0].mxu0
        %v1535 = vadd.f32 0.0, %v1534
        %v1536 = vpop.f32.mrb[0].mxu0
        %1537 = vmatprep.mubr.f32.mxu0 0.0
        %1538 = vmatmul.mubr.f32.gmra.mrb[0].mxu0 %v1372
        %v1539 = vpop.f32.mrb[0].mxu0
        %v1540 = vadd.f32 0.0, %v1539
        %v1541 = vpop.f32.mrb[0].mxu0
        %1542 = vmatprep.mubr.f32.mxu0 0.0
        %1543 = vmatmul.mubr.f32.gmra.mrb[0].mxu0 %v1375
        %v1544 = vpop.f32.mrb[0].mxu0
        %v1545 = vadd.f32 0.0, %v1544
        %v1546 = vpop.f32.mrb[0].mxu0
        %1547 = vmatprep.mubr.f32.mxu0 0.0
        %1548 = vmatmul.mubr.f32.gmra.mrb[0].mxu0 %v1378
        %v1549 = vpop.f32.mrb[0].mxu0
        %v1550 = vadd.f32 0.0, %v1549
        %v1551 = vpop.f32.mrb[0].mxu0
        %1552 = vdwg.mxu0
        %v1553 = vadd.f32 %v1191, %v1450
        %v1554 = vadd.f32 %v1196, %v1455
        %v1555 = vadd.f32 %v1201, %v1460
        %v1556 = vadd.f32 %v1206, %v1465
        %v1557 = vadd.f32 %v1211, %v1470
        %v1558 = vadd.f32 %v1216, %v1475
        %v1559 = vadd.f32 %v1221, %v1480
        %v1560 = vadd.f32 %v1226, %v1485
        %v1561 = vadd.f32 %v1231, %v1490
        %v1562 = vadd.f32 %v1236, %v1495
        %v1563 = vadd.f32 %v1241, %v1500
        %v1564 = vadd.f32 %v1246, %v1505
        %v1565 = vadd.f32 %v1251, %v1510
        %v1566 = vadd.f32 %v1256, %v1515
        %v1567 = vadd.f32 %v1261, %v1520
        %v1568 = vadd.f32 %v1266, %v1525
        %v1569 = vadd.f32 %v1271, %v1530
        %v1570 = vadd.f32 %v1276, %v1535
        %v1571 = vadd.f32 %v1281, %v1540
        %v1572 = vadd.f32 %v1286, %v1545
        %v1573 = vadd.f32 %v1291, %v1550
        %s1574 = sadd.s32 %s773, 87
        %s1575 = scalar_lea.vmem %s435, %s1574
        %v1576 = vld [vmem:[%s1575] sm:$0xff]
        %v1577 = vld [vmem:[%s1575 + $0x8] sm:$0xff]
        %v1578 = vld [vmem:[%s1575 + $0x10] sm:$0xff]
        %v1579 = vld [vmem:[%s1575 + $0x18] sm:$0xff]
        %v1580 = vld [vmem:[%s1575 + $0x20] sm:$0xff]
        %v1581 = vld [vmem:[%s1575 + $0x28] sm:$0xff]
        %v1582 = vld [vmem:[%s1575 + $0x30] sm:$0xff]
        %v1583 = vld [vmem:[%s1575 + $0x38] sm:$0xff]
        %v1584 = vld [vmem:[%s1575 + $0x40] sm:$0xff]
        %v1585 = vld [vmem:[%s1575 + $0x48] sm:$0xff]
        %v1586 = vld [vmem:[%s1575 + $0x50] sm:$0xff]
        %v1587 = vld [vmem:[%s1575 + $0x58] sm:$0xff]
        %v1588 = vld [vmem:[%s1575 + $0x60] sm:$0xff]
        %v1589 = vld [vmem:[%s1575 + $0x68] sm:$0xff]
        %v1590 = vld [vmem:[%s1575 + $0x70] sm:$0xff]
        %v1591 = vld [vmem:[%s1575 + $0x78] sm:$0xff]
        %v1592 = vld [vmem:[%s1575 + $0x80] sm:$0xff]
        %v1593 = vld [vmem:[%s1575 + $0x88] sm:$0xff]
        %v1594 = vld [vmem:[%s1575 + $0x90] sm:$0xff]
        %v1595 = vld [vmem:[%s1575 + $0x98] sm:$0xff]
        %v1596 = vld [vmem:[%s1575 + $0xa0] sm:$0xf]
        %v1598 = vsel %vm820, %v1576, 0
        %v1601 = vsel %vm820, %v1577, 0
        %v1604 = vsel %vm820, %v1578, 0
        %v1607 = vsel %vm820, %v1579, 0
        %v1610 = vsel %vm820, %v1580, 0
        %v1613 = vsel %vm820, %v1581, 0
        %v1616 = vsel %vm820, %v1582, 0
        %v1619 = vsel %vm820, %v1583, 0
        %v1622 = vsel %vm820, %v1584, 0
        %v1625 = vsel %vm820, %v1585, 0
        %v1628 = vsel %vm820, %v1586, 0
        %v1631 = vsel %vm820, %v1587, 0
        %v1634 = vsel %vm820, %v1588, 0
        %v1637 = vsel %vm820, %v1589, 0
        %v1640 = vsel %vm820, %v1590, 0
        %v1643 = vsel %vm820, %v1591, 0
        %v1646 = vsel %vm820, %v1592, 0
        %v1649 = vsel %vm820, %v1593, 0
        %v1652 = vsel %vm820, %v1594, 0
        %v1655 = vsel %vm820, %v1595, 0
        %v1658 = vsel %vm820, %v1596, 0
        %v1661 = vsel %vm884, %v754, 0
        %1663 = vmatprep.subr.mxu0 0.0
        %1664 = vmatpush1.msra.mxu0 %v1661
        %1665 = vmatprep.subr.mxu0 0.0
        %1666 = vmatpush1.msra.mxu0 0.0
        %1667 = vmatprep.subr.mxu0 0.0
        %1668 = vmatpush1.msra.mxu0 0.0
        %1669 = vmatprep.subr.mxu0 0.0
        %1670 = vmatpush1.msra.mxu0 0.0
        %1671 = vmatprep.subr.mxu0 0.0
        %1672 = vmatpush1.msra.mxu0 0.0
        %1673 = vmatprep.subr.mxu0 0.0
        %1674 = vmatpush1.msra.mxu0 0.0
        %1675 = vmatprep.subr.mxu0 0.0
        %1676 = vmatpush1.msra.mxu0 0.0
        %1677 = vmatprep.subr.mxu0 0.0
        %1678 = vmatpush1.msra.mxu0 0.0
        %1679 = vmatprep.subr.mxu0 0.0
        %1680 = vmatpush1.msra.mxu0 0.0
        %1681 = vmatprep.subr.mxu0 0.0
        %1682 = vmatpush1.msra.mxu0 0.0
        %1683 = vmatprep.subr.mxu0 0.0
        %1684 = vmatpush1.msra.mxu0 0.0
        %1685 = vmatprep.subr.mxu0 0.0
        %1686 = vmatpush1.msra.mxu0 0.0
        %1687 = vmatprep.subr.mxu0 0.0
        %1688 = vmatpush1.msra.mxu0 0.0
        %1689 = vmatprep.subr.mxu0 0.0
        %1690 = vmatpush1.msra.mxu0 0.0
        %1691 = vmatprep.subr.mxu0 0.0
        %1692 = vmatpush1.msra.mxu0 0.0
        %1693 = vmatprep.subr.mxu0 0.0
        %1694 = vmatpush1.msra.mxu0 0.0
        %1695 = vmatprep.subr.mxu0 0.0
        %1696 = vmatpush1.msra.mxu0 0.0
        %1697 = vmatprep.subr.mxu0 0.0
        %1698 = vmatpush1.msra.mxu0 0.0
        %1699 = vmatprep.subr.mxu0 0.0
        %1700 = vmatpush1.msra.mxu0 0.0
        %1701 = vmatprep.subr.mxu0 0.0
        %1702 = vmatpush1.msra.mxu0 0.0
        %1703 = vmatprep.subr.mxu0 0.0
        %1704 = vmatpush1.msra.mxu0 0.0
        %1705 = vmatprep.subr.mxu0 0.0
        %1706 = vmatpush1.msra.mxu0 0.0
        %1707 = vmatprep.subr.mxu0 0.0
        %1708 = vmatpush1.msra.mxu0 0.0
        %1709 = vmatprep.subr.mxu0 0.0
        %1710 = vmatpush1.msra.mxu0 0.0
        %1711 = vmatprep.subr.mxu0 0.0
        %1712 = vmatpush1.msra.mxu0 0.0
        %1713 = vmatprep.subr.mxu0 0.0
        %1714 = vmatpush1.msra.mxu0 0.0
        %1715 = vmatprep.subr.mxu0 0.0
        %1716 = vmatpush1.msra.mxu0 0.0
        %1717 = vmatprep.subr.mxu0 0.0
        %1718 = vmatpush1.msra.mxu0 0.0
        %1719 = vmatprep.subr.mxu0 0.0
        %1720 = vmatpush1.msra.mxu0 0.0
        %1721 = vmatprep.subr.mxu0 0.0
        %1722 = vmatpush1.msra.mxu0 0.0
        %1723 = vmatprep.subr.mxu0 0.0
        %1724 = vmatpush1.msra.mxu0 0.0
        %1725 = vmatprep.subr.mxu0 0.0
        %1726 = vmatpush1.msra.mxu0 0.0
        %1727 = vmatprep.mubr.f32.mxu0 0.0
        %1728 = vmatmul.mubr.f32.gmra.mrb[0].mxu0 %v1598
        %v1729 = vpop.f32.mrb[0].mxu0
        %v1730 = vadd.f32 0.0, %v1729
        %v1731 = vpop.f32.mrb[0].mxu0
        %1732 = vmatprep.mubr.f32.mxu0 0.0
        %1733 = vmatmul.mubr.f32.gmra.mrb[0].mxu0 %v1601
        %v1734 = vpop.f32.mrb[0].mxu0
        %v1735 = vadd.f32 0.0, %v1734
        %v1736 = vpop.f32.mrb[0].mxu0
        %1737 = vmatprep.mubr.f32.mxu0 0.0
        %1738 = vmatmul.mubr.f32.gmra.mrb[0].mxu0 %v1604
        %v1739 = vpop.f32.mrb[0].mxu0
        %v1740 = vadd.f32 0.0, %v1739
        %v1741 = vpop.f32.mrb[0].mxu0
        %1742 = vmatprep.mubr.f32.mxu0 0.0
        %1743 = vmatmul.mubr.f32.gmra.mrb[0].mxu0 %v1607
        %v1744 = vpop.f32.mrb[0].mxu0
        %v1745 = vadd.f32 0.0, %v1744
        %v1746 = vpop.f32.mrb[0].mxu0
        %1747 = vmatprep.mubr.f32.mxu0 0.0
        %1748 = vmatmul.mubr.f32.gmra.mrb[0].mxu0 %v1610
        %v1749 = vpop.f32.mrb[0].mxu0
        %v1750 = vadd.f32 0.0, %v1749
        %v1751 = vpop.f32.mrb[0].mxu0
        %1752 = vmatprep.mubr.f32.mxu0 0.0
        %1753 = vmatmul.mubr.f32.gmra.mrb[0].mxu0 %v1613
        %v1754 = vpop.f32.mrb[0].mxu0
        %v1755 = vadd.f32 0.0, %v1754
        %v1756 = vpop.f32.mrb[0].mxu0
        %1757 = vmatprep.mubr.f32.mxu0 0.0
        %1758 = vmatmul.mubr.f32.gmra.mrb[0].mxu0 %v1616
        %v1759 = vpop.f32.mrb[0].mxu0
        %v1760 = vadd.f32 0.0, %v1759
        %v1761 = vpop.f32.mrb[0].mxu0
        %1762 = vmatprep.mubr.f32.mxu0 0.0
        %1763 = vmatmul.mubr.f32.gmra.mrb[0].mxu0 %v1619
        %v1764 = vpop.f32.mrb[0].mxu0
        %v1765 = vadd.f32 0.0, %v1764
        %v1766 = vpop.f32.mrb[0].mxu0
        %1767 = vmatprep.mubr.f32.mxu0 0.0
        %1768 = vmatmul.mubr.f32.gmra.mrb[0].mxu0 %v1622
        %v1769 = vpop.f32.mrb[0].mxu0
        %v1770 = vadd.f32 0.0, %v1769
        %v1771 = vpop.f32.mrb[0].mxu0
        %1772 = vmatprep.mubr.f32.mxu0 0.0
        %1773 = vmatmul.mubr.f32.gmra.mrb[0].mxu0 %v1625
        %v1774 = vpop.f32.mrb[0].mxu0
        %v1775 = vadd.f32 0.0, %v1774
        %v1776 = vpop.f32.mrb[0].mxu0
        %1777 = vmatprep.mubr.f32.mxu0 0.0
        %1778 = vmatmul.mubr.f32.gmra.mrb[0].mxu0 %v1628
        %v1779 = vpop.f32.mrb[0].mxu0
        %v1780 = vadd.f32 0.0, %v1779
        %v1781 = vpop.f32.mrb[0].mxu0
        %1782 = vmatprep.mubr.f32.mxu0 0.0
        %1783 = vmatmul.mubr.f32.gmra.mrb[0].mxu0 %v1631
        %v1784 = vpop.f32.mrb[0].mxu0
        %v1785 = vadd.f32 0.0, %v1784
        %v1786 = vpop.f32.mrb[0].mxu0
        %1787 = vmatprep.mubr.f32.mxu0 0.0
        %1788 = vmatmul.mubr.f32.gmra.mrb[0].mxu0 %v1634
        %v1789 = vpop.f32.mrb[0].mxu0
        %v1790 = vadd.f32 0.0, %v1789
        %v1791 = vpop.f32.mrb[0].mxu0
        %1792 = vmatprep.mubr.f32.mxu0 0.0
        %1793 = vmatmul.mubr.f32.gmra.mrb[0].mxu0 %v1637
        %v1794 = vpop.f32.mrb[0].mxu0
        %v1795 = vadd.f32 0.0, %v1794
        %v1796 = vpop.f32.mrb[0].mxu0
        %1797 = vmatprep.mubr.f32.mxu0 0.0
        %1798 = vmatmul.mubr.f32.gmra.mrb[0].mxu0 %v1640
        %v1799 = vpop.f32.mrb[0].mxu0
        %v1800 = vadd.f32 0.0, %v1799
        %v1801 = vpop.f32.mrb[0].mxu0
        %1802 = vmatprep.mubr.f32.mxu0 0.0
        %1803 = vmatmul.mubr.f32.gmra.mrb[0].mxu0 %v1643
        %v1804 = vpop.f32.mrb[0].mxu0
        %v1805 = vadd.f32 0.0, %v1804
        %v1806 = vpop.f32.mrb[0].mxu0
        %1807 = vmatprep.mubr.f32.mxu0 0.0
        %1808 = vmatmul.mubr.f32.gmra.mrb[0].mxu0 %v1646
        %v1809 = vpop.f32.mrb[0].mxu0
        %v1810 = vadd.f32 0.0, %v1809
        %v1811 = vpop.f32.mrb[0].mxu0
        %1812 = vmatprep.mubr.f32.mxu0 0.0
        %1813 = vmatmul.mubr.f32.gmra.mrb[0].mxu0 %v1649
        %v1814 = vpop.f32.mrb[0].mxu0
        %v1815 = vadd.f32 0.0, %v1814
        %v1816 = vpop.f32.mrb[0].mxu0
        %1817 = vmatprep.mubr.f32.mxu0 0.0
        %1818 = vmatmul.mubr.f32.gmra.mrb[0].mxu0 %v1652
        %v1819 = vpop.f32.mrb[0].mxu0
        %v1820 = vadd.f32 0.0, %v1819
        %v1821 = vpop.f32.mrb[0].mxu0
        %1822 = vmatprep.mubr.f32.mxu0 0.0
        %1823 = vmatmul.mubr.f32.gmra.mrb[0].mxu0 %v1655
        %v1824 = vpop.f32.mrb[0].mxu0
        %v1825 = vadd.f32 0.0, %v1824
        %v1826 = vpop.f32.mrb[0].mxu0
        %1827 = vmatprep.mubr.f32.mxu0 0.0
        %1828 = vmatmul.mubr.f32.gmra.mrb[0].mxu0 %v1658
        %v1829 = vpop.f32.mrb[0].mxu0
        %v1830 = vadd.f32 0.0, %v1829
        %v1831 = vpop.f32.mrb[0].mxu0
        %1832 = vdwg.mxu0
        %v1833 = vadd.f32 %v1553, %v1730
        %v1834 = vadd.f32 %v1554, %v1735
        %v1835 = vadd.f32 %v1555, %v1740
        %v1836 = vadd.f32 %v1556, %v1745
        %v1837 = vadd.f32 %v1557, %v1750
        %v1838 = vadd.f32 %v1558, %v1755
        %v1839 = vadd.f32 %v1559, %v1760
        %v1840 = vadd.f32 %v1560, %v1765
        %v1841 = vadd.f32 %v1561, %v1770
        %v1842 = vadd.f32 %v1562, %v1775
        %v1843 = vadd.f32 %v1563, %v1780
        %v1844 = vadd.f32 %v1564, %v1785
        %v1845 = vadd.f32 %v1565, %v1790
        %v1846 = vadd.f32 %v1566, %v1795
        %v1847 = vadd.f32 %v1567, %v1800
        %v1848 = vadd.f32 %v1568, %v1805
        %v1849 = vadd.f32 %v1569, %v1810
        %v1850 = vadd.f32 %v1570, %v1815
        %v1851 = vadd.f32 %v1571, %v1820
        %v1852 = vadd.f32 %v1572, %v1825
        %v1853 = vadd.f32 %v1573, %v1830
        %s1854 = sadd.s32 %s773, 88
        %s1855 = scalar_lea.vmem %s435, %s1854
        %v1856 = vld [vmem:[%s1855] sm:$0xff]
        %v1857 = vld [vmem:[%s1855 + $0x8] sm:$0xff]
        %v1858 = vld [vmem:[%s1855 + $0x10] sm:$0xff]
        %v1859 = vld [vmem:[%s1855 + $0x18] sm:$0xff]
        %v1860 = vld [vmem:[%s1855 + $0x20] sm:$0xff]
        %v1861 = vld [vmem:[%s1855 + $0x28] sm:$0xff]
        %v1862 = vld [vmem:[%s1855 + $0x30] sm:$0xff]
        %v1863 = vld [vmem:[%s1855 + $0x38] sm:$0xff]
        %v1864 = vld [vmem:[%s1855 + $0x40] sm:$0xff]
        %v1865 = vld [vmem:[%s1855 + $0x48] sm:$0xff]
        %v1866 = vld [vmem:[%s1855 + $0x50] sm:$0xff]
        %v1867 = vld [vmem:[%s1855 + $0x58] sm:$0xff]
        %v1868 = vld [vmem:[%s1855 + $0x60] sm:$0xff]
        %v1869 = vld [vmem:[%s1855 + $0x68] sm:$0xff]
        %v1870 = vld [vmem:[%s1855 + $0x70] sm:$0xff]
        %v1871 = vld [vmem:[%s1855 + $0x78] sm:$0xff]
        %v1872 = vld [vmem:[%s1855 + $0x80] sm:$0xff]
        %v1873 = vld [vmem:[%s1855 + $0x88] sm:$0xff]
        %v1874 = vld [vmem:[%s1855 + $0x90] sm:$0xff]
        %v1875 = vld [vmem:[%s1855 + $0x98] sm:$0xff]
        %v1876 = vld [vmem:[%s1855 + $0xa0] sm:$0xf]
        %v1878 = vsel %vm820, %v1856, 0
        %v1881 = vsel %vm820, %v1857, 0
        %v1884 = vsel %vm820, %v1858, 0
        %v1887 = vsel %vm820, %v1859, 0
        %v1890 = vsel %vm820, %v1860, 0
        %v1893 = vsel %vm820, %v1861, 0
        %v1896 = vsel %vm820, %v1862, 0
        %v1899 = vsel %vm820, %v1863, 0
        %v1902 = vsel %vm820, %v1864, 0
        %v1905 = vsel %vm820, %v1865, 0
        %v1908 = vsel %vm820, %v1866, 0
        %v1911 = vsel %vm820, %v1867, 0
        %v1914 = vsel %vm820, %v1868, 0
        %v1917 = vsel %vm820, %v1869, 0
        %v1920 = vsel %vm820, %v1870, 0
        %v1923 = vsel %vm820, %v1871, 0
        %v1926 = vsel %vm820, %v1872, 0
        %v1929 = vsel %vm820, %v1873, 0
        %v1932 = vsel %vm820, %v1874, 0
        %v1935 = vsel %vm820, %v1875, 0
        %v1938 = vsel %vm820, %v1876, 0
        %v1941 = vsel %vm884, %v756, 0
        %1943 = vmatprep.subr.mxu0 0.0
        %1944 = vmatpush1.msra.mxu0 %v1941
        %1945 = vmatprep.subr.mxu0 0.0
        %1946 = vmatpush1.msra.mxu0 0.0
        %1947 = vmatprep.subr.mxu0 0.0
        %1948 = vmatpush1.msra.mxu0 0.0
        %1949 = vmatprep.subr.mxu0 0.0
        %1950 = vmatpush1.msra.mxu0 0.0
        %1951 = vmatprep.subr.mxu0 0.0
        %1952 = vmatpush1.msra.mxu0 0.0
        %1953 = vmatprep.subr.mxu0 0.0
        %1954 = vmatpush1.msra.mxu0 0.0
        %1955 = vmatprep.subr.mxu0 0.0
        %1956 = vmatpush1.msra.mxu0 0.0
        %1957 = vmatprep.subr.mxu0 0.0
        %1958 = vmatpush1.msra.mxu0 0.0
        %1959 = vmatprep.subr.mxu0 0.0
        %1960 = vmatpush1.msra.mxu0 0.0
        %1961 = vmatprep.subr.mxu0 0.0
        %1962 = vmatpush1.msra.mxu0 0.0
        %1963 = vmatprep.subr.mxu0 0.0
        %1964 = vmatpush1.msra.mxu0 0.0
        %1965 = vmatprep.subr.mxu0 0.0
        %1966 = vmatpush1.msra.mxu0 0.0
        %1967 = vmatprep.subr.mxu0 0.0
        %1968 = vmatpush1.msra.mxu0 0.0
        %1969 = vmatprep.subr.mxu0 0.0
        %1970 = vmatpush1.msra.mxu0 0.0
        %1971 = vmatprep.subr.mxu0 0.0
        %1972 = vmatpush1.msra.mxu0 0.0
        %1973 = vmatprep.subr.mxu0 0.0
        %1974 = vmatpush1.msra.mxu0 0.0
        %1975 = vmatprep.subr.mxu0 0.0
        %1976 = vmatpush1.msra.mxu0 0.0
        %1977 = vmatprep.subr.mxu0 0.0
        %1978 = vmatpush1.msra.mxu0 0.0
        %1979 = vmatprep.subr.mxu0 0.0
        %1980 = vmatpush1.msra.mxu0 0.0
        %1981 = vmatprep.subr.mxu0 0.0
        %1982 = vmatpush1.msra.mxu0 0.0
        %1983 = vmatprep.subr.mxu0 0.0
        %1984 = vmatpush1.msra.mxu0 0.0
        %1985 = vmatprep.subr.mxu0 0.0
        %1986 = vmatpush1.msra.mxu0 0.0
        %1987 = vmatprep.subr.mxu0 0.0
        %1988 = vmatpush1.msra.mxu0 0.0
        %1989 = vmatprep.subr.mxu0 0.0
        %1990 = vmatpush1.msra.mxu0 0.0
        %1991 = vmatprep.subr.mxu0 0.0
        %1992 = vmatpush1.msra.mxu0 0.0
        %1993 = vmatprep.subr.mxu0 0.0
        %1994 = vmatpush1.msra.mxu0 0.0
        %1995 = vmatprep.subr.mxu0 0.0
        %1996 = vmatpush1.msra.mxu0 0.0
        %1997 = vmatprep.subr.mxu0 0.0
        %1998 = vmatpush1.msra.mxu0 0.0
        %1999 = vmatprep.subr.mxu0 0.0
        %2000 = vmatpush1.msra.mxu0 0.0
        %2001 = vmatprep.subr.mxu0 0.0
        %2002 = vmatpush1.msra.mxu0 0.0
        %2003 = vmatprep.subr.mxu0 0.0
        %2004 = vmatpush1.msra.mxu0 0.0
        %2005 = vmatprep.subr.mxu0 0.0
        %2006 = vmatpush1.msra.mxu0 0.0
        %2007 = vmatprep.mubr.f32.mxu0 0.0
        %2008 = vmatmul.mubr.f32.gmra.mrb[0].mxu0 %v1878
        %v2009 = vpop.f32.mrb[0].mxu0
        %v2010 = vadd.f32 0.0, %v2009
        %v2011 = vpop.f32.mrb[0].mxu0
        %2012 = vmatprep.mubr.f32.mxu0 0.0
        %2013 = vmatmul.mubr.f32.gmra.mrb[0].mxu0 %v1881
        %v2014 = vpop.f32.mrb[0].mxu0
        %v2015 = vadd.f32 0.0, %v2014
        %v2016 = vpop.f32.mrb[0].mxu0
        %2017 = vmatprep.mubr.f32.mxu0 0.0
        %2018 = vmatmul.mubr.f32.gmra.mrb[0].mxu0 %v1884
        %v2019 = vpop.f32.mrb[0].mxu0
        %v2020 = vadd.f32 0.0, %v2019
        %v2021 = vpop.f32.mrb[0].mxu0
        %2022 = vmatprep.mubr.f32.mxu0 0.0
        %2023 = vmatmul.mubr.f32.gmra.mrb[0].mxu0 %v1887
        %v2024 = vpop.f32.mrb[0].mxu0
        %v2025 = vadd.f32 0.0, %v2024
        %v2026 = vpop.f32.mrb[0].mxu0
        %2027 = vmatprep.mubr.f32.mxu0 0.0
        %2028 = vmatmul.mubr.f32.gmra.mrb[0].mxu0 %v1890
        %v2029 = vpop.f32.mrb[0].mxu0
        %v2030 = vadd.f32 0.0, %v2029
        %v2031 = vpop.f32.mrb[0].mxu0
        %2032 = vmatprep.mubr.f32.mxu0 0.0
        %2033 = vmatmul.mubr.f32.gmra.mrb[0].mxu0 %v1893
        %v2034 = vpop.f32.mrb[0].mxu0
        %v2035 = vadd.f32 0.0, %v2034
        %v2036 = vpop.f32.mrb[0].mxu0
        %2037 = vmatprep.mubr.f32.mxu0 0.0
        %2038 = vmatmul.mubr.f32.gmra.mrb[0].mxu0 %v1896
        %v2039 = vpop.f32.mrb[0].mxu0
        %v2040 = vadd.f32 0.0, %v2039
        %v2041 = vpop.f32.mrb[0].mxu0
        %2042 = vmatprep.mubr.f32.mxu0 0.0
        %2043 = vmatmul.mubr.f32.gmra.mrb[0].mxu0 %v1899
        %v2044 = vpop.f32.mrb[0].mxu0
        %v2045 = vadd.f32 0.0, %v2044
        %v2046 = vpop.f32.mrb[0].mxu0
        %2047 = vmatprep.mubr.f32.mxu0 0.0
        %2048 = vmatmul.mubr.f32.gmra.mrb[0].mxu0 %v1902
        %v2049 = vpop.f32.mrb[0].mxu0
        %v2050 = vadd.f32 0.0, %v2049
        %v2051 = vpop.f32.mrb[0].mxu0
        %2052 = vmatprep.mubr.f32.mxu0 0.0
        %2053 = vmatmul.mubr.f32.gmra.mrb[0].mxu0 %v1905
        %v2054 = vpop.f32.mrb[0].mxu0
        %v2055 = vadd.f32 0.0, %v2054
        %v2056 = vpop.f32.mrb[0].mxu0
        %2057 = vmatprep.mubr.f32.mxu0 0.0
        %2058 = vmatmul.mubr.f32.gmra.mrb[0].mxu0 %v1908
        %v2059 = vpop.f32.mrb[0].mxu0
        %v2060 = vadd.f32 0.0, %v2059
        %v2061 = vpop.f32.mrb[0].mxu0
        %2062 = vmatprep.mubr.f32.mxu0 0.0
        %2063 = vmatmul.mubr.f32.gmra.mrb[0].mxu0 %v1911
        %v2064 = vpop.f32.mrb[0].mxu0
        %v2065 = vadd.f32 0.0, %v2064
        %v2066 = vpop.f32.mrb[0].mxu0
        %2067 = vmatprep.mubr.f32.mxu0 0.0
        %2068 = vmatmul.mubr.f32.gmra.mrb[0].mxu0 %v1914
        %v2069 = vpop.f32.mrb[0].mxu0
        %v2070 = vadd.f32 0.0, %v2069
        %v2071 = vpop.f32.mrb[0].mxu0
        %2072 = vmatprep.mubr.f32.mxu0 0.0
        %2073 = vmatmul.mubr.f32.gmra.mrb[0].mxu0 %v1917
        %v2074 = vpop.f32.mrb[0].mxu0
        %v2075 = vadd.f32 0.0, %v2074
        %v2076 = vpop.f32.mrb[0].mxu0
        %2077 = vmatprep.mubr.f32.mxu0 0.0
        %2078 = vmatmul.mubr.f32.gmra.mrb[0].mxu0 %v1920
        %v2079 = vpop.f32.mrb[0].mxu0
        %v2080 = vadd.f32 0.0, %v2079
        %v2081 = vpop.f32.mrb[0].mxu0
        %2082 = vmatprep.mubr.f32.mxu0 0.0
        %2083 = vmatmul.mubr.f32.gmra.mrb[0].mxu0 %v1923
        %v2084 = vpop.f32.mrb[0].mxu0
        %v2085 = vadd.f32 0.0, %v2084
        %v2086 = vpop.f32.mrb[0].mxu0
        %2087 = vmatprep.mubr.f32.mxu0 0.0
        %2088 = vmatmul.mubr.f32.gmra.mrb[0].mxu0 %v1926
        %v2089 = vpop.f32.mrb[0].mxu0
        %v2090 = vadd.f32 0.0, %v2089
        %v2091 = vpop.f32.mrb[0].mxu0
        %2092 = vmatprep.mubr.f32.mxu0 0.0
        %2093 = vmatmul.mubr.f32.gmra.mrb[0].mxu0 %v1929
        %v2094 = vpop.f32.mrb[0].mxu0
        %v2095 = vadd.f32 0.0, %v2094
        %v2096 = vpop.f32.mrb[0].mxu0
        %2097 = vmatprep.mubr.f32.mxu0 0.0
        %2098 = vmatmul.mubr.f32.gmra.mrb[0].mxu0 %v1932
        %v2099 = vpop.f32.mrb[0].mxu0
        %v2100 = vadd.f32 0.0, %v2099
        %v2101 = vpop.f32.mrb[0].mxu0
        %2102 = vmatprep.mubr.f32.mxu0 0.0
        %2103 = vmatmul.mubr.f32.gmra.mrb[0].mxu0 %v1935
        %v2104 = vpop.f32.mrb[0].mxu0
        %v2105 = vadd.f32 0.0, %v2104
        %v2106 = vpop.f32.mrb[0].mxu0
        %2107 = vmatprep.mubr.f32.mxu0 0.0
        %2108 = vmatmul.mubr.f32.gmra.mrb[0].mxu0 %v1938
        %v2109 = vpop.f32.mrb[0].mxu0
        %v2110 = vadd.f32 0.0, %v2109
        %v2111 = vpop.f32.mrb[0].mxu0
        %2112 = vdwg.mxu0
        %v2113 = vadd.f32 %v1833, %v2010
        %v2114 = vadd.f32 %v1834, %v2015
        %v2115 = vadd.f32 %v1835, %v2020
        %v2116 = vadd.f32 %v1836, %v2025
        %v2117 = vadd.f32 %v1837, %v2030
        %v2118 = vadd.f32 %v1838, %v2035
        %v2119 = vadd.f32 %v1839, %v2040
        %v2120 = vadd.f32 %v1840, %v2045
        %v2121 = vadd.f32 %v1841, %v2050
        %v2122 = vadd.f32 %v1842, %v2055
        %v2123 = vadd.f32 %v1843, %v2060
        %v2124 = vadd.f32 %v1844, %v2065
        %v2125 = vadd.f32 %v1845, %v2070
        %v2126 = vadd.f32 %v1846, %v2075
        %v2127 = vadd.f32 %v1847, %v2080
        %v2128 = vadd.f32 %v1848, %v2085
        %v2129 = vadd.f32 %v1849, %v2090
        %v2130 = vadd.f32 %v1850, %v2095
        %v2131 = vadd.f32 %v1851, %v2100
        %v2132 = vadd.f32 %v1852, %v2105
        %v2133 = vadd.f32 %v1853, %v2110
        %s2134 = sadd.s32 %s773, 89
        %s2135 = scalar_lea.vmem %s435, %s2134
        %v2136 = vld [vmem:[%s2135] sm:$0xff]
        %v2137 = vld [vmem:[%s2135 + $0x8] sm:$0xff]
        %v2138 = vld [vmem:[%s2135 + $0x10] sm:$0xff]
        %v2139 = vld [vmem:[%s2135 + $0x18] sm:$0xff]
        %v2140 = vld [vmem:[%s2135 + $0x20] sm:$0xff]
        %v2141 = vld [vmem:[%s2135 + $0x28] sm:$0xff]
        %v2142 = vld [vmem:[%s2135 + $0x30] sm:$0xff]
        %v2143 = vld [vmem:[%s2135 + $0x38] sm:$0xff]
        %v2144 = vld [vmem:[%s2135 + $0x40] sm:$0xff]
        %v2145 = vld [vmem:[%s2135 + $0x48] sm:$0xff]
        %v2146 = vld [vmem:[%s2135 + $0x50] sm:$0xff]
        %v2147 = vld [vmem:[%s2135 + $0x58] sm:$0xff]
        %v2148 = vld [vmem:[%s2135 + $0x60] sm:$0xff]
        %v2149 = vld [vmem:[%s2135 + $0x68] sm:$0xff]
        %v2150 = vld [vmem:[%s2135 + $0x70] sm:$0xff]
        %v2151 = vld [vmem:[%s2135 + $0x78] sm:$0xff]
        %v2152 = vld [vmem:[%s2135 + $0x80] sm:$0xff]
        %v2153 = vld [vmem:[%s2135 + $0x88] sm:$0xff]
        %v2154 = vld [vmem:[%s2135 + $0x90] sm:$0xff]
        %v2155 = vld [vmem:[%s2135 + $0x98] sm:$0xff]
        %v2156 = vld [vmem:[%s2135 + $0xa0] sm:$0xf]
        %v2158 = vsel %vm820, %v2136, 0
        %v2161 = vsel %vm820, %v2137, 0
        %v2164 = vsel %vm820, %v2138, 0
        %v2167 = vsel %vm820, %v2139, 0
        %v2170 = vsel %vm820, %v2140, 0
        %v2173 = vsel %vm820, %v2141, 0
        %v2176 = vsel %vm820, %v2142, 0
        %v2179 = vsel %vm820, %v2143, 0
        %v2182 = vsel %vm820, %v2144, 0
        %v2185 = vsel %vm820, %v2145, 0
        %v2188 = vsel %vm820, %v2146, 0
        %v2191 = vsel %vm820, %v2147, 0
        %v2194 = vsel %vm820, %v2148, 0
        %v2197 = vsel %vm820, %v2149, 0
        %v2200 = vsel %vm820, %v2150, 0
        %v2203 = vsel %vm820, %v2151, 0
        %v2206 = vsel %vm820, %v2152, 0
        %v2209 = vsel %vm820, %v2153, 0
        %v2212 = vsel %vm820, %v2154, 0
        %v2215 = vsel %vm820, %v2155, 0
        %v2218 = vsel %vm820, %v2156, 0
        %v2221 = vsel %vm884, %v758, 0
        %2223 = vmatprep.subr.mxu0 0.0
        %2224 = vmatpush1.msra.mxu0 %v2221
        %2225 = vmatprep.subr.mxu0 0.0
        %2226 = vmatpush1.msra.mxu0 0.0
        %2227 = vmatprep.subr.mxu0 0.0
        %2228 = vmatpush1.msra.mxu0 0.0
        %2229 = vmatprep.subr.mxu0 0.0
        %2230 = vmatpush1.msra.mxu0 0.0
        %2231 = vmatprep.subr.mxu0 0.0
        %2232 = vmatpush1.msra.mxu0 0.0
        %2233 = vmatprep.subr.mxu0 0.0
        %2234 = vmatpush1.msra.mxu0 0.0
        %2235 = vmatprep.subr.mxu0 0.0
        %2236 = vmatpush1.msra.mxu0 0.0
        %2237 = vmatprep.subr.mxu0 0.0
        %2238 = vmatpush1.msra.mxu0 0.0
        %2239 = vmatprep.subr.mxu0 0.0
        %2240 = vmatpush1.msra.mxu0 0.0
        %2241 = vmatprep.subr.mxu0 0.0
        %2242 = vmatpush1.msra.mxu0 0.0
        %2243 = vmatprep.subr.mxu0 0.0
        %2244 = vmatpush1.msra.mxu0 0.0
        %2245 = vmatprep.subr.mxu0 0.0
        %2246 = vmatpush1.msra.mxu0 0.0
        %2247 = vmatprep.subr.mxu0 0.0
        %2248 = vmatpush1.msra.mxu0 0.0
        %2249 = vmatprep.subr.mxu0 0.0
        %2250 = vmatpush1.msra.mxu0 0.0
        %2251 = vmatprep.subr.mxu0 0.0
        %2252 = vmatpush1.msra.mxu0 0.0
        %2253 = vmatprep.subr.mxu0 0.0
        %2254 = vmatpush1.msra.mxu0 0.0
        %2255 = vmatprep.subr.mxu0 0.0
        %2256 = vmatpush1.msra.mxu0 0.0
        %2257 = vmatprep.subr.mxu0 0.0
        %2258 = vmatpush1.msra.mxu0 0.0
        %2259 = vmatprep.subr.mxu0 0.0
        %2260 = vmatpush1.msra.mxu0 0.0
        %2261 = vmatprep.subr.mxu0 0.0
        %2262 = vmatpush1.msra.mxu0 0.0
        %2263 = vmatprep.subr.mxu0 0.0
        %2264 = vmatpush1.msra.mxu0 0.0
        %2265 = vmatprep.subr.mxu0 0.0
        %2266 = vmatpush1.msra.mxu0 0.0
        %2267 = vmatprep.subr.mxu0 0.0
        %2268 = vmatpush1.msra.mxu0 0.0
        %2269 = vmatprep.subr.mxu0 0.0
        %2270 = vmatpush1.msra.mxu0 0.0
        %2271 = vmatprep.subr.mxu0 0.0
        %2272 = vmatpush1.msra.mxu0 0.0
        %2273 = vmatprep.subr.mxu0 0.0
        %2274 = vmatpush1.msra.mxu0 0.0
        %2275 = vmatprep.subr.mxu0 0.0
        %2276 = vmatpush1.msra.mxu0 0.0
        %2277 = vmatprep.subr.mxu0 0.0
        %2278 = vmatpush1.msra.mxu0 0.0
        %2279 = vmatprep.subr.mxu0 0.0
        %2280 = vmatpush1.msra.mxu0 0.0
        %2281 = vmatprep.subr.mxu0 0.0
        %2282 = vmatpush1.msra.mxu0 0.0
        %2283 = vmatprep.subr.mxu0 0.0
        %2284 = vmatpush1.msra.mxu0 0.0
        %2285 = vmatprep.subr.mxu0 0.0
        %2286 = vmatpush1.msra.mxu0 0.0
        %2287 = vmatprep.mubr.f32.mxu0 0.0
        %2288 = vmatmul.mubr.f32.gmra.mrb[0].mxu0 %v2158
        %v2289 = vpop.f32.mrb[0].mxu0
        %v2290 = vadd.f32 0.0, %v2289
        %v2291 = vpop.f32.mrb[0].mxu0
        %2292 = vmatprep.mubr.f32.mxu0 0.0
        %2293 = vmatmul.mubr.f32.gmra.mrb[0].mxu0 %v2161
        %v2294 = vpop.f32.mrb[0].mxu0
        %v2295 = vadd.f32 0.0, %v2294
        %v2296 = vpop.f32.mrb[0].mxu0
        %2297 = vmatprep.mubr.f32.mxu0 0.0
        %2298 = vmatmul.mubr.f32.gmra.mrb[0].mxu0 %v2164
        %v2299 = vpop.f32.mrb[0].mxu0
        %v2300 = vadd.f32 0.0, %v2299
        %v2301 = vpop.f32.mrb[0].mxu0
        %2302 = vmatprep.mubr.f32.mxu0 0.0
        %2303 = vmatmul.mubr.f32.gmra.mrb[0].mxu0 %v2167
        %v2304 = vpop.f32.mrb[0].mxu0
        %v2305 = vadd.f32 0.0, %v2304
        %v2306 = vpop.f32.mrb[0].mxu0
        %2307 = vmatprep.mubr.f32.mxu0 0.0
        %2308 = vmatmul.mubr.f32.gmra.mrb[0].mxu0 %v2170
        %v2309 = vpop.f32.mrb[0].mxu0
        %v2310 = vadd.f32 0.0, %v2309
        %v2311 = vpop.f32.mrb[0].mxu0
        %2312 = vmatprep.mubr.f32.mxu0 0.0
        %2313 = vmatmul.mubr.f32.gmra.mrb[0].mxu0 %v2173
        %v2314 = vpop.f32.mrb[0].mxu0
        %v2315 = vadd.f32 0.0, %v2314
        %v2316 = vpop.f32.mrb[0].mxu0
        %2317 = vmatprep.mubr.f32.mxu0 0.0
        %2318 = vmatmul.mubr.f32.gmra.mrb[0].mxu0 %v2176
        %v2319 = vpop.f32.mrb[0].mxu0
        %v2320 = vadd.f32 0.0, %v2319
        %v2321 = vpop.f32.mrb[0].mxu0
        %2322 = vmatprep.mubr.f32.mxu0 0.0
        %2323 = vmatmul.mubr.f32.gmra.mrb[0].mxu0 %v2179
        %v2324 = vpop.f32.mrb[0].mxu0
        %v2325 = vadd.f32 0.0, %v2324
        %v2326 = vpop.f32.mrb[0].mxu0
        %2327 = vmatprep.mubr.f32.mxu0 0.0
        %2328 = vmatmul.mubr.f32.gmra.mrb[0].mxu0 %v2182
        %v2329 = vpop.f32.mrb[0].mxu0
        %v2330 = vadd.f32 0.0, %v2329
        %v2331 = vpop.f32.mrb[0].mxu0
        %2332 = vmatprep.mubr.f32.mxu0 0.0
        %2333 = vmatmul.mubr.f32.gmra.mrb[0].mxu0 %v2185
        %v2334 = vpop.f32.mrb[0].mxu0
        %v2335 = vadd.f32 0.0, %v2334
        %v2336 = vpop.f32.mrb[0].mxu0
        %2337 = vmatprep.mubr.f32.mxu0 0.0
        %2338 = vmatmul.mubr.f32.gmra.mrb[0].mxu0 %v2188
        %v2339 = vpop.f32.mrb[0].mxu0
        %v2340 = vadd.f32 0.0, %v2339
        %v2341 = vpop.f32.mrb[0].mxu0
        %2342 = vmatprep.mubr.f32.mxu0 0.0
        %2343 = vmatmul.mubr.f32.gmra.mrb[0].mxu0 %v2191
        %v2344 = vpop.f32.mrb[0].mxu0
        %v2345 = vadd.f32 0.0, %v2344
        %v2346 = vpop.f32.mrb[0].mxu0
        %2347 = vmatprep.mubr.f32.mxu0 0.0
        %2348 = vmatmul.mubr.f32.gmra.mrb[0].mxu0 %v2194
        %v2349 = vpop.f32.mrb[0].mxu0
        %v2350 = vadd.f32 0.0, %v2349
        %v2351 = vpop.f32.mrb[0].mxu0
        %2352 = vmatprep.mubr.f32.mxu0 0.0
        %2353 = vmatmul.mubr.f32.gmra.mrb[0].mxu0 %v2197
        %v2354 = vpop.f32.mrb[0].mxu0
        %v2355 = vadd.f32 0.0, %v2354
        %v2356 = vpop.f32.mrb[0].mxu0
        %2357 = vmatprep.mubr.f32.mxu0 0.0
        %2358 = vmatmul.mubr.f32.gmra.mrb[0].mxu0 %v2200
        %v2359 = vpop.f32.mrb[0].mxu0
        %v2360 = vadd.f32 0.0, %v2359
        %v2361 = vpop.f32.mrb[0].mxu0
        %2362 = vmatprep.mubr.f32.mxu0 0.0
        %2363 = vmatmul.mubr.f32.gmra.mrb[0].mxu0 %v2203
        %v2364 = vpop.f32.mrb[0].mxu0
        %v2365 = vadd.f32 0.0, %v2364
        %v2366 = vpop.f32.mrb[0].mxu0
        %2367 = vmatprep.mubr.f32.mxu0 0.0
        %2368 = vmatmul.mubr.f32.gmra.mrb[0].mxu0 %v2206
        %v2369 = vpop.f32.mrb[0].mxu0
        %v2370 = vadd.f32 0.0, %v2369
        %v2371 = vpop.f32.mrb[0].mxu0
        %2372 = vmatprep.mubr.f32.mxu0 0.0
        %2373 = vmatmul.mubr.f32.gmra.mrb[0].mxu0 %v2209
        %v2374 = vpop.f32.mrb[0].mxu0
        %v2375 = vadd.f32 0.0, %v2374
        %v2376 = vpop.f32.mrb[0].mxu0
        %2377 = vmatprep.mubr.f32.mxu0 0.0
        %2378 = vmatmul.mubr.f32.gmra.mrb[0].mxu0 %v2212
        %v2379 = vpop.f32.mrb[0].mxu0
        %v2380 = vadd.f32 0.0, %v2379
        %v2381 = vpop.f32.mrb[0].mxu0
        %2382 = vmatprep.mubr.f32.mxu0 0.0
        %2383 = vmatmul.mubr.f32.gmra.mrb[0].mxu0 %v2215
        %v2384 = vpop.f32.mrb[0].mxu0
        %v2385 = vadd.f32 0.0, %v2384
        %v2386 = vpop.f32.mrb[0].mxu0
        %2387 = vmatprep.mubr.f32.mxu0 0.0
        %2388 = vmatmul.mubr.f32.gmra.mrb[0].mxu0 %v2218
        %v2389 = vpop.f32.mrb[0].mxu0
        %v2390 = vadd.f32 0.0, %v2389
        %v2391 = vpop.f32.mrb[0].mxu0
        %2392 = vdwg.mxu0
        %v2393 = vadd.f32 %v2113, %v2290
        %v2394 = vadd.f32 %v2114, %v2295
        %v2395 = vadd.f32 %v2115, %v2300
        %v2396 = vadd.f32 %v2116, %v2305
        %v2397 = vadd.f32 %v2117, %v2310
        %v2398 = vadd.f32 %v2118, %v2315
        %v2399 = vadd.f32 %v2119, %v2320
        %v2400 = vadd.f32 %v2120, %v2325
        %v2401 = vadd.f32 %v2121, %v2330
        %v2402 = vadd.f32 %v2122, %v2335
        %v2403 = vadd.f32 %v2123, %v2340
        %v2404 = vadd.f32 %v2124, %v2345
        %v2405 = vadd.f32 %v2125, %v2350
        %v2406 = vadd.f32 %v2126, %v2355
        %v2407 = vadd.f32 %v2127, %v2360
        %v2408 = vadd.f32 %v2128, %v2365
        %v2409 = vadd.f32 %v2129, %v2370
        %v2410 = vadd.f32 %v2130, %v2375
        %v2411 = vadd.f32 %v2131, %v2380
        %v2412 = vadd.f32 %v2132, %v2385
        %v2413 = vadd.f32 %v2133, %v2390
        %s2414 = sadd.s32 %s773, 169
        %s2415 = scalar_lea.vmem %s435, %s2414
        %v2416 = vld [vmem:[%s2415] sm:$0xff]
        %v2417 = vld [vmem:[%s2415 + $0x8] sm:$0xff]
        %v2418 = vld [vmem:[%s2415 + $0x10] sm:$0xff]
        %v2419 = vld [vmem:[%s2415 + $0x18] sm:$0xff]
        %v2420 = vld [vmem:[%s2415 + $0x20] sm:$0xff]
        %v2421 = vld [vmem:[%s2415 + $0x28] sm:$0xff]
        %v2422 = vld [vmem:[%s2415 + $0x30] sm:$0xff]
        %v2423 = vld [vmem:[%s2415 + $0x38] sm:$0xff]
        %v2424 = vld [vmem:[%s2415 + $0x40] sm:$0xff]
        %v2425 = vld [vmem:[%s2415 + $0x48] sm:$0xff]
        %v2426 = vld [vmem:[%s2415 + $0x50] sm:$0xff]
        %v2427 = vld [vmem:[%s2415 + $0x58] sm:$0xff]
        %v2428 = vld [vmem:[%s2415 + $0x60] sm:$0xff]
        %v2429 = vld [vmem:[%s2415 + $0x68] sm:$0xff]
        %v2430 = vld [vmem:[%s2415 + $0x70] sm:$0xff]
        %v2431 = vld [vmem:[%s2415 + $0x78] sm:$0xff]
        %v2432 = vld [vmem:[%s2415 + $0x80] sm:$0xff]
        %v2433 = vld [vmem:[%s2415 + $0x88] sm:$0xff]
        %v2434 = vld [vmem:[%s2415 + $0x90] sm:$0xff]
        %v2435 = vld [vmem:[%s2415 + $0x98] sm:$0xff]
        %v2436 = vld [vmem:[%s2415 + $0xa0] sm:$0xf]
        %v2438 = vsel %vm820, %v2416, 0
        %v2441 = vsel %vm820, %v2417, 0
        %v2444 = vsel %vm820, %v2418, 0
        %v2447 = vsel %vm820, %v2419, 0
        %v2450 = vsel %vm820, %v2420, 0
        %v2453 = vsel %vm820, %v2421, 0
        %v2456 = vsel %vm820, %v2422, 0
        %v2459 = vsel %vm820, %v2423, 0
        %v2462 = vsel %vm820, %v2424, 0
        %v2465 = vsel %vm820, %v2425, 0
        %v2468 = vsel %vm820, %v2426, 0
        %v2471 = vsel %vm820, %v2427, 0
        %v2474 = vsel %vm820, %v2428, 0
        %v2477 = vsel %vm820, %v2429, 0
        %v2480 = vsel %vm820, %v2430, 0
        %v2483 = vsel %vm820, %v2431, 0
        %v2486 = vsel %vm820, %v2432, 0
        %v2489 = vsel %vm820, %v2433, 0
        %v2492 = vsel %vm820, %v2434, 0
        %v2495 = vsel %vm820, %v2435, 0
        %v2498 = vsel %vm820, %v2436, 0
        %v2501 = vsel %vm884, %v760, 0
        %2503 = vmatprep.subr.mxu0 0.0
        %2504 = vmatpush1.msra.mxu0 %v2501
        %2505 = vmatprep.subr.mxu0 0.0
        %2506 = vmatpush1.msra.mxu0 0.0
        %2507 = vmatprep.subr.mxu0 0.0
        %2508 = vmatpush1.msra.mxu0 0.0
        %2509 = vmatprep.subr.mxu0 0.0
        %2510 = vmatpush1.msra.mxu0 0.0
        %2511 = vmatprep.subr.mxu0 0.0
        %2512 = vmatpush1.msra.mxu0 0.0
        %2513 = vmatprep.subr.mxu0 0.0
        %2514 = vmatpush1.msra.mxu0 0.0
        %2515 = vmatprep.subr.mxu0 0.0
        %2516 = vmatpush1.msra.mxu0 0.0
        %2517 = vmatprep.subr.mxu0 0.0
        %2518 = vmatpush1.msra.mxu0 0.0
        %2519 = vmatprep.subr.mxu0 0.0
        %2520 = vmatpush1.msra.mxu0 0.0
        %2521 = vmatprep.subr.mxu0 0.0
        %2522 = vmatpush1.msra.mxu0 0.0
        %2523 = vmatprep.subr.mxu0 0.0
        %2524 = vmatpush1.msra.mxu0 0.0
        %2525 = vmatprep.subr.mxu0 0.0
        %2526 = vmatpush1.msra.mxu0 0.0
        %2527 = vmatprep.subr.mxu0 0.0
        %2528 = vmatpush1.msra.mxu0 0.0
        %2529 = vmatprep.subr.mxu0 0.0
        %2530 = vmatpush1.msra.mxu0 0.0
        %2531 = vmatprep.subr.mxu0 0.0
        %2532 = vmatpush1.msra.mxu0 0.0
        %2533 = vmatprep.subr.mxu0 0.0
        %2534 = vmatpush1.msra.mxu0 0.0
        %2535 = vmatprep.subr.mxu0 0.0
        %2536 = vmatpush1.msra.mxu0 0.0
        %2537 = vmatprep.subr.mxu0 0.0
        %2538 = vmatpush1.msra.mxu0 0.0
        %2539 = vmatprep.subr.mxu0 0.0
        %2540 = vmatpush1.msra.mxu0 0.0
        %2541 = vmatprep.subr.mxu0 0.0
        %2542 = vmatpush1.msra.mxu0 0.0
        %2543 = vmatprep.subr.mxu0 0.0
        %2544 = vmatpush1.msra.mxu0 0.0
        %2545 = vmatprep.subr.mxu0 0.0
        %2546 = vmatpush1.msra.mxu0 0.0
        %2547 = vmatprep.subr.mxu0 0.0
        %2548 = vmatpush1.msra.mxu0 0.0
        %2549 = vmatprep.subr.mxu0 0.0
        %2550 = vmatpush1.msra.mxu0 0.0
        %2551 = vmatprep.subr.mxu0 0.0
        %2552 = vmatpush1.msra.mxu0 0.0
        %2553 = vmatprep.subr.mxu0 0.0
        %2554 = vmatpush1.msra.mxu0 0.0
        %2555 = vmatprep.subr.mxu0 0.0
        %2556 = vmatpush1.msra.mxu0 0.0
        %2557 = vmatprep.subr.mxu0 0.0
        %2558 = vmatpush1.msra.mxu0 0.0
        %2559 = vmatprep.subr.mxu0 0.0
        %2560 = vmatpush1.msra.mxu0 0.0
        %2561 = vmatprep.subr.mxu0 0.0
        %2562 = vmatpush1.msra.mxu0 0.0
        %2563 = vmatprep.subr.mxu0 0.0
        %2564 = vmatpush1.msra.mxu0 0.0
        %2565 = vmatprep.subr.mxu0 0.0
        %2566 = vmatpush1.msra.mxu0 0.0
        %2567 = vmatprep.mubr.f32.mxu0 0.0
        %2568 = vmatmul.mubr.f32.gmra.mrb[0].mxu0 %v2438
        %v2569 = vpop.f32.mrb[0].mxu0
        %v2570 = vadd.f32 0.0, %v2569
        %v2571 = vpop.f32.mrb[0].mxu0
        %2572 = vmatprep.mubr.f32.mxu0 0.0
        %2573 = vmatmul.mubr.f32.gmra.mrb[0].mxu0 %v2441
        %v2574 = vpop.f32.mrb[0].mxu0
        %v2575 = vadd.f32 0.0, %v2574
        %v2576 = vpop.f32.mrb[0].mxu0
        %2577 = vmatprep.mubr.f32.mxu0 0.0
        %2578 = vmatmul.mubr.f32.gmra.mrb[0].mxu0 %v2444
        %v2579 = vpop.f32.mrb[0].mxu0
        %v2580 = vadd.f32 0.0, %v2579
        %v2581 = vpop.f32.mrb[0].mxu0
        %2582 = vmatprep.mubr.f32.mxu0 0.0
        %2583 = vmatmul.mubr.f32.gmra.mrb[0].mxu0 %v2447
        %v2584 = vpop.f32.mrb[0].mxu0
        %v2585 = vadd.f32 0.0, %v2584
        %v2586 = vpop.f32.mrb[0].mxu0
        %2587 = vmatprep.mubr.f32.mxu0 0.0
        %2588 = vmatmul.mubr.f32.gmra.mrb[0].mxu0 %v2450
        %v2589 = vpop.f32.mrb[0].mxu0
        %v2590 = vadd.f32 0.0, %v2589
        %v2591 = vpop.f32.mrb[0].mxu0
        %2592 = vmatprep.mubr.f32.mxu0 0.0
        %2593 = vmatmul.mubr.f32.gmra.mrb[0].mxu0 %v2453
        %v2594 = vpop.f32.mrb[0].mxu0
        %v2595 = vadd.f32 0.0, %v2594
        %v2596 = vpop.f32.mrb[0].mxu0
        %2597 = vmatprep.mubr.f32.mxu0 0.0
        %2598 = vmatmul.mubr.f32.gmra.mrb[0].mxu0 %v2456
        %v2599 = vpop.f32.mrb[0].mxu0
        %v2600 = vadd.f32 0.0, %v2599
        %v2601 = vpop.f32.mrb[0].mxu0
        %2602 = vmatprep.mubr.f32.mxu0 0.0
        %2603 = vmatmul.mubr.f32.gmra.mrb[0].mxu0 %v2459
        %v2604 = vpop.f32.mrb[0].mxu0
        %v2605 = vadd.f32 0.0, %v2604
        %v2606 = vpop.f32.mrb[0].mxu0
        %2607 = vmatprep.mubr.f32.mxu0 0.0
        %2608 = vmatmul.mubr.f32.gmra.mrb[0].mxu0 %v2462
        %v2609 = vpop.f32.mrb[0].mxu0
        %v2610 = vadd.f32 0.0, %v2609
        %v2611 = vpop.f32.mrb[0].mxu0
        %2612 = vmatprep.mubr.f32.mxu0 0.0
        %2613 = vmatmul.mubr.f32.gmra.mrb[0].mxu0 %v2465
        %v2614 = vpop.f32.mrb[0].mxu0
        %v2615 = vadd.f32 0.0, %v2614
        %v2616 = vpop.f32.mrb[0].mxu0
        %2617 = vmatprep.mubr.f32.mxu0 0.0
        %2618 = vmatmul.mubr.f32.gmra.mrb[0].mxu0 %v2468
        %v2619 = vpop.f32.mrb[0].mxu0
        %v2620 = vadd.f32 0.0, %v2619
        %v2621 = vpop.f32.mrb[0].mxu0
        %2622 = vmatprep.mubr.f32.mxu0 0.0
        %2623 = vmatmul.mubr.f32.gmra.mrb[0].mxu0 %v2471
        %v2624 = vpop.f32.mrb[0].mxu0
        %v2625 = vadd.f32 0.0, %v2624
        %v2626 = vpop.f32.mrb[0].mxu0
        %2627 = vmatprep.mubr.f32.mxu0 0.0
        %2628 = vmatmul.mubr.f32.gmra.mrb[0].mxu0 %v2474
        %v2629 = vpop.f32.mrb[0].mxu0
        %v2630 = vadd.f32 0.0, %v2629
        %v2631 = vpop.f32.mrb[0].mxu0
        %2632 = vmatprep.mubr.f32.mxu0 0.0
        %2633 = vmatmul.mubr.f32.gmra.mrb[0].mxu0 %v2477
        %v2634 = vpop.f32.mrb[0].mxu0
        %v2635 = vadd.f32 0.0, %v2634
        %v2636 = vpop.f32.mrb[0].mxu0
        %2637 = vmatprep.mubr.f32.mxu0 0.0
        %2638 = vmatmul.mubr.f32.gmra.mrb[0].mxu0 %v2480
        %v2639 = vpop.f32.mrb[0].mxu0
        %v2640 = vadd.f32 0.0, %v2639
        %v2641 = vpop.f32.mrb[0].mxu0
        %2642 = vmatprep.mubr.f32.mxu0 0.0
        %2643 = vmatmul.mubr.f32.gmra.mrb[0].mxu0 %v2483
        %v2644 = vpop.f32.mrb[0].mxu0
        %v2645 = vadd.f32 0.0, %v2644
        %v2646 = vpop.f32.mrb[0].mxu0
        %2647 = vmatprep.mubr.f32.mxu0 0.0
        %2648 = vmatmul.mubr.f32.gmra.mrb[0].mxu0 %v2486
        %v2649 = vpop.f32.mrb[0].mxu0
        %v2650 = vadd.f32 0.0, %v2649
        %v2651 = vpop.f32.mrb[0].mxu0
        %2652 = vmatprep.mubr.f32.mxu0 0.0
        %2653 = vmatmul.mubr.f32.gmra.mrb[0].mxu0 %v2489
        %v2654 = vpop.f32.mrb[0].mxu0
        %v2655 = vadd.f32 0.0, %v2654
        %v2656 = vpop.f32.mrb[0].mxu0
        %2657 = vmatprep.mubr.f32.mxu0 0.0
        %2658 = vmatmul.mubr.f32.gmra.mrb[0].mxu0 %v2492
        %v2659 = vpop.f32.mrb[0].mxu0
        %v2660 = vadd.f32 0.0, %v2659
        %v2661 = vpop.f32.mrb[0].mxu0
        %2662 = vmatprep.mubr.f32.mxu0 0.0
        %2663 = vmatmul.mubr.f32.gmra.mrb[0].mxu0 %v2495
        %v2664 = vpop.f32.mrb[0].mxu0
        %v2665 = vadd.f32 0.0, %v2664
        %v2666 = vpop.f32.mrb[0].mxu0
        %2667 = vmatprep.mubr.f32.mxu0 0.0
        %2668 = vmatmul.mubr.f32.gmra.mrb[0].mxu0 %v2498
        %v2669 = vpop.f32.mrb[0].mxu0
        %v2670 = vadd.f32 0.0, %v2669
        %v2671 = vpop.f32.mrb[0].mxu0
        %2672 = vdwg.mxu0
        %v2673 = vadd.f32 %v2393, %v2570
        %v2674 = vadd.f32 %v2394, %v2575
        %v2675 = vadd.f32 %v2395, %v2580
        %v2676 = vadd.f32 %v2396, %v2585
        %v2677 = vadd.f32 %v2397, %v2590
        %v2678 = vadd.f32 %v2398, %v2595
        %v2679 = vadd.f32 %v2399, %v2600
        %v2680 = vadd.f32 %v2400, %v2605
        %v2681 = vadd.f32 %v2401, %v2610
        %v2682 = vadd.f32 %v2402, %v2615
        %v2683 = vadd.f32 %v2403, %v2620
        %v2684 = vadd.f32 %v2404, %v2625
        %v2685 = vadd.f32 %v2405, %v2630
        %v2686 = vadd.f32 %v2406, %v2635
        %v2687 = vadd.f32 %v2407, %v2640
        %v2688 = vadd.f32 %v2408, %v2645
        %v2689 = vadd.f32 %v2409, %v2650
        %v2690 = vadd.f32 %v2410, %v2655
        %v2691 = vadd.f32 %v2411, %v2660
        %v2692 = vadd.f32 %v2412, %v2665
        %v2693 = vadd.f32 %v2413, %v2670
        %s2694 = sadd.s32 %s773, 170
        %s2695 = scalar_lea.vmem %s435, %s2694
        %v2696 = vld [vmem:[%s2695] sm:$0xff]
        %v2697 = vld [vmem:[%s2695 + $0x8] sm:$0xff]
        %v2698 = vld [vmem:[%s2695 + $0x10] sm:$0xff]
        %v2699 = vld [vmem:[%s2695 + $0x18] sm:$0xff]
        %v2700 = vld [vmem:[%s2695 + $0x20] sm:$0xff]
        %v2701 = vld [vmem:[%s2695 + $0x28] sm:$0xff]
        %v2702 = vld [vmem:[%s2695 + $0x30] sm:$0xff]
        %v2703 = vld [vmem:[%s2695 + $0x38] sm:$0xff]
        %v2704 = vld [vmem:[%s2695 + $0x40] sm:$0xff]
        %v2705 = vld [vmem:[%s2695 + $0x48] sm:$0xff]
        %v2706 = vld [vmem:[%s2695 + $0x50] sm:$0xff]
        %v2707 = vld [vmem:[%s2695 + $0x58] sm:$0xff]
        %v2708 = vld [vmem:[%s2695 + $0x60] sm:$0xff]
        %v2709 = vld [vmem:[%s2695 + $0x68] sm:$0xff]
        %v2710 = vld [vmem:[%s2695 + $0x70] sm:$0xff]
        %v2711 = vld [vmem:[%s2695 + $0x78] sm:$0xff]
        %v2712 = vld [vmem:[%s2695 + $0x80] sm:$0xff]
        %v2713 = vld [vmem:[%s2695 + $0x88] sm:$0xff]
        %v2714 = vld [vmem:[%s2695 + $0x90] sm:$0xff]
        %v2715 = vld [vmem:[%s2695 + $0x98] sm:$0xff]
        %v2716 = vld [vmem:[%s2695 + $0xa0] sm:$0xf]
        %v2718 = vsel %vm820, %v2696, 0
        %v2721 = vsel %vm820, %v2697, 0
        %v2724 = vsel %vm820, %v2698, 0
        %v2727 = vsel %vm820, %v2699, 0
        %v2730 = vsel %vm820, %v2700, 0
        %v2733 = vsel %vm820, %v2701, 0
        %v2736 = vsel %vm820, %v2702, 0
        %v2739 = vsel %vm820, %v2703, 0
        %v2742 = vsel %vm820, %v2704, 0
        %v2745 = vsel %vm820, %v2705, 0
        %v2748 = vsel %vm820, %v2706, 0
        %v2751 = vsel %vm820, %v2707, 0
        %v2754 = vsel %vm820, %v2708, 0
        %v2757 = vsel %vm820, %v2709, 0
        %v2760 = vsel %vm820, %v2710, 0
        %v2763 = vsel %vm820, %v2711, 0
        %v2766 = vsel %vm820, %v2712, 0
        %v2769 = vsel %vm820, %v2713, 0
        %v2772 = vsel %vm820, %v2714, 0
        %v2775 = vsel %vm820, %v2715, 0
        %v2778 = vsel %vm820, %v2716, 0
        %v2781 = vsel %vm884, %v762, 0
        %2783 = vmatprep.subr.mxu0 0.0
        %2784 = vmatpush1.msra.mxu0 %v2781
        %2785 = vmatprep.subr.mxu0 0.0
        %2786 = vmatpush1.msra.mxu0 0.0
        %2787 = vmatprep.subr.mxu0 0.0
        %2788 = vmatpush1.msra.mxu0 0.0
        %2789 = vmatprep.subr.mxu0 0.0
        %2790 = vmatpush1.msra.mxu0 0.0
        %2791 = vmatprep.subr.mxu0 0.0
        %2792 = vmatpush1.msra.mxu0 0.0
        %2793 = vmatprep.subr.mxu0 0.0
        %2794 = vmatpush1.msra.mxu0 0.0
        %2795 = vmatprep.subr.mxu0 0.0
        %2796 = vmatpush1.msra.mxu0 0.0
        %2797 = vmatprep.subr.mxu0 0.0
        %2798 = vmatpush1.msra.mxu0 0.0
        %2799 = vmatprep.subr.mxu0 0.0
        %2800 = vmatpush1.msra.mxu0 0.0
        %2801 = vmatprep.subr.mxu0 0.0
        %2802 = vmatpush1.msra.mxu0 0.0
        %2803 = vmatprep.subr.mxu0 0.0
        %2804 = vmatpush1.msra.mxu0 0.0
        %2805 = vmatprep.subr.mxu0 0.0
        %2806 = vmatpush1.msra.mxu0 0.0
        %2807 = vmatprep.subr.mxu0 0.0
        %2808 = vmatpush1.msra.mxu0 0.0
        %2809 = vmatprep.subr.mxu0 0.0
        %2810 = vmatpush1.msra.mxu0 0.0
        %2811 = vmatprep.subr.mxu0 0.0
        %2812 = vmatpush1.msra.mxu0 0.0
        %2813 = vmatprep.subr.mxu0 0.0
        %2814 = vmatpush1.msra.mxu0 0.0
        %2815 = vmatprep.subr.mxu0 0.0
        %2816 = vmatpush1.msra.mxu0 0.0
        %2817 = vmatprep.subr.mxu0 0.0
        %2818 = vmatpush1.msra.mxu0 0.0
        %2819 = vmatprep.subr.mxu0 0.0
        %2820 = vmatpush1.msra.mxu0 0.0
        %2821 = vmatprep.subr.mxu0 0.0
        %2822 = vmatpush1.msra.mxu0 0.0
        %2823 = vmatprep.subr.mxu0 0.0
        %2824 = vmatpush1.msra.mxu0 0.0
        %2825 = vmatprep.subr.mxu0 0.0
        %2826 = vmatpush1.msra.mxu0 0.0
        %2827 = vmatprep.subr.mxu0 0.0
        %2828 = vmatpush1.msra.mxu0 0.0
        %2829 = vmatprep.subr.mxu0 0.0
        %2830 = vmatpush1.msra.mxu0 0.0
        %2831 = vmatprep.subr.mxu0 0.0
        %2832 = vmatpush1.msra.mxu0 0.0
        %2833 = vmatprep.subr.mxu0 0.0
        %2834 = vmatpush1.msra.mxu0 0.0
        %2835 = vmatprep.subr.mxu0 0.0
        %2836 = vmatpush1.msra.mxu0 0.0
        %2837 = vmatprep.subr.mxu0 0.0
        %2838 = vmatpush1.msra.mxu0 0.0
        %2839 = vmatprep.subr.mxu0 0.0
        %2840 = vmatpush1.msra.mxu0 0.0
        %2841 = vmatprep.subr.mxu0 0.0
        %2842 = vmatpush1.msra.mxu0 0.0
        %2843 = vmatprep.subr.mxu0 0.0
        %2844 = vmatpush1.msra.mxu0 0.0
        %2845 = vmatprep.subr.mxu0 0.0
        %2846 = vmatpush1.msra.mxu0 0.0
        %2847 = vmatprep.mubr.f32.mxu0 0.0
        %2848 = vmatmul.mubr.f32.gmra.mrb[0].mxu0 %v2718
        %v2849 = vpop.f32.mrb[0].mxu0
        %v2850 = vadd.f32 0.0, %v2849
        %v2851 = vpop.f32.mrb[0].mxu0
        %2852 = vmatprep.mubr.f32.mxu0 0.0
        %2853 = vmatmul.mubr.f32.gmra.mrb[0].mxu0 %v2721
        %v2854 = vpop.f32.mrb[0].mxu0
        %v2855 = vadd.f32 0.0, %v2854
        %v2856 = vpop.f32.mrb[0].mxu0
        %2857 = vmatprep.mubr.f32.mxu0 0.0
        %2858 = vmatmul.mubr.f32.gmra.mrb[0].mxu0 %v2724
        %v2859 = vpop.f32.mrb[0].mxu0
        %v2860 = vadd.f32 0.0, %v2859
        %v2861 = vpop.f32.mrb[0].mxu0
        %2862 = vmatprep.mubr.f32.mxu0 0.0
        %2863 = vmatmul.mubr.f32.gmra.mrb[0].mxu0 %v2727
        %v2864 = vpop.f32.mrb[0].mxu0
        %v2865 = vadd.f32 0.0, %v2864
        %v2866 = vpop.f32.mrb[0].mxu0
        %2867 = vmatprep.mubr.f32.mxu0 0.0
        %2868 = vmatmul.mubr.f32.gmra.mrb[0].mxu0 %v2730
        %v2869 = vpop.f32.mrb[0].mxu0
        %v2870 = vadd.f32 0.0, %v2869
        %v2871 = vpop.f32.mrb[0].mxu0
        %2872 = vmatprep.mubr.f32.mxu0 0.0
        %2873 = vmatmul.mubr.f32.gmra.mrb[0].mxu0 %v2733
        %v2874 = vpop.f32.mrb[0].mxu0
        %v2875 = vadd.f32 0.0, %v2874
        %v2876 = vpop.f32.mrb[0].mxu0
        %2877 = vmatprep.mubr.f32.mxu0 0.0
        %2878 = vmatmul.mubr.f32.gmra.mrb[0].mxu0 %v2736
        %v2879 = vpop.f32.mrb[0].mxu0
        %v2880 = vadd.f32 0.0, %v2879
        %v2881 = vpop.f32.mrb[0].mxu0
        %2882 = vmatprep.mubr.f32.mxu0 0.0
        %2883 = vmatmul.mubr.f32.gmra.mrb[0].mxu0 %v2739
        %v2884 = vpop.f32.mrb[0].mxu0
        %v2885 = vadd.f32 0.0, %v2884
        %v2886 = vpop.f32.mrb[0].mxu0
        %2887 = vmatprep.mubr.f32.mxu0 0.0
        %2888 = vmatmul.mubr.f32.gmra.mrb[0].mxu0 %v2742
        %v2889 = vpop.f32.mrb[0].mxu0
        %v2890 = vadd.f32 0.0, %v2889
        %v2891 = vpop.f32.mrb[0].mxu0
        %2892 = vmatprep.mubr.f32.mxu0 0.0
        %2893 = vmatmul.mubr.f32.gmra.mrb[0].mxu0 %v2745
        %v2894 = vpop.f32.mrb[0].mxu0
        %v2895 = vadd.f32 0.0, %v2894
        %v2896 = vpop.f32.mrb[0].mxu0
        %2897 = vmatprep.mubr.f32.mxu0 0.0
        %2898 = vmatmul.mubr.f32.gmra.mrb[0].mxu0 %v2748
        %v2899 = vpop.f32.mrb[0].mxu0
        %v2900 = vadd.f32 0.0, %v2899
        %v2901 = vpop.f32.mrb[0].mxu0
        %2902 = vmatprep.mubr.f32.mxu0 0.0
        %2903 = vmatmul.mubr.f32.gmra.mrb[0].mxu0 %v2751
        %v2904 = vpop.f32.mrb[0].mxu0
        %v2905 = vadd.f32 0.0, %v2904
        %v2906 = vpop.f32.mrb[0].mxu0
        %2907 = vmatprep.mubr.f32.mxu0 0.0
        %2908 = vmatmul.mubr.f32.gmra.mrb[0].mxu0 %v2754
        %v2909 = vpop.f32.mrb[0].mxu0
        %v2910 = vadd.f32 0.0, %v2909
        %v2911 = vpop.f32.mrb[0].mxu0
        %2912 = vmatprep.mubr.f32.mxu0 0.0
        %2913 = vmatmul.mubr.f32.gmra.mrb[0].mxu0 %v2757
        %v2914 = vpop.f32.mrb[0].mxu0
        %v2915 = vadd.f32 0.0, %v2914
        %v2916 = vpop.f32.mrb[0].mxu0
        %2917 = vmatprep.mubr.f32.mxu0 0.0
        %2918 = vmatmul.mubr.f32.gmra.mrb[0].mxu0 %v2760
        %v2919 = vpop.f32.mrb[0].mxu0
        %v2920 = vadd.f32 0.0, %v2919
        %v2921 = vpop.f32.mrb[0].mxu0
        %2922 = vmatprep.mubr.f32.mxu0 0.0
        %2923 = vmatmul.mubr.f32.gmra.mrb[0].mxu0 %v2763
        %v2924 = vpop.f32.mrb[0].mxu0
        %v2925 = vadd.f32 0.0, %v2924
        %v2926 = vpop.f32.mrb[0].mxu0
        %2927 = vmatprep.mubr.f32.mxu0 0.0
        %2928 = vmatmul.mubr.f32.gmra.mrb[0].mxu0 %v2766
        %v2929 = vpop.f32.mrb[0].mxu0
        %v2930 = vadd.f32 0.0, %v2929
        %v2931 = vpop.f32.mrb[0].mxu0
        %2932 = vmatprep.mubr.f32.mxu0 0.0
        %2933 = vmatmul.mubr.f32.gmra.mrb[0].mxu0 %v2769
        %v2934 = vpop.f32.mrb[0].mxu0
        %v2935 = vadd.f32 0.0, %v2934
        %v2936 = vpop.f32.mrb[0].mxu0
        %2937 = vmatprep.mubr.f32.mxu0 0.0
        %2938 = vmatmul.mubr.f32.gmra.mrb[0].mxu0 %v2772
        %v2939 = vpop.f32.mrb[0].mxu0
        %v2940 = vadd.f32 0.0, %v2939
        %v2941 = vpop.f32.mrb[0].mxu0
        %2942 = vmatprep.mubr.f32.mxu0 0.0
        %2943 = vmatmul.mubr.f32.gmra.mrb[0].mxu0 %v2775
        %v2944 = vpop.f32.mrb[0].mxu0
        %v2945 = vadd.f32 0.0, %v2944
        %v2946 = vpop.f32.mrb[0].mxu0
        %2947 = vmatprep.mubr.f32.mxu0 0.0
        %2948 = vmatmul.mubr.f32.gmra.mrb[0].mxu0 %v2778
        %v2949 = vpop.f32.mrb[0].mxu0
        %v2950 = vadd.f32 0.0, %v2949
        %v2951 = vpop.f32.mrb[0].mxu0
        %2952 = vdwg.mxu0
        %v2953 = vadd.f32 %v2673, %v2850
        %v2954 = vadd.f32 %v2674, %v2855
        %v2955 = vadd.f32 %v2675, %v2860
        %v2956 = vadd.f32 %v2676, %v2865
        %v2957 = vadd.f32 %v2677, %v2870
        %v2958 = vadd.f32 %v2678, %v2875
        %v2959 = vadd.f32 %v2679, %v2880
        %v2960 = vadd.f32 %v2680, %v2885
        %v2961 = vadd.f32 %v2681, %v2890
        %v2962 = vadd.f32 %v2682, %v2895
        %v2963 = vadd.f32 %v2683, %v2900
        %v2964 = vadd.f32 %v2684, %v2905
        %v2965 = vadd.f32 %v2685, %v2910
        %v2966 = vadd.f32 %v2686, %v2915
        %v2967 = vadd.f32 %v2687, %v2920
        %v2968 = vadd.f32 %v2688, %v2925
        %v2969 = vadd.f32 %v2689, %v2930
        %v2970 = vadd.f32 %v2690, %v2935
        %v2971 = vadd.f32 %v2691, %v2940
        %v2972 = vadd.f32 %v2692, %v2945
        %v2973 = vadd.f32 %v2693, %v2950
        %s2974 = sadd.s32 %s773, 171
        %s2975 = scalar_lea.vmem %s435, %s2974
        %v2976 = vld [vmem:[%s2975] sm:$0xff]
        %v2977 = vld [vmem:[%s2975 + $0x8] sm:$0xff]
        %v2978 = vld [vmem:[%s2975 + $0x10] sm:$0xff]
        %v2979 = vld [vmem:[%s2975 + $0x18] sm:$0xff]
        %v2980 = vld [vmem:[%s2975 + $0x20] sm:$0xff]
        %v2981 = vld [vmem:[%s2975 + $0x28] sm:$0xff]
        %v2982 = vld [vmem:[%s2975 + $0x30] sm:$0xff]
        %v2983 = vld [vmem:[%s2975 + $0x38] sm:$0xff]
        %v2984 = vld [vmem:[%s2975 + $0x40] sm:$0xff]
        %v2985 = vld [vmem:[%s2975 + $0x48] sm:$0xff]
        %v2986 = vld [vmem:[%s2975 + $0x50] sm:$0xff]
        %v2987 = vld [vmem:[%s2975 + $0x58] sm:$0xff]
        %v2988 = vld [vmem:[%s2975 + $0x60] sm:$0xff]
        %v2989 = vld [vmem:[%s2975 + $0x68] sm:$0xff]
        %v2990 = vld [vmem:[%s2975 + $0x70] sm:$0xff]
        %v2991 = vld [vmem:[%s2975 + $0x78] sm:$0xff]
        %v2992 = vld [vmem:[%s2975 + $0x80] sm:$0xff]
        %v2993 = vld [vmem:[%s2975 + $0x88] sm:$0xff]
        %v2994 = vld [vmem:[%s2975 + $0x90] sm:$0xff]
        %v2995 = vld [vmem:[%s2975 + $0x98] sm:$0xff]
        %v2996 = vld [vmem:[%s2975 + $0xa0] sm:$0xf]
        %v2998 = vsel %vm820, %v2976, 0
        %v3001 = vsel %vm820, %v2977, 0
        %v3004 = vsel %vm820, %v2978, 0
        %v3007 = vsel %vm820, %v2979, 0
        %v3010 = vsel %vm820, %v2980, 0
        %v3013 = vsel %vm820, %v2981, 0
        %v3016 = vsel %vm820, %v2982, 0
        %v3019 = vsel %vm820, %v2983, 0
        %v3022 = vsel %vm820, %v2984, 0
        %v3025 = vsel %vm820, %v2985, 0
        %v3028 = vsel %vm820, %v2986, 0
        %v3031 = vsel %vm820, %v2987, 0
        %v3034 = vsel %vm820, %v2988, 0
        %v3037 = vsel %vm820, %v2989, 0
        %v3040 = vsel %vm820, %v2990, 0
        %v3043 = vsel %vm820, %v2991, 0
        %v3046 = vsel %vm820, %v2992, 0
        %v3049 = vsel %vm820, %v2993, 0
        %v3052 = vsel %vm820, %v2994, 0
        %v3055 = vsel %vm820, %v2995, 0
        %v3058 = vsel %vm820, %v2996, 0
        %v3061 = vsel %vm884, %v764, 0
        %3063 = vmatprep.subr.mxu0 0.0
        %3064 = vmatpush1.msra.mxu0 %v3061
        %3065 = vmatprep.subr.mxu0 0.0
        %3066 = vmatpush1.msra.mxu0 0.0
        %3067 = vmatprep.subr.mxu0 0.0
        %3068 = vmatpush1.msra.mxu0 0.0
        %3069 = vmatprep.subr.mxu0 0.0
        %3070 = vmatpush1.msra.mxu0 0.0
        %3071 = vmatprep.subr.mxu0 0.0
        %3072 = vmatpush1.msra.mxu0 0.0
        %3073 = vmatprep.subr.mxu0 0.0
        %3074 = vmatpush1.msra.mxu0 0.0
        %3075 = vmatprep.subr.mxu0 0.0
        %3076 = vmatpush1.msra.mxu0 0.0
        %3077 = vmatprep.subr.mxu0 0.0
        %3078 = vmatpush1.msra.mxu0 0.0
        %3079 = vmatprep.subr.mxu0 0.0
        %3080 = vmatpush1.msra.mxu0 0.0
        %3081 = vmatprep.subr.mxu0 0.0
        %3082 = vmatpush1.msra.mxu0 0.0
        %3083 = vmatprep.subr.mxu0 0.0
        %3084 = vmatpush1.msra.mxu0 0.0
        %3085 = vmatprep.subr.mxu0 0.0
        %3086 = vmatpush1.msra.mxu0 0.0
        %3087 = vmatprep.subr.mxu0 0.0
        %3088 = vmatpush1.msra.mxu0 0.0
        %3089 = vmatprep.subr.mxu0 0.0
        %3090 = vmatpush1.msra.mxu0 0.0
        %3091 = vmatprep.subr.mxu0 0.0
        %3092 = vmatpush1.msra.mxu0 0.0
        %3093 = vmatprep.subr.mxu0 0.0
        %3094 = vmatpush1.msra.mxu0 0.0
        %3095 = vmatprep.subr.mxu0 0.0
        %3096 = vmatpush1.msra.mxu0 0.0
        %3097 = vmatprep.subr.mxu0 0.0
        %3098 = vmatpush1.msra.mxu0 0.0
        %3099 = vmatprep.subr.mxu0 0.0
        %3100 = vmatpush1.msra.mxu0 0.0
        %3101 = vmatprep.subr.mxu0 0.0
        %3102 = vmatpush1.msra.mxu0 0.0
        %3103 = vmatprep.subr.mxu0 0.0
        %3104 = vmatpush1.msra.mxu0 0.0
        %3105 = vmatprep.subr.mxu0 0.0
        %3106 = vmatpush1.msra.mxu0 0.0
        %3107 = vmatprep.subr.mxu0 0.0
        %3108 = vmatpush1.msra.mxu0 0.0
        %3109 = vmatprep.subr.mxu0 0.0
        %3110 = vmatpush1.msra.mxu0 0.0
        %3111 = vmatprep.subr.mxu0 0.0
        %3112 = vmatpush1.msra.mxu0 0.0
        %3113 = vmatprep.subr.mxu0 0.0
        %3114 = vmatpush1.msra.mxu0 0.0
        %3115 = vmatprep.subr.mxu0 0.0
        %3116 = vmatpush1.msra.mxu0 0.0
        %3117 = vmatprep.subr.mxu0 0.0
        %3118 = vmatpush1.msra.mxu0 0.0
        %3119 = vmatprep.subr.mxu0 0.0
        %3120 = vmatpush1.msra.mxu0 0.0
        %3121 = vmatprep.subr.mxu0 0.0
        %3122 = vmatpush1.msra.mxu0 0.0
        %3123 = vmatprep.subr.mxu0 0.0
        %3124 = vmatpush1.msra.mxu0 0.0
        %3125 = vmatprep.subr.mxu0 0.0
        %3126 = vmatpush1.msra.mxu0 0.0
        %3127 = vmatprep.mubr.f32.mxu0 0.0
        %3128 = vmatmul.mubr.f32.gmra.mrb[0].mxu0 %v2998
        %v3129 = vpop.f32.mrb[0].mxu0
        %v3130 = vadd.f32 0.0, %v3129
        %v3131 = vpop.f32.mrb[0].mxu0
        %3132 = vmatprep.mubr.f32.mxu0 0.0
        %3133 = vmatmul.mubr.f32.gmra.mrb[0].mxu0 %v3001
        %v3134 = vpop.f32.mrb[0].mxu0
        %v3135 = vadd.f32 0.0, %v3134
        %v3136 = vpop.f32.mrb[0].mxu0
        %3137 = vmatprep.mubr.f32.mxu0 0.0
        %3138 = vmatmul.mubr.f32.gmra.mrb[0].mxu0 %v3004
        %v3139 = vpop.f32.mrb[0].mxu0
        %v3140 = vadd.f32 0.0, %v3139
        %v3141 = vpop.f32.mrb[0].mxu0
        %3142 = vmatprep.mubr.f32.mxu0 0.0
        %3143 = vmatmul.mubr.f32.gmra.mrb[0].mxu0 %v3007
        %v3144 = vpop.f32.mrb[0].mxu0
        %v3145 = vadd.f32 0.0, %v3144
        %v3146 = vpop.f32.mrb[0].mxu0
        %3147 = vmatprep.mubr.f32.mxu0 0.0
        %3148 = vmatmul.mubr.f32.gmra.mrb[0].mxu0 %v3010
        %v3149 = vpop.f32.mrb[0].mxu0
        %v3150 = vadd.f32 0.0, %v3149
        %v3151 = vpop.f32.mrb[0].mxu0
        %3152 = vmatprep.mubr.f32.mxu0 0.0
        %3153 = vmatmul.mubr.f32.gmra.mrb[0].mxu0 %v3013
        %v3154 = vpop.f32.mrb[0].mxu0
        %v3155 = vadd.f32 0.0, %v3154
        %v3156 = vpop.f32.mrb[0].mxu0
        %3157 = vmatprep.mubr.f32.mxu0 0.0
        %3158 = vmatmul.mubr.f32.gmra.mrb[0].mxu0 %v3016
        %v3159 = vpop.f32.mrb[0].mxu0
        %v3160 = vadd.f32 0.0, %v3159
        %v3161 = vpop.f32.mrb[0].mxu0
        %3162 = vmatprep.mubr.f32.mxu0 0.0
        %3163 = vmatmul.mubr.f32.gmra.mrb[0].mxu0 %v3019
        %v3164 = vpop.f32.mrb[0].mxu0
        %v3165 = vadd.f32 0.0, %v3164
        %v3166 = vpop.f32.mrb[0].mxu0
        %3167 = vmatprep.mubr.f32.mxu0 0.0
        %3168 = vmatmul.mubr.f32.gmra.mrb[0].mxu0 %v3022
        %v3169 = vpop.f32.mrb[0].mxu0
        %v3170 = vadd.f32 0.0, %v3169
        %v3171 = vpop.f32.mrb[0].mxu0
        %3172 = vmatprep.mubr.f32.mxu0 0.0
        %3173 = vmatmul.mubr.f32.gmra.mrb[0].mxu0 %v3025
        %v3174 = vpop.f32.mrb[0].mxu0
        %v3175 = vadd.f32 0.0, %v3174
        %v3176 = vpop.f32.mrb[0].mxu0
        %3177 = vmatprep.mubr.f32.mxu0 0.0
        %3178 = vmatmul.mubr.f32.gmra.mrb[0].mxu0 %v3028
        %v3179 = vpop.f32.mrb[0].mxu0
        %v3180 = vadd.f32 0.0, %v3179
        %v3181 = vpop.f32.mrb[0].mxu0
        %3182 = vmatprep.mubr.f32.mxu0 0.0
        %3183 = vmatmul.mubr.f32.gmra.mrb[0].mxu0 %v3031
        %v3184 = vpop.f32.mrb[0].mxu0
        %v3185 = vadd.f32 0.0, %v3184
        %v3186 = vpop.f32.mrb[0].mxu0
        %3187 = vmatprep.mubr.f32.mxu0 0.0
        %3188 = vmatmul.mubr.f32.gmra.mrb[0].mxu0 %v3034
        %v3189 = vpop.f32.mrb[0].mxu0
        %v3190 = vadd.f32 0.0, %v3189
        %v3191 = vpop.f32.mrb[0].mxu0
        %3192 = vmatprep.mubr.f32.mxu0 0.0
        %3193 = vmatmul.mubr.f32.gmra.mrb[0].mxu0 %v3037
        %v3194 = vpop.f32.mrb[0].mxu0
        %v3195 = vadd.f32 0.0, %v3194
        %v3196 = vpop.f32.mrb[0].mxu0
        %3197 = vmatprep.mubr.f32.mxu0 0.0
        %3198 = vmatmul.mubr.f32.gmra.mrb[0].mxu0 %v3040
        %v3199 = vpop.f32.mrb[0].mxu0
        %v3200 = vadd.f32 0.0, %v3199
        %v3201 = vpop.f32.mrb[0].mxu0
        %3202 = vmatprep.mubr.f32.mxu0 0.0
        %3203 = vmatmul.mubr.f32.gmra.mrb[0].mxu0 %v3043
        %v3204 = vpop.f32.mrb[0].mxu0
        %v3205 = vadd.f32 0.0, %v3204
        %v3206 = vpop.f32.mrb[0].mxu0
        %3207 = vmatprep.mubr.f32.mxu0 0.0
        %3208 = vmatmul.mubr.f32.gmra.mrb[0].mxu0 %v3046
        %v3209 = vpop.f32.mrb[0].mxu0
        %v3210 = vadd.f32 0.0, %v3209
        %v3211 = vpop.f32.mrb[0].mxu0
        %3212 = vmatprep.mubr.f32.mxu0 0.0
        %3213 = vmatmul.mubr.f32.gmra.mrb[0].mxu0 %v3049
        %v3214 = vpop.f32.mrb[0].mxu0
        %v3215 = vadd.f32 0.0, %v3214
        %v3216 = vpop.f32.mrb[0].mxu0
        %3217 = vmatprep.mubr.f32.mxu0 0.0
        %3218 = vmatmul.mubr.f32.gmra.mrb[0].mxu0 %v3052
        %v3219 = vpop.f32.mrb[0].mxu0
        %v3220 = vadd.f32 0.0, %v3219
        %v3221 = vpop.f32.mrb[0].mxu0
        %3222 = vmatprep.mubr.f32.mxu0 0.0
        %3223 = vmatmul.mubr.f32.gmra.mrb[0].mxu0 %v3055
        %v3224 = vpop.f32.mrb[0].mxu0
        %v3225 = vadd.f32 0.0, %v3224
        %v3226 = vpop.f32.mrb[0].mxu0
        %3227 = vmatprep.mubr.f32.mxu0 0.0
        %3228 = vmatmul.mubr.f32.gmra.mrb[0].mxu0 %v3058
        %v3229 = vpop.f32.mrb[0].mxu0
        %v3230 = vadd.f32 0.0, %v3229
        %v3231 = vpop.f32.mrb[0].mxu0
        %3232 = vdwg.mxu0
        %v3233 = vadd.f32 %v2953, %v3130
        %v3234 = vadd.f32 %v2954, %v3135
        %v3235 = vadd.f32 %v2955, %v3140
        %v3236 = vadd.f32 %v2956, %v3145
        %v3237 = vadd.f32 %v2957, %v3150
        %v3238 = vadd.f32 %v2958, %v3155
        %v3239 = vadd.f32 %v2959, %v3160
        %v3240 = vadd.f32 %v2960, %v3165
        %v3241 = vadd.f32 %v2961, %v3170
        %v3242 = vadd.f32 %v2962, %v3175
        %v3243 = vadd.f32 %v2963, %v3180
        %v3244 = vadd.f32 %v2964, %v3185
        %v3245 = vadd.f32 %v2965, %v3190
        %v3246 = vadd.f32 %v2966, %v3195
        %v3247 = vadd.f32 %v2967, %v3200
        %v3248 = vadd.f32 %v2968, %v3205
        %v3249 = vadd.f32 %v2969, %v3210
        %v3250 = vadd.f32 %v2970, %v3215
        %v3251 = vadd.f32 %v2971, %v3220
        %v3252 = vadd.f32 %v2972, %v3225
        %v3253 = vadd.f32 %v2973, %v3230
        %v3255 = vlaneseq
        %v3256 = vshrl.u32 %v3255, 7
        %v3257 = vsub.s32 0, %v3256
        %v3258 = vrot.slane %v765, %v3257
        %v3260 = vmul.f32 %v3233, %v3258
        %v3261 = vmul.f32 %v3234, %v3258
        %v3262 = vmul.f32 %v3235, %v3258
        %v3263 = vmul.f32 %v3236, %v3258
        %v3264 = vmul.f32 %v3237, %v3258
        %v3265 = vmul.f32 %v3238, %v3258
        %v3266 = vmul.f32 %v3239, %v3258
        %v3267 = vmul.f32 %v3240, %v3258
        %v3268 = vmul.f32 %v3241, %v3258
        %v3269 = vmul.f32 %v3242, %v3258
        %v3270 = vmul.f32 %v3243, %v3258
        %v3271 = vmul.f32 %v3244, %v3258
        %v3272 = vmul.f32 %v3245, %v3258
        %v3273 = vmul.f32 %v3246, %v3258
        %v3274 = vmul.f32 %v3247, %v3258
        %v3275 = vmul.f32 %v3248, %v3258
        %v3276 = vmul.f32 %v3249, %v3258
        %v3277 = vmul.f32 %v3250, %v3258
        %v3278 = vmul.f32 %v3251, %v3258
        %v3279 = vmul.f32 %v3252, %v3258
        %v3280 = vmul.f32 %v3253, %v3258
        %v3282 = vlaneseq
        %v3283 = vshrl.u32 %v3282, 7
        %v3284 = vsub.s32 0, %v3283
        %v3285 = vrot.slane %v766, %v3284
        %v3287 = vadd.f32 %v3260, %v3285
        %v3288 = vadd.f32 %v3261, %v3285
        %v3289 = vadd.f32 %v3262, %v3285
        %v3290 = vadd.f32 %v3263, %v3285
        %v3291 = vadd.f32 %v3264, %v3285
        %v3292 = vadd.f32 %v3265, %v3285
        %v3293 = vadd.f32 %v3266, %v3285
        %v3294 = vadd.f32 %v3267, %v3285
        %v3295 = vadd.f32 %v3268, %v3285
        %v3296 = vadd.f32 %v3269, %v3285
        %v3297 = vadd.f32 %v3270, %v3285
        %v3298 = vadd.f32 %v3271, %v3285
        %v3299 = vadd.f32 %v3272, %v3285
        %v3300 = vadd.f32 %v3273, %v3285
        %v3301 = vadd.f32 %v3274, %v3285
        %v3302 = vadd.f32 %v3275, %v3285
        %v3303 = vadd.f32 %v3276, %v3285
        %v3304 = vadd.f32 %v3277, %v3285
        %v3305 = vadd.f32 %v3278, %v3285
        %v3306 = vadd.f32 %v3279, %v3285
        %v3307 = vadd.f32 %v3280, %v3285
        %v3308 = vmax.f32 %v3287, 0.0
        %v3309 = vmax.f32 %v3288, 0.0
        %v3310 = vmax.f32 %v3289, 0.0
        %v3311 = vmax.f32 %v3290, 0.0
        %v3312 = vmax.f32 %v3291, 0.0
        %v3313 = vmax.f32 %v3292, 0.0
        %v3314 = vmax.f32 %v3293, 0.0
        %v3315 = vmax.f32 %v3294, 0.0
        %v3316 = vmax.f32 %v3295, 0.0
        %v3317 = vmax.f32 %v3296, 0.0
        %v3318 = vmax.f32 %v3297, 0.0
        %v3319 = vmax.f32 %v3298, 0.0
        %v3320 = vmax.f32 %v3299, 0.0
        %v3321 = vmax.f32 %v3300, 0.0
        %v3322 = vmax.f32 %v3301, 0.0
        %v3323 = vmax.f32 %v3302, 0.0
        %v3324 = vmax.f32 %v3303, 0.0
        %v3325 = vmax.f32 %v3304, 0.0
        %v3326 = vmax.f32 %v3305, 0.0
        %v3327 = vmax.f32 %v3306, 0.0
        %v3328 = vmax.f32 %v3307, 0.0
        %3329 = vst.msk [vmem:[#allocation5] sm:$0xff] %vm441, %v3308
        %3330 = vst.msk [vmem:[#allocation5 + $0x8] sm:$0xff] %vm441, %v3309
        %3331 = vst.msk [vmem:[#allocation5 + $0x10] sm:$0xff] %vm441, %v3310
        %3332 = vst.msk [vmem:[#allocation5 + $0x18] sm:$0xff] %vm441, %v3311
        %3333 = vst.msk [vmem:[#allocation5 + $0x20] sm:$0xff] %vm441, %v3312
        %3334 = vst.msk [vmem:[#allocation5 + $0x28] sm:$0xff] %vm441, %v3313
        %3335 = vst.msk [vmem:[#allocation5 + $0x30] sm:$0xff] %vm441, %v3314
        %3336 = vst.msk [vmem:[#allocation5 + $0x38] sm:$0xff] %vm441, %v3315
        %3337 = vst.msk [vmem:[#allocation5 + $0x40] sm:$0xff] %vm441, %v3316
        %3338 = vst.msk [vmem:[#allocation5 + $0x48] sm:$0xff] %vm441, %v3317
        %3339 = vst.msk [vmem:[#allocation5 + $0x50] sm:$0xff] %vm441, %v3318
        %3340 = vst.msk [vmem:[#allocation5 + $0x58] sm:$0xff] %vm441, %v3319
        %3341 = vst.msk [vmem:[#allocation5 + $0x60] sm:$0xff] %vm441, %v3320
        %3342 = vst.msk [vmem:[#allocation5 + $0x68] sm:$0xff] %vm441, %v3321
        %3343 = vst.msk [vmem:[#allocation5 + $0x70] sm:$0xff] %vm441, %v3322
        %3344 = vst.msk [vmem:[#allocation5 + $0x78] sm:$0xff] %vm441, %v3323
        %3345 = vst.msk [vmem:[#allocation5 + $0x80] sm:$0xff] %vm441, %v3324
        %3346 = vst.msk [vmem:[#allocation5 + $0x88] sm:$0xff] %vm441, %v3325
        %3347 = vst.msk [vmem:[#allocation5 + $0x90] sm:$0xff] %vm441, %v3326
        %3348 = vst.msk [vmem:[#allocation5 + $0x98] sm:$0xff] %vm441, %v3327
        %vm3349 = vcmask 125952
        %3350 = vst.msk [vmem:[#allocation5 + $0xa0] sm:$0xf] %vm3349, %v3328
        %v3351 = vld [vmem:[#allocation5] sm:$0xff]
        %v3352 = vld [vmem:[#allocation5 + $0x8] sm:$0xff]
        %v3353 = vld [vmem:[#allocation5 + $0x10] sm:$0xff]
        %v3354 = vld [vmem:[#allocation5 + $0x18] sm:$0xff]
        %v3355 = vld [vmem:[#allocation5 + $0x20] sm:$0xff]
        %v3356 = vld [vmem:[#allocation5 + $0x28] sm:$0xff]
        %v3357 = vld [vmem:[#allocation5 + $0x30] sm:$0xff]
        %v3358 = vld [vmem:[#allocation5 + $0x38] sm:$0xff]
        %v3359 = vld [vmem:[#allocation5 + $0x40] sm:$0xff]
        %v3360 = vld [vmem:[#allocation5 + $0x48] sm:$0xff]
        %v3361 = vld [vmem:[#allocation5 + $0x52] sm:$0xff]
        %v3362 = vld [vmem:[#allocation5 + $0x5a] sm:$0xff]
        %v3363 = vld [vmem:[#allocation5 + $0x62] sm:$0xff]
        %v3364 = vld [vmem:[#allocation5 + $0x6a] sm:$0xff]
        %v3365 = vld [vmem:[#allocation5 + $0x72] sm:$0xff]
        %v3366 = vld [vmem:[#allocation5 + $0x7a] sm:$0xff]
        %v3367 = vld [vmem:[#allocation5 + $0x82] sm:$0xff]
        %v3368 = vld [vmem:[#allocation5 + $0x8a] sm:$0xff]
        %v3369 = vld [vmem:[#allocation5 + $0x92] sm:$0xff]
        %v3370 = vld [vmem:[#allocation5 + $0x9a] sm:$0xff]
        %v3371 = vmax.f32 %v3351, %v3361
        %v3372 = vmax.f32 %v3352, %v3362
        %v3373 = vmax.f32 %v3353, %v3363
        %v3374 = vmax.f32 %v3354, %v3364
        %v3375 = vmax.f32 %v3355, %v3365
        %v3376 = vmax.f32 %v3356, %v3366
        %v3377 = vmax.f32 %v3357, %v3367
        %v3378 = vmax.f32 %v3358, %v3368
        %v3379 = vmax.f32 %v3359, %v3369
        %v3380 = vmax.f32 %v3360, %v3370
        %3381 = vst.msk [vmem:[#allocation6] sm:$0xff] %vm441, %v3371
        %3382 = vst.msk [vmem:[#allocation6 + $0x8] sm:$0xff] %vm441, %v3372
        %3383 = vst.msk [vmem:[#allocation6 + $0x10] sm:$0xff] %vm441, %v3373
        %3384 = vst.msk [vmem:[#allocation6 + $0x18] sm:$0xff] %vm441, %v3374
        %3385 = vst.msk [vmem:[#allocation6 + $0x20] sm:$0xff] %vm441, %v3375
        %3386 = vst.msk [vmem:[#allocation6 + $0x28] sm:$0xff] %vm441, %v3376
        %3387 = vst.msk [vmem:[#allocation6 + $0x30] sm:$0xff] %vm441, %v3377
        %3388 = vst.msk [vmem:[#allocation6 + $0x38] sm:$0xff] %vm441, %v3378
        %3389 = vst.msk [vmem:[#allocation6 + $0x40] sm:$0xff] %vm441, %v3379
        %3390 = vst.msk [vmem:[#allocation6 + $0x48] sm:$0xff] %vm441, %v3380
        %v3391 = vld [vmem:[#allocation6] ss:$2 sm:$0xff]
        %s3392 = scalar_lea.vmem [#allocation6], 16
        %v3393 = vld [vmem:[%s3392] ss:$2 sm:$0xff]
        %s3394 = scalar_lea.vmem [#allocation6], 32
        %v3395 = vld [vmem:[%s3394] ss:$2 sm:$0xff]
        %s3396 = scalar_lea.vmem [#allocation6], 48
        %v3397 = vld [vmem:[%s3396] ss:$2 sm:$0xff]
        %s3398 = scalar_lea.vmem [#allocation6], 64
        %v3399 = vld [vmem:[%s3398] ss:$2 sm:$0xff]
        %s3400 = scalar_lea.vmem [#allocation6], 1
        %v3401 = vld [vmem:[%s3400] ss:$2 sm:$0xff]
        %s3402 = scalar_lea.vmem [#allocation6], 17
        %v3403 = vld [vmem:[%s3402] ss:$2 sm:$0xff]
        %s3404 = scalar_lea.vmem [#allocation6], 33
        %v3405 = vld [vmem:[%s3404] ss:$2 sm:$0xff]
        %s3406 = scalar_lea.vmem [#allocation6], 49
        %v3407 = vld [vmem:[%s3406] ss:$2 sm:$0xff]
        %s3408 = scalar_lea.vmem [#allocation6], 65
        %v3409 = vld [vmem:[%s3408] ss:$2 sm:$0xff]
        %v3410 = vmax.f32 %v3391, %v3401
        %v3411 = vmax.f32 %v3393, %v3403
        %v3412 = vmax.f32 %v3395, %v3405
        %v3413 = vmax.f32 %v3397, %v3407
        %v3414 = vmax.f32 %v3399, %v3409
        %s3415 = smul.u32 %s768, 42
        %s3416 = sadd.s32 %s3415, 48
        %s3417 = scalar_lea.vmem [#allocation2], %s3416
        %3418 = vst.msk [vmem:[%s3417] sm:$0xff] %vm441, %v3410
        %3419 = vst.msk [vmem:[%s3417 + $0x8] sm:$0xff] %vm441, %v3411
        %3420 = vst.msk [vmem:[%s3417 + $0x10] sm:$0xff] %vm441, %v3412
        %3421 = vst.msk [vmem:[%s3417 + $0x18] sm:$0xff] %vm441, %v3413
        %3422 = vst.msk [vmem:[%s3417 + $0x20] sm:$0xff] %vm441, %v3414
      $region77: #{convnet_forward.1} parent=71 // loop_footer
        %s772 = sadd.s32 1, %s768
      $region78: #{convnet_forward.1} parent=71 // loop_footer_branch
        %767 = sbr.rel target = $region74
      $region79: #{convnet_forward.1} parent=71 // loop_exit
        _
      %v3423 = vld [vmem:[%s4] sm:$0xff]
      %v3424 = vld [vmem:[%s4 + $0x8] sm:$0xff]
      %s3425 = scalar_lea.vmem %s4, 16
      %v3426 = vld [vmem:[%s3425] sm:$0xff]
      %v3427 = vld [vmem:[%s3425 + $0x8] sm:$0xff]
      %s3428 = scalar_lea.vmem %s4, 32
      %v3429 = vld [vmem:[%s3428] sm:$0xff]
      %v3430 = vld [vmem:[%s3428 + $0x8] sm:$0xff]
      %s3431 = scalar_lea.vmem %s4, 48
      %v3432 = vld [vmem:[%s3431] sm:$0xff]
      %v3433 = vld [vmem:[%s3431 + $0x8] sm:$0xff]
      %s3434 = scalar_lea.vmem %s4, 64
      %v3435 = vld [vmem:[%s3434] sm:$0xff]
      %v3436 = vld [vmem:[%s3434 + $0x8] sm:$0xff]
      %s3437 = scalar_lea.vmem %s4, 80
      %v3438 = vld [vmem:[%s3437] sm:$0xff]
      %v3439 = vld [vmem:[%s3437 + $0x8] sm:$0xff]
      %s3440 = scalar_lea.vmem %s4, 96
      %v3441 = vld [vmem:[%s3440] sm:$0xff]
      %v3442 = vld [vmem:[%s3440 + $0x8] sm:$0xff]
      %s3443 = scalar_lea.vmem %s4, 112
      %v3444 = vld [vmem:[%s3443] sm:$0xff]
      %v3445 = vld [vmem:[%s3443 + $0x8] sm:$0xff]
      %s3446 = scalar_lea.vmem %s4, 128
      %v3447 = vld [vmem:[%s3446] sm:$0xff]
      %v3448 = vld [vmem:[%s3446 + $0x8] sm:$0xff]
      %v3449 = vld [vmem:[%s5] sm:$0x1]
      %v3450 = vld [vmem:[%s6] sm:$0x1]
      loop: start=0, step=1, limit=20
      $region80: #{convnet_forward.1} parent=71 // loop_pre_header
        _
      $region81: #{convnet_forward.1} parent=71 // loop_header
        %s3452 = sphi 0, %s3456
        %p3453 = scmp.ge.s32.totalorder %s3452, 20
      $region82: #{convnet_forward.1} parent=71 // loop_header_branch
        %3455 = sbr.rel (%p3453) target = $region86
      $region83: #{convnet_forward.1} parent=71 // loop_body
        %s3457 = smul.u32 %s3452, 84
        %s3458 = sadd.s32 %s3457, 5
        %s3459 = scalar_lea.vmem [#allocation2], %s3458
        %v3460 = vld [vmem:[%s3459] sm:$0xff]
        %v3461 = vld [vmem:[%s3459 + $0x8] sm:$0xff]
        %v3462 = vld [vmem:[%s3459 + $0x10] sm:$0xff]
        %v3463 = vld [vmem:[%s3459 + $0x18] sm:$0xff]
        %v3464 = vld [vmem:[%s3459 + $0x20] sm:$0xff]
        %v3465 = vld [vmem:[%s3459 + $0x28] sm:$0xff]
        %v3466 = vld [vmem:[%s3459 + $0x30] sm:$0xff]
        %v3467 = vld [vmem:[%s3459 + $0x38] sm:$0xff]
        %v3468 = vld [vmem:[%s3459 + $0x40] sm:$0xff]
        %v3469 = vld [vmem:[%s3459 + $0x48] sm:$0xff]
        %v3470 = vld [vmem:[%s3459 + $0x50] sm:$0xf]
        %s3471 = sadd.s32 %s3457, 6
        %s3472 = scalar_lea.vmem [#allocation2], %s3471
        %v3473 = vld [vmem:[%s3472] sm:$0xff]
        %v3474 = vld [vmem:[%s3472 + $0x8] sm:$0xff]
        %v3475 = vld [vmem:[%s3472 + $0x10] sm:$0xff]
        %v3476 = vld [vmem:[%s3472 + $0x18] sm:$0xff]
        %v3477 = vld [vmem:[%s3472 + $0x20] sm:$0xff]
        %v3478 = vld [vmem:[%s3472 + $0x28] sm:$0xff]
        %v3479 = vld [vmem:[%s3472 + $0x30] sm:$0xff]
        %v3480 = vld [vmem:[%s3472 + $0x38] sm:$0xff]
        %v3481 = vld [vmem:[%s3472 + $0x40] sm:$0xff]
        %v3482 = vld [vmem:[%s3472 + $0x48] sm:$0xff]
        %v3483 = vld [vmem:[%s3472 + $0x50] sm:$0xf]
        %v3485 = vsel %vm441, %v3473, 0
        %v3488 = vsel %vm441, %v3474, 0
        %v3491 = vsel %vm441, %v3475, 0
        %v3494 = vsel %vm441, %v3476, 0
        %v3497 = vsel %vm441, %v3477, 0
        %v3500 = vsel %vm441, %v3478, 0
        %v3503 = vsel %vm441, %v3479, 0
        %v3506 = vsel %vm441, %v3480, 0
        %v3509 = vsel %vm441, %v3481, 0
        %v3512 = vsel %vm441, %v3482, 0
        %v3515 = vsel %vm441, %v3483, 0
        %3517 = vmatprep.subr.mxu0 0.0
        %3518 = vmatpush1.msra.mxu0 %v3426
        %3519 = vmatprep.subr.mxu0 0.0
        %3520 = vmatpush1.msra.mxu0 %v3427
        %3521 = vmatprep.subr.mxu0 0.0
        %3522 = vmatpush1.msra.mxu0 0.0
        %3523 = vmatprep.subr.mxu0 0.0
        %3524 = vmatpush1.msra.mxu0 0.0
        %3525 = vmatprep.subr.mxu0 0.0
        %3526 = vmatpush1.msra.mxu0 0.0
        %3527 = vmatprep.subr.mxu0 0.0
        %3528 = vmatpush1.msra.mxu0 0.0
        %3529 = vmatprep.subr.mxu0 0.0
        %3530 = vmatpush1.msra.mxu0 0.0
        %3531 = vmatprep.subr.mxu0 0.0
        %3532 = vmatpush1.msra.mxu0 0.0
        %3533 = vmatprep.subr.mxu0 0.0
        %3534 = vmatpush1.msra.mxu0 0.0
        %3535 = vmatprep.subr.mxu0 0.0
        %3536 = vmatpush1.msra.mxu0 0.0
        %3537 = vmatprep.subr.mxu0 0.0
        %3538 = vmatpush1.msra.mxu0 0.0
        %3539 = vmatprep.subr.mxu0 0.0
        %3540 = vmatpush1.msra.mxu0 0.0
        %3541 = vmatprep.subr.mxu0 0.0
        %3542 = vmatpush1.msra.mxu0 0.0
        %3543 = vmatprep.subr.mxu0 0.0
        %3544 = vmatpush1.msra.mxu0 0.0
        %3545 = vmatprep.subr.mxu0 0.0
        %3546 = vmatpush1.msra.mxu0 0.0
        %3547 = vmatprep.subr.mxu0 0.0
        %3548 = vmatpush1.msra.mxu0 0.0
        %3549 = vmatprep.subr.mxu0 0.0
        %3550 = vmatpush1.msra.mxu0 0.0
        %3551 = vmatprep.subr.mxu0 0.0
        %3552 = vmatpush1.msra.mxu0 0.0
        %3553 = vmatprep.subr.mxu0 0.0
        %3554 = vmatpush1.msra.mxu0 0.0
        %3555 = vmatprep.subr.mxu0 0.0
        %3556 = vmatpush1.msra.mxu0 0.0
        %3557 = vmatprep.subr.mxu0 0.0
        %3558 = vmatpush1.msra.mxu0 0.0
        %3559 = vmatprep.subr.mxu0 0.0
        %3560 = vmatpush1.msra.mxu0 0.0
        %3561 = vmatprep.subr.mxu0 0.0
        %3562 = vmatpush1.msra.mxu0 0.0
        %3563 = vmatprep.subr.mxu0 0.0
        %3564 = vmatpush1.msra.mxu0 0.0
        %3565 = vmatprep.subr.mxu0 0.0
        %3566 = vmatpush1.msra.mxu0 0.0
        %3567 = vmatprep.subr.mxu0 0.0
        %3568 = vmatpush1.msra.mxu0 0.0
        %3569 = vmatprep.subr.mxu0 0.0
        %3570 = vmatpush1.msra.mxu0 0.0
        %3571 = vmatprep.subr.mxu0 0.0
        %3572 = vmatpush1.msra.mxu0 0.0
        %3573 = vmatprep.subr.mxu0 0.0
        %3574 = vmatpush1.msra.mxu0 0.0
        %3575 = vmatprep.subr.mxu0 0.0
        %3576 = vmatpush1.msra.mxu0 0.0
        %3577 = vmatprep.subr.mxu0 0.0
        %3578 = vmatpush1.msra.mxu0 0.0
        %3579 = vmatprep.subr.mxu0 0.0
        %3580 = vmatpush1.msra.mxu0 0.0
        %3581 = vmatprep.mubr.f32.mxu0 0.0
        %3582 = vmatmul.mubr.f32.gmra.mrb[0].mxu0 %v3485
        %v3583 = vpop.f32.mrb[0].mxu0
        %v3584 = vadd.f32 0.0, %v3583
        %v3585 = vpop.f32.mrb[0].mxu0
        %3586 = vmatprep.mubr.f32.mxu0 0.0
        %3587 = vmatmul.mubr.f32.gmra.mrb[0].mxu0 %v3488
        %v3588 = vpop.f32.mrb[0].mxu0
        %v3589 = vadd.f32 0.0, %v3588
        %v3590 = vpop.f32.mrb[0].mxu0
        %3591 = vmatprep.mubr.f32.mxu0 0.0
        %3592 = vmatmul.mubr.f32.gmra.mrb[0].mxu0 %v3491
        %v3593 = vpop.f32.mrb[0].mxu0
        %v3594 = vadd.f32 0.0, %v3593
        %v3595 = vpop.f32.mrb[0].mxu0
        %3596 = vmatprep.mubr.f32.mxu0 0.0
        %3597 = vmatmul.mubr.f32.gmra.mrb[0].mxu0 %v3494
        %v3598 = vpop.f32.mrb[0].mxu0
        %v3599 = vadd.f32 0.0, %v3598
        %v3600 = vpop.f32.mrb[0].mxu0
        %3601 = vmatprep.mubr.f32.mxu0 0.0
        %3602 = vmatmul.mubr.f32.gmra.mrb[0].mxu0 %v3497
        %v3603 = vpop.f32.mrb[0].mxu0
        %v3604 = vadd.f32 0.0, %v3603
        %v3605 = vpop.f32.mrb[0].mxu0
        %3606 = vmatprep.mubr.f32.mxu0 0.0
        %3607 = vmatmul.mubr.f32.gmra.mrb[0].mxu0 %v3500
        %v3608 = vpop.f32.mrb[0].mxu0
        %v3609 = vadd.f32 0.0, %v3608
        %v3610 = vpop.f32.mrb[0].mxu0
        %3611 = vmatprep.mubr.f32.mxu0 0.0
        %3612 = vmatmul.mubr.f32.gmra.mrb[0].mxu0 %v3503
        %v3613 = vpop.f32.mrb[0].mxu0
        %v3614 = vadd.f32 0.0, %v3613
        %v3615 = vpop.f32.mrb[0].mxu0
        %3616 = vmatprep.mubr.f32.mxu0 0.0
        %3617 = vmatmul.mubr.f32.gmra.mrb[0].mxu0 %v3506
        %v3618 = vpop.f32.mrb[0].mxu0
        %v3619 = vadd.f32 0.0, %v3618
        %v3620 = vpop.f32.mrb[0].mxu0
        %3621 = vmatprep.mubr.f32.mxu0 0.0
        %3622 = vmatmul.mubr.f32.gmra.mrb[0].mxu0 %v3509
        %v3623 = vpop.f32.mrb[0].mxu0
        %v3624 = vadd.f32 0.0, %v3623
        %v3625 = vpop.f32.mrb[0].mxu0
        %3626 = vmatprep.mubr.f32.mxu0 0.0
        %3627 = vmatmul.mubr.f32.gmra.mrb[0].mxu0 %v3512
        %v3628 = vpop.f32.mrb[0].mxu0
        %v3629 = vadd.f32 0.0, %v3628
        %v3630 = vpop.f32.mrb[0].mxu0
        %3631 = vmatprep.mubr.f32.mxu0 0.0
        %3632 = vmatmul.mubr.f32.gmra.mrb[0].mxu0 %v3515
        %v3633 = vpop.f32.mrb[0].mxu0
        %v3634 = vadd.f32 0.0, %v3633
        %v3635 = vpop.f32.mrb[0].mxu0
        %3636 = vdwg.mxu0
        %v3638 = vsel %vm441, %v3460, 0
        %v3641 = vsel %vm441, %v3461, 0
        %v3644 = vsel %vm441, %v3462, 0
        %v3647 = vsel %vm441, %v3463, 0
        %v3650 = vsel %vm441, %v3464, 0
        %v3653 = vsel %vm441, %v3465, 0
        %v3656 = vsel %vm441, %v3466, 0
        %v3659 = vsel %vm441, %v3467, 0
        %v3662 = vsel %vm441, %v3468, 0
        %v3665 = vsel %vm441, %v3469, 0
        %v3668 = vsel %vm441, %v3470, 0
        %3670 = vmatprep.subr.mxu0 0.0
        %3671 = vmatpush1.msra.mxu0 %v3423
        %3672 = vmatprep.subr.mxu0 0.0
        %3673 = vmatpush1.msra.mxu0 %v3424
        %3674 = vmatprep.subr.mxu0 0.0
        %3675 = vmatpush1.msra.mxu0 0.0
        %3676 = vmatprep.subr.mxu0 0.0
        %3677 = vmatpush1.msra.mxu0 0.0
        %3678 = vmatprep.subr.mxu0 0.0
        %3679 = vmatpush1.msra.mxu0 0.0
        %3680 = vmatprep.subr.mxu0 0.0
        %3681 = vmatpush1.msra.mxu0 0.0
        %3682 = vmatprep.subr.mxu0 0.0
        %3683 = vmatpush1.msra.mxu0 0.0
        %3684 = vmatprep.subr.mxu0 0.0
        %3685 = vmatpush1.msra.mxu0 0.0
        %3686 = vmatprep.subr.mxu0 0.0
        %3687 = vmatpush1.msra.mxu0 0.0
        %3688 = vmatprep.subr.mxu0 0.0
        %3689 = vmatpush1.msra.mxu0 0.0
        %3690 = vmatprep.subr.mxu0 0.0
        %3691 = vmatpush1.msra.mxu0 0.0
        %3692 = vmatprep.subr.mxu0 0.0
        %3693 = vmatpush1.msra.mxu0 0.0
        %3694 = vmatprep.subr.mxu0 0.0
        %3695 = vmatpush1.msra.mxu0 0.0
        %3696 = vmatprep.subr.mxu0 0.0
        %3697 = vmatpush1.msra.mxu0 0.0
        %3698 = vmatprep.subr.mxu0 0.0
        %3699 = vmatpush1.msra.mxu0 0.0
        %3700 = vmatprep.subr.mxu0 0.0
        %3701 = vmatpush1.msra.mxu0 0.0
        %3702 = vmatprep.subr.mxu0 0.0
        %3703 = vmatpush1.msra.mxu0 0.0
        %3704 = vmatprep.subr.mxu0 0.0
        %3705 = vmatpush1.msra.mxu0 0.0
        %3706 = vmatprep.subr.mxu0 0.0
        %3707 = vmatpush1.msra.mxu0 0.0
        %3708 = vmatprep.subr.mxu0 0.0
        %3709 = vmatpush1.msra.mxu0 0.0
        %3710 = vmatprep.subr.mxu0 0.0
        %3711 = vmatpush1.msra.mxu0 0.0
        %3712 = vmatprep.subr.mxu0 0.0
        %3713 = vmatpush1.msra.mxu0 0.0
        %3714 = vmatprep.subr.mxu0 0.0
        %3715 = vmatpush1.msra.mxu0 0.0
        %3716 = vmatprep.subr.mxu0 0.0
        %3717 = vmatpush1.msra.mxu0 0.0
        %3718 = vmatprep.subr.mxu0 0.0
        %3719 = vmatpush1.msra.mxu0 0.0
        %3720 = vmatprep.subr.mxu0 0.0
        %3721 = vmatpush1.msra.mxu0 0.0
        %3722 = vmatprep.subr.mxu0 0.0
        %3723 = vmatpush1.msra.mxu0 0.0
        %3724 = vmatprep.subr.mxu0 0.0
        %3725 = vmatpush1.msra.mxu0 0.0
        %3726 = vmatprep.subr.mxu0 0.0
        %3727 = vmatpush1.msra.mxu0 0.0
        %3728 = vmatprep.subr.mxu0 0.0
        %3729 = vmatpush1.msra.mxu0 0.0
        %3730 = vmatprep.subr.mxu0 0.0
        %3731 = vmatpush1.msra.mxu0 0.0
        %3732 = vmatprep.subr.mxu0 0.0
        %3733 = vmatpush1.msra.mxu0 0.0
        %3734 = vmatprep.mubr.f32.mxu0 0.0
        %3735 = vmatmul.mubr.f32.gmra.mrb[0].mxu0 %v3638
        %v3736 = vpop.f32.mrb[0].mxu0
        %v3737 = vadd.f32 %v3584, %v3736
        %v3738 = vpop.f32.mrb[0].mxu0
        %3739 = vmatprep.mubr.f32.mxu0 0.0
        %3740 = vmatmul.mubr.f32.gmra.mrb[0].mxu0 %v3641
        %v3741 = vpop.f32.mrb[0].mxu0
        %v3742 = vadd.f32 %v3589, %v3741
        %v3743 = vpop.f32.mrb[0].mxu0
        %3744 = vmatprep.mubr.f32.mxu0 0.0
        %3745 = vmatmul.mubr.f32.gmra.mrb[0].mxu0 %v3644
        %v3746 = vpop.f32.mrb[0].mxu0
        %v3747 = vadd.f32 %v3594, %v3746
        %v3748 = vpop.f32.mrb[0].mxu0
        %3749 = vmatprep.mubr.f32.mxu0 0.0
        %3750 = vmatmul.mubr.f32.gmra.mrb[0].mxu0 %v3647
        %v3751 = vpop.f32.mrb[0].mxu0
        %v3752 = vadd.f32 %v3599, %v3751
        %v3753 = vpop.f32.mrb[0].mxu0
        %3754 = vmatprep.mubr.f32.mxu0 0.0
        %3755 = vmatmul.mubr.f32.gmra.mrb[0].mxu0 %v3650
        %v3756 = vpop.f32.mrb[0].mxu0
        %v3757 = vadd.f32 %v3604, %v3756
        %v3758 = vpop.f32.mrb[0].mxu0
        %3759 = vmatprep.mubr.f32.mxu0 0.0
        %3760 = vmatmul.mubr.f32.gmra.mrb[0].mxu0 %v3653
        %v3761 = vpop.f32.mrb[0].mxu0
        %v3762 = vadd.f32 %v3609, %v3761
        %v3763 = vpop.f32.mrb[0].mxu0
        %3764 = vmatprep.mubr.f32.mxu0 0.0
        %3765 = vmatmul.mubr.f32.gmra.mrb[0].mxu0 %v3656
        %v3766 = vpop.f32.mrb[0].mxu0
        %v3767 = vadd.f32 %v3614, %v3766
        %v3768 = vpop.f32.mrb[0].mxu0
        %3769 = vmatprep.mubr.f32.mxu0 0.0
        %3770 = vmatmul.mubr.f32.gmra.mrb[0].mxu0 %v3659
        %v3771 = vpop.f32.mrb[0].mxu0
        %v3772 = vadd.f32 %v3619, %v3771
        %v3773 = vpop.f32.mrb[0].mxu0
        %3774 = vmatprep.mubr.f32.mxu0 0.0
        %3775 = vmatmul.mubr.f32.gmra.mrb[0].mxu0 %v3662
        %v3776 = vpop.f32.mrb[0].mxu0
        %v3777 = vadd.f32 %v3624, %v3776
        %v3778 = vpop.f32.mrb[0].mxu0
        %3779 = vmatprep.mubr.f32.mxu0 0.0
        %3780 = vmatmul.mubr.f32.gmra.mrb[0].mxu0 %v3665
        %v3781 = vpop.f32.mrb[0].mxu0
        %v3782 = vadd.f32 %v3629, %v3781
        %v3783 = vpop.f32.mrb[0].mxu0
        %3784 = vmatprep.mubr.f32.mxu0 0.0
        %3785 = vmatmul.mubr.f32.gmra.mrb[0].mxu0 %v3668
        %v3786 = vpop.f32.mrb[0].mxu0
        %v3787 = vadd.f32 %v3634, %v3786
        %v3788 = vpop.f32.mrb[0].mxu0
        %3789 = vdwg.mxu0
        %s3790 = sadd.s32 %s3457, 7
        %s3791 = scalar_lea.vmem [#allocation2], %s3790
        %v3792 = vld [vmem:[%s3791] sm:$0xff]
        %v3793 = vld [vmem:[%s3791 + $0x8] sm:$0xff]
        %v3794 = vld [vmem:[%s3791 + $0x10] sm:$0xff]
        %v3795 = vld [vmem:[%s3791 + $0x18] sm:$0xff]
        %v3796 = vld [vmem:[%s3791 + $0x20] sm:$0xff]
        %v3797 = vld [vmem:[%s3791 + $0x28] sm:$0xff]
        %v3798 = vld [vmem:[%s3791 + $0x30] sm:$0xff]
        %v3799 = vld [vmem:[%s3791 + $0x38] sm:$0xff]
        %v3800 = vld [vmem:[%s3791 + $0x40] sm:$0xff]
        %v3801 = vld [vmem:[%s3791 + $0x48] sm:$0xff]
        %v3802 = vld [vmem:[%s3791 + $0x50] sm:$0xf]
        %v3804 = vsel %vm441, %v3792, 0
        %v3807 = vsel %vm441, %v3793, 0
        %v3810 = vsel %vm441, %v3794, 0
        %v3813 = vsel %vm441, %v3795, 0
        %v3816 = vsel %vm441, %v3796, 0
        %v3819 = vsel %vm441, %v3797, 0
        %v3822 = vsel %vm441, %v3798, 0
        %v3825 = vsel %vm441, %v3799, 0
        %v3828 = vsel %vm441, %v3800, 0
        %v3831 = vsel %vm441, %v3801, 0
        %v3834 = vsel %vm441, %v3802, 0
        %3836 = vmatprep.subr.mxu0 0.0
        %3837 = vmatpush1.msra.mxu0 %v3429
        %3838 = vmatprep.subr.mxu0 0.0
        %3839 = vmatpush1.msra.mxu0 %v3430
        %3840 = vmatprep.subr.mxu0 0.0
        %3841 = vmatpush1.msra.mxu0 0.0
        %3842 = vmatprep.subr.mxu0 0.0
        %3843 = vmatpush1.msra.mxu0 0.0
        %3844 = vmatprep.subr.mxu0 0.0
        %3845 = vmatpush1.msra.mxu0 0.0
        %3846 = vmatprep.subr.mxu0 0.0
        %3847 = vmatpush1.msra.mxu0 0.0
        %3848 = vmatprep.subr.mxu0 0.0
        %3849 = vmatpush1.msra.mxu0 0.0
        %3850 = vmatprep.subr.mxu0 0.0
        %3851 = vmatpush1.msra.mxu0 0.0
        %3852 = vmatprep.subr.mxu0 0.0
        %3853 = vmatpush1.msra.mxu0 0.0
        %3854 = vmatprep.subr.mxu0 0.0
        %3855 = vmatpush1.msra.mxu0 0.0
        %3856 = vmatprep.subr.mxu0 0.0
        %3857 = vmatpush1.msra.mxu0 0.0
        %3858 = vmatprep.subr.mxu0 0.0
        %3859 = vmatpush1.msra.mxu0 0.0
        %3860 = vmatprep.subr.mxu0 0.0
        %3861 = vmatpush1.msra.mxu0 0.0
        %3862 = vmatprep.subr.mxu0 0.0
        %3863 = vmatpush1.msra.mxu0 0.0
        %3864 = vmatprep.subr.mxu0 0.0
        %3865 = vmatpush1.msra.mxu0 0.0
        %3866 = vmatprep.subr.mxu0 0.0
        %3867 = vmatpush1.msra.mxu0 0.0
        %3868 = vmatprep.subr.mxu0 0.0
        %3869 = vmatpush1.msra.mxu0 0.0
        %3870 = vmatprep.subr.mxu0 0.0
        %3871 = vmatpush1.msra.mxu0 0.0
        %3872 = vmatprep.subr.mxu0 0.0
        %3873 = vmatpush1.msra.mxu0 0.0
        %3874 = vmatprep.subr.mxu0 0.0
        %3875 = vmatpush1.msra.mxu0 0.0
        %3876 = vmatprep.subr.mxu0 0.0
        %3877 = vmatpush1.msra.mxu0 0.0
        %3878 = vmatprep.subr.mxu0 0.0
        %3879 = vmatpush1.msra.mxu0 0.0
        %3880 = vmatprep.subr.mxu0 0.0
        %3881 = vmatpush1.msra.mxu0 0.0
        %3882 = vmatprep.subr.mxu0 0.0
        %3883 = vmatpush1.msra.mxu0 0.0
        %3884 = vmatprep.subr.mxu0 0.0
        %3885 = vmatpush1.msra.mxu0 0.0
        %3886 = vmatprep.subr.mxu0 0.0
        %3887 = vmatpush1.msra.mxu0 0.0
        %3888 = vmatprep.subr.mxu0 0.0
        %3889 = vmatpush1.msra.mxu0 0.0
        %3890 = vmatprep.subr.mxu0 0.0
        %3891 = vmatpush1.msra.mxu0 0.0
        %3892 = vmatprep.subr.mxu0 0.0
        %3893 = vmatpush1.msra.mxu0 0.0
        %3894 = vmatprep.subr.mxu0 0.0
        %3895 = vmatpush1.msra.mxu0 0.0
        %3896 = vmatprep.subr.mxu0 0.0
        %3897 = vmatpush1.msra.mxu0 0.0
        %3898 = vmatprep.subr.mxu0 0.0
        %3899 = vmatpush1.msra.mxu0 0.0
        %3900 = vmatprep.mubr.f32.mxu0 0.0
        %3901 = vmatmul.mubr.f32.gmra.mrb[0].mxu0 %v3804
        %v3902 = vpop.f32.mrb[0].mxu0
        %v3903 = vadd.f32 0.0, %v3902
        %v3904 = vpop.f32.mrb[0].mxu0
        %3905 = vmatprep.mubr.f32.mxu0 0.0
        %3906 = vmatmul.mubr.f32.gmra.mrb[0].mxu0 %v3807
        %v3907 = vpop.f32.mrb[0].mxu0
        %v3908 = vadd.f32 0.0, %v3907
        %v3909 = vpop.f32.mrb[0].mxu0
        %3910 = vmatprep.mubr.f32.mxu0 0.0
        %3911 = vmatmul.mubr.f32.gmra.mrb[0].mxu0 %v3810
        %v3912 = vpop.f32.mrb[0].mxu0
        %v3913 = vadd.f32 0.0, %v3912
        %v3914 = vpop.f32.mrb[0].mxu0
        %3915 = vmatprep.mubr.f32.mxu0 0.0
        %3916 = vmatmul.mubr.f32.gmra.mrb[0].mxu0 %v3813
        %v3917 = vpop.f32.mrb[0].mxu0
        %v3918 = vadd.f32 0.0, %v3917
        %v3919 = vpop.f32.mrb[0].mxu0
        %3920 = vmatprep.mubr.f32.mxu0 0.0
        %3921 = vmatmul.mubr.f32.gmra.mrb[0].mxu0 %v3816
        %v3922 = vpop.f32.mrb[0].mxu0
        %v3923 = vadd.f32 0.0, %v3922
        %v3924 = vpop.f32.mrb[0].mxu0
        %3925 = vmatprep.mubr.f32.mxu0 0.0
        %3926 = vmatmul.mubr.f32.gmra.mrb[0].mxu0 %v3819
        %v3927 = vpop.f32.mrb[0].mxu0
        %v3928 = vadd.f32 0.0, %v3927
        %v3929 = vpop.f32.mrb[0].mxu0
        %3930 = vmatprep.mubr.f32.mxu0 0.0
        %3931 = vmatmul.mubr.f32.gmra.mrb[0].mxu0 %v3822
        %v3932 = vpop.f32.mrb[0].mxu0
        %v3933 = vadd.f32 0.0, %v3932
        %v3934 = vpop.f32.mrb[0].mxu0
        %3935 = vmatprep.mubr.f32.mxu0 0.0
        %3936 = vmatmul.mubr.f32.gmra.mrb[0].mxu0 %v3825
        %v3937 = vpop.f32.mrb[0].mxu0
        %v3938 = vadd.f32 0.0, %v3937
        %v3939 = vpop.f32.mrb[0].mxu0
        %3940 = vmatprep.mubr.f32.mxu0 0.0
        %3941 = vmatmul.mubr.f32.gmra.mrb[0].mxu0 %v3828
        %v3942 = vpop.f32.mrb[0].mxu0
        %v3943 = vadd.f32 0.0, %v3942
        %v3944 = vpop.f32.mrb[0].mxu0
        %3945 = vmatprep.mubr.f32.mxu0 0.0
        %3946 = vmatmul.mubr.f32.gmra.mrb[0].mxu0 %v3831
        %v3947 = vpop.f32.mrb[0].mxu0
        %v3948 = vadd.f32 0.0, %v3947
        %v3949 = vpop.f32.mrb[0].mxu0
        %3950 = vmatprep.mubr.f32.mxu0 0.0
        %3951 = vmatmul.mubr.f32.gmra.mrb[0].mxu0 %v3834
        %v3952 = vpop.f32.mrb[0].mxu0
        %v3953 = vadd.f32 0.0, %v3952
        %v3954 = vpop.f32.mrb[0].mxu0
        %3955 = vdwg.mxu0
        %v3956 = vadd.f32 %v3737, %v3903
        %v3957 = vadd.f32 %v3742, %v3908
        %v3958 = vadd.f32 %v3747, %v3913
        %v3959 = vadd.f32 %v3752, %v3918
        %v3960 = vadd.f32 %v3757, %v3923
        %v3961 = vadd.f32 %v3762, %v3928
        %v3962 = vadd.f32 %v3767, %v3933
        %v3963 = vadd.f32 %v3772, %v3938
        %v3964 = vadd.f32 %v3777, %v3943
        %v3965 = vadd.f32 %v3782, %v3948
        %v3966 = vadd.f32 %v3787, %v3953
        %s3967 = sadd.s32 %s3457, 47
        %s3968 = scalar_lea.vmem [#allocation2], %s3967
        %v3969 = vld [vmem:[%s3968] sm:$0xff]
        %v3970 = vld [vmem:[%s3968 + $0x8] sm:$0xff]
        %v3971 = vld [vmem:[%s3968 + $0x10] sm:$0xff]
        %v3972 = vld [vmem:[%s3968 + $0x18] sm:$0xff]
        %v3973 = vld [vmem:[%s3968 + $0x20] sm:$0xff]
        %v3974 = vld [vmem:[%s3968 + $0x28] sm:$0xff]
        %v3975 = vld [vmem:[%s3968 + $0x30] sm:$0xff]
        %v3976 = vld [vmem:[%s3968 + $0x38] sm:$0xff]
        %v3977 = vld [vmem:[%s3968 + $0x40] sm:$0xff]
        %v3978 = vld [vmem:[%s3968 + $0x48] sm:$0xff]
        %v3979 = vld [vmem:[%s3968 + $0x50] sm:$0xf]
        %v3981 = vsel %vm441, %v3969, 0
        %v3984 = vsel %vm441, %v3970, 0
        %v3987 = vsel %vm441, %v3971, 0
        %v3990 = vsel %vm441, %v3972, 0
        %v3993 = vsel %vm441, %v3973, 0
        %v3996 = vsel %vm441, %v3974, 0
        %v3999 = vsel %vm441, %v3975, 0
        %v4002 = vsel %vm441, %v3976, 0
        %v4005 = vsel %vm441, %v3977, 0
        %v4008 = vsel %vm441, %v3978, 0
        %v4011 = vsel %vm441, %v3979, 0
        %4013 = vmatprep.subr.mxu0 0.0
        %4014 = vmatpush1.msra.mxu0 %v3432
        %4015 = vmatprep.subr.mxu0 0.0
        %4016 = vmatpush1.msra.mxu0 %v3433
        %4017 = vmatprep.subr.mxu0 0.0
        %4018 = vmatpush1.msra.mxu0 0.0
        %4019 = vmatprep.subr.mxu0 0.0
        %4020 = vmatpush1.msra.mxu0 0.0
        %4021 = vmatprep.subr.mxu0 0.0
        %4022 = vmatpush1.msra.mxu0 0.0
        %4023 = vmatprep.subr.mxu0 0.0
        %4024 = vmatpush1.msra.mxu0 0.0
        %4025 = vmatprep.subr.mxu0 0.0
        %4026 = vmatpush1.msra.mxu0 0.0
        %4027 = vmatprep.subr.mxu0 0.0
        %4028 = vmatpush1.msra.mxu0 0.0
        %4029 = vmatprep.subr.mxu0 0.0
        %4030 = vmatpush1.msra.mxu0 0.0
        %4031 = vmatprep.subr.mxu0 0.0
        %4032 = vmatpush1.msra.mxu0 0.0
        %4033 = vmatprep.subr.mxu0 0.0
        %4034 = vmatpush1.msra.mxu0 0.0
        %4035 = vmatprep.subr.mxu0 0.0
        %4036 = vmatpush1.msra.mxu0 0.0
        %4037 = vmatprep.subr.mxu0 0.0
        %4038 = vmatpush1.msra.mxu0 0.0
        %4039 = vmatprep.subr.mxu0 0.0
        %4040 = vmatpush1.msra.mxu0 0.0
        %4041 = vmatprep.subr.mxu0 0.0
        %4042 = vmatpush1.msra.mxu0 0.0
        %4043 = vmatprep.subr.mxu0 0.0
        %4044 = vmatpush1.msra.mxu0 0.0
        %4045 = vmatprep.subr.mxu0 0.0
        %4046 = vmatpush1.msra.mxu0 0.0
        %4047 = vmatprep.subr.mxu0 0.0
        %4048 = vmatpush1.msra.mxu0 0.0
        %4049 = vmatprep.subr.mxu0 0.0
        %4050 = vmatpush1.msra.mxu0 0.0
        %4051 = vmatprep.subr.mxu0 0.0
        %4052 = vmatpush1.msra.mxu0 0.0
        %4053 = vmatprep.subr.mxu0 0.0
        %4054 = vmatpush1.msra.mxu0 0.0
        %4055 = vmatprep.subr.mxu0 0.0
        %4056 = vmatpush1.msra.mxu0 0.0
        %4057 = vmatprep.subr.mxu0 0.0
        %4058 = vmatpush1.msra.mxu0 0.0
        %4059 = vmatprep.subr.mxu0 0.0
        %4060 = vmatpush1.msra.mxu0 0.0
        %4061 = vmatprep.subr.mxu0 0.0
        %4062 = vmatpush1.msra.mxu0 0.0
        %4063 = vmatprep.subr.mxu0 0.0
        %4064 = vmatpush1.msra.mxu0 0.0
        %4065 = vmatprep.subr.mxu0 0.0
        %4066 = vmatpush1.msra.mxu0 0.0
        %4067 = vmatprep.subr.mxu0 0.0
        %4068 = vmatpush1.msra.mxu0 0.0
        %4069 = vmatprep.subr.mxu0 0.0
        %4070 = vmatpush1.msra.mxu0 0.0
        %4071 = vmatprep.subr.mxu0 0.0
        %4072 = vmatpush1.msra.mxu0 0.0
        %4073 = vmatprep.subr.mxu0 0.0
        %4074 = vmatpush1.msra.mxu0 0.0
        %4075 = vmatprep.subr.mxu0 0.0
        %4076 = vmatpush1.msra.mxu0 0.0
        %4077 = vmatprep.mubr.f32.mxu0 0.0
        %4078 = vmatmul.mubr.f32.gmra.mrb[0].mxu0 %v3981
        %v4079 = vpop.f32.mrb[0].mxu0
        %v4080 = vadd.f32 0.0, %v4079
        %v4081 = vpop.f32.mrb[0].mxu0
        %4082 = vmatprep.mubr.f32.mxu0 0.0
        %4083 = vmatmul.mubr.f32.gmra.mrb[0].mxu0 %v3984
        %v4084 = vpop.f32.mrb[0].mxu0
        %v4085 = vadd.f32 0.0, %v4084
        %v4086 = vpop.f32.mrb[0].mxu0
        %4087 = vmatprep.mubr.f32.mxu0 0.0
        %4088 = vmatmul.mubr.f32.gmra.mrb[0].mxu0 %v3987
        %v4089 = vpop.f32.mrb[0].mxu0
        %v4090 = vadd.f32 0.0, %v4089
        %v4091 = vpop.f32.mrb[0].mxu0
        %4092 = vmatprep.mubr.f32.mxu0 0.0
        %4093 = vmatmul.mubr.f32.gmra.mrb[0].mxu0 %v3990
        %v4094 = vpop.f32.mrb[0].mxu0
        %v4095 = vadd.f32 0.0, %v4094
        %v4096 = vpop.f32.mrb[0].mxu0
        %4097 = vmatprep.mubr.f32.mxu0 0.0
        %4098 = vmatmul.mubr.f32.gmra.mrb[0].mxu0 %v3993
        %v4099 = vpop.f32.mrb[0].mxu0
        %v4100 = vadd.f32 0.0, %v4099
        %v4101 = vpop.f32.mrb[0].mxu0
        %4102 = vmatprep.mubr.f32.mxu0 0.0
        %4103 = vmatmul.mubr.f32.gmra.mrb[0].mxu0 %v3996
        %v4104 = vpop.f32.mrb[0].mxu0
        %v4105 = vadd.f32 0.0, %v4104
        %v4106 = vpop.f32.mrb[0].mxu0
        %4107 = vmatprep.mubr.f32.mxu0 0.0
        %4108 = vmatmul.mubr.f32.gmra.mrb[0].mxu0 %v3999
        %v4109 = vpop.f32.mrb[0].mxu0
        %v4110 = vadd.f32 0.0, %v4109
        %v4111 = vpop.f32.mrb[0].mxu0
        %4112 = vmatprep.mubr.f32.mxu0 0.0
        %4113 = vmatmul.mubr.f32.gmra.mrb[0].mxu0 %v4002
        %v4114 = vpop.f32.mrb[0].mxu0
        %v4115 = vadd.f32 0.0, %v4114
        %v4116 = vpop.f32.mrb[0].mxu0
        %4117 = vmatprep.mubr.f32.mxu0 0.0
        %4118 = vmatmul.mubr.f32.gmra.mrb[0].mxu0 %v4005
        %v4119 = vpop.f32.mrb[0].mxu0
        %v4120 = vadd.f32 0.0, %v4119
        %v4121 = vpop.f32.mrb[0].mxu0
        %4122 = vmatprep.mubr.f32.mxu0 0.0
        %4123 = vmatmul.mubr.f32.gmra.mrb[0].mxu0 %v4008
        %v4124 = vpop.f32.mrb[0].mxu0
        %v4125 = vadd.f32 0.0, %v4124
        %v4126 = vpop.f32.mrb[0].mxu0
        %4127 = vmatprep.mubr.f32.mxu0 0.0
        %4128 = vmatmul.mubr.f32.gmra.mrb[0].mxu0 %v4011
        %v4129 = vpop.f32.mrb[0].mxu0
        %v4130 = vadd.f32 0.0, %v4129
        %v4131 = vpop.f32.mrb[0].mxu0
        %4132 = vdwg.mxu0
        %v4133 = vadd.f32 %v3956, %v4080
        %v4134 = vadd.f32 %v3957, %v4085
        %v4135 = vadd.f32 %v3958, %v4090
        %v4136 = vadd.f32 %v3959, %v4095
        %v4137 = vadd.f32 %v3960, %v4100
        %v4138 = vadd.f32 %v3961, %v4105
        %v4139 = vadd.f32 %v3962, %v4110
        %v4140 = vadd.f32 %v3963, %v4115
        %v4141 = vadd.f32 %v3964, %v4120
        %v4142 = vadd.f32 %v3965, %v4125
        %v4143 = vadd.f32 %v3966, %v4130
        %s4144 = sadd.s32 %s3457, 48
        %s4145 = scalar_lea.vmem [#allocation2], %s4144
        %v4146 = vld [vmem:[%s4145] sm:$0xff]
        %v4147 = vld [vmem:[%s4145 + $0x8] sm:$0xff]
        %v4148 = vld [vmem:[%s4145 + $0x10] sm:$0xff]
        %v4149 = vld [vmem:[%s4145 + $0x18] sm:$0xff]
        %v4150 = vld [vmem:[%s4145 + $0x20] sm:$0xff]
        %v4151 = vld [vmem:[%s4145 + $0x28] sm:$0xff]
        %v4152 = vld [vmem:[%s4145 + $0x30] sm:$0xff]
        %v4153 = vld [vmem:[%s4145 + $0x38] sm:$0xff]
        %v4154 = vld [vmem:[%s4145 + $0x40] sm:$0xff]
        %v4155 = vld [vmem:[%s4145 + $0x48] sm:$0xff]
        %v4156 = vld [vmem:[%s4145 + $0x50] sm:$0xf]
        %v4158 = vsel %vm441, %v4146, 0
        %v4161 = vsel %vm441, %v4147, 0
        %v4164 = vsel %vm441, %v4148, 0
        %v4167 = vsel %vm441, %v4149, 0
        %v4170 = vsel %vm441, %v4150, 0
        %v4173 = vsel %vm441, %v4151, 0
        %v4176 = vsel %vm441, %v4152, 0
        %v4179 = vsel %vm441, %v4153, 0
        %v4182 = vsel %vm441, %v4154, 0
        %v4185 = vsel %vm441, %v4155, 0
        %v4188 = vsel %vm441, %v4156, 0
        %4190 = vmatprep.subr.mxu0 0.0
        %4191 = vmatpush1.msra.mxu0 %v3435
        %4192 = vmatprep.subr.mxu0 0.0
        %4193 = vmatpush1.msra.mxu0 %v3436
        %4194 = vmatprep.subr.mxu0 0.0
        %4195 = vmatpush1.msra.mxu0 0.0
        %4196 = vmatprep.subr.mxu0 0.0
        %4197 = vmatpush1.msra.mxu0 0.0
        %4198 = vmatprep.subr.mxu0 0.0
        %4199 = vmatpush1.msra.mxu0 0.0
        %4200 = vmatprep.subr.mxu0 0.0
        %4201 = vmatpush1.msra.mxu0 0.0
        %4202 = vmatprep.subr.mxu0 0.0
        %4203 = vmatpush1.msra.mxu0 0.0
        %4204 = vmatprep.subr.mxu0 0.0
        %4205 = vmatpush1.msra.mxu0 0.0
        %4206 = vmatprep.subr.mxu0 0.0
        %4207 = vmatpush1.msra.mxu0 0.0
        %4208 = vmatprep.subr.mxu0 0.0
        %4209 = vmatpush1.msra.mxu0 0.0
        %4210 = vmatprep.subr.mxu0 0.0
        %4211 = vmatpush1.msra.mxu0 0.0
        %4212 = vmatprep.subr.mxu0 0.0
        %4213 = vmatpush1.msra.mxu0 0.0
        %4214 = vmatprep.subr.mxu0 0.0
        %4215 = vmatpush1.msra.mxu0 0.0
        %4216 = vmatprep.subr.mxu0 0.0
        %4217 = vmatpush1.msra.mxu0 0.0
        %4218 = vmatprep.subr.mxu0 0.0
        %4219 = vmatpush1.msra.mxu0 0.0
        %4220 = vmatprep.subr.mxu0 0.0
        %4221 = vmatpush1.msra.mxu0 0.0
        %4222 = vmatprep.subr.mxu0 0.0
        %4223 = vmatpush1.msra.mxu0 0.0
        %4224 = vmatprep.subr.mxu0 0.0
        %4225 = vmatpush1.msra.mxu0 0.0
        %4226 = vmatprep.subr.mxu0 0.0
        %4227 = vmatpush1.msra.mxu0 0.0
        %4228 = vmatprep.subr.mxu0 0.0
        %4229 = vmatpush1.msra.mxu0 0.0
        %4230 = vmatprep.subr.mxu0 0.0
        %4231 = vmatpush1.msra.mxu0 0.0
        %4232 = vmatprep.subr.mxu0 0.0
        %4233 = vmatpush1.msra.mxu0 0.0
        %4234 = vmatprep.subr.mxu0 0.0
        %4235 = vmatpush1.msra.mxu0 0.0
        %4236 = vmatprep.subr.mxu0 0.0
        %4237 = vmatpush1.msra.mxu0 0.0
        %4238 = vmatprep.subr.mxu0 0.0
        %4239 = vmatpush1.msra.mxu0 0.0
        %4240 = vmatprep.subr.mxu0 0.0
        %4241 = vmatpush1.msra.mxu0 0.0
        %4242 = vmatprep.subr.mxu0 0.0
        %4243 = vmatpush1.msra.mxu0 0.0
        %4244 = vmatprep.subr.mxu0 0.0
        %4245 = vmatpush1.msra.mxu0 0.0
        %4246 = vmatprep.subr.mxu0 0.0
        %4247 = vmatpush1.msra.mxu0 0.0
        %4248 = vmatprep.subr.mxu0 0.0
        %4249 = vmatpush1.msra.mxu0 0.0
        %4250 = vmatprep.subr.mxu0 0.0
        %4251 = vmatpush1.msra.mxu0 0.0
        %4252 = vmatprep.subr.mxu0 0.0
        %4253 = vmatpush1.msra.mxu0 0.0
        %4254 = vmatprep.mubr.f32.mxu0 0.0
        %4255 = vmatmul.mubr.f32.gmra.mrb[0].mxu0 %v4158
        %v4256 = vpop.f32.mrb[0].mxu0
        %v4257 = vadd.f32 0.0, %v4256
        %v4258 = vpop.f32.mrb[0].mxu0
        %4259 = vmatprep.mubr.f32.mxu0 0.0
        %4260 = vmatmul.mubr.f32.gmra.mrb[0].mxu0 %v4161
        %v4261 = vpop.f32.mrb[0].mxu0
        %v4262 = vadd.f32 0.0, %v4261
        %v4263 = vpop.f32.mrb[0].mxu0
        %4264 = vmatprep.mubr.f32.mxu0 0.0
        %4265 = vmatmul.mubr.f32.gmra.mrb[0].mxu0 %v4164
        %v4266 = vpop.f32.mrb[0].mxu0
        %v4267 = vadd.f32 0.0, %v4266
        %v4268 = vpop.f32.mrb[0].mxu0
        %4269 = vmatprep.mubr.f32.mxu0 0.0
        %4270 = vmatmul.mubr.f32.gmra.mrb[0].mxu0 %v4167
        %v4271 = vpop.f32.mrb[0].mxu0
        %v4272 = vadd.f32 0.0, %v4271
        %v4273 = vpop.f32.mrb[0].mxu0
        %4274 = vmatprep.mubr.f32.mxu0 0.0
        %4275 = vmatmul.mubr.f32.gmra.mrb[0].mxu0 %v4170
        %v4276 = vpop.f32.mrb[0].mxu0
        %v4277 = vadd.f32 0.0, %v4276
        %v4278 = vpop.f32.mrb[0].mxu0
        %4279 = vmatprep.mubr.f32.mxu0 0.0
        %4280 = vmatmul.mubr.f32.gmra.mrb[0].mxu0 %v4173
        %v4281 = vpop.f32.mrb[0].mxu0
        %v4282 = vadd.f32 0.0, %v4281
        %v4283 = vpop.f32.mrb[0].mxu0
        %4284 = vmatprep.mubr.f32.mxu0 0.0
        %4285 = vmatmul.mubr.f32.gmra.mrb[0].mxu0 %v4176
        %v4286 = vpop.f32.mrb[0].mxu0
        %v4287 = vadd.f32 0.0, %v4286
        %v4288 = vpop.f32.mrb[0].mxu0
        %4289 = vmatprep.mubr.f32.mxu0 0.0
        %4290 = vmatmul.mubr.f32.gmra.mrb[0].mxu0 %v4179
        %v4291 = vpop.f32.mrb[0].mxu0
        %v4292 = vadd.f32 0.0, %v4291
        %v4293 = vpop.f32.mrb[0].mxu0
        %4294 = vmatprep.mubr.f32.mxu0 0.0
        %4295 = vmatmul.mubr.f32.gmra.mrb[0].mxu0 %v4182
        %v4296 = vpop.f32.mrb[0].mxu0
        %v4297 = vadd.f32 0.0, %v4296
        %v4298 = vpop.f32.mrb[0].mxu0
        %4299 = vmatprep.mubr.f32.mxu0 0.0
        %4300 = vmatmul.mubr.f32.gmra.mrb[0].mxu0 %v4185
        %v4301 = vpop.f32.mrb[0].mxu0
        %v4302 = vadd.f32 0.0, %v4301
        %v4303 = vpop.f32.mrb[0].mxu0
        %4304 = vmatprep.mubr.f32.mxu0 0.0
        %4305 = vmatmul.mubr.f32.gmra.mrb[0].mxu0 %v4188
        %v4306 = vpop.f32.mrb[0].mxu0
        %v4307 = vadd.f32 0.0, %v4306
        %v4308 = vpop.f32.mrb[0].mxu0
        %4309 = vdwg.mxu0
        %v4310 = vadd.f32 %v4133, %v4257
        %v4311 = vadd.f32 %v4134, %v4262
        %v4312 = vadd.f32 %v4135, %v4267
        %v4313 = vadd.f32 %v4136, %v4272
        %v4314 = vadd.f32 %v4137, %v4277
        %v4315 = vadd.f32 %v4138, %v4282
        %v4316 = vadd.f32 %v4139, %v4287
        %v4317 = vadd.f32 %v4140, %v4292
        %v4318 = vadd.f32 %v4141, %v4297
        %v4319 = vadd.f32 %v4142, %v4302
        %v4320 = vadd.f32 %v4143, %v4307
        %s4321 = sadd.s32 %s3457, 49
        %s4322 = scalar_lea.vmem [#allocation2], %s4321
        %v4323 = vld [vmem:[%s4322] sm:$0xff]
        %v4324 = vld [vmem:[%s4322 + $0x8] sm:$0xff]
        %v4325 = vld [vmem:[%s4322 + $0x10] sm:$0xff]
        %v4326 = vld [vmem:[%s4322 + $0x18] sm:$0xff]
        %v4327 = vld [vmem:[%s4322 + $0x20] sm:$0xff]
        %v4328 = vld [vmem:[%s4322 + $0x28] sm:$0xff]
        %v4329 = vld [vmem:[%s4322 + $0x30] sm:$0xff]
        %v4330 = vld [vmem:[%s4322 + $0x38] sm:$0xff]
        %v4331 = vld [vmem:[%s4322 + $0x40] sm:$0xff]
        %v4332 = vld [vmem:[%s4322 + $0x48] sm:$0xff]
        %v4333 = vld [vmem:[%s4322 + $0x50] sm:$0xf]
        %v4335 = vsel %vm441, %v4323, 0
        %v4338 = vsel %vm441, %v4324, 0
        %v4341 = vsel %vm441, %v4325, 0
        %v4344 = vsel %vm441, %v4326, 0
        %v4347 = vsel %vm441, %v4327, 0
        %v4350 = vsel %vm441, %v4328, 0
        %v4353 = vsel %vm441, %v4329, 0
        %v4356 = vsel %vm441, %v4330, 0
        %v4359 = vsel %vm441, %v4331, 0
        %v4362 = vsel %vm441, %v4332, 0
        %v4365 = vsel %vm441, %v4333, 0
        %4367 = vmatprep.subr.mxu0 0.0
        %4368 = vmatpush1.msra.mxu0 %v3438
        %4369 = vmatprep.subr.mxu0 0.0
        %4370 = vmatpush1.msra.mxu0 %v3439
        %4371 = vmatprep.subr.mxu0 0.0
        %4372 = vmatpush1.msra.mxu0 0.0
        %4373 = vmatprep.subr.mxu0 0.0
        %4374 = vmatpush1.msra.mxu0 0.0
        %4375 = vmatprep.subr.mxu0 0.0
        %4376 = vmatpush1.msra.mxu0 0.0
        %4377 = vmatprep.subr.mxu0 0.0
        %4378 = vmatpush1.msra.mxu0 0.0
        %4379 = vmatprep.subr.mxu0 0.0
        %4380 = vmatpush1.msra.mxu0 0.0
        %4381 = vmatprep.subr.mxu0 0.0
        %4382 = vmatpush1.msra.mxu0 0.0
        %4383 = vmatprep.subr.mxu0 0.0
        %4384 = vmatpush1.msra.mxu0 0.0
        %4385 = vmatprep.subr.mxu0 0.0
        %4386 = vmatpush1.msra.mxu0 0.0
        %4387 = vmatprep.subr.mxu0 0.0
        %4388 = vmatpush1.msra.mxu0 0.0
        %4389 = vmatprep.subr.mxu0 0.0
        %4390 = vmatpush1.msra.mxu0 0.0
        %4391 = vmatprep.subr.mxu0 0.0
        %4392 = vmatpush1.msra.mxu0 0.0
        %4393 = vmatprep.subr.mxu0 0.0
        %4394 = vmatpush1.msra.mxu0 0.0
        %4395 = vmatprep.subr.mxu0 0.0
        %4396 = vmatpush1.msra.mxu0 0.0
        %4397 = vmatprep.subr.mxu0 0.0
        %4398 = vmatpush1.msra.mxu0 0.0
        %4399 = vmatprep.subr.mxu0 0.0
        %4400 = vmatpush1.msra.mxu0 0.0
        %4401 = vmatprep.subr.mxu0 0.0
        %4402 = vmatpush1.msra.mxu0 0.0
        %4403 = vmatprep.subr.mxu0 0.0
        %4404 = vmatpush1.msra.mxu0 0.0
        %4405 = vmatprep.subr.mxu0 0.0
        %4406 = vmatpush1.msra.mxu0 0.0
        %4407 = vmatprep.subr.mxu0 0.0
        %4408 = vmatpush1.msra.mxu0 0.0
        %4409 = vmatprep.subr.mxu0 0.0
        %4410 = vmatpush1.msra.mxu0 0.0
        %4411 = vmatprep.subr.mxu0 0.0
        %4412 = vmatpush1.msra.mxu0 0.0
        %4413 = vmatprep.subr.mxu0 0.0
        %4414 = vmatpush1.msra.mxu0 0.0
        %4415 = vmatprep.subr.mxu0 0.0
        %4416 = vmatpush1.msra.mxu0 0.0
        %4417 = vmatprep.subr.mxu0 0.0
        %4418 = vmatpush1.msra.mxu0 0.0
        %4419 = vmatprep.subr.mxu0 0.0
        %4420 = vmatpush1.msra.mxu0 0.0
        %4421 = vmatprep.subr.mxu0 0.0
        %4422 = vmatpush1.msra.mxu0 0.0
        %4423 = vmatprep.subr.mxu0 0.0
        %4424 = vmatpush1.msra.mxu0 0.0
        %4425 = vmatprep.subr.mxu0 0.0
        %4426 = vmatpush1.msra.mxu0 0.0
        %4427 = vmatprep.subr.mxu0 0.0
        %4428 = vmatpush1.msra.mxu0 0.0
        %4429 = vmatprep.subr.mxu0 0.0
        %4430 = vmatpush1.msra.mxu0 0.0
        %4431 = vmatprep.mubr.f32.mxu0 0.0
        %4432 = vmatmul.mubr.f32.gmra.mrb[0].mxu0 %v4335
        %v4433 = vpop.f32.mrb[0].mxu0
        %v4434 = vadd.f32 0.0, %v4433
        %v4435 = vpop.f32.mrb[0].mxu0
        %4436 = vmatprep.mubr.f32.mxu0 0.0
        %4437 = vmatmul.mubr.f32.gmra.mrb[0].mxu0 %v4338
        %v4438 = vpop.f32.mrb[0].mxu0
        %v4439 = vadd.f32 0.0, %v4438
        %v4440 = vpop.f32.mrb[0].mxu0
        %4441 = vmatprep.mubr.f32.mxu0 0.0
        %4442 = vmatmul.mubr.f32.gmra.mrb[0].mxu0 %v4341
        %v4443 = vpop.f32.mrb[0].mxu0
        %v4444 = vadd.f32 0.0, %v4443
        %v4445 = vpop.f32.mrb[0].mxu0
        %4446 = vmatprep.mubr.f32.mxu0 0.0
        %4447 = vmatmul.mubr.f32.gmra.mrb[0].mxu0 %v4344
        %v4448 = vpop.f32.mrb[0].mxu0
        %v4449 = vadd.f32 0.0, %v4448
        %v4450 = vpop.f32.mrb[0].mxu0
        %4451 = vmatprep.mubr.f32.mxu0 0.0
        %4452 = vmatmul.mubr.f32.gmra.mrb[0].mxu0 %v4347
        %v4453 = vpop.f32.mrb[0].mxu0
        %v4454 = vadd.f32 0.0, %v4453
        %v4455 = vpop.f32.mrb[0].mxu0
        %4456 = vmatprep.mubr.f32.mxu0 0.0
        %4457 = vmatmul.mubr.f32.gmra.mrb[0].mxu0 %v4350
        %v4458 = vpop.f32.mrb[0].mxu0
        %v4459 = vadd.f32 0.0, %v4458
        %v4460 = vpop.f32.mrb[0].mxu0
        %4461 = vmatprep.mubr.f32.mxu0 0.0
        %4462 = vmatmul.mubr.f32.gmra.mrb[0].mxu0 %v4353
        %v4463 = vpop.f32.mrb[0].mxu0
        %v4464 = vadd.f32 0.0, %v4463
        %v4465 = vpop.f32.mrb[0].mxu0
        %4466 = vmatprep.mubr.f32.mxu0 0.0
        %4467 = vmatmul.mubr.f32.gmra.mrb[0].mxu0 %v4356
        %v4468 = vpop.f32.mrb[0].mxu0
        %v4469 = vadd.f32 0.0, %v4468
        %v4470 = vpop.f32.mrb[0].mxu0
        %4471 = vmatprep.mubr.f32.mxu0 0.0
        %4472 = vmatmul.mubr.f32.gmra.mrb[0].mxu0 %v4359
        %v4473 = vpop.f32.mrb[0].mxu0
        %v4474 = vadd.f32 0.0, %v4473
        %v4475 = vpop.f32.mrb[0].mxu0
        %4476 = vmatprep.mubr.f32.mxu0 0.0
        %4477 = vmatmul.mubr.f32.gmra.mrb[0].mxu0 %v4362
        %v4478 = vpop.f32.mrb[0].mxu0
        %v4479 = vadd.f32 0.0, %v4478
        %v4480 = vpop.f32.mrb[0].mxu0
        %4481 = vmatprep.mubr.f32.mxu0 0.0
        %4482 = vmatmul.mubr.f32.gmra.mrb[0].mxu0 %v4365
        %v4483 = vpop.f32.mrb[0].mxu0
        %v4484 = vadd.f32 0.0, %v4483
        %v4485 = vpop.f32.mrb[0].mxu0
        %4486 = vdwg.mxu0
        %v4487 = vadd.f32 %v4310, %v4434
        %v4488 = vadd.f32 %v4311, %v4439
        %v4489 = vadd.f32 %v4312, %v4444
        %v4490 = vadd.f32 %v4313, %v4449
        %v4491 = vadd.f32 %v4314, %v4454
        %v4492 = vadd.f32 %v4315, %v4459
        %v4493 = vadd.f32 %v4316, %v4464
        %v4494 = vadd.f32 %v4317, %v4469
        %v4495 = vadd.f32 %v4318, %v4474
        %v4496 = vadd.f32 %v4319, %v4479
        %v4497 = vadd.f32 %v4320, %v4484
        %s4498 = sadd.s32 %s3457, 89
        %s4499 = scalar_lea.vmem [#allocation2], %s4498
        %v4500 = vld [vmem:[%s4499] sm:$0xff]
        %v4501 = vld [vmem:[%s4499 + $0x8] sm:$0xff]
        %v4502 = vld [vmem:[%s4499 + $0x10] sm:$0xff]
        %v4503 = vld [vmem:[%s4499 + $0x18] sm:$0xff]
        %v4504 = vld [vmem:[%s4499 + $0x20] sm:$0xff]
        %v4505 = vld [vmem:[%s4499 + $0x28] sm:$0xff]
        %v4506 = vld [vmem:[%s4499 + $0x30] sm:$0xff]
        %v4507 = vld [vmem:[%s4499 + $0x38] sm:$0xff]
        %v4508 = vld [vmem:[%s4499 + $0x40] sm:$0xff]
        %v4509 = vld [vmem:[%s4499 + $0x48] sm:$0xff]
        %v4510 = vld [vmem:[%s4499 + $0x50] sm:$0xf]
        %v4512 = vsel %vm441, %v4500, 0
        %v4515 = vsel %vm441, %v4501, 0
        %v4518 = vsel %vm441, %v4502, 0
        %v4521 = vsel %vm441, %v4503, 0
        %v4524 = vsel %vm441, %v4504, 0
        %v4527 = vsel %vm441, %v4505, 0
        %v4530 = vsel %vm441, %v4506, 0
        %v4533 = vsel %vm441, %v4507, 0
        %v4536 = vsel %vm441, %v4508, 0
        %v4539 = vsel %vm441, %v4509, 0
        %v4542 = vsel %vm441, %v4510, 0
        %4544 = vmatprep.subr.mxu0 0.0
        %4545 = vmatpush1.msra.mxu0 %v3441
        %4546 = vmatprep.subr.mxu0 0.0
        %4547 = vmatpush1.msra.mxu0 %v3442
        %4548 = vmatprep.subr.mxu0 0.0
        %4549 = vmatpush1.msra.mxu0 0.0
        %4550 = vmatprep.subr.mxu0 0.0
        %4551 = vmatpush1.msra.mxu0 0.0
        %4552 = vmatprep.subr.mxu0 0.0
        %4553 = vmatpush1.msra.mxu0 0.0
        %4554 = vmatprep.subr.mxu0 0.0
        %4555 = vmatpush1.msra.mxu0 0.0
        %4556 = vmatprep.subr.mxu0 0.0
        %4557 = vmatpush1.msra.mxu0 0.0
        %4558 = vmatprep.subr.mxu0 0.0
        %4559 = vmatpush1.msra.mxu0 0.0
        %4560 = vmatprep.subr.mxu0 0.0
        %4561 = vmatpush1.msra.mxu0 0.0
        %4562 = vmatprep.subr.mxu0 0.0
        %4563 = vmatpush1.msra.mxu0 0.0
        %4564 = vmatprep.subr.mxu0 0.0
        %4565 = vmatpush1.msra.mxu0 0.0
        %4566 = vmatprep.subr.mxu0 0.0
        %4567 = vmatpush1.msra.mxu0 0.0
        %4568 = vmatprep.subr.mxu0 0.0
        %4569 = vmatpush1.msra.mxu0 0.0
        %4570 = vmatprep.subr.mxu0 0.0
        %4571 = vmatpush1.msra.mxu0 0.0
        %4572 = vmatprep.subr.mxu0 0.0
        %4573 = vmatpush1.msra.mxu0 0.0
        %4574 = vmatprep.subr.mxu0 0.0
        %4575 = vmatpush1.msra.mxu0 0.0
        %4576 = vmatprep.subr.mxu0 0.0
        %4577 = vmatpush1.msra.mxu0 0.0
        %4578 = vmatprep.subr.mxu0 0.0
        %4579 = vmatpush1.msra.mxu0 0.0
        %4580 = vmatprep.subr.mxu0 0.0
        %4581 = vmatpush1.msra.mxu0 0.0
        %4582 = vmatprep.subr.mxu0 0.0
        %4583 = vmatpush1.msra.mxu0 0.0
        %4584 = vmatprep.subr.mxu0 0.0
        %4585 = vmatpush1.msra.mxu0 0.0
        %4586 = vmatprep.subr.mxu0 0.0
        %4587 = vmatpush1.msra.mxu0 0.0
        %4588 = vmatprep.subr.mxu0 0.0
        %4589 = vmatpush1.msra.mxu0 0.0
        %4590 = vmatprep.subr.mxu0 0.0
        %4591 = vmatpush1.msra.mxu0 0.0
        %4592 = vmatprep.subr.mxu0 0.0
        %4593 = vmatpush1.msra.mxu0 0.0
        %4594 = vmatprep.subr.mxu0 0.0
        %4595 = vmatpush1.msra.mxu0 0.0
        %4596 = vmatprep.subr.mxu0 0.0
        %4597 = vmatpush1.msra.mxu0 0.0
        %4598 = vmatprep.subr.mxu0 0.0
        %4599 = vmatpush1.msra.mxu0 0.0
        %4600 = vmatprep.subr.mxu0 0.0
        %4601 = vmatpush1.msra.mxu0 0.0
        %4602 = vmatprep.subr.mxu0 0.0
        %4603 = vmatpush1.msra.mxu0 0.0
        %4604 = vmatprep.subr.mxu0 0.0
        %4605 = vmatpush1.msra.mxu0 0.0
        %4606 = vmatprep.subr.mxu0 0.0
        %4607 = vmatpush1.msra.mxu0 0.0
        %4608 = vmatprep.mubr.f32.mxu0 0.0
        %4609 = vmatmul.mubr.f32.gmra.mrb[0].mxu0 %v4512
        %v4610 = vpop.f32.mrb[0].mxu0
        %v4611 = vadd.f32 0.0, %v4610
        %v4612 = vpop.f32.mrb[0].mxu0
        %4613 = vmatprep.mubr.f32.mxu0 0.0
        %4614 = vmatmul.mubr.f32.gmra.mrb[0].mxu0 %v4515
        %v4615 = vpop.f32.mrb[0].mxu0
        %v4616 = vadd.f32 0.0, %v4615
        %v4617 = vpop.f32.mrb[0].mxu0
        %4618 = vmatprep.mubr.f32.mxu0 0.0
        %4619 = vmatmul.mubr.f32.gmra.mrb[0].mxu0 %v4518
        %v4620 = vpop.f32.mrb[0].mxu0
        %v4621 = vadd.f32 0.0, %v4620
        %v4622 = vpop.f32.mrb[0].mxu0
        %4623 = vmatprep.mubr.f32.mxu0 0.0
        %4624 = vmatmul.mubr.f32.gmra.mrb[0].mxu0 %v4521
        %v4625 = vpop.f32.mrb[0].mxu0
        %v4626 = vadd.f32 0.0, %v4625
        %v4627 = vpop.f32.mrb[0].mxu0
        %4628 = vmatprep.mubr.f32.mxu0 0.0
        %4629 = vmatmul.mubr.f32.gmra.mrb[0].mxu0 %v4524
        %v4630 = vpop.f32.mrb[0].mxu0
        %v4631 = vadd.f32 0.0, %v4630
        %v4632 = vpop.f32.mrb[0].mxu0
        %4633 = vmatprep.mubr.f32.mxu0 0.0
        %4634 = vmatmul.mubr.f32.gmra.mrb[0].mxu0 %v4527
        %v4635 = vpop.f32.mrb[0].mxu0
        %v4636 = vadd.f32 0.0, %v4635
        %v4637 = vpop.f32.mrb[0].mxu0
        %4638 = vmatprep.mubr.f32.mxu0 0.0
        %4639 = vmatmul.mubr.f32.gmra.mrb[0].mxu0 %v4530
        %v4640 = vpop.f32.mrb[0].mxu0
        %v4641 = vadd.f32 0.0, %v4640
        %v4642 = vpop.f32.mrb[0].mxu0
        %4643 = vmatprep.mubr.f32.mxu0 0.0
        %4644 = vmatmul.mubr.f32.gmra.mrb[0].mxu0 %v4533
        %v4645 = vpop.f32.mrb[0].mxu0
        %v4646 = vadd.f32 0.0, %v4645
        %v4647 = vpop.f32.mrb[0].mxu0
        %4648 = vmatprep.mubr.f32.mxu0 0.0
        %4649 = vmatmul.mubr.f32.gmra.mrb[0].mxu0 %v4536
        %v4650 = vpop.f32.mrb[0].mxu0
        %v4651 = vadd.f32 0.0, %v4650
        %v4652 = vpop.f32.mrb[0].mxu0
        %4653 = vmatprep.mubr.f32.mxu0 0.0
        %4654 = vmatmul.mubr.f32.gmra.mrb[0].mxu0 %v4539
        %v4655 = vpop.f32.mrb[0].mxu0
        %v4656 = vadd.f32 0.0, %v4655
        %v4657 = vpop.f32.mrb[0].mxu0
        %4658 = vmatprep.mubr.f32.mxu0 0.0
        %4659 = vmatmul.mubr.f32.gmra.mrb[0].mxu0 %v4542
        %v4660 = vpop.f32.mrb[0].mxu0
        %v4661 = vadd.f32 0.0, %v4660
        %v4662 = vpop.f32.mrb[0].mxu0
        %4663 = vdwg.mxu0
        %v4664 = vadd.f32 %v4487, %v4611
        %v4665 = vadd.f32 %v4488, %v4616
        %v4666 = vadd.f32 %v4489, %v4621
        %v4667 = vadd.f32 %v4490, %v4626
        %v4668 = vadd.f32 %v4491, %v4631
        %v4669 = vadd.f32 %v4492, %v4636
        %v4670 = vadd.f32 %v4493, %v4641
        %v4671 = vadd.f32 %v4494, %v4646
        %v4672 = vadd.f32 %v4495, %v4651
        %v4673 = vadd.f32 %v4496, %v4656
        %v4674 = vadd.f32 %v4497, %v4661
        %s4675 = sadd.s32 %s3457, 90
        %s4676 = scalar_lea.vmem [#allocation2], %s4675
        %v4677 = vld [vmem:[%s4676] sm:$0xff]
        %v4678 = vld [vmem:[%s4676 + $0x8] sm:$0xff]
        %v4679 = vld [vmem:[%s4676 + $0x10] sm:$0xff]
        %v4680 = vld [vmem:[%s4676 + $0x18] sm:$0xff]
        %v4681 = vld [vmem:[%s4676 + $0x20] sm:$0xff]
        %v4682 = vld [vmem:[%s4676 + $0x28] sm:$0xff]
        %v4683 = vld [vmem:[%s4676 + $0x30] sm:$0xff]
        %v4684 = vld [vmem:[%s4676 + $0x38] sm:$0xff]
        %v4685 = vld [vmem:[%s4676 + $0x40] sm:$0xff]
        %v4686 = vld [vmem:[%s4676 + $0x48] sm:$0xff]
        %v4687 = vld [vmem:[%s4676 + $0x50] sm:$0xf]
        %v4689 = vsel %vm441, %v4677, 0
        %v4692 = vsel %vm441, %v4678, 0
        %v4695 = vsel %vm441, %v4679, 0
        %v4698 = vsel %vm441, %v4680, 0
        %v4701 = vsel %vm441, %v4681, 0
        %v4704 = vsel %vm441, %v4682, 0
        %v4707 = vsel %vm441, %v4683, 0
        %v4710 = vsel %vm441, %v4684, 0
        %v4713 = vsel %vm441, %v4685, 0
        %v4716 = vsel %vm441, %v4686, 0
        %v4719 = vsel %vm441, %v4687, 0
        %4721 = vmatprep.subr.mxu0 0.0
        %4722 = vmatpush1.msra.mxu0 %v3444
        %4723 = vmatprep.subr.mxu0 0.0
        %4724 = vmatpush1.msra.mxu0 %v3445
        %4725 = vmatprep.subr.mxu0 0.0
        %4726 = vmatpush1.msra.mxu0 0.0
        %4727 = vmatprep.subr.mxu0 0.0
        %4728 = vmatpush1.msra.mxu0 0.0
        %4729 = vmatprep.subr.mxu0 0.0
        %4730 = vmatpush1.msra.mxu0 0.0
        %4731 = vmatprep.subr.mxu0 0.0
        %4732 = vmatpush1.msra.mxu0 0.0
        %4733 = vmatprep.subr.mxu0 0.0
        %4734 = vmatpush1.msra.mxu0 0.0
        %4735 = vmatprep.subr.mxu0 0.0
        %4736 = vmatpush1.msra.mxu0 0.0
        %4737 = vmatprep.subr.mxu0 0.0
        %4738 = vmatpush1.msra.mxu0 0.0
        %4739 = vmatprep.subr.mxu0 0.0
        %4740 = vmatpush1.msra.mxu0 0.0
        %4741 = vmatprep.subr.mxu0 0.0
        %4742 = vmatpush1.msra.mxu0 0.0
        %4743 = vmatprep.subr.mxu0 0.0
        %4744 = vmatpush1.msra.mxu0 0.0
        %4745 = vmatprep.subr.mxu0 0.0
        %4746 = vmatpush1.msra.mxu0 0.0
        %4747 = vmatprep.subr.mxu0 0.0
        %4748 = vmatpush1.msra.mxu0 0.0
        %4749 = vmatprep.subr.mxu0 0.0
        %4750 = vmatpush1.msra.mxu0 0.0
        %4751 = vmatprep.subr.mxu0 0.0
        %4752 = vmatpush1.msra.mxu0 0.0
        %4753 = vmatprep.subr.mxu0 0.0
        %4754 = vmatpush1.msra.mxu0 0.0
        %4755 = vmatprep.subr.mxu0 0.0
        %4756 = vmatpush1.msra.mxu0 0.0
        %4757 = vmatprep.subr.mxu0 0.0
        %4758 = vmatpush1.msra.mxu0 0.0
        %4759 = vmatprep.subr.mxu0 0.0
        %4760 = vmatpush1.msra.mxu0 0.0
        %4761 = vmatprep.subr.mxu0 0.0
        %4762 = vmatpush1.msra.mxu0 0.0
        %4763 = vmatprep.subr.mxu0 0.0
        %4764 = vmatpush1.msra.mxu0 0.0
        %4765 = vmatprep.subr.mxu0 0.0
        %4766 = vmatpush1.msra.mxu0 0.0
        %4767 = vmatprep.subr.mxu0 0.0
        %4768 = vmatpush1.msra.mxu0 0.0
        %4769 = vmatprep.subr.mxu0 0.0
        %4770 = vmatpush1.msra.mxu0 0.0
        %4771 = vmatprep.subr.mxu0 0.0
        %4772 = vmatpush1.msra.mxu0 0.0
        %4773 = vmatprep.subr.mxu0 0.0
        %4774 = vmatpush1.msra.mxu0 0.0
        %4775 = vmatprep.subr.mxu0 0.0
        %4776 = vmatpush1.msra.mxu0 0.0
        %4777 = vmatprep.subr.mxu0 0.0
        %4778 = vmatpush1.msra.mxu0 0.0
        %4779 = vmatprep.subr.mxu0 0.0
        %4780 = vmatpush1.msra.mxu0 0.0
        %4781 = vmatprep.subr.mxu0 0.0
        %4782 = vmatpush1.msra.mxu0 0.0
        %4783 = vmatprep.subr.mxu0 0.0
        %4784 = vmatpush1.msra.mxu0 0.0
        %4785 = vmatprep.mubr.f32.mxu0 0.0
        %4786 = vmatmul.mubr.f32.gmra.mrb[0].mxu0 %v4689
        %v4787 = vpop.f32.mrb[0].mxu0
        %v4788 = vadd.f32 0.0, %v4787
        %v4789 = vpop.f32.mrb[0].mxu0
        %4790 = vmatprep.mubr.f32.mxu0 0.0
        %4791 = vmatmul.mubr.f32.gmra.mrb[0].mxu0 %v4692
        %v4792 = vpop.f32.mrb[0].mxu0
        %v4793 = vadd.f32 0.0, %v4792
        %v4794 = vpop.f32.mrb[0].mxu0
        %4795 = vmatprep.mubr.f32.mxu0 0.0
        %4796 = vmatmul.mubr.f32.gmra.mrb[0].mxu0 %v4695
        %v4797 = vpop.f32.mrb[0].mxu0
        %v4798 = vadd.f32 0.0, %v4797
        %v4799 = vpop.f32.mrb[0].mxu0
        %4800 = vmatprep.mubr.f32.mxu0 0.0
        %4801 = vmatmul.mubr.f32.gmra.mrb[0].mxu0 %v4698
        %v4802 = vpop.f32.mrb[0].mxu0
        %v4803 = vadd.f32 0.0, %v4802
        %v4804 = vpop.f32.mrb[0].mxu0
        %4805 = vmatprep.mubr.f32.mxu0 0.0
        %4806 = vmatmul.mubr.f32.gmra.mrb[0].mxu0 %v4701
        %v4807 = vpop.f32.mrb[0].mxu0
        %v4808 = vadd.f32 0.0, %v4807
        %v4809 = vpop.f32.mrb[0].mxu0
        %4810 = vmatprep.mubr.f32.mxu0 0.0
        %4811 = vmatmul.mubr.f32.gmra.mrb[0].mxu0 %v4704
        %v4812 = vpop.f32.mrb[0].mxu0
        %v4813 = vadd.f32 0.0, %v4812
        %v4814 = vpop.f32.mrb[0].mxu0
        %4815 = vmatprep.mubr.f32.mxu0 0.0
        %4816 = vmatmul.mubr.f32.gmra.mrb[0].mxu0 %v4707
        %v4817 = vpop.f32.mrb[0].mxu0
        %v4818 = vadd.f32 0.0, %v4817
        %v4819 = vpop.f32.mrb[0].mxu0
        %4820 = vmatprep.mubr.f32.mxu0 0.0
        %4821 = vmatmul.mubr.f32.gmra.mrb[0].mxu0 %v4710
        %v4822 = vpop.f32.mrb[0].mxu0
        %v4823 = vadd.f32 0.0, %v4822
        %v4824 = vpop.f32.mrb[0].mxu0
        %4825 = vmatprep.mubr.f32.mxu0 0.0
        %4826 = vmatmul.mubr.f32.gmra.mrb[0].mxu0 %v4713
        %v4827 = vpop.f32.mrb[0].mxu0
        %v4828 = vadd.f32 0.0, %v4827
        %v4829 = vpop.f32.mrb[0].mxu0
        %4830 = vmatprep.mubr.f32.mxu0 0.0
        %4831 = vmatmul.mubr.f32.gmra.mrb[0].mxu0 %v4716
        %v4832 = vpop.f32.mrb[0].mxu0
        %v4833 = vadd.f32 0.0, %v4832
        %v4834 = vpop.f32.mrb[0].mxu0
        %4835 = vmatprep.mubr.f32.mxu0 0.0
        %4836 = vmatmul.mubr.f32.gmra.mrb[0].mxu0 %v4719
        %v4837 = vpop.f32.mrb[0].mxu0
        %v4838 = vadd.f32 0.0, %v4837
        %v4839 = vpop.f32.mrb[0].mxu0
        %4840 = vdwg.mxu0
        %v4841 = vadd.f32 %v4664, %v4788
        %v4842 = vadd.f32 %v4665, %v4793
        %v4843 = vadd.f32 %v4666, %v4798
        %v4844 = vadd.f32 %v4667, %v4803
        %v4845 = vadd.f32 %v4668, %v4808
        %v4846 = vadd.f32 %v4669, %v4813
        %v4847 = vadd.f32 %v4670, %v4818
        %v4848 = vadd.f32 %v4671, %v4823
        %v4849 = vadd.f32 %v4672, %v4828
        %v4850 = vadd.f32 %v4673, %v4833
        %v4851 = vadd.f32 %v4674, %v4838
        %s4852 = sadd.s32 %s3457, 91
        %s4853 = scalar_lea.vmem [#allocation2], %s4852
        %v4854 = vld [vmem:[%s4853] sm:$0xff]
        %v4855 = vld [vmem:[%s4853 + $0x8] sm:$0xff]
        %v4856 = vld [vmem:[%s4853 + $0x10] sm:$0xff]
        %v4857 = vld [vmem:[%s4853 + $0x18] sm:$0xff]
        %v4858 = vld [vmem:[%s4853 + $0x20] sm:$0xff]
        %v4859 = vld [vmem:[%s4853 + $0x28] sm:$0xff]
        %v4860 = vld [vmem:[%s4853 + $0x30] sm:$0xff]
        %v4861 = vld [vmem:[%s4853 + $0x38] sm:$0xff]
        %v4862 = vld [vmem:[%s4853 + $0x40] sm:$0xff]
        %v4863 = vld [vmem:[%s4853 + $0x48] sm:$0xff]
        %v4864 = vld [vmem:[%s4853 + $0x50] sm:$0xf]
        %v4866 = vsel %vm441, %v4854, 0
        %v4869 = vsel %vm441, %v4855, 0
        %v4872 = vsel %vm441, %v4856, 0
        %v4875 = vsel %vm441, %v4857, 0
        %v4878 = vsel %vm441, %v4858, 0
        %v4881 = vsel %vm441, %v4859, 0
        %v4884 = vsel %vm441, %v4860, 0
        %v4887 = vsel %vm441, %v4861, 0
        %v4890 = vsel %vm441, %v4862, 0
        %v4893 = vsel %vm441, %v4863, 0
        %v4896 = vsel %vm441, %v4864, 0
        %4898 = vmatprep.subr.mxu0 0.0
        %4899 = vmatpush1.msra.mxu0 %v3447
        %4900 = vmatprep.subr.mxu0 0.0
        %4901 = vmatpush1.msra.mxu0 %v3448
        %4902 = vmatprep.subr.mxu0 0.0
        %4903 = vmatpush1.msra.mxu0 0.0
        %4904 = vmatprep.subr.mxu0 0.0
        %4905 = vmatpush1.msra.mxu0 0.0
        %4906 = vmatprep.subr.mxu0 0.0
        %4907 = vmatpush1.msra.mxu0 0.0
        %4908 = vmatprep.subr.mxu0 0.0
        %4909 = vmatpush1.msra.mxu0 0.0
        %4910 = vmatprep.subr.mxu0 0.0
        %4911 = vmatpush1.msra.mxu0 0.0
        %4912 = vmatprep.subr.mxu0 0.0
        %4913 = vmatpush1.msra.mxu0 0.0
        %4914 = vmatprep.subr.mxu0 0.0
        %4915 = vmatpush1.msra.mxu0 0.0
        %4916 = vmatprep.subr.mxu0 0.0
        %4917 = vmatpush1.msra.mxu0 0.0
        %4918 = vmatprep.subr.mxu0 0.0
        %4919 = vmatpush1.msra.mxu0 0.0
        %4920 = vmatprep.subr.mxu0 0.0
        %4921 = vmatpush1.msra.mxu0 0.0
        %4922 = vmatprep.subr.mxu0 0.0
        %4923 = vmatpush1.msra.mxu0 0.0
        %4924 = vmatprep.subr.mxu0 0.0
        %4925 = vmatpush1.msra.mxu0 0.0
        %4926 = vmatprep.subr.mxu0 0.0
        %4927 = vmatpush1.msra.mxu0 0.0
        %4928 = vmatprep.subr.mxu0 0.0
        %4929 = vmatpush1.msra.mxu0 0.0
        %4930 = vmatprep.subr.mxu0 0.0
        %4931 = vmatpush1.msra.mxu0 0.0
        %4932 = vmatprep.subr.mxu0 0.0
        %4933 = vmatpush1.msra.mxu0 0.0
        %4934 = vmatprep.subr.mxu0 0.0
        %4935 = vmatpush1.msra.mxu0 0.0
        %4936 = vmatprep.subr.mxu0 0.0
        %4937 = vmatpush1.msra.mxu0 0.0
        %4938 = vmatprep.subr.mxu0 0.0
        %4939 = vmatpush1.msra.mxu0 0.0
        %4940 = vmatprep.subr.mxu0 0.0
        %4941 = vmatpush1.msra.mxu0 0.0
        %4942 = vmatprep.subr.mxu0 0.0
        %4943 = vmatpush1.msra.mxu0 0.0
        %4944 = vmatprep.subr.mxu0 0.0
        %4945 = vmatpush1.msra.mxu0 0.0
        %4946 = vmatprep.subr.mxu0 0.0
        %4947 = vmatpush1.msra.mxu0 0.0
        %4948 = vmatprep.subr.mxu0 0.0
        %4949 = vmatpush1.msra.mxu0 0.0
        %4950 = vmatprep.subr.mxu0 0.0
        %4951 = vmatpush1.msra.mxu0 0.0
        %4952 = vmatprep.subr.mxu0 0.0
        %4953 = vmatpush1.msra.mxu0 0.0
        %4954 = vmatprep.subr.mxu0 0.0
        %4955 = vmatpush1.msra.mxu0 0.0
        %4956 = vmatprep.subr.mxu0 0.0
        %4957 = vmatpush1.msra.mxu0 0.0
        %4958 = vmatprep.subr.mxu0 0.0
        %4959 = vmatpush1.msra.mxu0 0.0
        %4960 = vmatprep.subr.mxu0 0.0
        %4961 = vmatpush1.msra.mxu0 0.0
        %4962 = vmatprep.mubr.f32.mxu0 0.0
        %4963 = vmatmul.mubr.f32.gmra.mrb[0].mxu0 %v4866
        %v4964 = vpop.f32.mrb[0].mxu0
        %v4965 = vadd.f32 0.0, %v4964
        %v4966 = vpop.f32.mrb[0].mxu0
        %4967 = vmatprep.mubr.f32.mxu0 0.0
        %4968 = vmatmul.mubr.f32.gmra.mrb[0].mxu0 %v4869
        %v4969 = vpop.f32.mrb[0].mxu0
        %v4970 = vadd.f32 0.0, %v4969
        %v4971 = vpop.f32.mrb[0].mxu0
        %4972 = vmatprep.mubr.f32.mxu0 0.0
        %4973 = vmatmul.mubr.f32.gmra.mrb[0].mxu0 %v4872
        %v4974 = vpop.f32.mrb[0].mxu0
        %v4975 = vadd.f32 0.0, %v4974
        %v4976 = vpop.f32.mrb[0].mxu0
        %4977 = vmatprep.mubr.f32.mxu0 0.0
        %4978 = vmatmul.mubr.f32.gmra.mrb[0].mxu0 %v4875
        %v4979 = vpop.f32.mrb[0].mxu0
        %v4980 = vadd.f32 0.0, %v4979
        %v4981 = vpop.f32.mrb[0].mxu0
        %4982 = vmatprep.mubr.f32.mxu0 0.0
        %4983 = vmatmul.mubr.f32.gmra.mrb[0].mxu0 %v4878
        %v4984 = vpop.f32.mrb[0].mxu0
        %v4985 = vadd.f32 0.0, %v4984
        %v4986 = vpop.f32.mrb[0].mxu0
        %4987 = vmatprep.mubr.f32.mxu0 0.0
        %4988 = vmatmul.mubr.f32.gmra.mrb[0].mxu0 %v4881
        %v4989 = vpop.f32.mrb[0].mxu0
        %v4990 = vadd.f32 0.0, %v4989
        %v4991 = vpop.f32.mrb[0].mxu0
        %4992 = vmatprep.mubr.f32.mxu0 0.0
        %4993 = vmatmul.mubr.f32.gmra.mrb[0].mxu0 %v4884
        %v4994 = vpop.f32.mrb[0].mxu0
        %v4995 = vadd.f32 0.0, %v4994
        %v4996 = vpop.f32.mrb[0].mxu0
        %4997 = vmatprep.mubr.f32.mxu0 0.0
        %4998 = vmatmul.mubr.f32.gmra.mrb[0].mxu0 %v4887
        %v4999 = vpop.f32.mrb[0].mxu0
        %v5000 = vadd.f32 0.0, %v4999
        %v5001 = vpop.f32.mrb[0].mxu0
        %5002 = vmatprep.mubr.f32.mxu0 0.0
        %5003 = vmatmul.mubr.f32.gmra.mrb[0].mxu0 %v4890
        %v5004 = vpop.f32.mrb[0].mxu0
        %v5005 = vadd.f32 0.0, %v5004
        %v5006 = vpop.f32.mrb[0].mxu0
        %5007 = vmatprep.mubr.f32.mxu0 0.0
        %5008 = vmatmul.mubr.f32.gmra.mrb[0].mxu0 %v4893
        %v5009 = vpop.f32.mrb[0].mxu0
        %v5010 = vadd.f32 0.0, %v5009
        %v5011 = vpop.f32.mrb[0].mxu0
        %5012 = vmatprep.mubr.f32.mxu0 0.0
        %5013 = vmatmul.mubr.f32.gmra.mrb[0].mxu0 %v4896
        %v5014 = vpop.f32.mrb[0].mxu0
        %v5015 = vadd.f32 0.0, %v5014
        %v5016 = vpop.f32.mrb[0].mxu0
        %5017 = vdwg.mxu0
        %v5018 = vadd.f32 %v4841, %v4965
        %v5019 = vadd.f32 %v4842, %v4970
        %v5020 = vadd.f32 %v4843, %v4975
        %v5021 = vadd.f32 %v4844, %v4980
        %v5022 = vadd.f32 %v4845, %v4985
        %v5023 = vadd.f32 %v4846, %v4990
        %v5024 = vadd.f32 %v4847, %v4995
        %v5025 = vadd.f32 %v4848, %v5000
        %v5026 = vadd.f32 %v4849, %v5005
        %v5027 = vadd.f32 %v4850, %v5010
        %v5028 = vadd.f32 %v4851, %v5015
        %v5030 = vlaneseq
        %v5031 = vshrl.u32 %v5030, 7
        %v5032 = vsub.s32 0, %v5031
        %v5033 = vrot.slane %v3449, %v5032
        %v5035 = vmul.f32 %v5018, %v5033
        %v5036 = vmul.f32 %v5019, %v5033
        %v5037 = vmul.f32 %v5020, %v5033
        %v5038 = vmul.f32 %v5021, %v5033
        %v5039 = vmul.f32 %v5022, %v5033
        %v5040 = vmul.f32 %v5023, %v5033
        %v5041 = vmul.f32 %v5024, %v5033
        %v5042 = vmul.f32 %v5025, %v5033
        %v5043 = vmul.f32 %v5026, %v5033
        %v5044 = vmul.f32 %v5027, %v5033
        %v5045 = vmul.f32 %v5028, %v5033
        %v5047 = vlaneseq
        %v5048 = vshrl.u32 %v5047, 7
        %v5049 = vsub.s32 0, %v5048
        %v5050 = vrot.slane %v3450, %v5049
        %v5052 = vadd.f32 %v5035, %v5050
        %v5053 = vadd.f32 %v5036, %v5050
        %v5054 = vadd.f32 %v5037, %v5050
        %v5055 = vadd.f32 %v5038, %v5050
        %v5056 = vadd.f32 %v5039, %v5050
        %v5057 = vadd.f32 %v5040, %v5050
        %v5058 = vadd.f32 %v5041, %v5050
        %v5059 = vadd.f32 %v5042, %v5050
        %v5060 = vadd.f32 %v5043, %v5050
        %v5061 = vadd.f32 %v5044, %v5050
        %v5062 = vadd.f32 %v5045, %v5050
        %v5063 = vmax.f32 %v5052, 0.0
        %v5064 = vmax.f32 %v5053, 0.0
        %v5065 = vmax.f32 %v5054, 0.0
        %v5066 = vmax.f32 %v5055, 0.0
        %v5067 = vmax.f32 %v5056, 0.0
        %v5068 = vmax.f32 %v5057, 0.0
        %v5069 = vmax.f32 %v5058, 0.0
        %v5070 = vmax.f32 %v5059, 0.0
        %v5071 = vmax.f32 %v5060, 0.0
        %v5072 = vmax.f32 %v5061, 0.0
        %v5073 = vmax.f32 %v5062, 0.0
        %5074 = vst.msk [vmem:[#allocation5] sm:$0xff] %vm441, %v5063
        %5075 = vst.msk [vmem:[#allocation5 + $0x8] sm:$0xff] %vm441, %v5064
        %5076 = vst.msk [vmem:[#allocation5 + $0x10] sm:$0xff] %vm441, %v5065
        %5077 = vst.msk [vmem:[#allocation5 + $0x18] sm:$0xff] %vm441, %v5066
        %5078 = vst.msk [vmem:[#allocation5 + $0x20] sm:$0xff] %vm441, %v5067
        %5079 = vst.msk [vmem:[#allocation5 + $0x28] sm:$0xff] %vm441, %v5068
        %5080 = vst.msk [vmem:[#allocation5 + $0x30] sm:$0xff] %vm441, %v5069
        %5081 = vst.msk [vmem:[#allocation5 + $0x38] sm:$0xff] %vm441, %v5070
        %5082 = vst.msk [vmem:[#allocation5 + $0x40] sm:$0xff] %vm441, %v5071
        %5083 = vst.msk [vmem:[#allocation5 + $0x48] sm:$0xff] %vm441, %v5072
        %vm5084 = vcmask 125952
        %5085 = vst.msk [vmem:[#allocation5 + $0x50] sm:$0xf] %vm5084, %v5073
        %v5086 = vld [vmem:[#allocation5] sm:$0xff]
        %v5087 = vld [vmem:[#allocation5 + $0x8] sm:$0xff]
        %v5088 = vld [vmem:[#allocation5 + $0x10] sm:$0xff]
        %v5089 = vld [vmem:[#allocation5 + $0x18] sm:$0xff]
        %v5090 = vld [vmem:[#allocation5 + $0x20] sm:$0xff]
        %v5091 = vld [vmem:[#allocation5 + $0x2a] sm:$0xff]
        %v5092 = vld [vmem:[#allocation5 + $0x32] sm:$0xff]
        %v5093 = vld [vmem:[#allocation5 + $0x3a] sm:$0xff]
        %v5094 = vld [vmem:[#allocation5 + $0x42] sm:$0xff]
        %v5095 = vld [vmem:[#allocation5 + $0x4a] sm:$0xff]
        %v5096 = vmax.f32 %v5086, %v5091
        %v5097 = vmax.f32 %v5087, %v5092
        %v5098 = vmax.f32 %v5088, %v5093
        %v5099 = vmax.f32 %v5089, %v5094
        %v5100 = vmax.f32 %v5090, %v5095
        %5101 = vst.msk [vmem:[#allocation6] sm:$0xff] %vm441, %v5096
        %5102 = vst.msk [vmem:[#allocation6 + $0x8] sm:$0xff] %vm441, %v5097
        %5103 = vst.msk [vmem:[#allocation6 + $0x10] sm:$0xff] %vm441, %v5098
        %5104 = vst.msk [vmem:[#allocation6 + $0x18] sm:$0xff] %vm441, %v5099
        %5105 = vst.msk [vmem:[#allocation6 + $0x20] sm:$0xff] %vm441, %v5100
        %v5106 = vld [vmem:[#allocation6] ss:$2 sm:$0xff]
        %s5107 = scalar_lea.vmem [#allocation6], 16
        %v5108 = vld [vmem:[%s5107] ss:$2 sm:$0xff]
        %s5109 = scalar_lea.vmem [#allocation6], 32
        %v5110 = vld [vmem:[%s5109] ss:$2 sm:$0xf]
        %s5111 = scalar_lea.vmem [#allocation6], 1
        %v5112 = vld [vmem:[%s5111] ss:$2 sm:$0xff]
        %s5113 = scalar_lea.vmem [#allocation6], 17
        %v5114 = vld [vmem:[%s5113] ss:$2 sm:$0xff]
        %s5115 = scalar_lea.vmem [#allocation6], 33
        %v5116 = vld [vmem:[%s5115] ss:$2 sm:$0xf]
        %v5117 = vmax.f32 %v5106, %v5112
        %v5118 = vmax.f32 %v5108, %v5114
        %v5119 = vmax.f32 %v5110, %v5116
        %s5120 = smul.u32 %s3452, 22
        %s5121 = sadd.s32 %s5120, 28
        %s5122 = scalar_lea.vmem [#allocation3], %s5121
        %5123 = vst.msk [vmem:[%s5122] sm:$0xff] %vm441, %v5117
        %5124 = vst.msk [vmem:[%s5122 + $0x8] sm:$0xff] %vm441, %v5118
        %5125 = vst.msk [vmem:[%s5122 + $0x10] sm:$0xf] %vm5084, %v5119
      $region84: #{convnet_forward.1} parent=71 // loop_footer
        %s3456 = sadd.s32 1, %s3452
      $region85: #{convnet_forward.1} parent=71 // loop_footer_branch
        %3451 = sbr.rel target = $region81
      $region86: #{convnet_forward.1} parent=71 // loop_exit
        _
      %v5126 = vld [vmem:[%s7] sm:$0xff]
      %v5127 = vld [vmem:[%s7 + $0x8] sm:$0xff]
      %s5128 = scalar_lea.vmem %s7, 16
      %v5129 = vld [vmem:[%s5128] sm:$0xff]
      %v5130 = vld [vmem:[%s5128 + $0x8] sm:$0xff]
      %s5131 = scalar_lea.vmem %s7, 32
      %v5132 = vld [vmem:[%s5131] sm:$0xff]
      %v5133 = vld [vmem:[%s5131 + $0x8] sm:$0xff]
      %s5134 = scalar_lea.vmem %s7, 48
      %v5135 = vld [vmem:[%s5134] sm:$0xff]
      %v5136 = vld [vmem:[%s5134 + $0x8] sm:$0xff]
      %s5137 = scalar_lea.vmem %s7, 64
      %v5138 = vld [vmem:[%s5137] sm:$0xff]
      %v5139 = vld [vmem:[%s5137 + $0x8] sm:$0xff]
      %s5140 = scalar_lea.vmem %s7, 80
      %v5141 = vld [vmem:[%s5140] sm:$0xff]
      %v5142 = vld [vmem:[%s5140 + $0x8] sm:$0xff]
      %s5143 = scalar_lea.vmem %s7, 96
      %v5144 = vld [vmem:[%s5143] sm:$0xff]
      %v5145 = vld [vmem:[%s5143 + $0x8] sm:$0xff]
      %s5146 = scalar_lea.vmem %s7, 112
      %v5147 = vld [vmem:[%s5146] sm:$0xff]
      %v5148 = vld [vmem:[%s5146 + $0x8] sm:$0xff]
      %s5149 = scalar_lea.vmem %s7, 128
      %v5150 = vld [vmem:[%s5149] sm:$0xff]
      %v5151 = vld [vmem:[%s5149 + $0x8] sm:$0xff]
      %v5152 = vld [vmem:[%s8] sm:$0x1]
      %v5153 = vld [vmem:[%s9] sm:$0x1]
      loop: start=0, step=1, limit=10
      $region87: #{convnet_forward.1} parent=71 // loop_pre_header
        _
      $region88: #{convnet_forward.1} parent=71 // loop_header
        %s5155 = sphi 0, %s5159
        %p5156 = scmp.ge.s32.totalorder %s5155, 10
      $region89: #{convnet_forward.1} parent=71 // loop_header_branch
        %5158 = sbr.rel (%p5156) target = $region93
      $region90: #{convnet_forward.1} parent=71 // loop_body
        %s5160 = smul.u32 %s5155, 44
        %s5161 = sadd.s32 %s5160, 5
        %s5162 = scalar_lea.vmem [#allocation3], %s5161
        %v5163 = vld [vmem:[%s5162] sm:$0xff]
        %v5164 = vld [vmem:[%s5162 + $0x8] sm:$0xff]
        %v5165 = vld [vmem:[%s5162 + $0x10] sm:$0xff]
        %v5166 = vld [vmem:[%s5162 + $0x18] sm:$0xff]
        %v5167 = vld [vmem:[%s5162 + $0x20] sm:$0xff]
        %v5168 = vld [vmem:[%s5162 + $0x28] sm:$0xf]
        %s5169 = sadd.s32 %s5160, 6
        %s5170 = scalar_lea.vmem [#allocation3], %s5169
        %v5171 = vld [vmem:[%s5170] sm:$0xff]
        %v5172 = vld [vmem:[%s5170 + $0x8] sm:$0xff]
        %v5173 = vld [vmem:[%s5170 + $0x10] sm:$0xff]
        %v5174 = vld [vmem:[%s5170 + $0x18] sm:$0xff]
        %v5175 = vld [vmem:[%s5170 + $0x20] sm:$0xff]
        %v5176 = vld [vmem:[%s5170 + $0x28] sm:$0xf]
        %v5178 = vsel %vm441, %v5171, 0
        %v5181 = vsel %vm441, %v5172, 0
        %v5184 = vsel %vm441, %v5173, 0
        %v5187 = vsel %vm441, %v5174, 0
        %v5190 = vsel %vm441, %v5175, 0
        %v5193 = vsel %vm441, %v5176, 0
        %5195 = vmatprep.subr.mxu0 0.0
        %5196 = vmatpush1.msra.mxu0 %v5129
        %5197 = vmatprep.subr.mxu0 0.0
        %5198 = vmatpush1.msra.mxu0 %v5130
        %5199 = vmatprep.subr.mxu0 0.0
        %5200 = vmatpush1.msra.mxu0 0.0
        %5201 = vmatprep.subr.mxu0 0.0
        %5202 = vmatpush1.msra.mxu0 0.0
        %5203 = vmatprep.subr.mxu0 0.0
        %5204 = vmatpush1.msra.mxu0 0.0
        %5205 = vmatprep.subr.mxu0 0.0
        %5206 = vmatpush1.msra.mxu0 0.0
        %5207 = vmatprep.subr.mxu0 0.0
        %5208 = vmatpush1.msra.mxu0 0.0
        %5209 = vmatprep.subr.mxu0 0.0
        %5210 = vmatpush1.msra.mxu0 0.0
        %5211 = vmatprep.subr.mxu0 0.0
        %5212 = vmatpush1.msra.mxu0 0.0
        %5213 = vmatprep.subr.mxu0 0.0
        %5214 = vmatpush1.msra.mxu0 0.0
        %5215 = vmatprep.subr.mxu0 0.0
        %5216 = vmatpush1.msra.mxu0 0.0
        %5217 = vmatprep.subr.mxu0 0.0
        %5218 = vmatpush1.msra.mxu0 0.0
        %5219 = vmatprep.subr.mxu0 0.0
        %5220 = vmatpush1.msra.mxu0 0.0
        %5221 = vmatprep.subr.mxu0 0.0
        %5222 = vmatpush1.msra.mxu0 0.0
        %5223 = vmatprep.subr.mxu0 0.0
        %5224 = vmatpush1.msra.mxu0 0.0
        %5225 = vmatprep.subr.mxu0 0.0
        %5226 = vmatpush1.msra.mxu0 0.0
        %5227 = vmatprep.subr.mxu0 0.0
        %5228 = vmatpush1.msra.mxu0 0.0
        %5229 = vmatprep.subr.mxu0 0.0
        %5230 = vmatpush1.msra.mxu0 0.0
        %5231 = vmatprep.subr.mxu0 0.0
        %5232 = vmatpush1.msra.mxu0 0.0
        %5233 = vmatprep.subr.mxu0 0.0
        %5234 = vmatpush1.msra.mxu0 0.0
        %5235 = vmatprep.subr.mxu0 0.0
        %5236 = vmatpush1.msra.mxu0 0.0
        %5237 = vmatprep.subr.mxu0 0.0
        %5238 = vmatpush1.msra.mxu0 0.0
        %5239 = vmatprep.subr.mxu0 0.0
        %5240 = vmatpush1.msra.mxu0 0.0
        %5241 = vmatprep.subr.mxu0 0.0
        %5242 = vmatpush1.msra.mxu0 0.0
        %5243 = vmatprep.subr.mxu0 0.0
        %5244 = vmatpush1.msra.mxu0 0.0
        %5245 = vmatprep.subr.mxu0 0.0
        %5246 = vmatpush1.msra.mxu0 0.0
        %5247 = vmatprep.subr.mxu0 0.0
        %5248 = vmatpush1.msra.mxu0 0.0
        %5249 = vmatprep.subr.mxu0 0.0
        %5250 = vmatpush1.msra.mxu0 0.0
        %5251 = vmatprep.subr.mxu0 0.0
        %5252 = vmatpush1.msra.mxu0 0.0
        %5253 = vmatprep.subr.mxu0 0.0
        %5254 = vmatpush1.msra.mxu0 0.0
        %5255 = vmatprep.subr.mxu0 0.0
        %5256 = vmatpush1.msra.mxu0 0.0
        %5257 = vmatprep.subr.mxu0 0.0
        %5258 = vmatpush1.msra.mxu0 0.0
        %5259 = vmatprep.mubr.f32.mxu0 0.0
        %5260 = vmatmul.mubr.f32.gmra.mrb[0].mxu0 %v5178
        %v5261 = vpop.f32.mrb[0].mxu0
        %v5262 = vadd.f32 0.0, %v5261
        %v5263 = vpop.f32.mrb[0].mxu0
        %5264 = vmatprep.mubr.f32.mxu0 0.0
        %5265 = vmatmul.mubr.f32.gmra.mrb[0].mxu0 %v5181
        %v5266 = vpop.f32.mrb[0].mxu0
        %v5267 = vadd.f32 0.0, %v5266
        %v5268 = vpop.f32.mrb[0].mxu0
        %5269 = vmatprep.mubr.f32.mxu0 0.0
        %5270 = vmatmul.mubr.f32.gmra.mrb[0].mxu0 %v5184
        %v5271 = vpop.f32.mrb[0].mxu0
        %v5272 = vadd.f32 0.0, %v5271
        %v5273 = vpop.f32.mrb[0].mxu0
        %5274 = vmatprep.mubr.f32.mxu0 0.0
        %5275 = vmatmul.mubr.f32.gmra.mrb[0].mxu0 %v5187
        %v5276 = vpop.f32.mrb[0].mxu0
        %v5277 = vadd.f32 0.0, %v5276
        %v5278 = vpop.f32.mrb[0].mxu0
        %5279 = vmatprep.mubr.f32.mxu0 0.0
        %5280 = vmatmul.mubr.f32.gmra.mrb[0].mxu0 %v5190
        %v5281 = vpop.f32.mrb[0].mxu0
        %v5282 = vadd.f32 0.0, %v5281
        %v5283 = vpop.f32.mrb[0].mxu0
        %5284 = vmatprep.mubr.f32.mxu0 0.0
        %5285 = vmatmul.mubr.f32.gmra.mrb[0].mxu0 %v5193
        %v5286 = vpop.f32.mrb[0].mxu0
        %v5287 = vadd.f32 0.0, %v5286
        %v5288 = vpop.f32.mrb[0].mxu0
        %5289 = vdwg.mxu0
        %v5291 = vsel %vm441, %v5163, 0
        %v5294 = vsel %vm441, %v5164, 0
        %v5297 = vsel %vm441, %v5165, 0
        %v5300 = vsel %vm441, %v5166, 0
        %v5303 = vsel %vm441, %v5167, 0
        %v5306 = vsel %vm441, %v5168, 0
        %5308 = vmatprep.subr.mxu0 0.0
        %5309 = vmatpush1.msra.mxu0 %v5126
        %5310 = vmatprep.subr.mxu0 0.0
        %5311 = vmatpush1.msra.mxu0 %v5127
        %5312 = vmatprep.subr.mxu0 0.0
        %5313 = vmatpush1.msra.mxu0 0.0
        %5314 = vmatprep.subr.mxu0 0.0
        %5315 = vmatpush1.msra.mxu0 0.0
        %5316 = vmatprep.subr.mxu0 0.0
        %5317 = vmatpush1.msra.mxu0 0.0
        %5318 = vmatprep.subr.mxu0 0.0
        %5319 = vmatpush1.msra.mxu0 0.0
        %5320 = vmatprep.subr.mxu0 0.0
        %5321 = vmatpush1.msra.mxu0 0.0
        %5322 = vmatprep.subr.mxu0 0.0
        %5323 = vmatpush1.msra.mxu0 0.0
        %5324 = vmatprep.subr.mxu0 0.0
        %5325 = vmatpush1.msra.mxu0 0.0
        %5326 = vmatprep.subr.mxu0 0.0
        %5327 = vmatpush1.msra.mxu0 0.0
        %5328 = vmatprep.subr.mxu0 0.0
        %5329 = vmatpush1.msra.mxu0 0.0
        %5330 = vmatprep.subr.mxu0 0.0
        %5331 = vmatpush1.msra.mxu0 0.0
        %5332 = vmatprep.subr.mxu0 0.0
        %5333 = vmatpush1.msra.mxu0 0.0
        %5334 = vmatprep.subr.mxu0 0.0
        %5335 = vmatpush1.msra.mxu0 0.0
        %5336 = vmatprep.subr.mxu0 0.0
        %5337 = vmatpush1.msra.mxu0 0.0
        %5338 = vmatprep.subr.mxu0 0.0
        %5339 = vmatpush1.msra.mxu0 0.0
        %5340 = vmatprep.subr.mxu0 0.0
        %5341 = vmatpush1.msra.mxu0 0.0
        %5342 = vmatprep.subr.mxu0 0.0
        %5343 = vmatpush1.msra.mxu0 0.0
        %5344 = vmatprep.subr.mxu0 0.0
        %5345 = vmatpush1.msra.mxu0 0.0
        %5346 = vmatprep.subr.mxu0 0.0
        %5347 = vmatpush1.msra.mxu0 0.0
        %5348 = vmatprep.subr.mxu0 0.0
        %5349 = vmatpush1.msra.mxu0 0.0
        %5350 = vmatprep.subr.mxu0 0.0
        %5351 = vmatpush1.msra.mxu0 0.0
        %5352 = vmatprep.subr.mxu0 0.0
        %5353 = vmatpush1.msra.mxu0 0.0
        %5354 = vmatprep.subr.mxu0 0.0
        %5355 = vmatpush1.msra.mxu0 0.0
        %5356 = vmatprep.subr.mxu0 0.0
        %5357 = vmatpush1.msra.mxu0 0.0
        %5358 = vmatprep.subr.mxu0 0.0
        %5359 = vmatpush1.msra.mxu0 0.0
        %5360 = vmatprep.subr.mxu0 0.0
        %5361 = vmatpush1.msra.mxu0 0.0
        %5362 = vmatprep.subr.mxu0 0.0
        %5363 = vmatpush1.msra.mxu0 0.0
        %5364 = vmatprep.subr.mxu0 0.0
        %5365 = vmatpush1.msra.mxu0 0.0
        %5366 = vmatprep.subr.mxu0 0.0
        %5367 = vmatpush1.msra.mxu0 0.0
        %5368 = vmatprep.subr.mxu0 0.0
        %5369 = vmatpush1.msra.mxu0 0.0
        %5370 = vmatprep.subr.mxu0 0.0
        %5371 = vmatpush1.msra.mxu0 0.0
        %5372 = vmatprep.mubr.f32.mxu0 0.0
        %5373 = vmatmul.mubr.f32.gmra.mrb[0].mxu0 %v5291
        %v5374 = vpop.f32.mrb[0].mxu0
        %v5375 = vadd.f32 %v5262, %v5374
        %v5376 = vpop.f32.mrb[0].mxu0
        %5377 = vmatprep.mubr.f32.mxu0 0.0
        %5378 = vmatmul.mubr.f32.gmra.mrb[0].mxu0 %v5294
        %v5379 = vpop.f32.mrb[0].mxu0
        %v5380 = vadd.f32 %v5267, %v5379
        %v5381 = vpop.f32.mrb[0].mxu0
        %5382 = vmatprep.mubr.f32.mxu0 0.0
        %5383 = vmatmul.mubr.f32.gmra.mrb[0].mxu0 %v5297
        %v5384 = vpop.f32.mrb[0].mxu0
        %v5385 = vadd.f32 %v5272, %v5384
        %v5386 = vpop.f32.mrb[0].mxu0
        %5387 = vmatprep.mubr.f32.mxu0 0.0
        %5388 = vmatmul.mubr.f32.gmra.mrb[0].mxu0 %v5300
        %v5389 = vpop.f32.mrb[0].mxu0
        %v5390 = vadd.f32 %v5277, %v5389
        %v5391 = vpop.f32.mrb[0].mxu0
        %5392 = vmatprep.mubr.f32.mxu0 0.0
        %5393 = vmatmul.mubr.f32.gmra.mrb[0].mxu0 %v5303
        %v5394 = vpop.f32.mrb[0].mxu0
        %v5395 = vadd.f32 %v5282, %v5394
        %v5396 = vpop.f32.mrb[0].mxu0
        %5397 = vmatprep.mubr.f32.mxu0 0.0
        %5398 = vmatmul.mubr.f32.gmra.mrb[0].mxu0 %v5306
        %v5399 = vpop.f32.mrb[0].mxu0
        %v5400 = vadd.f32 %v5287, %v5399
        %v5401 = vpop.f32.mrb[0].mxu0
        %5402 = vdwg.mxu0
        %s5403 = sadd.s32 %s5160, 7
        %s5404 = scalar_lea.vmem [#allocation3], %s5403
        %v5405 = vld [vmem:[%s5404] sm:$0xff]
        %v5406 = vld [vmem:[%s5404 + $0x8] sm:$0xff]
        %v5407 = vld [vmem:[%s5404 + $0x10] sm:$0xff]
        %v5408 = vld [vmem:[%s5404 + $0x18] sm:$0xff]
        %v5409 = vld [vmem:[%s5404 + $0x20] sm:$0xff]
        %v5410 = vld [vmem:[%s5404 + $0x28] sm:$0xf]
        %v5412 = vsel %vm441, %v5405, 0
        %v5415 = vsel %vm441, %v5406, 0
        %v5418 = vsel %vm441, %v5407, 0
        %v5421 = vsel %vm441, %v5408, 0
        %v5424 = vsel %vm441, %v5409, 0
        %v5427 = vsel %vm441, %v5410, 0
        %5429 = vmatprep.subr.mxu0 0.0
        %5430 = vmatpush1.msra.mxu0 %v5132
        %5431 = vmatprep.subr.mxu0 0.0
        %5432 = vmatpush1.msra.mxu0 %v5133
        %5433 = vmatprep.subr.mxu0 0.0
        %5434 = vmatpush1.msra.mxu0 0.0
        %5435 = vmatprep.subr.mxu0 0.0
        %5436 = vmatpush1.msra.mxu0 0.0
        %5437 = vmatprep.subr.mxu0 0.0
        %5438 = vmatpush1.msra.mxu0 0.0
        %5439 = vmatprep.subr.mxu0 0.0
        %5440 = vmatpush1.msra.mxu0 0.0
        %5441 = vmatprep.subr.mxu0 0.0
        %5442 = vmatpush1.msra.mxu0 0.0
        %5443 = vmatprep.subr.mxu0 0.0
        %5444 = vmatpush1.msra.mxu0 0.0
        %5445 = vmatprep.subr.mxu0 0.0
        %5446 = vmatpush1.msra.mxu0 0.0
        %5447 = vmatprep.subr.mxu0 0.0
        %5448 = vmatpush1.msra.mxu0 0.0
        %5449 = vmatprep.subr.mxu0 0.0
        %5450 = vmatpush1.msra.mxu0 0.0
        %5451 = vmatprep.subr.mxu0 0.0
        %5452 = vmatpush1.msra.mxu0 0.0
        %5453 = vmatprep.subr.mxu0 0.0
        %5454 = vmatpush1.msra.mxu0 0.0
        %5455 = vmatprep.subr.mxu0 0.0
        %5456 = vmatpush1.msra.mxu0 0.0
        %5457 = vmatprep.subr.mxu0 0.0
        %5458 = vmatpush1.msra.mxu0 0.0
        %5459 = vmatprep.subr.mxu0 0.0
        %5460 = vmatpush1.msra.mxu0 0.0
        %5461 = vmatprep.subr.mxu0 0.0
        %5462 = vmatpush1.msra.mxu0 0.0
        %5463 = vmatprep.subr.mxu0 0.0
        %5464 = vmatpush1.msra.mxu0 0.0
        %5465 = vmatprep.subr.mxu0 0.0
        %5466 = vmatpush1.msra.mxu0 0.0
        %5467 = vmatprep.subr.mxu0 0.0
        %5468 = vmatpush1.msra.mxu0 0.0
        %5469 = vmatprep.subr.mxu0 0.0
        %5470 = vmatpush1.msra.mxu0 0.0
        %5471 = vmatprep.subr.mxu0 0.0
        %5472 = vmatpush1.msra.mxu0 0.0
        %5473 = vmatprep.subr.mxu0 0.0
        %5474 = vmatpush1.msra.mxu0 0.0
        %5475 = vmatprep.subr.mxu0 0.0
        %5476 = vmatpush1.msra.mxu0 0.0
        %5477 = vmatprep.subr.mxu0 0.0
        %5478 = vmatpush1.msra.mxu0 0.0
        %5479 = vmatprep.subr.mxu0 0.0
        %5480 = vmatpush1.msra.mxu0 0.0
        %5481 = vmatprep.subr.mxu0 0.0
        %5482 = vmatpush1.msra.mxu0 0.0
        %5483 = vmatprep.subr.mxu0 0.0
        %5484 = vmatpush1.msra.mxu0 0.0
        %5485 = vmatprep.subr.mxu0 0.0
        %5486 = vmatpush1.msra.mxu0 0.0
        %5487 = vmatprep.subr.mxu0 0.0
        %5488 = vmatpush1.msra.mxu0 0.0
        %5489 = vmatprep.subr.mxu0 0.0
        %5490 = vmatpush1.msra.mxu0 0.0
        %5491 = vmatprep.subr.mxu0 0.0
        %5492 = vmatpush1.msra.mxu0 0.0
        %5493 = vmatprep.mubr.f32.mxu0 0.0
        %5494 = vmatmul.mubr.f32.gmra.mrb[0].mxu0 %v5412
        %v5495 = vpop.f32.mrb[0].mxu0
        %v5496 = vadd.f32 0.0, %v5495
        %v5497 = vpop.f32.mrb[0].mxu0
        %5498 = vmatprep.mubr.f32.mxu0 0.0
        %5499 = vmatmul.mubr.f32.gmra.mrb[0].mxu0 %v5415
        %v5500 = vpop.f32.mrb[0].mxu0
        %v5501 = vadd.f32 0.0, %v5500
        %v5502 = vpop.f32.mrb[0].mxu0
        %5503 = vmatprep.mubr.f32.mxu0 0.0
        %5504 = vmatmul.mubr.f32.gmra.mrb[0].mxu0 %v5418
        %v5505 = vpop.f32.mrb[0].mxu0
        %v5506 = vadd.f32 0.0, %v5505
        %v5507 = vpop.f32.mrb[0].mxu0
        %5508 = vmatprep.mubr.f32.mxu0 0.0
        %5509 = vmatmul.mubr.f32.gmra.mrb[0].mxu0 %v5421
        %v5510 = vpop.f32.mrb[0].mxu0
        %v5511 = vadd.f32 0.0, %v5510
        %v5512 = vpop.f32.mrb[0].mxu0
        %5513 = vmatprep.mubr.f32.mxu0 0.0
        %5514 = vmatmul.mubr.f32.gmra.mrb[0].mxu0 %v5424
        %v5515 = vpop.f32.mrb[0].mxu0
        %v5516 = vadd.f32 0.0, %v5515
        %v5517 = vpop.f32.mrb[0].mxu0
        %5518 = vmatprep.mubr.f32.mxu0 0.0
        %5519 = vmatmul.mubr.f32.gmra.mrb[0].mxu0 %v5427
        %v5520 = vpop.f32.mrb[0].mxu0
        %v5521 = vadd.f32 0.0, %v5520
        %v5522 = vpop.f32.mrb[0].mxu0
        %5523 = vdwg.mxu0
        %v5524 = vadd.f32 %v5375, %v5496
        %v5525 = vadd.f32 %v5380, %v5501
        %v5526 = vadd.f32 %v5385, %v5506
        %v5527 = vadd.f32 %v5390, %v5511
        %v5528 = vadd.f32 %v5395, %v5516
        %v5529 = vadd.f32 %v5400, %v5521
        %s5530 = sadd.s32 %s5160, 27
        %s5531 = scalar_lea.vmem [#allocation3], %s5530
        %v5532 = vld [vmem:[%s5531] sm:$0xff]
        %v5533 = vld [vmem:[%s5531 + $0x8] sm:$0xff]
        %v5534 = vld [vmem:[%s5531 + $0x10] sm:$0xff]
        %v5535 = vld [vmem:[%s5531 + $0x18] sm:$0xff]
        %v5536 = vld [vmem:[%s5531 + $0x20] sm:$0xff]
        %v5537 = vld [vmem:[%s5531 + $0x28] sm:$0xf]
        %v5539 = vsel %vm441, %v5532, 0
        %v5542 = vsel %vm441, %v5533, 0
        %v5545 = vsel %vm441, %v5534, 0
        %v5548 = vsel %vm441, %v5535, 0
        %v5551 = vsel %vm441, %v5536, 0
        %v5554 = vsel %vm441, %v5537, 0
        %5556 = vmatprep.subr.mxu0 0.0
        %5557 = vmatpush1.msra.mxu0 %v5135
        %5558 = vmatprep.subr.mxu0 0.0
        %5559 = vmatpush1.msra.mxu0 %v5136
        %5560 = vmatprep.subr.mxu0 0.0
        %5561 = vmatpush1.msra.mxu0 0.0
        %5562 = vmatprep.subr.mxu0 0.0
        %5563 = vmatpush1.msra.mxu0 0.0
        %5564 = vmatprep.subr.mxu0 0.0
        %5565 = vmatpush1.msra.mxu0 0.0
        %5566 = vmatprep.subr.mxu0 0.0
        %5567 = vmatpush1.msra.mxu0 0.0
        %5568 = vmatprep.subr.mxu0 0.0
        %5569 = vmatpush1.msra.mxu0 0.0
        %5570 = vmatprep.subr.mxu0 0.0
        %5571 = vmatpush1.msra.mxu0 0.0
        %5572 = vmatprep.subr.mxu0 0.0
        %5573 = vmatpush1.msra.mxu0 0.0
        %5574 = vmatprep.subr.mxu0 0.0
        %5575 = vmatpush1.msra.mxu0 0.0
        %5576 = vmatprep.subr.mxu0 0.0
        %5577 = vmatpush1.msra.mxu0 0.0
        %5578 = vmatprep.subr.mxu0 0.0
        %5579 = vmatpush1.msra.mxu0 0.0
        %5580 = vmatprep.subr.mxu0 0.0
        %5581 = vmatpush1.msra.mxu0 0.0
        %5582 = vmatprep.subr.mxu0 0.0
        %5583 = vmatpush1.msra.mxu0 0.0
        %5584 = vmatprep.subr.mxu0 0.0
        %5585 = vmatpush1.msra.mxu0 0.0
        %5586 = vmatprep.subr.mxu0 0.0
        %5587 = vmatpush1.msra.mxu0 0.0
        %5588 = vmatprep.subr.mxu0 0.0
        %5589 = vmatpush1.msra.mxu0 0.0
        %5590 = vmatprep.subr.mxu0 0.0
        %5591 = vmatpush1.msra.mxu0 0.0
        %5592 = vmatprep.subr.mxu0 0.0
        %5593 = vmatpush1.msra.mxu0 0.0
        %5594 = vmatprep.subr.mxu0 0.0
        %5595 = vmatpush1.msra.mxu0 0.0
        %5596 = vmatprep.subr.mxu0 0.0
        %5597 = vmatpush1.msra.mxu0 0.0
        %5598 = vmatprep.subr.mxu0 0.0
        %5599 = vmatpush1.msra.mxu0 0.0
        %5600 = vmatprep.subr.mxu0 0.0
        %5601 = vmatpush1.msra.mxu0 0.0
        %5602 = vmatprep.subr.mxu0 0.0
        %5603 = vmatpush1.msra.mxu0 0.0
        %5604 = vmatprep.subr.mxu0 0.0
        %5605 = vmatpush1.msra.mxu0 0.0
        %5606 = vmatprep.subr.mxu0 0.0
        %5607 = vmatpush1.msra.mxu0 0.0
        %5608 = vmatprep.subr.mxu0 0.0
        %5609 = vmatpush1.msra.mxu0 0.0
        %5610 = vmatprep.subr.mxu0 0.0
        %5611 = vmatpush1.msra.mxu0 0.0
        %5612 = vmatprep.subr.mxu0 0.0
        %5613 = vmatpush1.msra.mxu0 0.0
        %5614 = vmatprep.subr.mxu0 0.0
        %5615 = vmatpush1.msra.mxu0 0.0
        %5616 = vmatprep.subr.mxu0 0.0
        %5617 = vmatpush1.msra.mxu0 0.0
        %5618 = vmatprep.subr.mxu0 0.0
        %5619 = vmatpush1.msra.mxu0 0.0
        %5620 = vmatprep.mubr.f32.mxu0 0.0
        %5621 = vmatmul.mubr.f32.gmra.mrb[0].mxu0 %v5539
        %v5622 = vpop.f32.mrb[0].mxu0
        %v5623 = vadd.f32 0.0, %v5622
        %v5624 = vpop.f32.mrb[0].mxu0
        %5625 = vmatprep.mubr.f32.mxu0 0.0
        %5626 = vmatmul.mubr.f32.gmra.mrb[0].mxu0 %v5542
        %v5627 = vpop.f32.mrb[0].mxu0
        %v5628 = vadd.f32 0.0, %v5627
        %v5629 = vpop.f32.mrb[0].mxu0
        %5630 = vmatprep.mubr.f32.mxu0 0.0
        %5631 = vmatmul.mubr.f32.gmra.mrb[0].mxu0 %v5545
        %v5632 = vpop.f32.mrb[0].mxu0
        %v5633 = vadd.f32 0.0, %v5632
        %v5634 = vpop.f32.mrb[0].mxu0
        %5635 = vmatprep.mubr.f32.mxu0 0.0
        %5636 = vmatmul.mubr.f32.gmra.mrb[0].mxu0 %v5548
        %v5637 = vpop.f32.mrb[0].mxu0
        %v5638 = vadd.f32 0.0, %v5637
        %v5639 = vpop.f32.mrb[0].mxu0
        %5640 = vmatprep.mubr.f32.mxu0 0.0
        %5641 = vmatmul.mubr.f32.gmra.mrb[0].mxu0 %v5551
        %v5642 = vpop.f32.mrb[0].mxu0
        %v5643 = vadd.f32 0.0, %v5642
        %v5644 = vpop.f32.mrb[0].mxu0
        %5645 = vmatprep.mubr.f32.mxu0 0.0
        %5646 = vmatmul.mubr.f32.gmra.mrb[0].mxu0 %v5554
        %v5647 = vpop.f32.mrb[0].mxu0
        %v5648 = vadd.f32 0.0, %v5647
        %v5649 = vpop.f32.mrb[0].mxu0
        %5650 = vdwg.mxu0
        %v5651 = vadd.f32 %v5524, %v5623
        %v5652 = vadd.f32 %v5525, %v5628
        %v5653 = vadd.f32 %v5526, %v5633
        %v5654 = vadd.f32 %v5527, %v5638
        %v5655 = vadd.f32 %v5528, %v5643
        %v5656 = vadd.f32 %v5529, %v5648
        %s5657 = sadd.s32 %s5160, 28
        %s5658 = scalar_lea.vmem [#allocation3], %s5657
        %v5659 = vld [vmem:[%s5658] sm:$0xff]
        %v5660 = vld [vmem:[%s5658 + $0x8] sm:$0xff]
        %v5661 = vld [vmem:[%s5658 + $0x10] sm:$0xff]
        %v5662 = vld [vmem:[%s5658 + $0x18] sm:$0xff]
        %v5663 = vld [vmem:[%s5658 + $0x20] sm:$0xff]
        %v5664 = vld [vmem:[%s5658 + $0x28] sm:$0xf]
        %v5666 = vsel %vm441, %v5659, 0
        %v5669 = vsel %vm441, %v5660, 0
        %v5672 = vsel %vm441, %v5661, 0
        %v5675 = vsel %vm441, %v5662, 0
        %v5678 = vsel %vm441, %v5663, 0
        %v5681 = vsel %vm441, %v5664, 0
        %5683 = vmatprep.subr.mxu0 0.0
        %5684 = vmatpush1.msra.mxu0 %v5138
        %5685 = vmatprep.subr.mxu0 0.0
        %5686 = vmatpush1.msra.mxu0 %v5139
        %5687 = vmatprep.subr.mxu0 0.0
        %5688 = vmatpush1.msra.mxu0 0.0
        %5689 = vmatprep.subr.mxu0 0.0
        %5690 = vmatpush1.msra.mxu0 0.0
        %5691 = vmatprep.subr.mxu0 0.0
        %5692 = vmatpush1.msra.mxu0 0.0
        %5693 = vmatprep.subr.mxu0 0.0
        %5694 = vmatpush1.msra.mxu0 0.0
        %5695 = vmatprep.subr.mxu0 0.0
        %5696 = vmatpush1.msra.mxu0 0.0
        %5697 = vmatprep.subr.mxu0 0.0
        %5698 = vmatpush1.msra.mxu0 0.0
        %5699 = vmatprep.subr.mxu0 0.0
        %5700 = vmatpush1.msra.mxu0 0.0
        %5701 = vmatprep.subr.mxu0 0.0
        %5702 = vmatpush1.msra.mxu0 0.0
        %5703 = vmatprep.subr.mxu0 0.0
        %5704 = vmatpush1.msra.mxu0 0.0
        %5705 = vmatprep.subr.mxu0 0.0
        %5706 = vmatpush1.msra.mxu0 0.0
        %5707 = vmatprep.subr.mxu0 0.0
        %5708 = vmatpush1.msra.mxu0 0.0
        %5709 = vmatprep.subr.mxu0 0.0
        %5710 = vmatpush1.msra.mxu0 0.0
        %5711 = vmatprep.subr.mxu0 0.0
        %5712 = vmatpush1.msra.mxu0 0.0
        %5713 = vmatprep.subr.mxu0 0.0
        %5714 = vmatpush1.msra.mxu0 0.0
        %5715 = vmatprep.subr.mxu0 0.0
        %5716 = vmatpush1.msra.mxu0 0.0
        %5717 = vmatprep.subr.mxu0 0.0
        %5718 = vmatpush1.msra.mxu0 0.0
        %5719 = vmatprep.subr.mxu0 0.0
        %5720 = vmatpush1.msra.mxu0 0.0
        %5721 = vmatprep.subr.mxu0 0.0
        %5722 = vmatpush1.msra.mxu0 0.0
        %5723 = vmatprep.subr.mxu0 0.0
        %5724 = vmatpush1.msra.mxu0 0.0
        %5725 = vmatprep.subr.mxu0 0.0
        %5726 = vmatpush1.msra.mxu0 0.0
        %5727 = vmatprep.subr.mxu0 0.0
        %5728 = vmatpush1.msra.mxu0 0.0
        %5729 = vmatprep.subr.mxu0 0.0
        %5730 = vmatpush1.msra.mxu0 0.0
        %5731 = vmatprep.subr.mxu0 0.0
        %5732 = vmatpush1.msra.mxu0 0.0
        %5733 = vmatprep.subr.mxu0 0.0
        %5734 = vmatpush1.msra.mxu0 0.0
        %5735 = vmatprep.subr.mxu0 0.0
        %5736 = vmatpush1.msra.mxu0 0.0
        %5737 = vmatprep.subr.mxu0 0.0
        %5738 = vmatpush1.msra.mxu0 0.0
        %5739 = vmatprep.subr.mxu0 0.0
        %5740 = vmatpush1.msra.mxu0 0.0
        %5741 = vmatprep.subr.mxu0 0.0
        %5742 = vmatpush1.msra.mxu0 0.0
        %5743 = vmatprep.subr.mxu0 0.0
        %5744 = vmatpush1.msra.mxu0 0.0
        %5745 = vmatprep.subr.mxu0 0.0
        %5746 = vmatpush1.msra.mxu0 0.0
        %5747 = vmatprep.mubr.f32.mxu0 0.0
        %5748 = vmatmul.mubr.f32.gmra.mrb[0].mxu0 %v5666
        %v5749 = vpop.f32.mrb[0].mxu0
        %v5750 = vadd.f32 0.0, %v5749
        %v5751 = vpop.f32.mrb[0].mxu0
        %5752 = vmatprep.mubr.f32.mxu0 0.0
        %5753 = vmatmul.mubr.f32.gmra.mrb[0].mxu0 %v5669
        %v5754 = vpop.f32.mrb[0].mxu0
        %v5755 = vadd.f32 0.0, %v5754
        %v5756 = vpop.f32.mrb[0].mxu0
        %5757 = vmatprep.mubr.f32.mxu0 0.0
        %5758 = vmatmul.mubr.f32.gmra.mrb[0].mxu0 %v5672
        %v5759 = vpop.f32.mrb[0].mxu0
        %v5760 = vadd.f32 0.0, %v5759
        %v5761 = vpop.f32.mrb[0].mxu0
        %5762 = vmatprep.mubr.f32.mxu0 0.0
        %5763 = vmatmul.mubr.f32.gmra.mrb[0].mxu0 %v5675
        %v5764 = vpop.f32.mrb[0].mxu0
        %v5765 = vadd.f32 0.0, %v5764
        %v5766 = vpop.f32.mrb[0].mxu0
        %5767 = vmatprep.mubr.f32.mxu0 0.0
        %5768 = vmatmul.mubr.f32.gmra.mrb[0].mxu0 %v5678
        %v5769 = vpop.f32.mrb[0].mxu0
        %v5770 = vadd.f32 0.0, %v5769
        %v5771 = vpop.f32.mrb[0].mxu0
        %5772 = vmatprep.mubr.f32.mxu0 0.0
        %5773 = vmatmul.mubr.f32.gmra.mrb[0].mxu0 %v5681
        %v5774 = vpop.f32.mrb[0].mxu0
        %v5775 = vadd.f32 0.0, %v5774
        %v5776 = vpop.f32.mrb[0].mxu0
        %5777 = vdwg.mxu0
        %v5778 = vadd.f32 %v5651, %v5750
        %v5779 = vadd.f32 %v5652, %v5755
        %v5780 = vadd.f32 %v5653, %v5760
        %v5781 = vadd.f32 %v5654, %v5765
        %v5782 = vadd.f32 %v5655, %v5770
        %v5783 = vadd.f32 %v5656, %v5775
        %s5784 = sadd.s32 %s5160, 29
        %s5785 = scalar_lea.vmem [#allocation3], %s5784
        %v5786 = vld [vmem:[%s5785] sm:$0xff]
        %v5787 = vld [vmem:[%s5785 + $0x8] sm:$0xff]
        %v5788 = vld [vmem:[%s5785 + $0x10] sm:$0xff]
        %v5789 = vld [vmem:[%s5785 + $0x18] sm:$0xff]
        %v5790 = vld [vmem:[%s5785 + $0x20] sm:$0xff]
        %v5791 = vld [vmem:[%s5785 + $0x28] sm:$0xf]
        %v5793 = vsel %vm441, %v5786, 0
        %v5796 = vsel %vm441, %v5787, 0
        %v5799 = vsel %vm441, %v5788, 0
        %v5802 = vsel %vm441, %v5789, 0
        %v5805 = vsel %vm441, %v5790, 0
        %v5808 = vsel %vm441, %v5791, 0
        %5810 = vmatprep.subr.mxu0 0.0
        %5811 = vmatpush1.msra.mxu0 %v5141
        %5812 = vmatprep.subr.mxu0 0.0
        %5813 = vmatpush1.msra.mxu0 %v5142
        %5814 = vmatprep.subr.mxu0 0.0
        %5815 = vmatpush1.msra.mxu0 0.0
        %5816 = vmatprep.subr.mxu0 0.0
        %5817 = vmatpush1.msra.mxu0 0.0
        %5818 = vmatprep.subr.mxu0 0.0
        %5819 = vmatpush1.msra.mxu0 0.0
        %5820 = vmatprep.subr.mxu0 0.0
        %5821 = vmatpush1.msra.mxu0 0.0
        %5822 = vmatprep.subr.mxu0 0.0
        %5823 = vmatpush1.msra.mxu0 0.0
        %5824 = vmatprep.subr.mxu0 0.0
        %5825 = vmatpush1.msra.mxu0 0.0
        %5826 = vmatprep.subr.mxu0 0.0
        %5827 = vmatpush1.msra.mxu0 0.0
        %5828 = vmatprep.subr.mxu0 0.0
        %5829 = vmatpush1.msra.mxu0 0.0
        %5830 = vmatprep.subr.mxu0 0.0
        %5831 = vmatpush1.msra.mxu0 0.0
        %5832 = vmatprep.subr.mxu0 0.0
        %5833 = vmatpush1.msra.mxu0 0.0
        %5834 = vmatprep.subr.mxu0 0.0
        %5835 = vmatpush1.msra.mxu0 0.0
        %5836 = vmatprep.subr.mxu0 0.0
        %5837 = vmatpush1.msra.mxu0 0.0
        %5838 = vmatprep.subr.mxu0 0.0
        %5839 = vmatpush1.msra.mxu0 0.0
        %5840 = vmatprep.subr.mxu0 0.0
        %5841 = vmatpush1.msra.mxu0 0.0
        %5842 = vmatprep.subr.mxu0 0.0
        %5843 = vmatpush1.msra.mxu0 0.0
        %5844 = vmatprep.subr.mxu0 0.0
        %5845 = vmatpush1.msra.mxu0 0.0
        %5846 = vmatprep.subr.mxu0 0.0
        %5847 = vmatpush1.msra.mxu0 0.0
        %5848 = vmatprep.subr.mxu0 0.0
        %5849 = vmatpush1.msra.mxu0 0.0
        %5850 = vmatprep.subr.mxu0 0.0
        %5851 = vmatpush1.msra.mxu0 0.0
        %5852 = vmatprep.subr.mxu0 0.0
        %5853 = vmatpush1.msra.mxu0 0.0
        %5854 = vmatprep.subr.mxu0 0.0
        %5855 = vmatpush1.msra.mxu0 0.0
        %5856 = vmatprep.subr.mxu0 0.0
        %5857 = vmatpush1.msra.mxu0 0.0
        %5858 = vmatprep.subr.mxu0 0.0
        %5859 = vmatpush1.msra.mxu0 0.0
        %5860 = vmatprep.subr.mxu0 0.0
        %5861 = vmatpush1.msra.mxu0 0.0
        %5862 = vmatprep.subr.mxu0 0.0
        %5863 = vmatpush1.msra.mxu0 0.0
        %5864 = vmatprep.subr.mxu0 0.0
        %5865 = vmatpush1.msra.mxu0 0.0
        %5866 = vmatprep.subr.mxu0 0.0
        %5867 = vmatpush1.msra.mxu0 0.0
        %5868 = vmatprep.subr.mxu0 0.0
        %5869 = vmatpush1.msra.mxu0 0.0
        %5870 = vmatprep.subr.mxu0 0.0
        %5871 = vmatpush1.msra.mxu0 0.0
        %5872 = vmatprep.subr.mxu0 0.0
        %5873 = vmatpush1.msra.mxu0 0.0
        %5874 = vmatprep.mubr.f32.mxu0 0.0
        %5875 = vmatmul.mubr.f32.gmra.mrb[0].mxu0 %v5793
        %v5876 = vpop.f32.mrb[0].mxu0
        %v5877 = vadd.f32 0.0, %v5876
        %v5878 = vpop.f32.mrb[0].mxu0
        %5879 = vmatprep.mubr.f32.mxu0 0.0
        %5880 = vmatmul.mubr.f32.gmra.mrb[0].mxu0 %v5796
        %v5881 = vpop.f32.mrb[0].mxu0
        %v5882 = vadd.f32 0.0, %v5881
        %v5883 = vpop.f32.mrb[0].mxu0
        %5884 = vmatprep.mubr.f32.mxu0 0.0
        %5885 = vmatmul.mubr.f32.gmra.mrb[0].mxu0 %v5799
        %v5886 = vpop.f32.mrb[0].mxu0
        %v5887 = vadd.f32 0.0, %v5886
        %v5888 = vpop.f32.mrb[0].mxu0
        %5889 = vmatprep.mubr.f32.mxu0 0.0
        %5890 = vmatmul.mubr.f32.gmra.mrb[0].mxu0 %v5802
        %v5891 = vpop.f32.mrb[0].mxu0
        %v5892 = vadd.f32 0.0, %v5891
        %v5893 = vpop.f32.mrb[0].mxu0
        %5894 = vmatprep.mubr.f32.mxu0 0.0
        %5895 = vmatmul.mubr.f32.gmra.mrb[0].mxu0 %v5805
        %v5896 = vpop.f32.mrb[0].mxu0
        %v5897 = vadd.f32 0.0, %v5896
        %v5898 = vpop.f32.mrb[0].mxu0
        %5899 = vmatprep.mubr.f32.mxu0 0.0
        %5900 = vmatmul.mubr.f32.gmra.mrb[0].mxu0 %v5808
        %v5901 = vpop.f32.mrb[0].mxu0
        %v5902 = vadd.f32 0.0, %v5901
        %v5903 = vpop.f32.mrb[0].mxu0
        %5904 = vdwg.mxu0
        %v5905 = vadd.f32 %v5778, %v5877
        %v5906 = vadd.f32 %v5779, %v5882
        %v5907 = vadd.f32 %v5780, %v5887
        %v5908 = vadd.f32 %v5781, %v5892
        %v5909 = vadd.f32 %v5782, %v5897
        %v5910 = vadd.f32 %v5783, %v5902
        %s5911 = sadd.s32 %s5160, 49
        %s5912 = scalar_lea.vmem [#allocation3], %s5911
        %v5913 = vld [vmem:[%s5912] sm:$0xff]
        %v5914 = vld [vmem:[%s5912 + $0x8] sm:$0xff]
        %v5915 = vld [vmem:[%s5912 + $0x10] sm:$0xff]
        %v5916 = vld [vmem:[%s5912 + $0x18] sm:$0xff]
        %v5917 = vld [vmem:[%s5912 + $0x20] sm:$0xff]
        %v5918 = vld [vmem:[%s5912 + $0x28] sm:$0xf]
        %v5920 = vsel %vm441, %v5913, 0
        %v5923 = vsel %vm441, %v5914, 0
        %v5926 = vsel %vm441, %v5915, 0
        %v5929 = vsel %vm441, %v5916, 0
        %v5932 = vsel %vm441, %v5917, 0
        %v5935 = vsel %vm441, %v5918, 0
        %5937 = vmatprep.subr.mxu0 0.0
        %5938 = vmatpush1.msra.mxu0 %v5144
        %5939 = vmatprep.subr.mxu0 0.0
        %5940 = vmatpush1.msra.mxu0 %v5145
        %5941 = vmatprep.subr.mxu0 0.0
        %5942 = vmatpush1.msra.mxu0 0.0
        %5943 = vmatprep.subr.mxu0 0.0
        %5944 = vmatpush1.msra.mxu0 0.0
        %5945 = vmatprep.subr.mxu0 0.0
        %5946 = vmatpush1.msra.mxu0 0.0
        %5947 = vmatprep.subr.mxu0 0.0
        %5948 = vmatpush1.msra.mxu0 0.0
        %5949 = vmatprep.subr.mxu0 0.0
        %5950 = vmatpush1.msra.mxu0 0.0
        %5951 = vmatprep.subr.mxu0 0.0
        %5952 = vmatpush1.msra.mxu0 0.0
        %5953 = vmatprep.subr.mxu0 0.0
        %5954 = vmatpush1.msra.mxu0 0.0
        %5955 = vmatprep.subr.mxu0 0.0
        %5956 = vmatpush1.msra.mxu0 0.0
        %5957 = vmatprep.subr.mxu0 0.0
        %5958 = vmatpush1.msra.mxu0 0.0
        %5959 = vmatprep.subr.mxu0 0.0
        %5960 = vmatpush1.msra.mxu0 0.0
        %5961 = vmatprep.subr.mxu0 0.0
        %5962 = vmatpush1.msra.mxu0 0.0
        %5963 = vmatprep.subr.mxu0 0.0
        %5964 = vmatpush1.msra.mxu0 0.0
        %5965 = vmatprep.subr.mxu0 0.0
        %5966 = vmatpush1.msra.mxu0 0.0
        %5967 = vmatprep.subr.mxu0 0.0
        %5968 = vmatpush1.msra.mxu0 0.0
        %5969 = vmatprep.subr.mxu0 0.0
        %5970 = vmatpush1.msra.mxu0 0.0
        %5971 = vmatprep.subr.mxu0 0.0
        %5972 = vmatpush1.msra.mxu0 0.0
        %5973 = vmatprep.subr.mxu0 0.0
        %5974 = vmatpush1.msra.mxu0 0.0
        %5975 = vmatprep.subr.mxu0 0.0
        %5976 = vmatpush1.msra.mxu0 0.0
        %5977 = vmatprep.subr.mxu0 0.0
        %5978 = vmatpush1.msra.mxu0 0.0
        %5979 = vmatprep.subr.mxu0 0.0
        %5980 = vmatpush1.msra.mxu0 0.0
        %5981 = vmatprep.subr.mxu0 0.0
        %5982 = vmatpush1.msra.mxu0 0.0
        %5983 = vmatprep.subr.mxu0 0.0
        %5984 = vmatpush1.msra.mxu0 0.0
        %5985 = vmatprep.subr.mxu0 0.0
        %5986 = vmatpush1.msra.mxu0 0.0
        %5987 = vmatprep.subr.mxu0 0.0
        %5988 = vmatpush1.msra.mxu0 0.0
        %5989 = vmatprep.subr.mxu0 0.0
        %5990 = vmatpush1.msra.mxu0 0.0
        %5991 = vmatprep.subr.mxu0 0.0
        %5992 = vmatpush1.msra.mxu0 0.0
        %5993 = vmatprep.subr.mxu0 0.0
        %5994 = vmatpush1.msra.mxu0 0.0
        %5995 = vmatprep.subr.mxu0 0.0
        %5996 = vmatpush1.msra.mxu0 0.0
        %5997 = vmatprep.subr.mxu0 0.0
        %5998 = vmatpush1.msra.mxu0 0.0
        %5999 = vmatprep.subr.mxu0 0.0
        %6000 = vmatpush1.msra.mxu0 0.0
        %6001 = vmatprep.mubr.f32.mxu0 0.0
        %6002 = vmatmul.mubr.f32.gmra.mrb[0].mxu0 %v5920
        %v6003 = vpop.f32.mrb[0].mxu0
        %v6004 = vadd.f32 0.0, %v6003
        %v6005 = vpop.f32.mrb[0].mxu0
        %6006 = vmatprep.mubr.f32.mxu0 0.0
        %6007 = vmatmul.mubr.f32.gmra.mrb[0].mxu0 %v5923
        %v6008 = vpop.f32.mrb[0].mxu0
        %v6009 = vadd.f32 0.0, %v6008
        %v6010 = vpop.f32.mrb[0].mxu0
        %6011 = vmatprep.mubr.f32.mxu0 0.0
        %6012 = vmatmul.mubr.f32.gmra.mrb[0].mxu0 %v5926
        %v6013 = vpop.f32.mrb[0].mxu0
        %v6014 = vadd.f32 0.0, %v6013
        %v6015 = vpop.f32.mrb[0].mxu0
        %6016 = vmatprep.mubr.f32.mxu0 0.0
        %6017 = vmatmul.mubr.f32.gmra.mrb[0].mxu0 %v5929
        %v6018 = vpop.f32.mrb[0].mxu0
        %v6019 = vadd.f32 0.0, %v6018
        %v6020 = vpop.f32.mrb[0].mxu0
        %6021 = vmatprep.mubr.f32.mxu0 0.0
        %6022 = vmatmul.mubr.f32.gmra.mrb[0].mxu0 %v5932
        %v6023 = vpop.f32.mrb[0].mxu0
        %v6024 = vadd.f32 0.0, %v6023
        %v6025 = vpop.f32.mrb[0].mxu0
        %6026 = vmatprep.mubr.f32.mxu0 0.0
        %6027 = vmatmul.mubr.f32.gmra.mrb[0].mxu0 %v5935
        %v6028 = vpop.f32.mrb[0].mxu0
        %v6029 = vadd.f32 0.0, %v6028
        %v6030 = vpop.f32.mrb[0].mxu0
        %6031 = vdwg.mxu0
        %v6032 = vadd.f32 %v5905, %v6004
        %v6033 = vadd.f32 %v5906, %v6009
        %v6034 = vadd.f32 %v5907, %v6014
        %v6035 = vadd.f32 %v5908, %v6019
        %v6036 = vadd.f32 %v5909, %v6024
        %v6037 = vadd.f32 %v5910, %v6029
        %s6038 = sadd.s32 %s5160, 50
        %s6039 = scalar_lea.vmem [#allocation3], %s6038
        %v6040 = vld [vmem:[%s6039] sm:$0xff]
        %v6041 = vld [vmem:[%s6039 + $0x8] sm:$0xff]
        %v6042 = vld [vmem:[%s6039 + $0x10] sm:$0xff]
        %v6043 = vld [vmem:[%s6039 + $0x18] sm:$0xff]
        %v6044 = vld [vmem:[%s6039 + $0x20] sm:$0xff]
        %v6045 = vld [vmem:[%s6039 + $0x28] sm:$0xf]
        %v6047 = vsel %vm441, %v6040, 0
        %v6050 = vsel %vm441, %v6041, 0
        %v6053 = vsel %vm441, %v6042, 0
        %v6056 = vsel %vm441, %v6043, 0
        %v6059 = vsel %vm441, %v6044, 0
        %v6062 = vsel %vm441, %v6045, 0
        %6064 = vmatprep.subr.mxu0 0.0
        %6065 = vmatpush1.msra.mxu0 %v5147
        %6066 = vmatprep.subr.mxu0 0.0
        %6067 = vmatpush1.msra.mxu0 %v5148
        %6068 = vmatprep.subr.mxu0 0.0
        %6069 = vmatpush1.msra.mxu0 0.0
        %6070 = vmatprep.subr.mxu0 0.0
        %6071 = vmatpush1.msra.mxu0 0.0
        %6072 = vmatprep.subr.mxu0 0.0
        %6073 = vmatpush1.msra.mxu0 0.0
        %6074 = vmatprep.subr.mxu0 0.0
        %6075 = vmatpush1.msra.mxu0 0.0
        %6076 = vmatprep.subr.mxu0 0.0
        %6077 = vmatpush1.msra.mxu0 0.0
        %6078 = vmatprep.subr.mxu0 0.0
        %6079 = vmatpush1.msra.mxu0 0.0
        %6080 = vmatprep.subr.mxu0 0.0
        %6081 = vmatpush1.msra.mxu0 0.0
        %6082 = vmatprep.subr.mxu0 0.0
        %6083 = vmatpush1.msra.mxu0 0.0
        %6084 = vmatprep.subr.mxu0 0.0
        %6085 = vmatpush1.msra.mxu0 0.0
        %6086 = vmatprep.subr.mxu0 0.0
        %6087 = vmatpush1.msra.mxu0 0.0
        %6088 = vmatprep.subr.mxu0 0.0
        %6089 = vmatpush1.msra.mxu0 0.0
        %6090 = vmatprep.subr.mxu0 0.0
        %6091 = vmatpush1.msra.mxu0 0.0
        %6092 = vmatprep.subr.mxu0 0.0
        %6093 = vmatpush1.msra.mxu0 0.0
        %6094 = vmatprep.subr.mxu0 0.0
        %6095 = vmatpush1.msra.mxu0 0.0
        %6096 = vmatprep.subr.mxu0 0.0
        %6097 = vmatpush1.msra.mxu0 0.0
        %6098 = vmatprep.subr.mxu0 0.0
        %6099 = vmatpush1.msra.mxu0 0.0
        %6100 = vmatprep.subr.mxu0 0.0
        %6101 = vmatpush1.msra.mxu0 0.0
        %6102 = vmatprep.subr.mxu0 0.0
        %6103 = vmatpush1.msra.mxu0 0.0
        %6104 = vmatprep.subr.mxu0 0.0
        %6105 = vmatpush1.msra.mxu0 0.0
        %6106 = vmatprep.subr.mxu0 0.0
        %6107 = vmatpush1.msra.mxu0 0.0
        %6108 = vmatprep.subr.mxu0 0.0
        %6109 = vmatpush1.msra.mxu0 0.0
        %6110 = vmatprep.subr.mxu0 0.0
        %6111 = vmatpush1.msra.mxu0 0.0
        %6112 = vmatprep.subr.mxu0 0.0
        %6113 = vmatpush1.msra.mxu0 0.0
        %6114 = vmatprep.subr.mxu0 0.0
        %6115 = vmatpush1.msra.mxu0 0.0
        %6116 = vmatprep.subr.mxu0 0.0
        %6117 = vmatpush1.msra.mxu0 0.0
        %6118 = vmatprep.subr.mxu0 0.0
        %6119 = vmatpush1.msra.mxu0 0.0
        %6120 = vmatprep.subr.mxu0 0.0
        %6121 = vmatpush1.msra.mxu0 0.0
        %6122 = vmatprep.subr.mxu0 0.0
        %6123 = vmatpush1.msra.mxu0 0.0
        %6124 = vmatprep.subr.mxu0 0.0
        %6125 = vmatpush1.msra.mxu0 0.0
        %6126 = vmatprep.subr.mxu0 0.0
        %6127 = vmatpush1.msra.mxu0 0.0
        %6128 = vmatprep.mubr.f32.mxu0 0.0
        %6129 = vmatmul.mubr.f32.gmra.mrb[0].mxu0 %v6047
        %v6130 = vpop.f32.mrb[0].mxu0
        %v6131 = vadd.f32 0.0, %v6130
        %v6132 = vpop.f32.mrb[0].mxu0
        %6133 = vmatprep.mubr.f32.mxu0 0.0
        %6134 = vmatmul.mubr.f32.gmra.mrb[0].mxu0 %v6050
        %v6135 = vpop.f32.mrb[0].mxu0
        %v6136 = vadd.f32 0.0, %v6135
        %v6137 = vpop.f32.mrb[0].mxu0
        %6138 = vmatprep.mubr.f32.mxu0 0.0
        %6139 = vmatmul.mubr.f32.gmra.mrb[0].mxu0 %v6053
        %v6140 = vpop.f32.mrb[0].mxu0
        %v6141 = vadd.f32 0.0, %v6140
        %v6142 = vpop.f32.mrb[0].mxu0
        %6143 = vmatprep.mubr.f32.mxu0 0.0
        %6144 = vmatmul.mubr.f32.gmra.mrb[0].mxu0 %v6056
        %v6145 = vpop.f32.mrb[0].mxu0
        %v6146 = vadd.f32 0.0, %v6145
        %v6147 = vpop.f32.mrb[0].mxu0
        %6148 = vmatprep.mubr.f32.mxu0 0.0
        %6149 = vmatmul.mubr.f32.gmra.mrb[0].mxu0 %v6059
        %v6150 = vpop.f32.mrb[0].mxu0
        %v6151 = vadd.f32 0.0, %v6150
        %v6152 = vpop.f32.mrb[0].mxu0
        %6153 = vmatprep.mubr.f32.mxu0 0.0
        %6154 = vmatmul.mubr.f32.gmra.mrb[0].mxu0 %v6062
        %v6155 = vpop.f32.mrb[0].mxu0
        %v6156 = vadd.f32 0.0, %v6155
        %v6157 = vpop.f32.mrb[0].mxu0
        %6158 = vdwg.mxu0
        %v6159 = vadd.f32 %v6032, %v6131
        %v6160 = vadd.f32 %v6033, %v6136
        %v6161 = vadd.f32 %v6034, %v6141
        %v6162 = vadd.f32 %v6035, %v6146
        %v6163 = vadd.f32 %v6036, %v6151
        %v6164 = vadd.f32 %v6037, %v6156
        %s6165 = sadd.s32 %s5160, 51
        %s6166 = scalar_lea.vmem [#allocation3], %s6165
        %v6167 = vld [vmem:[%s6166] sm:$0xff]
        %v6168 = vld [vmem:[%s6166 + $0x8] sm:$0xff]
        %v6169 = vld [vmem:[%s6166 + $0x10] sm:$0xff]
        %v6170 = vld [vmem:[%s6166 + $0x18] sm:$0xff]
        %v6171 = vld [vmem:[%s6166 + $0x20] sm:$0xff]
        %v6172 = vld [vmem:[%s6166 + $0x28] sm:$0xf]
        %v6174 = vsel %vm441, %v6167, 0
        %v6177 = vsel %vm441, %v6168, 0
        %v6180 = vsel %vm441, %v6169, 0
        %v6183 = vsel %vm441, %v6170, 0
        %v6186 = vsel %vm441, %v6171, 0
        %v6189 = vsel %vm441, %v6172, 0
        %6191 = vmatprep.subr.mxu0 0.0
        %6192 = vmatpush1.msra.mxu0 %v5150
        %6193 = vmatprep.subr.mxu0 0.0
        %6194 = vmatpush1.msra.mxu0 %v5151
        %6195 = vmatprep.subr.mxu0 0.0
        %6196 = vmatpush1.msra.mxu0 0.0
        %6197 = vmatprep.subr.mxu0 0.0
        %6198 = vmatpush1.msra.mxu0 0.0
        %6199 = vmatprep.subr.mxu0 0.0
        %6200 = vmatpush1.msra.mxu0 0.0
        %6201 = vmatprep.subr.mxu0 0.0
        %6202 = vmatpush1.msra.mxu0 0.0
        %6203 = vmatprep.subr.mxu0 0.0
        %6204 = vmatpush1.msra.mxu0 0.0
        %6205 = vmatprep.subr.mxu0 0.0
        %6206 = vmatpush1.msra.mxu0 0.0
        %6207 = vmatprep.subr.mxu0 0.0
        %6208 = vmatpush1.msra.mxu0 0.0
        %6209 = vmatprep.subr.mxu0 0.0
        %6210 = vmatpush1.msra.mxu0 0.0
        %6211 = vmatprep.subr.mxu0 0.0
        %6212 = vmatpush1.msra.mxu0 0.0
        %6213 = vmatprep.subr.mxu0 0.0
        %6214 = vmatpush1.msra.mxu0 0.0
        %6215 = vmatprep.subr.mxu0 0.0
        %6216 = vmatpush1.msra.mxu0 0.0
        %6217 = vmatprep.subr.mxu0 0.0
        %6218 = vmatpush1.msra.mxu0 0.0
        %6219 = vmatprep.subr.mxu0 0.0
        %6220 = vmatpush1.msra.mxu0 0.0
        %6221 = vmatprep.subr.mxu0 0.0
        %6222 = vmatpush1.msra.mxu0 0.0
        %6223 = vmatprep.subr.mxu0 0.0
        %6224 = vmatpush1.msra.mxu0 0.0
        %6225 = vmatprep.subr.mxu0 0.0
        %6226 = vmatpush1.msra.mxu0 0.0
        %6227 = vmatprep.subr.mxu0 0.0
        %6228 = vmatpush1.msra.mxu0 0.0
        %6229 = vmatprep.subr.mxu0 0.0
        %6230 = vmatpush1.msra.mxu0 0.0
        %6231 = vmatprep.subr.mxu0 0.0
        %6232 = vmatpush1.msra.mxu0 0.0
        %6233 = vmatprep.subr.mxu0 0.0
        %6234 = vmatpush1.msra.mxu0 0.0
        %6235 = vmatprep.subr.mxu0 0.0
        %6236 = vmatpush1.msra.mxu0 0.0
        %6237 = vmatprep.subr.mxu0 0.0
        %6238 = vmatpush1.msra.mxu0 0.0
        %6239 = vmatprep.subr.mxu0 0.0
        %6240 = vmatpush1.msra.mxu0 0.0
        %6241 = vmatprep.subr.mxu0 0.0
        %6242 = vmatpush1.msra.mxu0 0.0
        %6243 = vmatprep.subr.mxu0 0.0
        %6244 = vmatpush1.msra.mxu0 0.0
        %6245 = vmatprep.subr.mxu0 0.0
        %6246 = vmatpush1.msra.mxu0 0.0
        %6247 = vmatprep.subr.mxu0 0.0
        %6248 = vmatpush1.msra.mxu0 0.0
        %6249 = vmatprep.subr.mxu0 0.0
        %6250 = vmatpush1.msra.mxu0 0.0
        %6251 = vmatprep.subr.mxu0 0.0
        %6252 = vmatpush1.msra.mxu0 0.0
        %6253 = vmatprep.subr.mxu0 0.0
        %6254 = vmatpush1.msra.mxu0 0.0
        %6255 = vmatprep.mubr.f32.mxu0 0.0
        %6256 = vmatmul.mubr.f32.gmra.mrb[0].mxu0 %v6174
        %v6257 = vpop.f32.mrb[0].mxu0
        %v6258 = vadd.f32 0.0, %v6257
        %v6259 = vpop.f32.mrb[0].mxu0
        %6260 = vmatprep.mubr.f32.mxu0 0.0
        %6261 = vmatmul.mubr.f32.gmra.mrb[0].mxu0 %v6177
        %v6262 = vpop.f32.mrb[0].mxu0
        %v6263 = vadd.f32 0.0, %v6262
        %v6264 = vpop.f32.mrb[0].mxu0
        %6265 = vmatprep.mubr.f32.mxu0 0.0
        %6266 = vmatmul.mubr.f32.gmra.mrb[0].mxu0 %v6180
        %v6267 = vpop.f32.mrb[0].mxu0
        %v6268 = vadd.f32 0.0, %v6267
        %v6269 = vpop.f32.mrb[0].mxu0
        %6270 = vmatprep.mubr.f32.mxu0 0.0
        %6271 = vmatmul.mubr.f32.gmra.mrb[0].mxu0 %v6183
        %v6272 = vpop.f32.mrb[0].mxu0
        %v6273 = vadd.f32 0.0, %v6272
        %v6274 = vpop.f32.mrb[0].mxu0
        %6275 = vmatprep.mubr.f32.mxu0 0.0
        %6276 = vmatmul.mubr.f32.gmra.mrb[0].mxu0 %v6186
        %v6277 = vpop.f32.mrb[0].mxu0
        %v6278 = vadd.f32 0.0, %v6277
        %v6279 = vpop.f32.mrb[0].mxu0
        %6280 = vmatprep.mubr.f32.mxu0 0.0
        %6281 = vmatmul.mubr.f32.gmra.mrb[0].mxu0 %v6189
        %v6282 = vpop.f32.mrb[0].mxu0
        %v6283 = vadd.f32 0.0, %v6282
        %v6284 = vpop.f32.mrb[0].mxu0
        %6285 = vdwg.mxu0
        %v6286 = vadd.f32 %v6159, %v6258
        %v6287 = vadd.f32 %v6160, %v6263
        %v6288 = vadd.f32 %v6161, %v6268
        %v6289 = vadd.f32 %v6162, %v6273
        %v6290 = vadd.f32 %v6163, %v6278
        %v6291 = vadd.f32 %v6164, %v6283
        %v6293 = vlaneseq
        %v6294 = vshrl.u32 %v6293, 7
        %v6295 = vsub.s32 0, %v6294
        %v6296 = vrot.slane %v5152, %v6295
        %v6298 = vmul.f32 %v6286, %v6296
        %v6299 = vmul.f32 %v6287, %v6296
        %v6300 = vmul.f32 %v6288, %v6296
        %v6301 = vmul.f32 %v6289, %v6296
        %v6302 = vmul.f32 %v6290, %v6296
        %v6303 = vmul.f32 %v6291, %v6296
        %v6305 = vlaneseq
        %v6306 = vshrl.u32 %v6305, 7
        %v6307 = vsub.s32 0, %v6306
        %v6308 = vrot.slane %v5153, %v6307
        %v6310 = vadd.f32 %v6298, %v6308
        %v6311 = vadd.f32 %v6299, %v6308
        %v6312 = vadd.f32 %v6300, %v6308
        %v6313 = vadd.f32 %v6301, %v6308
        %v6314 = vadd.f32 %v6302, %v6308
        %v6315 = vadd.f32 %v6303, %v6308
        %v6316 = vmax.f32 %v6310, 0.0
        %v6317 = vmax.f32 %v6311, 0.0
        %v6318 = vmax.f32 %v6312, 0.0
        %v6319 = vmax.f32 %v6313, 0.0
        %v6320 = vmax.f32 %v6314, 0.0
        %v6321 = vmax.f32 %v6315, 0.0
        %6322 = vst.msk [vmem:[#allocation5] sm:$0xff] %vm441, %v6316
        %6323 = vst.msk [vmem:[#allocation5 + $0x8] sm:$0xff] %vm441, %v6317
        %6324 = vst.msk [vmem:[#allocation5 + $0x10] sm:$0xff] %vm441, %v6318
        %6325 = vst.msk [vmem:[#allocation5 + $0x18] sm:$0xff] %vm441, %v6319
        %6326 = vst.msk [vmem:[#allocation5 + $0x20] sm:$0xff] %vm441, %v6320
        %vm6327 = vcmask 125952
        %6328 = vst.msk [vmem:[#allocation5 + $0x28] sm:$0xf] %vm6327, %v6321
        %v6329 = vld [vmem:[#allocation5] sm:$0xff]
        %v6330 = vld [vmem:[#allocation5 + $0x8] sm:$0xff]
        %v6331 = vld [vmem:[#allocation5 + $0x10] sm:$0xf]
        %v6332 = vld [vmem:[#allocation5 + $0x16] sm:$0xff]
        %v6333 = vld [vmem:[#allocation5 + $0x1e] sm:$0xff]
        %v6334 = vld [vmem:[#allocation5 + $0x26] sm:$0xf]
        %v6335 = vmax.f32 %v6329, %v6332
        %v6336 = vmax.f32 %v6330, %v6333
        %v6337 = vmax.f32 %v6331, %v6334
        %6338 = vst.msk [vmem:[#allocation6] sm:$0xff] %vm441, %v6335
        %6339 = vst.msk [vmem:[#allocation6 + $0x8] sm:$0xff] %vm441, %v6336
        %6340 = vst.msk [vmem:[#allocation6 + $0x10] sm:$0xf] %vm6327, %v6337
        %v6341 = vld [vmem:[#allocation6] ss:$2 sm:$0xff]
        %s6342 = scalar_lea.vmem [#allocation6], 16
        %v6343 = vld [vmem:[%s6342] ss:$2 sm:$0x3]
        %s6344 = scalar_lea.vmem [#allocation6], 1
        %v6345 = vld [vmem:[%s6344] ss:$2 sm:$0xff]
        %s6346 = scalar_lea.vmem [#allocation6], 17
        %v6347 = vld [vmem:[%s6346] ss:$2 sm:$0x3]
        %v6348 = vmax.f32 %v6341, %v6345
        %v6349 = vmax.f32 %v6343, %v6347
        %s6350 = smul.u32 %s5155, 12
        %s6351 = sadd.s32 %s6350, 18
        %s6352 = scalar_lea.vmem [#allocation4], %s6351
        %6353 = vst.msk [vmem:[%s6352] sm:$0xff] %vm441, %v6348
        %vm6354 = vcmask 123904
        %6355 = vst.msk [vmem:[%s6352 + $0x8] sm:$0x3] %vm6354, %v6349
      $region91: #{convnet_forward.1} parent=71 // loop_footer
        %s5159 = sadd.s32 1, %s5155
      $region92: #{convnet_forward.1} parent=71 // loop_footer_branch
        %5154 = sbr.rel target = $region88
      $region93: #{convnet_forward.1} parent=71 // loop_exit
        _
      %v6356 = vld [vmem:[%s10] sm:$0xff]
      %v6357 = vld [vmem:[%s10 + $0x8] sm:$0xff]
      %s6358 = scalar_lea.vmem %s10, 16
      %v6359 = vld [vmem:[%s6358] sm:$0xff]
      %v6360 = vld [vmem:[%s6358 + $0x8] sm:$0xff]
      %s6361 = scalar_lea.vmem %s10, 32
      %v6362 = vld [vmem:[%s6361] sm:$0xff]
      %v6363 = vld [vmem:[%s6361 + $0x8] sm:$0xff]
      %s6364 = scalar_lea.vmem %s10, 48
      %v6365 = vld [vmem:[%s6364] sm:$0xff]
      %v6366 = vld [vmem:[%s6364 + $0x8] sm:$0xff]
      %s6367 = scalar_lea.vmem %s10, 64
      %v6368 = vld [vmem:[%s6367] sm:$0xff]
      %v6369 = vld [vmem:[%s6367 + $0x8] sm:$0xff]
      %s6370 = scalar_lea.vmem %s10, 80
      %v6371 = vld [vmem:[%s6370] sm:$0xff]
      %v6372 = vld [vmem:[%s6370 + $0x8] sm:$0xff]
      %s6373 = scalar_lea.vmem %s10, 96
      %v6374 = vld [vmem:[%s6373] sm:$0xff]
      %v6375 = vld [vmem:[%s6373 + $0x8] sm:$0xff]
      %s6376 = scalar_lea.vmem %s10, 112
      %v6377 = vld [vmem:[%s6376] sm:$0xff]
      %v6378 = vld [vmem:[%s6376 + $0x8] sm:$0xff]
      %s6379 = scalar_lea.vmem %s10, 128
      %v6380 = vld [vmem:[%s6379] sm:$0xff]
      %v6381 = vld [vmem:[%s6379 + $0x8] sm:$0xff]
      %v6382 = vld [vmem:[%s11] sm:$0x1]
      %v6383 = vld [vmem:[%s12] sm:$0x1]
      loop: start=0, step=1, limit=5
      $region94: #{convnet_forward.1} parent=71 // loop_pre_header
        _
      $region95: #{convnet_forward.1} parent=71 // loop_header
        %s6385 = sphi 0, %s6389
        %p6386 = scmp.ge.s32.totalorder %s6385, 5
      $region96: #{convnet_forward.1} parent=71 // loop_header_branch
        %6388 = sbr.rel (%p6386) target = $region100
      $region97: #{convnet_forward.1} parent=71 // loop_body
        %s6390 = smul.u32 %s6385, 24
        %s6391 = sadd.s32 %s6390, 5
        %s6392 = scalar_lea.vmem [#allocation4], %s6391
        %v6393 = vld [vmem:[%s6392] sm:$0xff]
        %v6394 = vld [vmem:[%s6392 + $0x8] sm:$0xff]
        %v6395 = vld [vmem:[%s6392 + $0x10] sm:$0xff]
        %s6396 = sadd.s32 %s6390, 6
        %s6397 = scalar_lea.vmem [#allocation4], %s6396
        %v6398 = vld [vmem:[%s6397] sm:$0xff]
        %v6399 = vld [vmem:[%s6397 + $0x8] sm:$0xff]
        %v6400 = vld [vmem:[%s6397 + $0x10] sm:$0xff]
        %v6402 = vsel %vm441, %v6398, 0
        %v6405 = vsel %vm441, %v6399, 0
        %v6408 = vsel %vm441, %v6400, 0
        %6410 = vmatprep.subr.mxu0 0.0
        %6411 = vmatpush1.msra.mxu0 %v6359
        %6412 = vmatprep.subr.mxu0 0.0
        %6413 = vmatpush1.msra.mxu0 %v6360
        %6414 = vmatprep.subr.mxu0 0.0
        %6415 = vmatpush1.msra.mxu0 0.0
        %6416 = vmatprep.subr.mxu0 0.0
        %6417 = vmatpush1.msra.mxu0 0.0
        %6418 = vmatprep.subr.mxu0 0.0
        %6419 = vmatpush1.msra.mxu0 0.0
        %6420 = vmatprep.subr.mxu0 0.0
        %6421 = vmatpush1.msra.mxu0 0.0
        %6422 = vmatprep.subr.mxu0 0.0
        %6423 = vmatpush1.msra.mxu0 0.0
        %6424 = vmatprep.subr.mxu0 0.0
        %6425 = vmatpush1.msra.mxu0 0.0
        %6426 = vmatprep.subr.mxu0 0.0
        %6427 = vmatpush1.msra.mxu0 0.0
        %6428 = vmatprep.subr.mxu0 0.0
        %6429 = vmatpush1.msra.mxu0 0.0
        %6430 = vmatprep.subr.mxu0 0.0
        %6431 = vmatpush1.msra.mxu0 0.0
        %6432 = vmatprep.subr.mxu0 0.0
        %6433 = vmatpush1.msra.mxu0 0.0
        %6434 = vmatprep.subr.mxu0 0.0
        %6435 = vmatpush1.msra.mxu0 0.0
        %6436 = vmatprep.subr.mxu0 0.0
        %6437 = vmatpush1.msra.mxu0 0.0
        %6438 = vmatprep.subr.mxu0 0.0
        %6439 = vmatpush1.msra.mxu0 0.0
        %6440 = vmatprep.subr.mxu0 0.0
        %6441 = vmatpush1.msra.mxu0 0.0
        %6442 = vmatprep.subr.mxu0 0.0
        %6443 = vmatpush1.msra.mxu0 0.0
        %6444 = vmatprep.subr.mxu0 0.0
        %6445 = vmatpush1.msra.mxu0 0.0
        %6446 = vmatprep.subr.mxu0 0.0
        %6447 = vmatpush1.msra.mxu0 0.0
        %6448 = vmatprep.subr.mxu0 0.0
        %6449 = vmatpush1.msra.mxu0 0.0
        %6450 = vmatprep.subr.mxu0 0.0
        %6451 = vmatpush1.msra.mxu0 0.0
        %6452 = vmatprep.subr.mxu0 0.0
        %6453 = vmatpush1.msra.mxu0 0.0
        %6454 = vmatprep.subr.mxu0 0.0
        %6455 = vmatpush1.msra.mxu0 0.0
        %6456 = vmatprep.subr.mxu0 0.0
        %6457 = vmatpush1.msra.mxu0 0.0
        %6458 = vmatprep.subr.mxu0 0.0
        %6459 = vmatpush1.msra.mxu0 0.0
        %6460 = vmatprep.subr.mxu0 0.0
        %6461 = vmatpush1.msra.mxu0 0.0
        %6462 = vmatprep.subr.mxu0 0.0
        %6463 = vmatpush1.msra.mxu0 0.0
        %6464 = vmatprep.subr.mxu0 0.0
        %6465 = vmatpush1.msra.mxu0 0.0
        %6466 = vmatprep.subr.mxu0 0.0
        %6467 = vmatpush1.msra.mxu0 0.0
        %6468 = vmatprep.subr.mxu0 0.0
        %6469 = vmatpush1.msra.mxu0 0.0
        %6470 = vmatprep.subr.mxu0 0.0
        %6471 = vmatpush1.msra.mxu0 0.0
        %6472 = vmatprep.subr.mxu0 0.0
        %6473 = vmatpush1.msra.mxu0 0.0
        %6474 = vmatprep.mubr.f32.mxu0 0.0
        %6475 = vmatmul.mubr.f32.gmra.mrb[0].mxu0 %v6402
        %v6476 = vpop.f32.mrb[0].mxu0
        %v6477 = vadd.f32 0.0, %v6476
        %v6478 = vpop.f32.mrb[0].mxu0
        %6479 = vmatprep.mubr.f32.mxu0 0.0
        %6480 = vmatmul.mubr.f32.gmra.mrb[0].mxu0 %v6405
        %v6481 = vpop.f32.mrb[0].mxu0
        %v6482 = vadd.f32 0.0, %v6481
        %v6483 = vpop.f32.mrb[0].mxu0
        %6484 = vmatprep.mubr.f32.mxu0 0.0
        %6485 = vmatmul.mubr.f32.gmra.mrb[0].mxu0 %v6408
        %v6486 = vpop.f32.mrb[0].mxu0
        %v6487 = vadd.f32 0.0, %v6486
        %v6488 = vpop.f32.mrb[0].mxu0
        %6489 = vdwg.mxu0
        %v6491 = vsel %vm441, %v6393, 0
        %v6494 = vsel %vm441, %v6394, 0
        %v6497 = vsel %vm441, %v6395, 0
        %6499 = vmatprep.subr.mxu0 0.0
        %6500 = vmatpush1.msra.mxu0 %v6356
        %6501 = vmatprep.subr.mxu0 0.0
        %6502 = vmatpush1.msra.mxu0 %v6357
        %6503 = vmatprep.subr.mxu0 0.0
        %6504 = vmatpush1.msra.mxu0 0.0
        %6505 = vmatprep.subr.mxu0 0.0
        %6506 = vmatpush1.msra.mxu0 0.0
        %6507 = vmatprep.subr.mxu0 0.0
        %6508 = vmatpush1.msra.mxu0 0.0
        %6509 = vmatprep.subr.mxu0 0.0
        %6510 = vmatpush1.msra.mxu0 0.0
        %6511 = vmatprep.subr.mxu0 0.0
        %6512 = vmatpush1.msra.mxu0 0.0
        %6513 = vmatprep.subr.mxu0 0.0
        %6514 = vmatpush1.msra.mxu0 0.0
        %6515 = vmatprep.subr.mxu0 0.0
        %6516 = vmatpush1.msra.mxu0 0.0
        %6517 = vmatprep.subr.mxu0 0.0
        %6518 = vmatpush1.msra.mxu0 0.0
        %6519 = vmatprep.subr.mxu0 0.0
        %6520 = vmatpush1.msra.mxu0 0.0
        %6521 = vmatprep.subr.mxu0 0.0
        %6522 = vmatpush1.msra.mxu0 0.0
        %6523 = vmatprep.subr.mxu0 0.0
        %6524 = vmatpush1.msra.mxu0 0.0
        %6525 = vmatprep.subr.mxu0 0.0
        %6526 = vmatpush1.msra.mxu0 0.0
        %6527 = vmatprep.subr.mxu0 0.0
        %6528 = vmatpush1.msra.mxu0 0.0
        %6529 = vmatprep.subr.mxu0 0.0
        %6530 = vmatpush1.msra.mxu0 0.0
        %6531 = vmatprep.subr.mxu0 0.0
        %6532 = vmatpush1.msra.mxu0 0.0
        %6533 = vmatprep.subr.mxu0 0.0
        %6534 = vmatpush1.msra.mxu0 0.0
        %6535 = vmatprep.subr.mxu0 0.0
        %6536 = vmatpush1.msra.mxu0 0.0
        %6537 = vmatprep.subr.mxu0 0.0
        %6538 = vmatpush1.msra.mxu0 0.0
        %6539 = vmatprep.subr.mxu0 0.0
        %6540 = vmatpush1.msra.mxu0 0.0
        %6541 = vmatprep.subr.mxu0 0.0
        %6542 = vmatpush1.msra.mxu0 0.0
        %6543 = vmatprep.subr.mxu0 0.0
        %6544 = vmatpush1.msra.mxu0 0.0
        %6545 = vmatprep.subr.mxu0 0.0
        %6546 = vmatpush1.msra.mxu0 0.0
        %6547 = vmatprep.subr.mxu0 0.0
        %6548 = vmatpush1.msra.mxu0 0.0
        %6549 = vmatprep.subr.mxu0 0.0
        %6550 = vmatpush1.msra.mxu0 0.0
        %6551 = vmatprep.subr.mxu0 0.0
        %6552 = vmatpush1.msra.mxu0 0.0
        %6553 = vmatprep.subr.mxu0 0.0
        %6554 = vmatpush1.msra.mxu0 0.0
        %6555 = vmatprep.subr.mxu0 0.0
        %6556 = vmatpush1.msra.mxu0 0.0
        %6557 = vmatprep.subr.mxu0 0.0
        %6558 = vmatpush1.msra.mxu0 0.0
        %6559 = vmatprep.subr.mxu0 0.0
        %6560 = vmatpush1.msra.mxu0 0.0
        %6561 = vmatprep.subr.mxu0 0.0
        %6562 = vmatpush1.msra.mxu0 0.0
        %6563 = vmatprep.mubr.f32.mxu0 0.0
        %6564 = vmatmul.mubr.f32.gmra.mrb[0].mxu0 %v6491
        %v6565 = vpop.f32.mrb[0].mxu0
        %v6566 = vadd.f32 %v6477, %v6565
        %v6567 = vpop.f32.mrb[0].mxu0
        %6568 = vmatprep.mubr.f32.mxu0 0.0
        %6569 = vmatmul.mubr.f32.gmra.mrb[0].mxu0 %v6494
        %v6570 = vpop.f32.mrb[0].mxu0
        %v6571 = vadd.f32 %v6482, %v6570
        %v6572 = vpop.f32.mrb[0].mxu0
        %6573 = vmatprep.mubr.f32.mxu0 0.0
        %6574 = vmatmul.mubr.f32.gmra.mrb[0].mxu0 %v6497
        %v6575 = vpop.f32.mrb[0].mxu0
        %v6576 = vadd.f32 %v6487, %v6575
        %v6577 = vpop.f32.mrb[0].mxu0
        %6578 = vdwg.mxu0
        %s6579 = sadd.s32 %s6390, 7
        %s6580 = scalar_lea.vmem [#allocation4], %s6579
        %v6581 = vld [vmem:[%s6580] sm:$0xff]
        %v6582 = vld [vmem:[%s6580 + $0x8] sm:$0xff]
        %v6583 = vld [vmem:[%s6580 + $0x10] sm:$0xff]
        %v6585 = vsel %vm441, %v6581, 0
        %v6588 = vsel %vm441, %v6582, 0
        %v6591 = vsel %vm441, %v6583, 0
        %6593 = vmatprep.subr.mxu0 0.0
        %6594 = vmatpush1.msra.mxu0 %v6362
        %6595 = vmatprep.subr.mxu0 0.0
        %6596 = vmatpush1.msra.mxu0 %v6363
        %6597 = vmatprep.subr.mxu0 0.0
        %6598 = vmatpush1.msra.mxu0 0.0
        %6599 = vmatprep.subr.mxu0 0.0
        %6600 = vmatpush1.msra.mxu0 0.0
        %6601 = vmatprep.subr.mxu0 0.0
        %6602 = vmatpush1.msra.mxu0 0.0
        %6603 = vmatprep.subr.mxu0 0.0
        %6604 = vmatpush1.msra.mxu0 0.0
        %6605 = vmatprep.subr.mxu0 0.0
        %6606 = vmatpush1.msra.mxu0 0.0
        %6607 = vmatprep.subr.mxu0 0.0
        %6608 = vmatpush1.msra.mxu0 0.0
        %6609 = vmatprep.subr.mxu0 0.0
        %6610 = vmatpush1.msra.mxu0 0.0
        %6611 = vmatprep.subr.mxu0 0.0
        %6612 = vmatpush1.msra.mxu0 0.0
        %6613 = vmatprep.subr.mxu0 0.0
        %6614 = vmatpush1.msra.mxu0 0.0
        %6615 = vmatprep.subr.mxu0 0.0
        %6616 = vmatpush1.msra.mxu0 0.0
        %6617 = vmatprep.subr.mxu0 0.0
        %6618 = vmatpush1.msra.mxu0 0.0
        %6619 = vmatprep.subr.mxu0 0.0
        %6620 = vmatpush1.msra.mxu0 0.0
        %6621 = vmatprep.subr.mxu0 0.0
        %6622 = vmatpush1.msra.mxu0 0.0
        %6623 = vmatprep.subr.mxu0 0.0
        %6624 = vmatpush1.msra.mxu0 0.0
        %6625 = vmatprep.subr.mxu0 0.0
        %6626 = vmatpush1.msra.mxu0 0.0
        %6627 = vmatprep.subr.mxu0 0.0
        %6628 = vmatpush1.msra.mxu0 0.0
        %6629 = vmatprep.subr.mxu0 0.0
        %6630 = vmatpush1.msra.mxu0 0.0
        %6631 = vmatprep.subr.mxu0 0.0
        %6632 = vmatpush1.msra.mxu0 0.0
        %6633 = vmatprep.subr.mxu0 0.0
        %6634 = vmatpush1.msra.mxu0 0.0
        %6635 = vmatprep.subr.mxu0 0.0
        %6636 = vmatpush1.msra.mxu0 0.0
        %6637 = vmatprep.subr.mxu0 0.0
        %6638 = vmatpush1.msra.mxu0 0.0
        %6639 = vmatprep.subr.mxu0 0.0
        %6640 = vmatpush1.msra.mxu0 0.0
        %6641 = vmatprep.subr.mxu0 0.0
        %6642 = vmatpush1.msra.mxu0 0.0
        %6643 = vmatprep.subr.mxu0 0.0
        %6644 = vmatpush1.msra.mxu0 0.0
        %6645 = vmatprep.subr.mxu0 0.0
        %6646 = vmatpush1.msra.mxu0 0.0
        %6647 = vmatprep.subr.mxu0 0.0
        %6648 = vmatpush1.msra.mxu0 0.0
        %6649 = vmatprep.subr.mxu0 0.0
        %6650 = vmatpush1.msra.mxu0 0.0
        %6651 = vmatprep.subr.mxu0 0.0
        %6652 = vmatpush1.msra.mxu0 0.0
        %6653 = vmatprep.subr.mxu0 0.0
        %6654 = vmatpush1.msra.mxu0 0.0
        %6655 = vmatprep.subr.mxu0 0.0
        %6656 = vmatpush1.msra.mxu0 0.0
        %6657 = vmatprep.mubr.f32.mxu0 0.0
        %6658 = vmatmul.mubr.f32.gmra.mrb[0].mxu0 %v6585
        %v6659 = vpop.f32.mrb[0].mxu0
        %v6660 = vadd.f32 0.0, %v6659
        %v6661 = vpop.f32.mrb[0].mxu0
        %6662 = vmatprep.mubr.f32.mxu0 0.0
        %6663 = vmatmul.mubr.f32.gmra.mrb[0].mxu0 %v6588
        %v6664 = vpop.f32.mrb[0].mxu0
        %v6665 = vadd.f32 0.0, %v6664
        %v6666 = vpop.f32.mrb[0].mxu0
        %6667 = vmatprep.mubr.f32.mxu0 0.0
        %6668 = vmatmul.mubr.f32.gmra.mrb[0].mxu0 %v6591
        %v6669 = vpop.f32.mrb[0].mxu0
        %v6670 = vadd.f32 0.0, %v6669
        %v6671 = vpop.f32.mrb[0].mxu0
        %6672 = vdwg.mxu0
        %v6673 = vadd.f32 %v6566, %v6660
        %v6674 = vadd.f32 %v6571, %v6665
        %v6675 = vadd.f32 %v6576, %v6670
        %s6676 = sadd.s32 %s6390, 17
        %s6677 = scalar_lea.vmem [#allocation4], %s6676
        %v6678 = vld [vmem:[%s6677] sm:$0xff]
        %v6679 = vld [vmem:[%s6677 + $0x8] sm:$0xff]
        %v6680 = vld [vmem:[%s6677 + $0x10] sm:$0xff]
        %v6682 = vsel %vm441, %v6678, 0
        %v6685 = vsel %vm441, %v6679, 0
        %v6688 = vsel %vm441, %v6680, 0
        %6690 = vmatprep.subr.mxu0 0.0
        %6691 = vmatpush1.msra.mxu0 %v6365
        %6692 = vmatprep.subr.mxu0 0.0
        %6693 = vmatpush1.msra.mxu0 %v6366
        %6694 = vmatprep.subr.mxu0 0.0
        %6695 = vmatpush1.msra.mxu0 0.0
        %6696 = vmatprep.subr.mxu0 0.0
        %6697 = vmatpush1.msra.mxu0 0.0
        %6698 = vmatprep.subr.mxu0 0.0
        %6699 = vmatpush1.msra.mxu0 0.0
        %6700 = vmatprep.subr.mxu0 0.0
        %6701 = vmatpush1.msra.mxu0 0.0
        %6702 = vmatprep.subr.mxu0 0.0
        %6703 = vmatpush1.msra.mxu0 0.0
        %6704 = vmatprep.subr.mxu0 0.0
        %6705 = vmatpush1.msra.mxu0 0.0
        %6706 = vmatprep.subr.mxu0 0.0
        %6707 = vmatpush1.msra.mxu0 0.0
        %6708 = vmatprep.subr.mxu0 0.0
        %6709 = vmatpush1.msra.mxu0 0.0
        %6710 = vmatprep.subr.mxu0 0.0
        %6711 = vmatpush1.msra.mxu0 0.0
        %6712 = vmatprep.subr.mxu0 0.0
        %6713 = vmatpush1.msra.mxu0 0.0
        %6714 = vmatprep.subr.mxu0 0.0
        %6715 = vmatpush1.msra.mxu0 0.0
        %6716 = vmatprep.subr.mxu0 0.0
        %6717 = vmatpush1.msra.mxu0 0.0
        %6718 = vmatprep.subr.mxu0 0.0
        %6719 = vmatpush1.msra.mxu0 0.0
        %6720 = vmatprep.subr.mxu0 0.0
        %6721 = vmatpush1.msra.mxu0 0.0
        %6722 = vmatprep.subr.mxu0 0.0
        %6723 = vmatpush1.msra.mxu0 0.0
        %6724 = vmatprep.subr.mxu0 0.0
        %6725 = vmatpush1.msra.mxu0 0.0
        %6726 = vmatprep.subr.mxu0 0.0
        %6727 = vmatpush1.msra.mxu0 0.0
        %6728 = vmatprep.subr.mxu0 0.0
        %6729 = vmatpush1.msra.mxu0 0.0
        %6730 = vmatprep.subr.mxu0 0.0
        %6731 = vmatpush1.msra.mxu0 0.0
        %6732 = vmatprep.subr.mxu0 0.0
        %6733 = vmatpush1.msra.mxu0 0.0
        %6734 = vmatprep.subr.mxu0 0.0
        %6735 = vmatpush1.msra.mxu0 0.0
        %6736 = vmatprep.subr.mxu0 0.0
        %6737 = vmatpush1.msra.mxu0 0.0
        %6738 = vmatprep.subr.mxu0 0.0
        %6739 = vmatpush1.msra.mxu0 0.0
        %6740 = vmatprep.subr.mxu0 0.0
        %6741 = vmatpush1.msra.mxu0 0.0
        %6742 = vmatprep.subr.mxu0 0.0
        %6743 = vmatpush1.msra.mxu0 0.0
        %6744 = vmatprep.subr.mxu0 0.0
        %6745 = vmatpush1.msra.mxu0 0.0
        %6746 = vmatprep.subr.mxu0 0.0
        %6747 = vmatpush1.msra.mxu0 0.0
        %6748 = vmatprep.subr.mxu0 0.0
        %6749 = vmatpush1.msra.mxu0 0.0
        %6750 = vmatprep.subr.mxu0 0.0
        %6751 = vmatpush1.msra.mxu0 0.0
        %6752 = vmatprep.subr.mxu0 0.0
        %6753 = vmatpush1.msra.mxu0 0.0
        %6754 = vmatprep.mubr.f32.mxu0 0.0
        %6755 = vmatmul.mubr.f32.gmra.mrb[0].mxu0 %v6682
        %v6756 = vpop.f32.mrb[0].mxu0
        %v6757 = vadd.f32 0.0, %v6756
        %v6758 = vpop.f32.mrb[0].mxu0
        %6759 = vmatprep.mubr.f32.mxu0 0.0
        %6760 = vmatmul.mubr.f32.gmra.mrb[0].mxu0 %v6685
        %v6761 = vpop.f32.mrb[0].mxu0
        %v6762 = vadd.f32 0.0, %v6761
        %v6763 = vpop.f32.mrb[0].mxu0
        %6764 = vmatprep.mubr.f32.mxu0 0.0
        %6765 = vmatmul.mubr.f32.gmra.mrb[0].mxu0 %v6688
        %v6766 = vpop.f32.mrb[0].mxu0
        %v6767 = vadd.f32 0.0, %v6766
        %v6768 = vpop.f32.mrb[0].mxu0
        %6769 = vdwg.mxu0
        %v6770 = vadd.f32 %v6673, %v6757
        %v6771 = vadd.f32 %v6674, %v6762
        %v6772 = vadd.f32 %v6675, %v6767
        %s6773 = sadd.s32 %s6390, 18
        %s6774 = scalar_lea.vmem [#allocation4], %s6773
        %v6775 = vld [vmem:[%s6774] sm:$0xff]
        %v6776 = vld [vmem:[%s6774 + $0x8] sm:$0xff]
        %v6777 = vld [vmem:[%s6774 + $0x10] sm:$0xff]
        %v6779 = vsel %vm441, %v6775, 0
        %v6782 = vsel %vm441, %v6776, 0
        %v6785 = vsel %vm441, %v6777, 0
        %6787 = vmatprep.subr.mxu0 0.0
        %6788 = vmatpush1.msra.mxu0 %v6368
        %6789 = vmatprep.subr.mxu0 0.0
        %6790 = vmatpush1.msra.mxu0 %v6369
        %6791 = vmatprep.subr.mxu0 0.0
        %6792 = vmatpush1.msra.mxu0 0.0
        %6793 = vmatprep.subr.mxu0 0.0
        %6794 = vmatpush1.msra.mxu0 0.0
        %6795 = vmatprep.subr.mxu0 0.0
        %6796 = vmatpush1.msra.mxu0 0.0
        %6797 = vmatprep.subr.mxu0 0.0
        %6798 = vmatpush1.msra.mxu0 0.0
        %6799 = vmatprep.subr.mxu0 0.0
        %6800 = vmatpush1.msra.mxu0 0.0
        %6801 = vmatprep.subr.mxu0 0.0
        %6802 = vmatpush1.msra.mxu0 0.0
        %6803 = vmatprep.subr.mxu0 0.0
        %6804 = vmatpush1.msra.mxu0 0.0
        %6805 = vmatprep.subr.mxu0 0.0
        %6806 = vmatpush1.msra.mxu0 0.0
        %6807 = vmatprep.subr.mxu0 0.0
        %6808 = vmatpush1.msra.mxu0 0.0
        %6809 = vmatprep.subr.mxu0 0.0
        %6810 = vmatpush1.msra.mxu0 0.0
        %6811 = vmatprep.subr.mxu0 0.0
        %6812 = vmatpush1.msra.mxu0 0.0
        %6813 = vmatprep.subr.mxu0 0.0
        %6814 = vmatpush1.msra.mxu0 0.0
        %6815 = vmatprep.subr.mxu0 0.0
        %6816 = vmatpush1.msra.mxu0 0.0
        %6817 = vmatprep.subr.mxu0 0.0
        %6818 = vmatpush1.msra.mxu0 0.0
        %6819 = vmatprep.subr.mxu0 0.0
        %6820 = vmatpush1.msra.mxu0 0.0
        %6821 = vmatprep.subr.mxu0 0.0
        %6822 = vmatpush1.msra.mxu0 0.0
        %6823 = vmatprep.subr.mxu0 0.0
        %6824 = vmatpush1.msra.mxu0 0.0
        %6825 = vmatprep.subr.mxu0 0.0
        %6826 = vmatpush1.msra.mxu0 0.0
        %6827 = vmatprep.subr.mxu0 0.0
        %6828 = vmatpush1.msra.mxu0 0.0
        %6829 = vmatprep.subr.mxu0 0.0
        %6830 = vmatpush1.msra.mxu0 0.0
        %6831 = vmatprep.subr.mxu0 0.0
        %6832 = vmatpush1.msra.mxu0 0.0
        %6833 = vmatprep.subr.mxu0 0.0
        %6834 = vmatpush1.msra.mxu0 0.0
        %6835 = vmatprep.subr.mxu0 0.0
        %6836 = vmatpush1.msra.mxu0 0.0
        %6837 = vmatprep.subr.mxu0 0.0
        %6838 = vmatpush1.msra.mxu0 0.0
        %6839 = vmatprep.subr.mxu0 0.0
        %6840 = vmatpush1.msra.mxu0 0.0
        %6841 = vmatprep.subr.mxu0 0.0
        %6842 = vmatpush1.msra.mxu0 0.0
        %6843 = vmatprep.subr.mxu0 0.0
        %6844 = vmatpush1.msra.mxu0 0.0
        %6845 = vmatprep.subr.mxu0 0.0
        %6846 = vmatpush1.msra.mxu0 0.0
        %6847 = vmatprep.subr.mxu0 0.0
        %6848 = vmatpush1.msra.mxu0 0.0
        %6849 = vmatprep.subr.mxu0 0.0
        %6850 = vmatpush1.msra.mxu0 0.0
        %6851 = vmatprep.mubr.f32.mxu0 0.0
        %6852 = vmatmul.mubr.f32.gmra.mrb[0].mxu0 %v6779
        %v6853 = vpop.f32.mrb[0].mxu0
        %v6854 = vadd.f32 0.0, %v6853
        %v6855 = vpop.f32.mrb[0].mxu0
        %6856 = vmatprep.mubr.f32.mxu0 0.0
        %6857 = vmatmul.mubr.f32.gmra.mrb[0].mxu0 %v6782
        %v6858 = vpop.f32.mrb[0].mxu0
        %v6859 = vadd.f32 0.0, %v6858
        %v6860 = vpop.f32.mrb[0].mxu0
        %6861 = vmatprep.mubr.f32.mxu0 0.0
        %6862 = vmatmul.mubr.f32.gmra.mrb[0].mxu0 %v6785
        %v6863 = vpop.f32.mrb[0].mxu0
        %v6864 = vadd.f32 0.0, %v6863
        %v6865 = vpop.f32.mrb[0].mxu0
        %6866 = vdwg.mxu0
        %v6867 = vadd.f32 %v6770, %v6854
        %v6868 = vadd.f32 %v6771, %v6859
        %v6869 = vadd.f32 %v6772, %v6864
        %s6870 = sadd.s32 %s6390, 19
        %s6871 = scalar_lea.vmem [#allocation4], %s6870
        %v6872 = vld [vmem:[%s6871] sm:$0xff]
        %v6873 = vld [vmem:[%s6871 + $0x8] sm:$0xff]
        %v6874 = vld [vmem:[%s6871 + $0x10] sm:$0xff]
        %v6876 = vsel %vm441, %v6872, 0
        %v6879 = vsel %vm441, %v6873, 0
        %v6882 = vsel %vm441, %v6874, 0
        %6884 = vmatprep.subr.mxu0 0.0
        %6885 = vmatpush1.msra.mxu0 %v6371
        %6886 = vmatprep.subr.mxu0 0.0
        %6887 = vmatpush1.msra.mxu0 %v6372
        %6888 = vmatprep.subr.mxu0 0.0
        %6889 = vmatpush1.msra.mxu0 0.0
        %6890 = vmatprep.subr.mxu0 0.0
        %6891 = vmatpush1.msra.mxu0 0.0
        %6892 = vmatprep.subr.mxu0 0.0
        %6893 = vmatpush1.msra.mxu0 0.0
        %6894 = vmatprep.subr.mxu0 0.0
        %6895 = vmatpush1.msra.mxu0 0.0
        %6896 = vmatprep.subr.mxu0 0.0
        %6897 = vmatpush1.msra.mxu0 0.0
        %6898 = vmatprep.subr.mxu0 0.0
        %6899 = vmatpush1.msra.mxu0 0.0
        %6900 = vmatprep.subr.mxu0 0.0
        %6901 = vmatpush1.msra.mxu0 0.0
        %6902 = vmatprep.subr.mxu0 0.0
        %6903 = vmatpush1.msra.mxu0 0.0
        %6904 = vmatprep.subr.mxu0 0.0
        %6905 = vmatpush1.msra.mxu0 0.0
        %6906 = vmatprep.subr.mxu0 0.0
        %6907 = vmatpush1.msra.mxu0 0.0
        %6908 = vmatprep.subr.mxu0 0.0
        %6909 = vmatpush1.msra.mxu0 0.0
        %6910 = vmatprep.subr.mxu0 0.0
        %6911 = vmatpush1.msra.mxu0 0.0
        %6912 = vmatprep.subr.mxu0 0.0
        %6913 = vmatpush1.msra.mxu0 0.0
        %6914 = vmatprep.subr.mxu0 0.0
        %6915 = vmatpush1.msra.mxu0 0.0
        %6916 = vmatprep.subr.mxu0 0.0
        %6917 = vmatpush1.msra.mxu0 0.0
        %6918 = vmatprep.subr.mxu0 0.0
        %6919 = vmatpush1.msra.mxu0 0.0
        %6920 = vmatprep.subr.mxu0 0.0
        %6921 = vmatpush1.msra.mxu0 0.0
        %6922 = vmatprep.subr.mxu0 0.0
        %6923 = vmatpush1.msra.mxu0 0.0
        %6924 = vmatprep.subr.mxu0 0.0
        %6925 = vmatpush1.msra.mxu0 0.0
        %6926 = vmatprep.subr.mxu0 0.0
        %6927 = vmatpush1.msra.mxu0 0.0
        %6928 = vmatprep.subr.mxu0 0.0
        %6929 = vmatpush1.msra.mxu0 0.0
        %6930 = vmatprep.subr.mxu0 0.0
        %6931 = vmatpush1.msra.mxu0 0.0
        %6932 = vmatprep.subr.mxu0 0.0
        %6933 = vmatpush1.msra.mxu0 0.0
        %6934 = vmatprep.subr.mxu0 0.0
        %6935 = vmatpush1.msra.mxu0 0.0
        %6936 = vmatprep.subr.mxu0 0.0
        %6937 = vmatpush1.msra.mxu0 0.0
        %6938 = vmatprep.subr.mxu0 0.0
        %6939 = vmatpush1.msra.mxu0 0.0
        %6940 = vmatprep.subr.mxu0 0.0
        %6941 = vmatpush1.msra.mxu0 0.0
        %6942 = vmatprep.subr.mxu0 0.0
        %6943 = vmatpush1.msra.mxu0 0.0
        %6944 = vmatprep.subr.mxu0 0.0
        %6945 = vmatpush1.msra.mxu0 0.0
        %6946 = vmatprep.subr.mxu0 0.0
        %6947 = vmatpush1.msra.mxu0 0.0
        %6948 = vmatprep.mubr.f32.mxu0 0.0
        %6949 = vmatmul.mubr.f32.gmra.mrb[0].mxu0 %v6876
        %v6950 = vpop.f32.mrb[0].mxu0
        %v6951 = vadd.f32 0.0, %v6950
        %v6952 = vpop.f32.mrb[0].mxu0
        %6953 = vmatprep.mubr.f32.mxu0 0.0
        %6954 = vmatmul.mubr.f32.gmra.mrb[0].mxu0 %v6879
        %v6955 = vpop.f32.mrb[0].mxu0
        %v6956 = vadd.f32 0.0, %v6955
        %v6957 = vpop.f32.mrb[0].mxu0
        %6958 = vmatprep.mubr.f32.mxu0 0.0
        %6959 = vmatmul.mubr.f32.gmra.mrb[0].mxu0 %v6882
        %v6960 = vpop.f32.mrb[0].mxu0
        %v6961 = vadd.f32 0.0, %v6960
        %v6962 = vpop.f32.mrb[0].mxu0
        %6963 = vdwg.mxu0
        %v6964 = vadd.f32 %v6867, %v6951
        %v6965 = vadd.f32 %v6868, %v6956
        %v6966 = vadd.f32 %v6869, %v6961
        %s6967 = sadd.s32 %s6390, 29
        %s6968 = scalar_lea.vmem [#allocation4], %s6967
        %v6969 = vld [vmem:[%s6968] sm:$0xff]
        %v6970 = vld [vmem:[%s6968 + $0x8] sm:$0xff]
        %v6971 = vld [vmem:[%s6968 + $0x10] sm:$0xff]
        %v6973 = vsel %vm441, %v6969, 0
        %v6976 = vsel %vm441, %v6970, 0
        %v6979 = vsel %vm441, %v6971, 0
        %6981 = vmatprep.subr.mxu0 0.0
        %6982 = vmatpush1.msra.mxu0 %v6374
        %6983 = vmatprep.subr.mxu0 0.0
        %6984 = vmatpush1.msra.mxu0 %v6375
        %6985 = vmatprep.subr.mxu0 0.0
        %6986 = vmatpush1.msra.mxu0 0.0
        %6987 = vmatprep.subr.mxu0 0.0
        %6988 = vmatpush1.msra.mxu0 0.0
        %6989 = vmatprep.subr.mxu0 0.0
        %6990 = vmatpush1.msra.mxu0 0.0
        %6991 = vmatprep.subr.mxu0 0.0
        %6992 = vmatpush1.msra.mxu0 0.0
        %6993 = vmatprep.subr.mxu0 0.0
        %6994 = vmatpush1.msra.mxu0 0.0
        %6995 = vmatprep.subr.mxu0 0.0
        %6996 = vmatpush1.msra.mxu0 0.0
        %6997 = vmatprep.subr.mxu0 0.0
        %6998 = vmatpush1.msra.mxu0 0.0
        %6999 = vmatprep.subr.mxu0 0.0
        %7000 = vmatpush1.msra.mxu0 0.0
        %7001 = vmatprep.subr.mxu0 0.0
        %7002 = vmatpush1.msra.mxu0 0.0
        %7003 = vmatprep.subr.mxu0 0.0
        %7004 = vmatpush1.msra.mxu0 0.0
        %7005 = vmatprep.subr.mxu0 0.0
        %7006 = vmatpush1.msra.mxu0 0.0
        %7007 = vmatprep.subr.mxu0 0.0
        %7008 = vmatpush1.msra.mxu0 0.0
        %7009 = vmatprep.subr.mxu0 0.0
        %7010 = vmatpush1.msra.mxu0 0.0
        %7011 = vmatprep.subr.mxu0 0.0
        %7012 = vmatpush1.msra.mxu0 0.0
        %7013 = vmatprep.subr.mxu0 0.0
        %7014 = vmatpush1.msra.mxu0 0.0
        %7015 = vmatprep.subr.mxu0 0.0
        %7016 = vmatpush1.msra.mxu0 0.0
        %7017 = vmatprep.subr.mxu0 0.0
        %7018 = vmatpush1.msra.mxu0 0.0
        %7019 = vmatprep.subr.mxu0 0.0
        %7020 = vmatpush1.msra.mxu0 0.0
        %7021 = vmatprep.subr.mxu0 0.0
        %7022 = vmatpush1.msra.mxu0 0.0
        %7023 = vmatprep.subr.mxu0 0.0
        %7024 = vmatpush1.msra.mxu0 0.0
        %7025 = vmatprep.subr.mxu0 0.0
        %7026 = vmatpush1.msra.mxu0 0.0
        %7027 = vmatprep.subr.mxu0 0.0
        %7028 = vmatpush1.msra.mxu0 0.0
        %7029 = vmatprep.subr.mxu0 0.0
        %7030 = vmatpush1.msra.mxu0 0.0
        %7031 = vmatprep.subr.mxu0 0.0
        %7032 = vmatpush1.msra.mxu0 0.0
        %7033 = vmatprep.subr.mxu0 0.0
        %7034 = vmatpush1.msra.mxu0 0.0
        %7035 = vmatprep.subr.mxu0 0.0
        %7036 = vmatpush1.msra.mxu0 0.0
        %7037 = vmatprep.subr.mxu0 0.0
        %7038 = vmatpush1.msra.mxu0 0.0
        %7039 = vmatprep.subr.mxu0 0.0
        %7040 = vmatpush1.msra.mxu0 0.0
        %7041 = vmatprep.subr.mxu0 0.0
        %7042 = vmatpush1.msra.mxu0 0.0
        %7043 = vmatprep.subr.mxu0 0.0
        %7044 = vmatpush1.msra.mxu0 0.0
        %7045 = vmatprep.mubr.f32.mxu0 0.0
        %7046 = vmatmul.mubr.f32.gmra.mrb[0].mxu0 %v6973
        %v7047 = vpop.f32.mrb[0].mxu0
        %v7048 = vadd.f32 0.0, %v7047
        %v7049 = vpop.f32.mrb[0].mxu0
        %7050 = vmatprep.mubr.f32.mxu0 0.0
        %7051 = vmatmul.mubr.f32.gmra.mrb[0].mxu0 %v6976
        %v7052 = vpop.f32.mrb[0].mxu0
        %v7053 = vadd.f32 0.0, %v7052
        %v7054 = vpop.f32.mrb[0].mxu0
        %7055 = vmatprep.mubr.f32.mxu0 0.0
        %7056 = vmatmul.mubr.f32.gmra.mrb[0].mxu0 %v6979
        %v7057 = vpop.f32.mrb[0].mxu0
        %v7058 = vadd.f32 0.0, %v7057
        %v7059 = vpop.f32.mrb[0].mxu0
        %7060 = vdwg.mxu0
        %v7061 = vadd.f32 %v6964, %v7048
        %v7062 = vadd.f32 %v6965, %v7053
        %v7063 = vadd.f32 %v6966, %v7058
        %s7064 = sadd.s32 %s6390, 30
        %s7065 = scalar_lea.vmem [#allocation4], %s7064
        %v7066 = vld [vmem:[%s7065] sm:$0xff]
        %v7067 = vld [vmem:[%s7065 + $0x8] sm:$0xff]
        %v7068 = vld [vmem:[%s7065 + $0x10] sm:$0xff]
        %v7070 = vsel %vm441, %v7066, 0
        %v7073 = vsel %vm441, %v7067, 0
        %v7076 = vsel %vm441, %v7068, 0
        %7078 = vmatprep.subr.mxu0 0.0
        %7079 = vmatpush1.msra.mxu0 %v6377
        %7080 = vmatprep.subr.mxu0 0.0
        %7081 = vmatpush1.msra.mxu0 %v6378
        %7082 = vmatprep.subr.mxu0 0.0
        %7083 = vmatpush1.msra.mxu0 0.0
        %7084 = vmatprep.subr.mxu0 0.0
        %7085 = vmatpush1.msra.mxu0 0.0
        %7086 = vmatprep.subr.mxu0 0.0
        %7087 = vmatpush1.msra.mxu0 0.0
        %7088 = vmatprep.subr.mxu0 0.0
        %7089 = vmatpush1.msra.mxu0 0.0
        %7090 = vmatprep.subr.mxu0 0.0
        %7091 = vmatpush1.msra.mxu0 0.0
        %7092 = vmatprep.subr.mxu0 0.0
        %7093 = vmatpush1.msra.mxu0 0.0
        %7094 = vmatprep.subr.mxu0 0.0
        %7095 = vmatpush1.msra.mxu0 0.0
        %7096 = vmatprep.subr.mxu0 0.0
        %7097 = vmatpush1.msra.mxu0 0.0
        %7098 = vmatprep.subr.mxu0 0.0
        %7099 = vmatpush1.msra.mxu0 0.0
        %7100 = vmatprep.subr.mxu0 0.0
        %7101 = vmatpush1.msra.mxu0 0.0
        %7102 = vmatprep.subr.mxu0 0.0
        %7103 = vmatpush1.msra.mxu0 0.0
        %7104 = vmatprep.subr.mxu0 0.0
        %7105 = vmatpush1.msra.mxu0 0.0
        %7106 = vmatprep.subr.mxu0 0.0
        %7107 = vmatpush1.msra.mxu0 0.0
        %7108 = vmatprep.subr.mxu0 0.0
        %7109 = vmatpush1.msra.mxu0 0.0
        %7110 = vmatprep.subr.mxu0 0.0
        %7111 = vmatpush1.msra.mxu0 0.0
        %7112 = vmatprep.subr.mxu0 0.0
        %7113 = vmatpush1.msra.mxu0 0.0
        %7114 = vmatprep.subr.mxu0 0.0
        %7115 = vmatpush1.msra.mxu0 0.0
        %7116 = vmatprep.subr.mxu0 0.0
        %7117 = vmatpush1.msra.mxu0 0.0
        %7118 = vmatprep.subr.mxu0 0.0
        %7119 = vmatpush1.msra.mxu0 0.0
        %7120 = vmatprep.subr.mxu0 0.0
        %7121 = vmatpush1.msra.mxu0 0.0
        %7122 = vmatprep.subr.mxu0 0.0
        %7123 = vmatpush1.msra.mxu0 0.0
        %7124 = vmatprep.subr.mxu0 0.0
        %7125 = vmatpush1.msra.mxu0 0.0
        %7126 = vmatprep.subr.mxu0 0.0
        %7127 = vmatpush1.msra.mxu0 0.0
        %7128 = vmatprep.subr.mxu0 0.0
        %7129 = vmatpush1.msra.mxu0 0.0
        %7130 = vmatprep.subr.mxu0 0.0
        %7131 = vmatpush1.msra.mxu0 0.0
        %7132 = vmatprep.subr.mxu0 0.0
        %7133 = vmatpush1.msra.mxu0 0.0
        %7134 = vmatprep.subr.mxu0 0.0
        %7135 = vmatpush1.msra.mxu0 0.0
        %7136 = vmatprep.subr.mxu0 0.0
        %7137 = vmatpush1.msra.mxu0 0.0
        %7138 = vmatprep.subr.mxu0 0.0
        %7139 = vmatpush1.msra.mxu0 0.0
        %7140 = vmatprep.subr.mxu0 0.0
        %7141 = vmatpush1.msra.mxu0 0.0
        %7142 = vmatprep.mubr.f32.mxu0 0.0
        %7143 = vmatmul.mubr.f32.gmra.mrb[0].mxu0 %v7070
        %v7144 = vpop.f32.mrb[0].mxu0
        %v7145 = vadd.f32 0.0, %v7144
        %v7146 = vpop.f32.mrb[0].mxu0
        %7147 = vmatprep.mubr.f32.mxu0 0.0
        %7148 = vmatmul.mubr.f32.gmra.mrb[0].mxu0 %v7073
        %v7149 = vpop.f32.mrb[0].mxu0
        %v7150 = vadd.f32 0.0, %v7149
        %v7151 = vpop.f32.mrb[0].mxu0
        %7152 = vmatprep.mubr.f32.mxu0 0.0
        %7153 = vmatmul.mubr.f32.gmra.mrb[0].mxu0 %v7076
        %v7154 = vpop.f32.mrb[0].mxu0
        %v7155 = vadd.f32 0.0, %v7154
        %v7156 = vpop.f32.mrb[0].mxu0
        %7157 = vdwg.mxu0
        %v7158 = vadd.f32 %v7061, %v7145
        %v7159 = vadd.f32 %v7062, %v7150
        %v7160 = vadd.f32 %v7063, %v7155
        %s7161 = sadd.s32 %s6390, 31
        %s7162 = scalar_lea.vmem [#allocation4], %s7161
        %v7163 = vld [vmem:[%s7162] sm:$0xff]
        %v7164 = vld [vmem:[%s7162 + $0x8] sm:$0xff]
        %v7165 = vld [vmem:[%s7162 + $0x10] sm:$0xff]
        %v7167 = vsel %vm441, %v7163, 0
        %v7170 = vsel %vm441, %v7164, 0
        %v7173 = vsel %vm441, %v7165, 0
        %7175 = vmatprep.subr.mxu0 0.0
        %7176 = vmatpush1.msra.mxu0 %v6380
        %7177 = vmatprep.subr.mxu0 0.0
        %7178 = vmatpush1.msra.mxu0 %v6381
        %7179 = vmatprep.subr.mxu0 0.0
        %7180 = vmatpush1.msra.mxu0 0.0
        %7181 = vmatprep.subr.mxu0 0.0
        %7182 = vmatpush1.msra.mxu0 0.0
        %7183 = vmatprep.subr.mxu0 0.0
        %7184 = vmatpush1.msra.mxu0 0.0
        %7185 = vmatprep.subr.mxu0 0.0
        %7186 = vmatpush1.msra.mxu0 0.0
        %7187 = vmatprep.subr.mxu0 0.0
        %7188 = vmatpush1.msra.mxu0 0.0
        %7189 = vmatprep.subr.mxu0 0.0
        %7190 = vmatpush1.msra.mxu0 0.0
        %7191 = vmatprep.subr.mxu0 0.0
        %7192 = vmatpush1.msra.mxu0 0.0
        %7193 = vmatprep.subr.mxu0 0.0
        %7194 = vmatpush1.msra.mxu0 0.0
        %7195 = vmatprep.subr.mxu0 0.0
        %7196 = vmatpush1.msra.mxu0 0.0
        %7197 = vmatprep.subr.mxu0 0.0
        %7198 = vmatpush1.msra.mxu0 0.0
        %7199 = vmatprep.subr.mxu0 0.0
        %7200 = vmatpush1.msra.mxu0 0.0
        %7201 = vmatprep.subr.mxu0 0.0
        %7202 = vmatpush1.msra.mxu0 0.0
        %7203 = vmatprep.subr.mxu0 0.0
        %7204 = vmatpush1.msra.mxu0 0.0
        %7205 = vmatprep.subr.mxu0 0.0
        %7206 = vmatpush1.msra.mxu0 0.0
        %7207 = vmatprep.subr.mxu0 0.0
        %7208 = vmatpush1.msra.mxu0 0.0
        %7209 = vmatprep.subr.mxu0 0.0
        %7210 = vmatpush1.msra.mxu0 0.0
        %7211 = vmatprep.subr.mxu0 0.0
        %7212 = vmatpush1.msra.mxu0 0.0
        %7213 = vmatprep.subr.mxu0 0.0
        %7214 = vmatpush1.msra.mxu0 0.0
        %7215 = vmatprep.subr.mxu0 0.0
        %7216 = vmatpush1.msra.mxu0 0.0
        %7217 = vmatprep.subr.mxu0 0.0
        %7218 = vmatpush1.msra.mxu0 0.0
        %7219 = vmatprep.subr.mxu0 0.0
        %7220 = vmatpush1.msra.mxu0 0.0
        %7221 = vmatprep.subr.mxu0 0.0
        %7222 = vmatpush1.msra.mxu0 0.0
        %7223 = vmatprep.subr.mxu0 0.0
        %7224 = vmatpush1.msra.mxu0 0.0
        %7225 = vmatprep.subr.mxu0 0.0
        %7226 = vmatpush1.msra.mxu0 0.0
        %7227 = vmatprep.subr.mxu0 0.0
        %7228 = vmatpush1.msra.mxu0 0.0
        %7229 = vmatprep.subr.mxu0 0.0
        %7230 = vmatpush1.msra.mxu0 0.0
        %7231 = vmatprep.subr.mxu0 0.0
        %7232 = vmatpush1.msra.mxu0 0.0
        %7233 = vmatprep.subr.mxu0 0.0
        %7234 = vmatpush1.msra.mxu0 0.0
        %7235 = vmatprep.subr.mxu0 0.0
        %7236 = vmatpush1.msra.mxu0 0.0
        %7237 = vmatprep.subr.mxu0 0.0
        %7238 = vmatpush1.msra.mxu0 0.0
        %7239 = vmatprep.mubr.f32.mxu0 0.0
        %7240 = vmatmul.mubr.f32.gmra.mrb[0].mxu0 %v7167
        %v7241 = vpop.f32.mrb[0].mxu0
        %v7242 = vadd.f32 0.0, %v7241
        %v7243 = vpop.f32.mrb[0].mxu0
        %7244 = vmatprep.mubr.f32.mxu0 0.0
        %7245 = vmatmul.mubr.f32.gmra.mrb[0].mxu0 %v7170
        %v7246 = vpop.f32.mrb[0].mxu0
        %v7247 = vadd.f32 0.0, %v7246
        %v7248 = vpop.f32.mrb[0].mxu0
        %7249 = vmatprep.mubr.f32.mxu0 0.0
        %7250 = vmatmul.mubr.f32.gmra.mrb[0].mxu0 %v7173
        %v7251 = vpop.f32.mrb[0].mxu0
        %v7252 = vadd.f32 0.0, %v7251
        %v7253 = vpop.f32.mrb[0].mxu0
        %7254 = vdwg.mxu0
        %v7255 = vadd.f32 %v7158, %v7242
        %v7256 = vadd.f32 %v7159, %v7247
        %v7257 = vadd.f32 %v7160, %v7252
        %v7259 = vlaneseq
        %v7260 = vshrl.u32 %v7259, 7
        %v7261 = vsub.s32 0, %v7260
        %v7262 = vrot.slane %v6382, %v7261
        %v7264 = vmul.f32 %v7255, %v7262
        %v7265 = vmul.f32 %v7256, %v7262
        %v7266 = vmul.f32 %v7257, %v7262
        %v7268 = vlaneseq
        %v7269 = vshrl.u32 %v7268, 7
        %v7270 = vsub.s32 0, %v7269
        %v7271 = vrot.slane %v6383, %v7270
        %v7273 = vadd.f32 %v7264, %v7271
        %v7274 = vadd.f32 %v7265, %v7271
        %v7275 = vadd.f32 %v7266, %v7271
        %v7276 = vmax.f32 %v7273, 0.0
        %v7277 = vmax.f32 %v7274, 0.0
        %v7278 = vmax.f32 %v7275, 0.0
        %7279 = vst.msk [vmem:[#allocation5] sm:$0xff] %vm441, %v7276
        %7280 = vst.msk [vmem:[#allocation5 + $0x8] sm:$0xff] %vm441, %v7277
        %7281 = vst.msk [vmem:[#allocation5 + $0x10] sm:$0xff] %vm441, %v7278
        %v7282 = vld [vmem:[#allocation5] sm:$0xff]
        %v7283 = vld [vmem:[#allocation5 + $0x8] sm:$0x3]
        %v7284 = vld [vmem:[#allocation5 + $0xc] sm:$0xff]
        %v7285 = vld [vmem:[#allocation5 + $0x14] sm:$0x3]
        %v7286 = vmax.f32 %v7282, %v7284
        %v7287 = vmax.f32 %v7283, %v7285
        %7288 = vst.msk [vmem:[#allocation6] sm:$0xff] %vm441, %v7286
        %vm7289 = vcmask 123904
        %7290 = vst.msk [vmem:[#allocation6 + $0x8] sm:$0x3] %vm7289, %v7287
        %v7291 = vld [vmem:[#allocation6] ss:$2 sm:$0x1f]
        %s7292 = scalar_lea.vmem [#allocation6], 1
        %v7293 = vld [vmem:[%s7292] ss:$2 sm:$0x1f]
        %v7294 = vmax.f32 %v7291, %v7293
        %s7295 = smul.u32 %s6385, 8
        %s7296 = scalar_lea.vmem [#allocation7], %s7295
        %vm7297 = vcmask 126976
        %7298 = vst.msk [vmem:[%s7296] sm:$0x1f] %vm7297, %v7294
      $region98: #{convnet_forward.1} parent=71 // loop_footer
        %s6389 = sadd.s32 1, %s6385
      $region99: #{convnet_forward.1} parent=71 // loop_footer_branch
        %6384 = sbr.rel target = $region95
      $region100: #{convnet_forward.1} parent=71 // loop_exit
        _
      %v7299 = vld [vmem:[#allocation7] sm:$0x1f]
      %v7300 = vld [vmem:[#allocation7 + $0x8] sm:$0x1f]
      %v7301 = vld [vmem:[#allocation7 + $0x10] sm:$0x1f]
      %v7302 = vld [vmem:[#allocation7 + $0x18] sm:$0x1f]
      %v7303 = vld [vmem:[#allocation7 + $0x20] sm:$0x1f]
      %vm7304 = vcmask 126976
      %7305 = vst.msk [vmem:[%s440] sm:$0x1f] %vm7304, %v7299
      %7306 = vst.msk [vmem:[%s440 + $0x8] sm:$0x1f] %vm7304, %v7300
      %7307 = vst.msk [vmem:[%s440 + $0x10] sm:$0x1f] %vm7304, %v7301
      %7308 = vst.msk [vmem:[%s440 + $0x18] sm:$0x1f] %vm7304, %v7302
      %7309 = vst.msk [vmem:[%s440 + $0x20] sm:$0x1f] %vm7304, %v7303
      %p7310 = scmp.lt.s32.totalorder %s24, 1
      %s7311 = scalar_select %p7310, %s24, 1
      %s7312 = smul.addr %s7311, 5
      %s7313 = smul.addr %s7312, 8
      %s7314 = scalar_lea.vmem %s13, %s7313
      // Predicated region
      $region101: #{convnet_forward.1} parent=71 // pred_check
        %p7315 = pneg %p320
      $region102: #{convnet_forward.1} parent=71 // pred_check_branch
        %7317 = sbr.rel (%p7315) target = $region104
      $region103: #{convnet_forward.1} parent=71 // pred_region
        _
      $region104: #{convnet_forward.1} parent=71 // pred_fallthru
        _
    $region72: #{convnet_forward.1} parent=5 // pred_fallthru
      _
    %p7318 = scmp.le.s32.totalorder 2, %s19
    // Predicated region
    $region105: #{convnet_forward.1} parent=5 // pred_check
      %p7319 = pneg %p7318
    $region106: #{convnet_forward.1} parent=5 // pred_check_branch
      %7321 = sbr.rel (%p7319) target = $region108
    $region107: #{convnet_forward.1} parent=5 // pred_region
      %s7322 = ssub.s32 %s19, 2
      // Predicated region
      $region109: #{convnet_forward.1} parent=107 // pred_check
        %p7323 = pneg %p326
      $region110: #{convnet_forward.1} parent=107 // pred_check_branch
        %7325 = sbr.rel (%p7323) target = $region112
      $region111: #{convnet_forward.1} parent=107 // pred_region
        %p7326 = scmp.lt.s32.totalorder %s25, 1
        %s7327 = scalar_select %p7326, %s25, 1
        %s7328 = smul.addr %s7327, 5
        %s7329 = smul.addr %s7328, 8
        %s7330 = scalar_lea.vmem %s13, %s7329
      $region112: #{convnet_forward.1} parent=107 // pred_fallthru
        _
    $region108: #{convnet_forward.1} parent=5 // pred_fallthru
      _
  $region6: #{convnet_forward.1} parent=0 // loop_footer
    %s23 = sadd.s32 1, %s19
  $region7: #{convnet_forward.1} parent=0 // loop_footer_branch
    %18 = sbr.rel target = $region3
  $region8: #{convnet_forward.1} parent=0 // loop_exit
    _

</llo_original>
